<compile_context>
chip_gen: v7x
topology: tpu7x:2x2x1
jax: 0.10.0
libtpu: 0.0.40
codegen_flags: <defaults>
</compile_context>

<pallas_src>
import jax
import jax.numpy as jnp
import numpy as np
from jax.experimental import pallas as pl
from jax.experimental.pallas import tpu as pltpu


# ----------------------------------------------------------------------------
# Fused kernel
# ----------------------------------------------------------------------------
def _make_fused_kernel(*, D, H, W, Cin, hid, oup, Dt, Dcore, stride, Ho, Wo,
                       expand, use_res):
    """Builds the fused inverted-residual kernel for one (n, d_tile) step."""
    sd, sh, sw = stride
    M2 = Dt * Ho * Wo

    def body(x_ref, xp_ref, xn_ref, w1_ref, b1_ref, wd_ref, b2_ref, w3_ref,
             b3_ref, o_ref, hid_ref):
        t = pl.program_id(1)

        def expand_rows(rows):                       # (R, Cin) -> (R, hid)
            if not expand:
                return rows                           # hid == Cin in this case
            y = jnp.dot(rows, w1_ref[...], preferred_element_type=jnp.float32)
            return jnp.clip(y + b1_ref[...], 0.0, 6.0)

        # Zero-padded hidden scratch: the H/W border and any out-of-range
        # D-halo planes stay zero (this realizes the depthwise "padding=1").
        hid_ref[...] = jnp.zeros_like(hid_ref)

        # --- expand pointwise (1x1x1 conv + folded BN + ReLU6), core planes --
        xc = x_ref[...].astype(jnp.float32)           # (Dcore, H, W, Cin)
        xc_flat = xc.reshape(Dcore * H * W, Cin)
        hc = expand_rows(xc_flat)                     # (Dcore*H*W, hid)
        hid_ref[1:Dcore + 1, 1:H + 1, 1:W + 1, :] = hc.reshape(Dcore, H, W, hid)

        # --- D-halo planes (clamped single-plane fetches, masked at edges) ---
        top_ok = t > 0
        hp = expand_rows(xp_ref[...].astype(jnp.float32).reshape(H * W, Cin))
        hp = jnp.where(top_ok, hp, 0.0)
        hid_ref[0:1, 1:H + 1, 1:W + 1, :] = hp.reshape(1, H, W, hid)

        bot_ok = (t + 1) * Dcore < D
        hn = expand_rows(xn_ref[...].astype(jnp.float32).reshape(H * W, Cin))
        hn = jnp.where(bot_ok, hn, 0.0)
        hid_ref[Dcore + 1:Dcore + 2, 1:H + 1, 1:W + 1, :] = \
            hn.reshape(1, H, W, hid)

        # --- depthwise 3x3x3 conv (BN2 scale folded into taps) + ReLU6 -------
        acc = jnp.zeros((Dt, Ho, Wo, hid), jnp.float32)
        if (sd, sh, sw) == (1, 1, 1):
            for kd in range(3):
                for kh in range(3):
                    for kw in range(3):
                        k = kd * 9 + kh * 3 + kw
                        patch = hid_ref[kd:kd + Dt, kh:kh + Ho, kw:kw + Wo, :]
                        acc = acc + patch * wd_ref[k, :]
        else:
            # TODO(synk): strided (>1) depthwise path uses strided lax.slice
            # inside the kernel and is not exercised by the demo below.
            hfull = hid_ref[...]
            for kd in range(3):
                for kh in range(3):
                    for kw in range(3):
                        k = kd * 9 + kh * 3 + kw
                        patch = jax.lax.slice(
                            hfull, (kd, kh, kw, 0),
                            (kd + (Dt - 1) * sd + 1,
                             kh + (Ho - 1) * sh + 1,
                             kw + (Wo - 1) * sw + 1, hid),
                            (sd, sh, sw, 1))
                        acc = acc + patch * wd_ref[k, :]
        y = jnp.clip(acc + b2_ref[...], 0.0, 6.0)

        # --- project pointwise (1x1x1 conv + folded BN) + residual -----------
        out = jnp.dot(y.reshape(M2, hid), w3_ref[...],
                      preferred_element_type=jnp.float32) + b3_ref[...]
        if use_res:
            # stride == (1,1,1): the core input planes are exactly the
            # residual planes and Cin == oup.
            out = out + xc_flat
        o_ref[...] = out.astype(o_ref.dtype)

    if expand:
        def kernel(x_ref, xp_ref, xn_ref, w1_ref, b1_ref, wd_ref, b2_ref,
                   w3_ref, b3_ref, o_ref, hid_ref):
            body(x_ref, xp_ref, xn_ref, w1_ref, b1_ref, wd_ref, b2_ref,
                 w3_ref, b3_ref, o_ref, hid_ref)
    else:
        def kernel(x_ref, xp_ref, xn_ref, wd_ref, b2_ref, w3_ref, b3_ref,
                   o_ref, hid_ref):
            body(x_ref, xp_ref, xn_ref, None, None, wd_ref, b2_ref, w3_ref,
                 b3_ref, o_ref, hid_ref)
    return kernel


# ----------------------------------------------------------------------------
# Helpers
# ----------------------------------------------------------------------------
def _fold_bn(gamma, beta, mean, var, eps=1e-5):
    scale = gamma / jnp.sqrt(var + eps)
    return scale, beta - mean * scale


def _pick_d_tile(Do, N, sd, H, W, hid, HoWo):
    """Largest D-tile (divisor of Do) whose padded hidden scratch fits a VMEM
    budget, preferring enough grid steps to feed both TensorCores."""
    if sd != 1:
        return Do                         # strided depthwise: one tile per sample
    lane = max(hid, 128)                  # lane padding of the VMEM scratch
    sub = -(-(W + 2) // 8) * 8            # sublane padding
    budget = 8 * 1024 * 1024
    divs = [d for d in range(1, Do + 1) if Do % d == 0]
    ok = [d for d in divs
          if (d + 2) * (H + 2) * sub * lane * 4 <= budget
          and ((d * HoWo) % 8 == 0 or d == Do)]
    if not ok:
        ok = [Do]
    multi = [d for d in ok if (Do // d) * N >= 4]
    return max(multi) if multi else max(ok)


# ----------------------------------------------------------------------------
# Module
# ----------------------------------------------------------------------------
class MobileV2Residual3DPallas:
    """MobileV2_Residual_3D (eval-mode BN) with deterministic synthetic params."""

    def __init__(self, inp, oup, stride, expanse_ratio, key):
        self.inp = inp
        self.oup = oup
        self.stride = tuple(stride)
        self.expanse_ratio = expanse_ratio
        self.hidden = round(inp * expanse_ratio)
        self.use_res = self.stride == (1, 1, 1) and inp == oup

        ks = jax.random.split(key, 8)

        def bn_params(k, c):
            k0, k1, k2, k3 = jax.random.split(k, 4)
            gamma = jax.random.uniform(k0, (c,), jnp.float32, 0.5, 1.5)
            beta = 0.1 * jax.random.normal(k1, (c,), jnp.float32)
            mean = 0.1 * jax.random.normal(k2, (c,), jnp.float32)
            var = jax.random.uniform(k3, (c,), jnp.float32, 0.5, 1.5)
            return gamma, beta, mean, var

        h = self.hidden
        if expanse_ratio != 1:
            self.w1 = 0.1 * jax.random.normal(ks[0], (inp, h), jnp.float32)
            self.bn1 = bn_params(ks[1], h)
            s1, b1 = _fold_bn(*self.bn1)
            self.w1f = self.w1 * s1[None, :]          # BN scale folded in
            self.b1f = b1.reshape(1, h)
        # depthwise weights stored as (27, hidden) = reshape of (3,3,3,hidden)
        self.wdw = 0.1 * jax.random.normal(ks[2], (27, h), jnp.float32)
        self.bn2 = bn_params(ks[3], h)
        s2, b2 = _fold_bn(*self.bn2)
        self.wdwf = self.wdw * s2[None, :]
        self.b2f = b2.reshape(1, h)
        self.w3 = 0.1 * jax.random.normal(ks[4], (h, oup), jnp.float32)
        self.bn3 = bn_params(ks[5], oup)
        s3, b3 = _fold_bn(*self.bn3)
        self.w3f = self.w3 * s3[None, :]
        self.b3f = b3.reshape(1, oup)

    def __call__(self, x):
        """x: (N, C, D, H, W) float32, PyTorch layout."""
        xcl = jnp.transpose(x, (0, 2, 3, 4, 1))        # -> NDHWC
        N, D, H, W, Cin = xcl.shape
        sd, sh, sw = self.stride
        Do = (D - 1) // sd + 1
        Ho = (H - 1) // sh + 1
        Wo = (W - 1) // sw + 1
        hid, oup = self.hidden, self.oup
        expand = self.expanse_ratio != 1

        Dt = _pick_d_tile(Do, N, sd, H, W, hid, Ho * Wo)
        nDt = Do // Dt
        Dcore = Dt * sd if sd == 1 else D
        assert Do % Dt == 0
        M2 = Dt * Ho * Wo

        kernel = _make_fused_kernel(
            D=D, H=H, W=W, Cin=Cin, hid=hid, oup=oup, Dt=Dt, Dcore=Dcore,
            stride=(sd, sh, sw), Ho=Ho, Wo=Wo, expand=expand,
            use_res=self.use_res)

        core_spec = pl.BlockSpec((None, Dcore, H, W, Cin),
                                 lambda n, t: (n, t, 0, 0, 0))
        prev_spec = pl.BlockSpec(
            (None, 1, H, W, Cin),
            lambda n, t: (n, jnp.maximum(t * Dcore - 1, 0), 0, 0, 0))
        next_spec = pl.BlockSpec(
            (None, 1, H, W, Cin),
            lambda n, t: (n, jnp.minimum((t + 1) * Dcore, D - 1), 0, 0, 0))

        def full(shape):
            return pl.BlockSpec(shape, lambda n, t: (0,) * len(shape))

        in_specs = [core_spec, prev_spec, next_spec]
        args = [xcl, xcl, xcl]
        if expand:
            in_specs += [full((Cin, hid)), full((1, hid))]
            args += [self.w1f, self.b1f]
        in_specs += [full((27, hid)), full((1, hid)),
                     full((hid, oup)), full((1, oup))]
        args += [self.wdwf, self.b2f, self.w3f, self.b3f]

        out = pl.pallas_call(
            kernel,
            out_shape=jax.ShapeDtypeStruct((N, Do * Ho * Wo, oup), jnp.float32),
            grid=(N, nDt),
            in_specs=in_specs,
            out_specs=pl.BlockSpec((None, M2, oup), lambda n, t: (n, t, 0)),
            scratch_shapes=[
                pltpu.VMEM((Dcore + 2, H + 2, W + 2, hid), jnp.float32)],
            compiler_params=pltpu.CompilerParams(
                dimension_semantics=("parallel", "parallel"),
                vmem_limit_bytes=48 * 1024 * 1024),
        )(*args)

        out = out.reshape(N, Do, Ho, Wo, oup)
        return jnp.transpose(out, (0, 4, 1, 2, 3))     # -> NCDHW


# ----------------------------------------------------------------------------
# Pure-JAX (lax.conv) reference, mirroring the PyTorch module in eval mode.
# ----------------------------------------------------------------------------
def _reference_forward(mod, x):
    prec = jax.lax.Precision.HIGHEST

    def conv3d(y, w, stride, pad, groups):
        return jax.lax.conv_general_dilated(
            y, w, window_strides=stride, padding=[(pad, pad)] * 3,
            dimension_numbers=("NCDHW", "OIDHW", "NCDHW"),
            feature_group_count=groups, precision=prec)

    def bn(y, params):
        g, b, m, v = params
        sh = (1, -1, 1, 1, 1)
        return (y - m.reshape(sh)) * (g / jnp.sqrt(v + 1e-5)).reshape(sh) \
            + b.reshape(sh)

    relu6 = lambda y: jnp.clip(y, 0.0, 6.0)
    h = mod.hidden

    y = x
    if mod.expanse_ratio != 1:
        w1_t = mod.w1.T.reshape(h, mod.inp, 1, 1, 1)
        y = relu6(bn(conv3d(y, w1_t, (1, 1, 1), 0, 1), mod.bn1))
    wdw_t = mod.wdw.reshape(3, 3, 3, h).transpose(3, 0, 1, 2)[:, None]
    y = relu6(bn(conv3d(y, wdw_t, mod.stride, 1, h), mod.bn2))
    w3_t = mod.w3.T.reshape(mod.oup, h, 1, 1, 1)
    y = bn(conv3d(y, w3_t, (1, 1, 1), 0, 1), mod.bn3)
    return x + y if mod.use_res else y


# ----------------------------------------------------------------------------
if __name__ == "__main__":
    key = jax.random.PRNGKey(0)
    k_param, k_x = jax.random.split(key)

    # inp == oup and stride == (1,1,1) -> residual path; expanse_ratio=2 ->
    # expand + depthwise + project all exercised; D=16 with a D-tile of 8
    # exercises both D-halo paths of the fused kernel (grid = (2, 2)).
    inp, oup, stride, expanse_ratio = 4, 4, (1, 1, 1), 2
    N, D, H, W = 2, 16, 8, 8

    mod = MobileV2Residual3DPallas(inp, oup, stride, expanse_ratio, k_param)
    x = jax.random.normal(k_x, (N, inp, D, H, W), jnp.float32)

    out = jax.block_until_ready(mod(x))
    ref = jax.block_until_ready(_reference_forward(mod, x))

    np.testing.assert_allclose(np.asarray(out), np.asarray(ref),
                               rtol=1e-4, atol=1e-4)
    print("KERNEL_OK")
</pallas_src>

<mosaic_0001>
module attributes {stable_mosaic.version = 11 : i64} {
  func.func @kernel(%arg0: i32, %arg1: i32, %arg2: memref<1x8x8x8x4xf32, #tpu.memory_space<vmem>>, %arg3: memref<1x1x8x8x4xf32, #tpu.memory_space<vmem>>, %arg4: memref<1x1x8x8x4xf32, #tpu.memory_space<vmem>>, %arg5: memref<4x8xf32, #tpu.memory_space<vmem>>, %arg6: memref<1x8xf32, #tpu.memory_space<vmem>>, %arg7: memref<27x8xf32, #tpu.memory_space<vmem>>, %arg8: memref<1x8xf32, #tpu.memory_space<vmem>>, %arg9: memref<8x4xf32, #tpu.memory_space<vmem>>, %arg10: memref<1x4xf32, #tpu.memory_space<vmem>>, %arg11: memref<1x512x4xf32, #tpu.memory_space<vmem>>, %arg12: memref<10x10x10x8xf32, #tpu.memory_space<vmem>>) attributes {dimension_semantics = [#tpu.dimension_semantics<parallel>, #tpu.dimension_semantics<parallel>], iteration_bounds = array<i64: 2, 2>, scalar_prefetch = 0 : i64, scratch_operands = 1 : i64, tpu.core_type = #tpu.core_type<tc>, window_params = [{transform_indices = @transform_0, window_bounds = array<i64: 1, 8, 8, 8, 4>}, {transform_indices = @transform_1, window_bounds = array<i64: 1, 1, 8, 8, 4>}, {transform_indices = @transform_2, window_bounds = array<i64: 1, 1, 8, 8, 4>}, {pipeline_mode = #tpu.pipeline_mode<synchronous>, transform_indices = @transform_3, window_bounds = array<i64: 4, 8>}, {pipeline_mode = #tpu.pipeline_mode<synchronous>, transform_indices = @transform_4, window_bounds = array<i64: 1, 8>}, {pipeline_mode = #tpu.pipeline_mode<synchronous>, transform_indices = @transform_5, window_bounds = array<i64: 27, 8>}, {pipeline_mode = #tpu.pipeline_mode<synchronous>, transform_indices = @transform_6, window_bounds = array<i64: 1, 8>}, {pipeline_mode = #tpu.pipeline_mode<synchronous>, transform_indices = @transform_7, window_bounds = array<i64: 8, 4>}, {pipeline_mode = #tpu.pipeline_mode<synchronous>, transform_indices = @transform_8, window_bounds = array<i64: 1, 4>}, {transform_indices = @transform_9, window_bounds = array<i64: 1, 512, 4>}]} {
    %cst = arith.constant 0.000000e+00 : f32
    %0 = vector.broadcast %cst : f32 to vector<10x10x10x8xf32>
    %c0 = arith.constant 0 : index
    %c0_0 = arith.constant 0 : index
    %c0_1 = arith.constant 0 : index
    %c0_2 = arith.constant 0 : index
    %1 = vector.load %arg12[%c0, %c0_0, %c0_1, %c0_2] : memref<10x10x10x8xf32, #tpu.memory_space<vmem>>, vector<10x10x10x8xf32>
    tpu.vector_store %arg12[%c0, %c0_0, %c0_1, %c0_2], %0 {strides = array<i32>} : memref<10x10x10x8xf32, #tpu.memory_space<vmem>>, vector<10x10x10x8xf32>,
    %c0_3 = arith.constant 0 : index
    %c0_4 = arith.constant 0 : index
    %c0_5 = arith.constant 0 : index
    %c0_6 = arith.constant 0 : index
    %c0_7 = arith.constant 0 : index
    %2 = vector.load %arg2[%c0_3, %c0_4, %c0_5, %c0_6, %c0_7] : memref<1x8x8x8x4xf32, #tpu.memory_space<vmem>>, vector<1x8x8x8x4xf32>
    %3 = vector.shape_cast %2 : vector<1x8x8x8x4xf32> to vector<8x8x8x4xf32>
    %4 = vector.shape_cast %3 : vector<8x8x8x4xf32> to vector<512x4xf32>
    %c0_8 = arith.constant 0 : index
    %c0_9 = arith.constant 0 : index
    %5 = vector.load %arg5[%c0_8, %c0_9] : memref<4x8xf32, #tpu.memory_space<vmem>>, vector<4x8xf32>
    %cst_10 = arith.constant dense<0.000000e+00> : vector<512x8xf32>
    %6 = tpu.matmul %4, %5, %cst_10 {dimension_numbers = #tpu.dot_dimension_numbers<[1], [0], [0], [1], [0, 0, 1, 1], [], []>} : vector<512x4xf32>, vector<4x8xf32>, vector<512x8xf32> -> vector<512x8xf32>
    %c0_11 = arith.constant 0 : index
    %c0_12 = arith.constant 0 : index
    %7 = vector.load %arg6[%c0_11, %c0_12] : memref<1x8xf32, #tpu.memory_space<vmem>>, vector<1x8xf32>
    %8 = vector.broadcast %7 : vector<1x8xf32> to vector<512x8xf32>
    %9 = arith.addf %6, %8 : vector<512x8xf32>
    %cst_13 = arith.constant 0.000000e+00 : f32
    %cst_14 = arith.constant 6.000000e+00 : f32
    %10 = vector.broadcast %cst_13 : f32 to vector<512x8xf32>
    %11 = arith.maximumf %10, %9 : vector<512x8xf32>
    %12 = vector.broadcast %cst_14 : f32 to vector<512x8xf32>
    %13 = arith.minimumf %12, %11 : vector<512x8xf32>
    %14 = vector.shape_cast %13 : vector<512x8xf32> to vector<8x8x8x8xf32>
    %c1 = arith.constant 1 : index
    %c1_15 = arith.constant 1 : index
    %c1_16 = arith.constant 1 : index
    %c0_17 = arith.constant 0 : index
    %15 = vector.load %arg12[%c1, %c1_15, %c1_16, %c0_17] : memref<10x10x10x8xf32, #tpu.memory_space<vmem>>, vector<8x8x8x8xf32>
    tpu.vector_store %arg12[%c1, %c1_15, %c1_16, %c0_17], %14 {strides = array<i32>} : memref<10x10x10x8xf32, #tpu.memory_space<vmem>>, vector<8x8x8x8xf32>,
    %c0_i32 = arith.constant 0 : i32
    %16 = arith.cmpi sgt, %arg1, %c0_i32 : i32
    %c0_18 = arith.constant 0 : index
    %c0_19 = arith.constant 0 : index
    %c0_20 = arith.constant 0 : index
    %c0_21 = arith.constant 0 : index
    %c0_22 = arith.constant 0 : index
    %17 = vector.load %arg3[%c0_18, %c0_19, %c0_20, %c0_21, %c0_22] : memref<1x1x8x8x4xf32, #tpu.memory_space<vmem>>, vector<1x1x8x8x4xf32>
    %18 = vector.shape_cast %17 : vector<1x1x8x8x4xf32> to vector<1x8x8x4xf32>
    %19 = vector.shape_cast %18 : vector<1x8x8x4xf32> to vector<64x4xf32>
    %c0_23 = arith.constant 0 : index
    %c0_24 = arith.constant 0 : index
    %20 = vector.load %arg5[%c0_23, %c0_24] : memref<4x8xf32, #tpu.memory_space<vmem>>, vector<4x8xf32>
    %cst_25 = arith.constant dense<0.000000e+00> : vector<64x8xf32>
    %21 = tpu.matmul %19, %20, %cst_25 {dimension_numbers = #tpu.dot_dimension_numbers<[1], [0], [0], [1], [0, 0, 1, 1], [], []>} : vector<64x4xf32>, vector<4x8xf32>, vector<64x8xf32> -> vector<64x8xf32>
    %c0_26 = arith.constant 0 : index
    %c0_27 = arith.constant 0 : index
    %22 = vector.load %arg6[%c0_26, %c0_27] : memref<1x8xf32, #tpu.memory_space<vmem>>, vector<1x8xf32>
    %23 = vector.broadcast %22 : vector<1x8xf32> to vector<64x8xf32>
    %24 = arith.addf %21, %23 : vector<64x8xf32>
    %cst_28 = arith.constant 0.000000e+00 : f32
    %cst_29 = arith.constant 6.000000e+00 : f32
    %25 = vector.broadcast %cst_28 : f32 to vector<64x8xf32>
    %26 = arith.maximumf %25, %24 : vector<64x8xf32>
    %27 = vector.broadcast %cst_29 : f32 to vector<64x8xf32>
    %28 = arith.minimumf %27, %26 : vector<64x8xf32>
    %cst_30 = arith.constant 0.000000e+00 : f32
    %29 = vector.broadcast %cst_30 : f32 to vector<64x8xf32>
    %30 = arith.select %16, %28, %29 : vector<64x8xf32>
    %31 = vector.shape_cast %30 : vector<64x8xf32> to vector<1x8x8x8xf32>
    %c0_31 = arith.constant 0 : index
    %c1_32 = arith.constant 1 : index
    %c1_33 = arith.constant 1 : index
    %c0_34 = arith.constant 0 : index
    %32 = vector.load %arg12[%c0_31, %c1_32, %c1_33, %c0_34] : memref<10x10x10x8xf32, #tpu.memory_space<vmem>>, vector<1x8x8x8xf32>
    tpu.vector_store %arg12[%c0_31, %c1_32, %c1_33, %c0_34], %31 {strides = array<i32>} : memref<10x10x10x8xf32, #tpu.memory_space<vmem>>, vector<1x8x8x8xf32>,
    %c1_i32 = arith.constant 1 : i32
    %33 = arith.addi %arg1, %c1_i32 : i32
    %c8_i32 = arith.constant 8 : i32
    %34 = arith.muli %33, %c8_i32 : i32
    %c16_i32 = arith.constant 16 : i32
    %35 = arith.cmpi slt, %34, %c16_i32 : i32
    %c0_35 = arith.constant 0 : index
    %c0_36 = arith.constant 0 : index
    %c0_37 = arith.constant 0 : index
    %c0_38 = arith.constant 0 : index
    %c0_39 = arith.constant 0 : index
    %36 = vector.load %arg4[%c0_35, %c0_36, %c0_37, %c0_38, %c0_39] : memref<1x1x8x8x4xf32, #tpu.memory_space<vmem>>, vector<1x1x8x8x4xf32>
    %37 = vector.shape_cast %36 : vector<1x1x8x8x4xf32> to vector<1x8x8x4xf32>
    %38 = vector.shape_cast %37 : vector<1x8x8x4xf32> to vector<64x4xf32>
    %c0_40 = arith.constant 0 : index
    %c0_41 = arith.constant 0 : index
    %39 = vector.load %arg5[%c0_40, %c0_41] : memref<4x8xf32, #tpu.memory_space<vmem>>, vector<4x8xf32>
    %cst_42 = arith.constant dense<0.000000e+00> : vector<64x8xf32>
    %40 = tpu.matmul %38, %39, %cst_42 {dimension_numbers = #tpu.dot_dimension_numbers<[1], [0], [0], [1], [0, 0, 1, 1], [], []>} : vector<64x4xf32>, vector<4x8xf32>, vector<64x8xf32> -> vector<64x8xf32>
    %c0_43 = arith.constant 0 : index
    %c0_44 = arith.constant 0 : index
    %41 = vector.load %arg6[%c0_43, %c0_44] : memref<1x8xf32, #tpu.memory_space<vmem>>, vector<1x8xf32>
    %42 = vector.broadcast %41 : vector<1x8xf32> to vector<64x8xf32>
    %43 = arith.addf %40, %42 : vector<64x8xf32>
    %cst_45 = arith.constant 0.000000e+00 : f32
    %cst_46 = arith.constant 6.000000e+00 : f32
    %44 = vector.broadcast %cst_45 : f32 to vector<64x8xf32>
    %45 = arith.maximumf %44, %43 : vector<64x8xf32>
    %46 = vector.broadcast %cst_46 : f32 to vector<64x8xf32>
    %47 = arith.minimumf %46, %45 : vector<64x8xf32>
    %cst_47 = arith.constant 0.000000e+00 : f32
    %48 = vector.broadcast %cst_47 : f32 to vector<64x8xf32>
    %49 = arith.select %35, %47, %48 : vector<64x8xf32>
    %50 = vector.shape_cast %49 : vector<64x8xf32> to vector<1x8x8x8xf32>
    %c9 = arith.constant 9 : index
    %c1_48 = arith.constant 1 : index
    %c1_49 = arith.constant 1 : index
    %c0_50 = arith.constant 0 : index
    %51 = vector.load %arg12[%c9, %c1_48, %c1_49, %c0_50] : memref<10x10x10x8xf32, #tpu.memory_space<vmem>>, vector<1x8x8x8xf32>
    tpu.vector_store %arg12[%c9, %c1_48, %c1_49, %c0_50], %50 {strides = array<i32>} : memref<10x10x10x8xf32, #tpu.memory_space<vmem>>, vector<1x8x8x8xf32>,
    %cst_51 = arith.constant 0.000000e+00 : f32
    %52 = vector.broadcast %cst_51 : f32 to vector<8x8x8x8xf32>
    %c0_52 = arith.constant 0 : index
    %c0_53 = arith.constant 0 : index
    %c0_54 = arith.constant 0 : index
    %c0_55 = arith.constant 0 : index
    %53 = vector.load %arg12[%c0_52, %c0_53, %c0_54, %c0_55] : memref<10x10x10x8xf32, #tpu.memory_space<vmem>>, vector<8x8x8x8xf32>
    %c0_56 = arith.constant 0 : index
    %c0_57 = arith.constant 0 : index
    %54 = vector.load %arg7[%c0_56, %c0_57] : memref<27x8xf32, #tpu.memory_space<vmem>>, vector<1x8xf32>
    %55 = vector.shape_cast %54 : vector<1x8xf32> to vector<8xf32>
    %56 = vector.shape_cast %55 : vector<8xf32> to vector<1x1x1x8xf32>
    %57 = vector.broadcast %56 : vector<1x1x1x8xf32> to vector<8x8x8x8xf32>
    %58 = arith.mulf %53, %57 : vector<8x8x8x8xf32>
    %59 = arith.addf %52, %58 : vector<8x8x8x8xf32>
    %c0_58 = arith.constant 0 : index
    %c0_59 = arith.constant 0 : index
    %c1_60 = arith.constant 1 : index
    %c0_61 = arith.constant 0 : index
    %60 = vector.load %arg12[%c0_58, %c0_59, %c1_60, %c0_61] : memref<10x10x10x8xf32, #tpu.memory_space<vmem>>, vector<8x8x8x8xf32>
    %c1_62 = arith.constant 1 : index
    %c0_63 = arith.constant 0 : index
    %61 = vector.load %arg7[%c1_62, %c0_63] : memref<27x8xf32, #tpu.memory_space<vmem>>, vector<1x8xf32>
    %62 = vector.shape_cast %61 : vector<1x8xf32> to vector<8xf32>
    %63 = vector.shape_cast %62 : vector<8xf32> to vector<1x1x1x8xf32>
    %64 = vector.broadcast %63 : vector<1x1x1x8xf32> to vector<8x8x8x8xf32>
    %65 = arith.mulf %60, %64 : vector<8x8x8x8xf32>
    %66 = arith.addf %59, %65 : vector<8x8x8x8xf32>
    %c0_64 = arith.constant 0 : index
    %c0_65 = arith.constant 0 : index
    %c2 = arith.constant 2 : index
    %c0_66 = arith.constant 0 : index
    %67 = vector.load %arg12[%c0_64, %c0_65, %c2, %c0_66] : memref<10x10x10x8xf32, #tpu.memory_space<vmem>>, vector<8x8x8x8xf32>
    %c2_67 = arith.constant 2 : index
    %c0_68 = arith.constant 0 : index
    %68 = vector.load %arg7[%c2_67, %c0_68] : memref<27x8xf32, #tpu.memory_space<vmem>>, vector<1x8xf32>
    %69 = vector.shape_cast %68 : vector<1x8xf32> to vector<8xf32>
    %70 = vector.shape_cast %69 : vector<8xf32> to vector<1x1x1x8xf32>
    %71 = vector.broadcast %70 : vector<1x1x1x8xf32> to vector<8x8x8x8xf32>
    %72 = arith.mulf %67, %71 : vector<8x8x8x8xf32>
    %73 = arith.addf %66, %72 : vector<8x8x8x8xf32>
    %c0_69 = arith.constant 0 : index
    %c1_70 = arith.constant 1 : index
    %c0_71 = arith.constant 0 : index
    %c0_72 = arith.constant 0 : index
    %74 = vector.load %arg12[%c0_69, %c1_70, %c0_71, %c0_72] : memref<10x10x10x8xf32, #tpu.memory_space<vmem>>, vector<8x8x8x8xf32>
    %c3 = arith.constant 3 : index
    %c0_73 = arith.constant 0 : index
    %75 = vector.load %arg7[%c3, %c0_73] : memref<27x8xf32, #tpu.memory_space<vmem>>, vector<1x8xf32>
    %76 = vector.shape_cast %75 : vector<1x8xf32> to vector<8xf32>
    %77 = vector.shape_cast %76 : vector<8xf32> to vector<1x1x1x8xf32>
    %78 = vector.broadcast %77 : vector<1x1x1x8xf32> to vector<8x8x8x8xf32>
    %79 = arith.mulf %74, %78 : vector<8x8x8x8xf32>
    %80 = arith.addf %73, %79 : vector<8x8x8x8xf32>
    %c0_74 = arith.constant 0 : index
    %c1_75 = arith.constant 1 : index
    %c1_76 = arith.constant 1 : index
    %c0_77 = arith.constant 0 : index
    %81 = vector.load %arg12[%c0_74, %c1_75, %c1_76, %c0_77] : memref<10x10x10x8xf32, #tpu.memory_space<vmem>>, vector<8x8x8x8xf32>
    %c4 = arith.constant 4 : index
    %c0_78 = arith.constant 0 : index
    %82 = vector.load %arg7[%c4, %c0_78] : memref<27x8xf32, #tpu.memory_space<vmem>>, vector<1x8xf32>
    %83 = vector.shape_cast %82 : vector<1x8xf32> to vector<8xf32>
    %84 = vector.shape_cast %83 : vector<8xf32> to vector<1x1x1x8xf32>
    %85 = vector.broadcast %84 : vector<1x1x1x8xf32> to vector<8x8x8x8xf32>
    %86 = arith.mulf %81, %85 : vector<8x8x8x8xf32>
    %87 = arith.addf %80, %86 : vector<8x8x8x8xf32>
    %c0_79 = arith.constant 0 : index
    %c1_80 = arith.constant 1 : index
    %c2_81 = arith.constant 2 : index
    %c0_82 = arith.constant 0 : index
    %88 = vector.load %arg12[%c0_79, %c1_80, %c2_81, %c0_82] : memref<10x10x10x8xf32, #tpu.memory_space<vmem>>, vector<8x8x8x8xf32>
    %c5 = arith.constant 5 : index
    %c0_83 = arith.constant 0 : index
    %89 = vector.load %arg7[%c5, %c0_83] : memref<27x8xf32, #tpu.memory_space<vmem>>, vector<1x8xf32>
    %90 = vector.shape_cast %89 : vector<1x8xf32> to vector<8xf32>
    %91 = vector.shape_cast %90 : vector<8xf32> to vector<1x1x1x8xf32>
    %92 = vector.broadcast %91 : vector<1x1x1x8xf32> to vector<8x8x8x8xf32>
    %93 = arith.mulf %88, %92 : vector<8x8x8x8xf32>
    %94 = arith.addf %87, %93 : vector<8x8x8x8xf32>
    %c0_84 = arith.constant 0 : index
    %c2_85 = arith.constant 2 : index
    %c0_86 = arith.constant 0 : index
    %c0_87 = arith.constant 0 : index
    %95 = vector.load %arg12[%c0_84, %c2_85, %c0_86, %c0_87] : memref<10x10x10x8xf32, #tpu.memory_space<vmem>>, vector<8x8x8x8xf32>
    %c6 = arith.constant 6 : index
    %c0_88 = arith.constant 0 : index
    %96 = vector.load %arg7[%c6, %c0_88] : memref<27x8xf32, #tpu.memory_space<vmem>>, vector<1x8xf32>
    %97 = vector.shape_cast %96 : vector<1x8xf32> to vector<8xf32>
    %98 = vector.shape_cast %97 : vector<8xf32> to vector<1x1x1x8xf32>
    %99 = vector.broadcast %98 : vector<1x1x1x8xf32> to vector<8x8x8x8xf32>
    %100 = arith.mulf %95, %99 : vector<8x8x8x8xf32>
    %101 = arith.addf %94, %100 : vector<8x8x8x8xf32>
    %c0_89 = arith.constant 0 : index
    %c2_90 = arith.constant 2 : index
    %c1_91 = arith.constant 1 : index
    %c0_92 = arith.constant 0 : index
    %102 = vector.load %arg12[%c0_89, %c2_90, %c1_91, %c0_92] : memref<10x10x10x8xf32, #tpu.memory_space<vmem>>, vector<8x8x8x8xf32>
    %c7 = arith.constant 7 : index
    %c0_93 = arith.constant 0 : index
    %103 = vector.load %arg7[%c7, %c0_93] : memref<27x8xf32, #tpu.memory_space<vmem>>, vector<1x8xf32>
    %104 = vector.shape_cast %103 : vector<1x8xf32> to vector<8xf32>
    %105 = vector.shape_cast %104 : vector<8xf32> to vector<1x1x1x8xf32>
    %106 = vector.broadcast %105 : vector<1x1x1x8xf32> to vector<8x8x8x8xf32>
    %107 = arith.mulf %102, %106 : vector<8x8x8x8xf32>
    %108 = arith.addf %101, %107 : vector<8x8x8x8xf32>
    %c0_94 = arith.constant 0 : index
    %c2_95 = arith.constant 2 : index
    %c2_96 = arith.constant 2 : index
    %c0_97 = arith.constant 0 : index
    %109 = vector.load %arg12[%c0_94, %c2_95, %c2_96, %c0_97] : memref<10x10x10x8xf32, #tpu.memory_space<vmem>>, vector<8x8x8x8xf32>
    %c8 = arith.constant 8 : index
    %c0_98 = arith.constant 0 : index
    %110 = vector.load %arg7[%c8, %c0_98] : memref<27x8xf32, #tpu.memory_space<vmem>>, vector<1x8xf32>
    %111 = vector.shape_cast %110 : vector<1x8xf32> to vector<8xf32>
    %112 = vector.shape_cast %111 : vector<8xf32> to vector<1x1x1x8xf32>
    %113 = vector.broadcast %112 : vector<1x1x1x8xf32> to vector<8x8x8x8xf32>
    %114 = arith.mulf %109, %113 : vector<8x8x8x8xf32>
    %115 = arith.addf %108, %114 : vector<8x8x8x8xf32>
    %c1_99 = arith.constant 1 : index
    %c0_100 = arith.constant 0 : index
    %c0_101 = arith.constant 0 : index
    %c0_102 = arith.constant 0 : index
    %116 = vector.load %arg12[%c1_99, %c0_100, %c0_101, %c0_102] : memref<10x10x10x8xf32, #tpu.memory_space<vmem>>, vector<8x8x8x8xf32>
    %c9_103 = arith.constant 9 : index
    %c0_104 = arith.constant 0 : index
    %117 = vector.load %arg7[%c9_103, %c0_104] : memref<27x8xf32, #tpu.memory_space<vmem>>, vector<1x8xf32>
    %118 = vector.shape_cast %117 : vector<1x8xf32> to vector<8xf32>
    %119 = vector.shape_cast %118 : vector<8xf32> to vector<1x1x1x8xf32>
    %120 = vector.broadcast %119 : vector<1x1x1x8xf32> to vector<8x8x8x8xf32>
    %121 = arith.mulf %116, %120 : vector<8x8x8x8xf32>
    %122 = arith.addf %115, %121 : vector<8x8x8x8xf32>
    %c1_105 = arith.constant 1 : index
    %c0_106 = arith.constant 0 : index
    %c1_107 = arith.constant 1 : index
    %c0_108 = arith.constant 0 : index
    %123 = vector.load %arg12[%c1_105, %c0_106, %c1_107, %c0_108] : memref<10x10x10x8xf32, #tpu.memory_space<vmem>>, vector<8x8x8x8xf32>
    %c10 = arith.constant 10 : index
    %c0_109 = arith.constant 0 : index
    %124 = vector.load %arg7[%c10, %c0_109] : memref<27x8xf32, #tpu.memory_space<vmem>>, vector<1x8xf32>
    %125 = vector.shape_cast %124 : vector<1x8xf32> to vector<8xf32>
    %126 = vector.shape_cast %125 : vector<8xf32> to vector<1x1x1x8xf32>
    %127 = vector.broadcast %126 : vector<1x1x1x8xf32> to vector<8x8x8x8xf32>
    %128 = arith.mulf %123, %127 : vector<8x8x8x8xf32>
    %129 = arith.addf %122, %128 : vector<8x8x8x8xf32>
    %c1_110 = arith.constant 1 : index
    %c0_111 = arith.constant 0 : index
    %c2_112 = arith.constant 2 : index
    %c0_113 = arith.constant 0 : index
    %130 = vector.load %arg12[%c1_110, %c0_111, %c2_112, %c0_113] : memref<10x10x10x8xf32, #tpu.memory_space<vmem>>, vector<8x8x8x8xf32>
    %c11 = arith.constant 11 : index
    %c0_114 = arith.constant 0 : index
    %131 = vector.load %arg7[%c11, %c0_114] : memref<27x8xf32, #tpu.memory_space<vmem>>, vector<1x8xf32>
    %132 = vector.shape_cast %131 : vector<1x8xf32> to vector<8xf32>
    %133 = vector.shape_cast %132 : vector<8xf32> to vector<1x1x1x8xf32>
    %134 = vector.broadcast %133 : vector<1x1x1x8xf32> to vector<8x8x8x8xf32>
    %135 = arith.mulf %130, %134 : vector<8x8x8x8xf32>
    %136 = arith.addf %129, %135 : vector<8x8x8x8xf32>
    %c1_115 = arith.constant 1 : index
    %c1_116 = arith.constant 1 : index
    %c0_117 = arith.constant 0 : index
    %c0_118 = arith.constant 0 : index
    %137 = vector.load %arg12[%c1_115, %c1_116, %c0_117, %c0_118] : memref<10x10x10x8xf32, #tpu.memory_space<vmem>>, vector<8x8x8x8xf32>
    %c12 = arith.constant 12 : index
    %c0_119 = arith.constant 0 : index
    %138 = vector.load %arg7[%c12, %c0_119] : memref<27x8xf32, #tpu.memory_space<vmem>>, vector<1x8xf32>
    %139 = vector.shape_cast %138 : vector<1x8xf32> to vector<8xf32>
    %140 = vector.shape_cast %139 : vector<8xf32> to vector<1x1x1x8xf32>
    %141 = vector.broadcast %140 : vector<1x1x1x8xf32> to vector<8x8x8x8xf32>
    %142 = arith.mulf %137, %141 : vector<8x8x8x8xf32>
    %143 = arith.addf %136, %142 : vector<8x8x8x8xf32>
    %c1_120 = arith.constant 1 : index
    %c1_121 = arith.constant 1 : index
    %c1_122 = arith.constant 1 : index
    %c0_123 = arith.constant 0 : index
    %144 = vector.load %arg12[%c1_120, %c1_121, %c1_122, %c0_123] : memref<10x10x10x8xf32, #tpu.memory_space<vmem>>, vector<8x8x8x8xf32>
    %c13 = arith.constant 13 : index
    %c0_124 = arith.constant 0 : index
    %145 = vector.load %arg7[%c13, %c0_124] : memref<27x8xf32, #tpu.memory_space<vmem>>, vector<1x8xf32>
    %146 = vector.shape_cast %145 : vector<1x8xf32> to vector<8xf32>
    %147 = vector.shape_cast %146 : vector<8xf32> to vector<1x1x1x8xf32>
    %148 = vector.broadcast %147 : vector<1x1x1x8xf32> to vector<8x8x8x8xf32>
    %149 = arith.mulf %144, %148 : vector<8x8x8x8xf32>
    %150 = arith.addf %143, %149 : vector<8x8x8x8xf32>
    %c1_125 = arith.constant 1 : index
    %c1_126 = arith.constant 1 : index
    %c2_127 = arith.constant 2 : index
    %c0_128 = arith.constant 0 : index
    %151 = vector.load %arg12[%c1_125, %c1_126, %c2_127, %c0_128] : memref<10x10x10x8xf32, #tpu.memory_space<vmem>>, vector<8x8x8x8xf32>
    %c14 = arith.constant 14 : index
    %c0_129 = arith.constant 0 : index
    %152 = vector.load %arg7[%c14, %c0_129] : memref<27x8xf32, #tpu.memory_space<vmem>>, vector<1x8xf32>
    %153 = vector.shape_cast %152 : vector<1x8xf32> to vector<8xf32>
    %154 = vector.shape_cast %153 : vector<8xf32> to vector<1x1x1x8xf32>
    %155 = vector.broadcast %154 : vector<1x1x1x8xf32> to vector<8x8x8x8xf32>
    %156 = arith.mulf %151, %155 : vector<8x8x8x8xf32>
    %157 = arith.addf %150, %156 : vector<8x8x8x8xf32>
    %c1_130 = arith.constant 1 : index
    %c2_131 = arith.constant 2 : index
    %c0_132 = arith.constant 0 : index
    %c0_133 = arith.constant 0 : index
    %158 = vector.load %arg12[%c1_130, %c2_131, %c0_132, %c0_133] : memref<10x10x10x8xf32, #tpu.memory_space<vmem>>, vector<8x8x8x8xf32>
    %c15 = arith.constant 15 : index
    %c0_134 = arith.constant 0 : index
    %159 = vector.load %arg7[%c15, %c0_134] : memref<27x8xf32, #tpu.memory_space<vmem>>, vector<1x8xf32>
    %160 = vector.shape_cast %159 : vector<1x8xf32> to vector<8xf32>
    %161 = vector.shape_cast %160 : vector<8xf32> to vector<1x1x1x8xf32>
    %162 = vector.broadcast %161 : vector<1x1x1x8xf32> to vector<8x8x8x8xf32>
    %163 = arith.mulf %158, %162 : vector<8x8x8x8xf32>
    %164 = arith.addf %157, %163 : vector<8x8x8x8xf32>
    %c1_135 = arith.constant 1 : index
    %c2_136 = arith.constant 2 : index
    %c1_137 = arith.constant 1 : index
    %c0_138 = arith.constant 0 : index
    %165 = vector.load %arg12[%c1_135, %c2_136, %c1_137, %c0_138] : memref<10x10x10x8xf32, #tpu.memory_space<vmem>>, vector<8x8x8x8xf32>
    %c16 = arith.constant 16 : index
    %c0_139 = arith.constant 0 : index
    %166 = vector.load %arg7[%c16, %c0_139] : memref<27x8xf32, #tpu.memory_space<vmem>>, vector<1x8xf32>
    %167 = vector.shape_cast %166 : vector<1x8xf32> to vector<8xf32>
    %168 = vector.shape_cast %167 : vector<8xf32> to vector<1x1x1x8xf32>
    %169 = vector.broadcast %168 : vector<1x1x1x8xf32> to vector<8x8x8x8xf32>
    %170 = arith.mulf %165, %169 : vector<8x8x8x8xf32>
    %171 = arith.addf %164, %170 : vector<8x8x8x8xf32>
    %c1_140 = arith.constant 1 : index
    %c2_141 = arith.constant 2 : index
    %c2_142 = arith.constant 2 : index
    %c0_143 = arith.constant 0 : index
    %172 = vector.load %arg12[%c1_140, %c2_141, %c2_142, %c0_143] : memref<10x10x10x8xf32, #tpu.memory_space<vmem>>, vector<8x8x8x8xf32>
    %c17 = arith.constant 17 : index
    %c0_144 = arith.constant 0 : index
    %173 = vector.load %arg7[%c17, %c0_144] : memref<27x8xf32, #tpu.memory_space<vmem>>, vector<1x8xf32>
    %174 = vector.shape_cast %173 : vector<1x8xf32> to vector<8xf32>
    %175 = vector.shape_cast %174 : vector<8xf32> to vector<1x1x1x8xf32>
    %176 = vector.broadcast %175 : vector<1x1x1x8xf32> to vector<8x8x8x8xf32>
    %177 = arith.mulf %172, %176 : vector<8x8x8x8xf32>
    %178 = arith.addf %171, %177 : vector<8x8x8x8xf32>
    %c2_145 = arith.constant 2 : index
    %c0_146 = arith.constant 0 : index
    %c0_147 = arith.constant 0 : index
    %c0_148 = arith.constant 0 : index
    %179 = vector.load %arg12[%c2_145, %c0_146, %c0_147, %c0_148] : memref<10x10x10x8xf32, #tpu.memory_space<vmem>>, vector<8x8x8x8xf32>
    %c18 = arith.constant 18 : index
    %c0_149 = arith.constant 0 : index
    %180 = vector.load %arg7[%c18, %c0_149] : memref<27x8xf32, #tpu.memory_space<vmem>>, vector<1x8xf32>
    %181 = vector.shape_cast %180 : vector<1x8xf32> to vector<8xf32>
    %182 = vector.shape_cast %181 : vector<8xf32> to vector<1x1x1x8xf32>
    %183 = vector.broadcast %182 : vector<1x1x1x8xf32> to vector<8x8x8x8xf32>
    %184 = arith.mulf %179, %183 : vector<8x8x8x8xf32>
    %185 = arith.addf %178, %184 : vector<8x8x8x8xf32>
    %c2_150 = arith.constant 2 : index
    %c0_151 = arith.constant 0 : index
    %c1_152 = arith.constant 1 : index
    %c0_153 = arith.constant 0 : index
    %186 = vector.load %arg12[%c2_150, %c0_151, %c1_152, %c0_153] : memref<10x10x10x8xf32, #tpu.memory_space<vmem>>, vector<8x8x8x8xf32>
    %c19 = arith.constant 19 : index
    %c0_154 = arith.constant 0 : index
    %187 = vector.load %arg7[%c19, %c0_154] : memref<27x8xf32, #tpu.memory_space<vmem>>, vector<1x8xf32>
    %188 = vector.shape_cast %187 : vector<1x8xf32> to vector<8xf32>
    %189 = vector.shape_cast %188 : vector<8xf32> to vector<1x1x1x8xf32>
    %190 = vector.broadcast %189 : vector<1x1x1x8xf32> to vector<8x8x8x8xf32>
    %191 = arith.mulf %186, %190 : vector<8x8x8x8xf32>
    %192 = arith.addf %185, %191 : vector<8x8x8x8xf32>
    %c2_155 = arith.constant 2 : index
    %c0_156 = arith.constant 0 : index
    %c2_157 = arith.constant 2 : index
    %c0_158 = arith.constant 0 : index
    %193 = vector.load %arg12[%c2_155, %c0_156, %c2_157, %c0_158] : memref<10x10x10x8xf32, #tpu.memory_space<vmem>>, vector<8x8x8x8xf32>
    %c20 = arith.constant 20 : index
    %c0_159 = arith.constant 0 : index
    %194 = vector.load %arg7[%c20, %c0_159] : memref<27x8xf32, #tpu.memory_space<vmem>>, vector<1x8xf32>
    %195 = vector.shape_cast %194 : vector<1x8xf32> to vector<8xf32>
    %196 = vector.shape_cast %195 : vector<8xf32> to vector<1x1x1x8xf32>
    %197 = vector.broadcast %196 : vector<1x1x1x8xf32> to vector<8x8x8x8xf32>
    %198 = arith.mulf %193, %197 : vector<8x8x8x8xf32>
    %199 = arith.addf %192, %198 : vector<8x8x8x8xf32>
    %c2_160 = arith.constant 2 : index
    %c1_161 = arith.constant 1 : index
    %c0_162 = arith.constant 0 : index
    %c0_163 = arith.constant 0 : index
    %200 = vector.load %arg12[%c2_160, %c1_161, %c0_162, %c0_163] : memref<10x10x10x8xf32, #tpu.memory_space<vmem>>, vector<8x8x8x8xf32>
    %c21 = arith.constant 21 : index
    %c0_164 = arith.constant 0 : index
    %201 = vector.load %arg7[%c21, %c0_164] : memref<27x8xf32, #tpu.memory_space<vmem>>, vector<1x8xf32>
    %202 = vector.shape_cast %201 : vector<1x8xf32> to vector<8xf32>
    %203 = vector.shape_cast %202 : vector<8xf32> to vector<1x1x1x8xf32>
    %204 = vector.broadcast %203 : vector<1x1x1x8xf32> to vector<8x8x8x8xf32>
    %205 = arith.mulf %200, %204 : vector<8x8x8x8xf32>
    %206 = arith.addf %199, %205 : vector<8x8x8x8xf32>
    %c2_165 = arith.constant 2 : index
    %c1_166 = arith.constant 1 : index
    %c1_167 = arith.constant 1 : index
    %c0_168 = arith.constant 0 : index
    %207 = vector.load %arg12[%c2_165, %c1_166, %c1_167, %c0_168] : memref<10x10x10x8xf32, #tpu.memory_space<vmem>>, vector<8x8x8x8xf32>
    %c22 = arith.constant 22 : index
    %c0_169 = arith.constant 0 : index
    %208 = vector.load %arg7[%c22, %c0_169] : memref<27x8xf32, #tpu.memory_space<vmem>>, vector<1x8xf32>
    %209 = vector.shape_cast %208 : vector<1x8xf32> to vector<8xf32>
    %210 = vector.shape_cast %209 : vector<8xf32> to vector<1x1x1x8xf32>
    %211 = vector.broadcast %210 : vector<1x1x1x8xf32> to vector<8x8x8x8xf32>
    %212 = arith.mulf %207, %211 : vector<8x8x8x8xf32>
    %213 = arith.addf %206, %212 : vector<8x8x8x8xf32>
    %c2_170 = arith.constant 2 : index
    %c1_171 = arith.constant 1 : index
    %c2_172 = arith.constant 2 : index
    %c0_173 = arith.constant 0 : index
    %214 = vector.load %arg12[%c2_170, %c1_171, %c2_172, %c0_173] : memref<10x10x10x8xf32, #tpu.memory_space<vmem>>, vector<8x8x8x8xf32>
    %c23 = arith.constant 23 : index
    %c0_174 = arith.constant 0 : index
    %215 = vector.load %arg7[%c23, %c0_174] : memref<27x8xf32, #tpu.memory_space<vmem>>, vector<1x8xf32>
    %216 = vector.shape_cast %215 : vector<1x8xf32> to vector<8xf32>
    %217 = vector.shape_cast %216 : vector<8xf32> to vector<1x1x1x8xf32>
    %218 = vector.broadcast %217 : vector<1x1x1x8xf32> to vector<8x8x8x8xf32>
    %219 = arith.mulf %214, %218 : vector<8x8x8x8xf32>
    %220 = arith.addf %213, %219 : vector<8x8x8x8xf32>
    %c2_175 = arith.constant 2 : index
    %c2_176 = arith.constant 2 : index
    %c0_177 = arith.constant 0 : index
    %c0_178 = arith.constant 0 : index
    %221 = vector.load %arg12[%c2_175, %c2_176, %c0_177, %c0_178] : memref<10x10x10x8xf32, #tpu.memory_space<vmem>>, vector<8x8x8x8xf32>
    %c24 = arith.constant 24 : index
    %c0_179 = arith.constant 0 : index
    %222 = vector.load %arg7[%c24, %c0_179] : memref<27x8xf32, #tpu.memory_space<vmem>>, vector<1x8xf32>
    %223 = vector.shape_cast %222 : vector<1x8xf32> to vector<8xf32>
    %224 = vector.shape_cast %223 : vector<8xf32> to vector<1x1x1x8xf32>
    %225 = vector.broadcast %224 : vector<1x1x1x8xf32> to vector<8x8x8x8xf32>
    %226 = arith.mulf %221, %225 : vector<8x8x8x8xf32>
    %227 = arith.addf %220, %226 : vector<8x8x8x8xf32>
    %c2_180 = arith.constant 2 : index
    %c2_181 = arith.constant 2 : index
    %c1_182 = arith.constant 1 : index
    %c0_183 = arith.constant 0 : index
    %228 = vector.load %arg12[%c2_180, %c2_181, %c1_182, %c0_183] : memref<10x10x10x8xf32, #tpu.memory_space<vmem>>, vector<8x8x8x8xf32>
    %c25 = arith.constant 25 : index
    %c0_184 = arith.constant 0 : index
    %229 = vector.load %arg7[%c25, %c0_184] : memref<27x8xf32, #tpu.memory_space<vmem>>, vector<1x8xf32>
    %230 = vector.shape_cast %229 : vector<1x8xf32> to vector<8xf32>
    %231 = vector.shape_cast %230 : vector<8xf32> to vector<1x1x1x8xf32>
    %232 = vector.broadcast %231 : vector<1x1x1x8xf32> to vector<8x8x8x8xf32>
    %233 = arith.mulf %228, %232 : vector<8x8x8x8xf32>
    %234 = arith.addf %227, %233 : vector<8x8x8x8xf32>
    %c2_185 = arith.constant 2 : index
    %c2_186 = arith.constant 2 : index
    %c2_187 = arith.constant 2 : index
    %c0_188 = arith.constant 0 : index
    %235 = vector.load %arg12[%c2_185, %c2_186, %c2_187, %c0_188] : memref<10x10x10x8xf32, #tpu.memory_space<vmem>>, vector<8x8x8x8xf32>
    %c26 = arith.constant 26 : index
    %c0_189 = arith.constant 0 : index
    %236 = vector.load %arg7[%c26, %c0_189] : memref<27x8xf32, #tpu.memory_space<vmem>>, vector<1x8xf32>
    %237 = vector.shape_cast %236 : vector<1x8xf32> to vector<8xf32>
    %238 = vector.shape_cast %237 : vector<8xf32> to vector<1x1x1x8xf32>
    %239 = vector.broadcast %238 : vector<1x1x1x8xf32> to vector<8x8x8x8xf32>
    %240 = arith.mulf %235, %239 : vector<8x8x8x8xf32>
    %241 = arith.addf %234, %240 : vector<8x8x8x8xf32>
    %c0_190 = arith.constant 0 : index
    %c0_191 = arith.constant 0 : index
    %242 = vector.load %arg8[%c0_190, %c0_191] : memref<1x8xf32, #tpu.memory_space<vmem>>, vector<1x8xf32>
    %243 = vector.shape_cast %242 : vector<1x8xf32> to vector<1x1x1x8xf32>
    %244 = vector.broadcast %243 : vector<1x1x1x8xf32> to vector<8x8x8x8xf32>
    %245 = arith.addf %241, %244 : vector<8x8x8x8xf32>
    %cst_192 = arith.constant 0.000000e+00 : f32
    %cst_193 = arith.constant 6.000000e+00 : f32
    %246 = vector.broadcast %cst_192 : f32 to vector<8x8x8x8xf32>
    %247 = arith.maximumf %246, %245 : vector<8x8x8x8xf32>
    %248 = vector.broadcast %cst_193 : f32 to vector<8x8x8x8xf32>
    %249 = arith.minimumf %248, %247 : vector<8x8x8x8xf32>
    %250 = vector.shape_cast %249 : vector<8x8x8x8xf32> to vector<512x8xf32>
    %c0_194 = arith.constant 0 : index
    %c0_195 = arith.constant 0 : index
    %251 = vector.load %arg9[%c0_194, %c0_195] : memref<8x4xf32, #tpu.memory_space<vmem>>, vector<8x4xf32>
    %cst_196 = arith.constant dense<0.000000e+00> : vector<512x4xf32>
    %252 = tpu.matmul %250, %251, %cst_196 {dimension_numbers = #tpu.dot_dimension_numbers<[1], [0], [0], [1], [0, 0, 1, 1], [], []>} : vector<512x8xf32>, vector<8x4xf32>, vector<512x4xf32> -> vector<512x4xf32>
    %c0_197 = arith.constant 0 : index
    %c0_198 = arith.constant 0 : index
    %253 = vector.load %arg10[%c0_197, %c0_198] : memref<1x4xf32, #tpu.memory_space<vmem>>, vector<1x4xf32>
    %254 = vector.broadcast %253 : vector<1x4xf32> to vector<512x4xf32>
    %255 = arith.addf %252, %254 : vector<512x4xf32>
    %256 = arith.addf %255, %4 : vector<512x4xf32>
    %c0_199 = arith.constant 0 : index
    %c0_200 = arith.constant 0 : index
    %c0_201 = arith.constant 0 : index
    %257 = vector.load %arg11[%c0_199, %c0_200, %c0_201] : memref<1x512x4xf32, #tpu.memory_space<vmem>>, vector<1x512x4xf32>
    %258 = vector.shape_cast %257 : vector<1x512x4xf32> to vector<512x4xf32>
    %259 = vector.shape_cast %256 : vector<512x4xf32> to vector<1x512x4xf32>
    tpu.vector_store %arg11[%c0_199, %c0_200, %c0_201], %259 {strides = array<i32>} : memref<1x512x4xf32, #tpu.memory_space<vmem>>, vector<1x512x4xf32>,
    return
  }
  func.func @transform_0(%arg0: i32, %arg1: i32) -> (i32, i32, i32, i32, i32) {
    %c0_i32 = arith.constant 0 : i32
    %c0_i32_0 = arith.constant 0 : i32
    %c0_i32_1 = arith.constant 0 : i32
    %c0_i32_2 = arith.constant 0 : i32
    return %arg0, %arg1, %c0_i32, %c0_i32_0, %c0_i32_1 : i32, i32, i32, i32, i32
  }
  func.func @transform_1(%arg0: i32, %arg1: i32) -> (i32, i32, i32, i32, i32) {
    %c8_i32 = arith.constant 8 : i32
    %0 = arith.muli %arg1, %c8_i32 : i32
    %c1_i32 = arith.constant 1 : i32
    %1 = arith.subi %0, %c1_i32 : i32
    %c0_i32 = arith.constant 0 : i32
    %2 = arith.maxsi %1, %c0_i32 : i32
    %c0_i32_0 = arith.constant 0 : i32
    %c0_i32_1 = arith.constant 0 : i32
    %c0_i32_2 = arith.constant 0 : i32
    %c0_i32_3 = arith.constant 0 : i32
    return %arg0, %2, %c0_i32_0, %c0_i32_1, %c0_i32_2 : i32, i32, i32, i32, i32
  }
  func.func @transform_2(%arg0: i32, %arg1: i32) -> (i32, i32, i32, i32, i32) {
    %c1_i32 = arith.constant 1 : i32
    %0 = arith.addi %arg1, %c1_i32 : i32
    %c8_i32 = arith.constant 8 : i32
    %1 = arith.muli %0, %c8_i32 : i32
    %c15_i32 = arith.constant 15 : i32
    %2 = arith.minsi %1, %c15_i32 : i32
    %c0_i32 = arith.constant 0 : i32
    %c0_i32_0 = arith.constant 0 : i32
    %c0_i32_1 = arith.constant 0 : i32
    %c0_i32_2 = arith.constant 0 : i32
    return %arg0, %2, %c0_i32, %c0_i32_0, %c0_i32_1 : i32, i32, i32, i32, i32
  }
  func.func @transform_3(%arg0: i32, %arg1: i32) -> (i32, i32) {
    %c0_i32 = arith.constant 0 : i32
    %c0_i32_0 = arith.constant 0 : i32
    %c0_i32_1 = arith.constant 0 : i32
    return %c0_i32, %c0_i32_0 : i32, i32
  }
  func.func @transform_4(%arg0: i32, %arg1: i32) -> (i32, i32) {
    %c0_i32 = arith.constant 0 : i32
    %c0_i32_0 = arith.constant 0 : i32
    %c0_i32_1 = arith.constant 0 : i32
    return %c0_i32, %c0_i32_0 : i32, i32
  }
  func.func @transform_5(%arg0: i32, %arg1: i32) -> (i32, i32) {
    %c0_i32 = arith.constant 0 : i32
    %c0_i32_0 = arith.constant 0 : i32
    %c0_i32_1 = arith.constant 0 : i32
    return %c0_i32, %c0_i32_0 : i32, i32
  }
  func.func @transform_6(%arg0: i32, %arg1: i32) -> (i32, i32) {
    %c0_i32 = arith.constant 0 : i32
    %c0_i32_0 = arith.constant 0 : i32
    %c0_i32_1 = arith.constant 0 : i32
    return %c0_i32, %c0_i32_0 : i32, i32
  }
  func.func @transform_7(%arg0: i32, %arg1: i32) -> (i32, i32) {
    %c0_i32 = arith.constant 0 : i32
    %c0_i32_0 = arith.constant 0 : i32
    %c0_i32_1 = arith.constant 0 : i32
    return %c0_i32, %c0_i32_0 : i32, i32
  }
  func.func @transform_8(%arg0: i32, %arg1: i32) -> (i32, i32) {
    %c0_i32 = arith.constant 0 : i32
    %c0_i32_0 = arith.constant 0 : i32
    %c0_i32_1 = arith.constant 0 : i32
    return %c0_i32, %c0_i32_0 : i32, i32
  }
  func.func @transform_9(%arg0: i32, %arg1: i32) -> (i32, i32, i32) {
    %c0_i32 = arith.constant 0 : i32
    %c0_i32_0 = arith.constant 0 : i32
    return %arg0, %arg1, %c0_i32 : i32, i32, i32
  }
}

</mosaic_0001>

<llo_original>
// kernel: tpu_custom_call.1
$region0: #{tpu_custom_call.1}
  #allocation0 [shape = 'u32[]', space=smem, size = 0x4, offset = 0x4, fixed_abs, tag = 'smem constant byte address 0x4 - core index']
  #allocation1 [shape = 'u32[144,128]{1,0:T(1,128)}', space=vmem, size = 0x12000, scoped, tag = 'internal scratch']
  #allocation2 [shape = 'f32[10,10,10,8]{3,2,1,0:T(8,128)}', space=vmem, size = 0xc8000, scoped, tag = 'scratch operand']
  %s0 = inlined_call_operand.vmem [shape: f32[2,16,8,8,4], index: 0, kind: input, shape index: {}]
  %s1 = inlined_call_operand.vmem [shape: f32[2,16,8,8,4], index: 1, kind: input, shape index: {}]
  %s2 = inlined_call_operand.vmem [shape: f32[2,16,8,8,4], index: 2, kind: input, shape index: {}]
  %s3 = inlined_call_operand.vmem [shape: f32[4,8], index: 3, kind: input, shape index: {}]
  %s4 = inlined_call_operand.vmem [shape: f32[1,8], index: 4, kind: input, shape index: {}]
  %s5 = inlined_call_operand.vmem [shape: f32[27,8], index: 5, kind: input, shape index: {}]
  %s6 = inlined_call_operand.vmem [shape: f32[1,8], index: 6, kind: input, shape index: {}]
  %s7 = inlined_call_operand.vmem [shape: f32[8,4], index: 7, kind: input, shape index: {}]
  %s8 = inlined_call_operand.vmem [shape: f32[1,4], index: 8, kind: input, shape index: {}]
  %s9 = inlined_call_operand.vmem [shape: f32[2,1024,4], index: 9, kind: output, shape index: {}]
  %s10 = sld [smem:[#allocation0]]
  $region69: #{tpu_custom_call.1} parent=0
    _
  %s12 = ssub.s32 1, %s10
  %s13 = scalar_select 0, %s12, %s10
  loop: start=0, step=1, limit=6
  $region2: #{tpu_custom_call.1} parent=0 // loop_pre_header
    _
  $region3: #{tpu_custom_call.1} parent=0 // loop_header
    %s15 = sphi 0, %s19
    %p16 = scmp.ge.s32.totalorder %s15, 6
    %s22 = sphi 0, %s34
    %s23 = sphi 0, %s30
    %s24 = sphi 0, %s22
    %s25 = sphi 0, %s23
    %s26 = sphi 0, %s24
    %s27 = sphi 0, %s25
    %s39 = sphi 0, %s41
    %s42 = sphi 0, %s39
    %s43 = sphi 0, %s42
    %s59 = sphi 0, %s43
    %s75 = sphi 0, %s77
    %s78 = sphi 0, %s75
    %s79 = sphi 0, %s78
    %s95 = sphi 0, %s79
    %s111 = sphi 0, %s113
    %s114 = sphi 0, %s111
    %s115 = sphi 0, %s114
    %s131 = sphi 0, %s115
    %s135 = sphi 0, %s135
    %s137 = sphi 0, %s135
    %s138 = sphi 0, %s137
    %s152 = sphi 0, %s138
    %s156 = sphi 0, %s156
    %s158 = sphi 0, %s156
    %s159 = sphi 0, %s158
    %s173 = sphi 0, %s159
    %s177 = sphi 0, %s177
    %s179 = sphi 0, %s177
    %s180 = sphi 0, %s179
    %s194 = sphi 0, %s180
    %s198 = sphi 0, %s198
    %s200 = sphi 0, %s198
    %s201 = sphi 0, %s200
    %s215 = sphi 0, %s201
    %s219 = sphi 0, %s219
    %s221 = sphi 0, %s219
    %s222 = sphi 0, %s221
    %s236 = sphi 0, %s222
    %s240 = sphi 0, %s240
    %s242 = sphi 0, %s240
    %s243 = sphi 0, %s242
    %s257 = sphi 0, %s243
    %s265 = sphi 0, %s267
    %s268 = sphi 0, %s265
    %s269 = sphi 0, %s268
    %s285 = sphi 0, %s269
  $region4: #{tpu_custom_call.1} parent=0 // loop_header_branch
    %18 = sbr.rel (%p16) target = $region8
  $region5: #{tpu_custom_call.1} parent=0 // loop_body
    %s20 = ssub.s32 %s15, 1
    %s21 = ssub.s32 %s15, 2
    %s28 = sadd.s32 1, %s23
    %p29 = scmp.ge.s32.totalorder %s28, 2
    %s30 = scalar_select %p29, 0, %s28
    %s31 = sadd.s32 1, %s22
    %s32 = scalar_select %p29, %s31, %s22
    %p33 = scmp.ge.s32.totalorder %s32, 2
    %s34 = scalar_select %p33, 0, %s32
    %s35 = ssub.s32 %s22, %s34
    %s36 = ssub.s32 %s23, %s30
    %s37 = sor.u32 %s35, %s36
    %p38 = scmp.eq.s32.totalorder %s37, 0
    %s40 = sadd.s32 %s39, 1
    %s41 = scalar_select %p38, %s39, %s40
    %p44 = pneg %p38
    %p45 = scmp.eq.s32.totalorder %s15, 3
    %p46 = por %p44, %p45
    %p47 = scmp.ne.s32.totalorder %s39, %s42
    %p48 = scmp.eq.s32.totalorder %s15, 0
    %p49 = por %p47, %p48
    %p50 = scmp.ne.s32.totalorder %s39, %s42
    %p51 = scmp.eq.s32.totalorder %s20, 3
    %p52 = por %p50, %p51
    %p53 = scmp.ne.s32.totalorder %s42, %s43
    %p54 = scmp.eq.s32.totalorder %s20, 0
    %p55 = por %p53, %p54
    %p56 = scmp.ne.s32.totalorder %s42, %s43
    %p57 = scmp.eq.s32.totalorder %s21, 3
    %p58 = por %p56, %p57
    %p60 = scmp.ne.s32.totalorder %s43, %s59
    %p61 = scmp.eq.s32.totalorder %s21, 0
    %p62 = por %p60, %p61
    %s63 = smul.u32 %s23, 8
    %s64 = ssub.s32 %s63, 1
    %p65 = scmp.gt.s32.totalorder %s64, 0
    %s66 = scalar_select %p65, %s64, 0
    %s67 = smul.u32 %s30, 8
    %s68 = ssub.s32 %s67, 1
    %p69 = scmp.gt.s32.totalorder %s68, 0
    %s70 = scalar_select %p69, %s68, 0
    %s71 = ssub.s32 %s22, %s34
    %s72 = ssub.s32 %s66, %s70
    %s73 = sor.u32 %s71, %s72
    %p74 = scmp.eq.s32.totalorder %s73, 0
    %s76 = sadd.s32 %s75, 1
    %s77 = scalar_select %p74, %s75, %s76
    %p80 = pneg %p74
    %p81 = scmp.eq.s32.totalorder %s15, 3
    %p82 = por %p80, %p81
    %p83 = scmp.ne.s32.totalorder %s75, %s78
    %p84 = scmp.eq.s32.totalorder %s15, 0
    %p85 = por %p83, %p84
    %p86 = scmp.ne.s32.totalorder %s75, %s78
    %p87 = scmp.eq.s32.totalorder %s20, 3
    %p88 = por %p86, %p87
    %p89 = scmp.ne.s32.totalorder %s78, %s79
    %p90 = scmp.eq.s32.totalorder %s20, 0
    %p91 = por %p89, %p90
    %p92 = scmp.ne.s32.totalorder %s78, %s79
    %p93 = scmp.eq.s32.totalorder %s21, 3
    %p94 = por %p92, %p93
    %p96 = scmp.ne.s32.totalorder %s79, %s95
    %p97 = scmp.eq.s32.totalorder %s21, 0
    %p98 = por %p96, %p97
    %s99 = sadd.s32 %s23, 1
    %s100 = smul.u32 %s99, 8
    %p101 = scmp.lt.s32.totalorder %s100, 15
    %s102 = scalar_select %p101, %s100, 15
    %s103 = sadd.s32 %s30, 1
    %s104 = smul.u32 %s103, 8
    %p105 = scmp.lt.s32.totalorder %s104, 15
    %s106 = scalar_select %p105, %s104, 15
    %s107 = ssub.s32 %s22, %s34
    %s108 = ssub.s32 %s102, %s106
    %s109 = sor.u32 %s107, %s108
    %p110 = scmp.eq.s32.totalorder %s109, 0
    %s112 = sadd.s32 %s111, 1
    %s113 = scalar_select %p110, %s111, %s112
    %p116 = pneg %p110
    %p117 = scmp.eq.s32.totalorder %s15, 3
    %p118 = por %p116, %p117
    %p119 = scmp.ne.s32.totalorder %s111, %s114
    %p120 = scmp.eq.s32.totalorder %s15, 0
    %p121 = por %p119, %p120
    %p122 = scmp.ne.s32.totalorder %s111, %s114
    %p123 = scmp.eq.s32.totalorder %s20, 3
    %p124 = por %p122, %p123
    %p125 = scmp.ne.s32.totalorder %s114, %s115
    %p126 = scmp.eq.s32.totalorder %s20, 0
    %p127 = por %p125, %p126
    %p128 = scmp.ne.s32.totalorder %s114, %s115
    %p129 = scmp.eq.s32.totalorder %s21, 3
    %p130 = por %p128, %p129
    %p132 = scmp.ne.s32.totalorder %s115, %s131
    %p133 = scmp.eq.s32.totalorder %s21, 0
    %p134 = por %p132, %p133
    %s136 = sadd.s32 %s135, 1
    %p139 = scmp.eq.s32.totalorder %s15, 3
    %p140 = scmp.ne.s32.totalorder %s135, %s137
    %p141 = scmp.eq.s32.totalorder %s15, 0
    %p142 = por %p140, %p141
    %p143 = scmp.ne.s32.totalorder %s135, %s137
    %p144 = scmp.eq.s32.totalorder %s20, 3
    %p145 = por %p143, %p144
    %p146 = scmp.ne.s32.totalorder %s137, %s138
    %p147 = scmp.eq.s32.totalorder %s20, 0
    %p148 = por %p146, %p147
    %p149 = scmp.ne.s32.totalorder %s137, %s138
    %p150 = scmp.eq.s32.totalorder %s21, 3
    %p151 = por %p149, %p150
    %p153 = scmp.ne.s32.totalorder %s138, %s152
    %p154 = scmp.eq.s32.totalorder %s21, 0
    %p155 = por %p153, %p154
    %s157 = sadd.s32 %s156, 1
    %p160 = scmp.eq.s32.totalorder %s15, 3
    %p161 = scmp.ne.s32.totalorder %s156, %s158
    %p162 = scmp.eq.s32.totalorder %s15, 0
    %p163 = por %p161, %p162
    %p164 = scmp.ne.s32.totalorder %s156, %s158
    %p165 = scmp.eq.s32.totalorder %s20, 3
    %p166 = por %p164, %p165
    %p167 = scmp.ne.s32.totalorder %s158, %s159
    %p168 = scmp.eq.s32.totalorder %s20, 0
    %p169 = por %p167, %p168
    %p170 = scmp.ne.s32.totalorder %s158, %s159
    %p171 = scmp.eq.s32.totalorder %s21, 3
    %p172 = por %p170, %p171
    %p174 = scmp.ne.s32.totalorder %s159, %s173
    %p175 = scmp.eq.s32.totalorder %s21, 0
    %p176 = por %p174, %p175
    %s178 = sadd.s32 %s177, 1
    %p181 = scmp.eq.s32.totalorder %s15, 3
    %p182 = scmp.ne.s32.totalorder %s177, %s179
    %p183 = scmp.eq.s32.totalorder %s15, 0
    %p184 = por %p182, %p183
    %p185 = scmp.ne.s32.totalorder %s177, %s179
    %p186 = scmp.eq.s32.totalorder %s20, 3
    %p187 = por %p185, %p186
    %p188 = scmp.ne.s32.totalorder %s179, %s180
    %p189 = scmp.eq.s32.totalorder %s20, 0
    %p190 = por %p188, %p189
    %p191 = scmp.ne.s32.totalorder %s179, %s180
    %p192 = scmp.eq.s32.totalorder %s21, 3
    %p193 = por %p191, %p192
    %p195 = scmp.ne.s32.totalorder %s180, %s194
    %p196 = scmp.eq.s32.totalorder %s21, 0
    %p197 = por %p195, %p196
    %s199 = sadd.s32 %s198, 1
    %p202 = scmp.eq.s32.totalorder %s15, 3
    %p203 = scmp.ne.s32.totalorder %s198, %s200
    %p204 = scmp.eq.s32.totalorder %s15, 0
    %p205 = por %p203, %p204
    %p206 = scmp.ne.s32.totalorder %s198, %s200
    %p207 = scmp.eq.s32.totalorder %s20, 3
    %p208 = por %p206, %p207
    %p209 = scmp.ne.s32.totalorder %s200, %s201
    %p210 = scmp.eq.s32.totalorder %s20, 0
    %p211 = por %p209, %p210
    %p212 = scmp.ne.s32.totalorder %s200, %s201
    %p213 = scmp.eq.s32.totalorder %s21, 3
    %p214 = por %p212, %p213
    %p216 = scmp.ne.s32.totalorder %s201, %s215
    %p217 = scmp.eq.s32.totalorder %s21, 0
    %p218 = por %p216, %p217
    %s220 = sadd.s32 %s219, 1
    %p223 = scmp.eq.s32.totalorder %s15, 3
    %p224 = scmp.ne.s32.totalorder %s219, %s221
    %p225 = scmp.eq.s32.totalorder %s15, 0
    %p226 = por %p224, %p225
    %p227 = scmp.ne.s32.totalorder %s219, %s221
    %p228 = scmp.eq.s32.totalorder %s20, 3
    %p229 = por %p227, %p228
    %p230 = scmp.ne.s32.totalorder %s221, %s222
    %p231 = scmp.eq.s32.totalorder %s20, 0
    %p232 = por %p230, %p231
    %p233 = scmp.ne.s32.totalorder %s221, %s222
    %p234 = scmp.eq.s32.totalorder %s21, 3
    %p235 = por %p233, %p234
    %p237 = scmp.ne.s32.totalorder %s222, %s236
    %p238 = scmp.eq.s32.totalorder %s21, 0
    %p239 = por %p237, %p238
    %s241 = sadd.s32 %s240, 1
    %p244 = scmp.eq.s32.totalorder %s15, 3
    %p245 = scmp.ne.s32.totalorder %s240, %s242
    %p246 = scmp.eq.s32.totalorder %s15, 0
    %p247 = por %p245, %p246
    %p248 = scmp.ne.s32.totalorder %s240, %s242
    %p249 = scmp.eq.s32.totalorder %s20, 3
    %p250 = por %p248, %p249
    %p251 = scmp.ne.s32.totalorder %s242, %s243
    %p252 = scmp.eq.s32.totalorder %s20, 0
    %p253 = por %p251, %p252
    %p254 = scmp.ne.s32.totalorder %s242, %s243
    %p255 = scmp.eq.s32.totalorder %s21, 3
    %p256 = por %p254, %p255
    %p258 = scmp.ne.s32.totalorder %s243, %s257
    %p259 = scmp.eq.s32.totalorder %s21, 0
    %p260 = por %p258, %p259
    %s261 = ssub.s32 %s22, %s34
    %s262 = ssub.s32 %s23, %s30
    %s263 = sor.u32 %s261, %s262
    %p264 = scmp.eq.s32.totalorder %s263, 0
    %s266 = sadd.s32 %s265, 1
    %s267 = scalar_select %p264, %s265, %s266
    %p270 = pneg %p264
    %p271 = scmp.eq.s32.totalorder %s15, 3
    %p272 = por %p270, %p271
    %p273 = scmp.ne.s32.totalorder %s265, %s268
    %p274 = scmp.eq.s32.totalorder %s15, 0
    %p275 = por %p273, %p274
    %p276 = scmp.ne.s32.totalorder %s265, %s268
    %p277 = scmp.eq.s32.totalorder %s20, 3
    %p278 = por %p276, %p277
    %p279 = scmp.ne.s32.totalorder %s268, %s269
    %p280 = scmp.eq.s32.totalorder %s20, 0
    %p281 = por %p279, %p280
    %p282 = scmp.ne.s32.totalorder %s268, %s269
    %p283 = scmp.eq.s32.totalorder %s21, 3
    %p284 = por %p282, %p283
    %p286 = scmp.ne.s32.totalorder %s269, %s285
    %p287 = scmp.eq.s32.totalorder %s21, 0
    %p288 = por %p286, %p287
    %p289 = scmp.le.s32.totalorder 1, %s15
    %p290 = scmp.lt.s32.totalorder %s15, 5
    %p291 = pnand %p289, %p290
    %p292 = pneg %p291
    // Predicated region
    $region9: #{tpu_custom_call.1} parent=5 // pred_check
      _
    $region10: #{tpu_custom_call.1} parent=5 // pred_check_branch
      %294 = sbr.rel (%p291) target = $region12
    $region11: #{tpu_custom_call.1} parent=5 // pred_region
      %s295 = ssub.s32 %s15, 1
      // Predicated region
      $region13: #{tpu_custom_call.1} parent=11 // pred_check
        %p296 = pneg %p148
      $region14: #{tpu_custom_call.1} parent=11 // pred_check_branch
        %298 = sbr.rel (%p296) target = $region16
      $region15: #{tpu_custom_call.1} parent=11 // pred_region
        _
      $region16: #{tpu_custom_call.1} parent=11 // pred_fallthru
        _
      // Predicated region
      $region17: #{tpu_custom_call.1} parent=11 // pred_check
        %p299 = pneg %p169
      $region18: #{tpu_custom_call.1} parent=11 // pred_check_branch
        %301 = sbr.rel (%p299) target = $region20
      $region19: #{tpu_custom_call.1} parent=11 // pred_region
        _
      $region20: #{tpu_custom_call.1} parent=11 // pred_fallthru
        _
      // Predicated region
      $region21: #{tpu_custom_call.1} parent=11 // pred_check
        %p302 = pneg %p190
      $region22: #{tpu_custom_call.1} parent=11 // pred_check_branch
        %304 = sbr.rel (%p302) target = $region24
      $region23: #{tpu_custom_call.1} parent=11 // pred_region
        _
      $region24: #{tpu_custom_call.1} parent=11 // pred_fallthru
        _
      // Predicated region
      $region25: #{tpu_custom_call.1} parent=11 // pred_check
        %p305 = pneg %p211
      $region26: #{tpu_custom_call.1} parent=11 // pred_check_branch
        %307 = sbr.rel (%p305) target = $region28
      $region27: #{tpu_custom_call.1} parent=11 // pred_region
        _
      $region28: #{tpu_custom_call.1} parent=11 // pred_fallthru
        _
      // Predicated region
      $region29: #{tpu_custom_call.1} parent=11 // pred_check
        %p308 = pneg %p232
      $region30: #{tpu_custom_call.1} parent=11 // pred_check_branch
        %310 = sbr.rel (%p308) target = $region32
      $region31: #{tpu_custom_call.1} parent=11 // pred_region
        _
      $region32: #{tpu_custom_call.1} parent=11 // pred_fallthru
        _
      // Predicated region
      $region33: #{tpu_custom_call.1} parent=11 // pred_check
        %p311 = pneg %p253
      $region34: #{tpu_custom_call.1} parent=11 // pred_check_branch
        %313 = sbr.rel (%p311) target = $region36
      $region35: #{tpu_custom_call.1} parent=11 // pred_region
        _
      $region36: #{tpu_custom_call.1} parent=11 // pred_fallthru
        _
    $region12: #{tpu_custom_call.1} parent=5 // pred_fallthru
      _
    %p314 = scmp.lt.s32.totalorder %s15, 4
    // Predicated region
    $region37: #{tpu_custom_call.1} parent=5 // pred_check
      %p315 = pneg %p314
    $region38: #{tpu_custom_call.1} parent=5 // pred_check_branch
      %317 = sbr.rel (%p315) target = $region40
    $region39: #{tpu_custom_call.1} parent=5 // pred_region
      // Predicated region
      $region41: #{tpu_custom_call.1} parent=39 // pred_check
        %p318 = pneg %p49
      $region42: #{tpu_custom_call.1} parent=39 // pred_check_branch
        %320 = sbr.rel (%p318) target = $region44
      $region43: #{tpu_custom_call.1} parent=39 // pred_region
        %s321 = smul.u32 8, %s23
        %p322 = scmp.lt.s32.totalorder %s22, 1
        %s323 = scalar_select %p322, %s22, 1
        %p324 = scmp.lt.s32.totalorder %s321, 15
        %s325 = scalar_select %p324, %s321, 15
        %s326 = smul.addr %s325, 8
        %s327 = smul.addr %s323, 128
        %s328 = sadd.s32 %s326, %s327
        %s329 = smul.addr %s328, 8
        %s330 = scalar_lea.vmem %s0, %s329
        %s331 = smul.u32 8, %s23
      $region44: #{tpu_custom_call.1} parent=39 // pred_fallthru
        _
      // Predicated region
      $region45: #{tpu_custom_call.1} parent=39 // pred_check
        %p332 = pneg %p85
      $region46: #{tpu_custom_call.1} parent=39 // pred_check_branch
        %334 = sbr.rel (%p332) target = $region48
      $region47: #{tpu_custom_call.1} parent=39 // pred_region
        %s335 = smul.u32 %s23, 8
        %s336 = ssub.s32 %s335, 1
        %p337 = scmp.gt.s32.totalorder %s336, 0
        %s338 = scalar_select %p337, %s336, 0
        %p339 = scmp.lt.s32.totalorder %s22, 1
        %s340 = scalar_select %p339, %s22, 1
        %p341 = scmp.lt.s32.totalorder %s338, 15
        %s342 = scalar_select %p341, %s338, 15
        %s343 = smul.addr %s342, 8
        %s344 = smul.addr %s340, 128
        %s345 = sadd.s32 %s343, %s344
        %s346 = smul.addr %s345, 8
        %s347 = scalar_lea.vmem %s1, %s346
        %s348 = smul.u32 %s23, 8
        %s349 = ssub.s32 %s348, 1
        %p350 = scmp.gt.s32.totalorder %s349, 0
        %s351 = scalar_select %p350, %s349, 0
      $region48: #{tpu_custom_call.1} parent=39 // pred_fallthru
        _
      // Predicated region
      $region49: #{tpu_custom_call.1} parent=39 // pred_check
        %p352 = pneg %p121
      $region50: #{tpu_custom_call.1} parent=39 // pred_check_branch
        %354 = sbr.rel (%p352) target = $region52
      $region51: #{tpu_custom_call.1} parent=39 // pred_region
        %s355 = sadd.s32 %s23, 1
        %s356 = smul.u32 %s355, 8
        %p357 = scmp.lt.s32.totalorder %s356, 15
        %s358 = scalar_select %p357, %s356, 15
        %p359 = scmp.lt.s32.totalorder %s22, 1
        %s360 = scalar_select %p359, %s22, 1
        %p361 = scmp.lt.s32.totalorder %s358, 15
        %s362 = scalar_select %p361, %s358, 15
        %s363 = smul.addr %s362, 8
        %s364 = smul.addr %s360, 128
        %s365 = sadd.s32 %s363, %s364
        %s366 = smul.addr %s365, 8
        %s367 = scalar_lea.vmem %s2, %s366
        %s368 = sadd.s32 %s23, 1
        %s369 = smul.u32 %s368, 8
        %p370 = scmp.lt.s32.totalorder %s369, 15
        %s371 = scalar_select %p370, %s369, 15
      $region52: #{tpu_custom_call.1} parent=39 // pred_fallthru
        _
    $region40: #{tpu_custom_call.1} parent=5 // pred_fallthru
      _
    %p372 = scmp.le.s32.totalorder 1, %s15
    %p373 = scmp.lt.s32.totalorder %s15, 5
    %p374 = pnand %p372, %p373
    %p375 = pneg %p374
    // Predicated region
    $region53: #{tpu_custom_call.1} parent=5 // pred_check
      _
    $region54: #{tpu_custom_call.1} parent=5 // pred_check_branch
      %377 = sbr.rel (%p374) target = $region56
    $region55: #{tpu_custom_call.1} parent=5 // pred_region
      %s378 = ssub.s32 %s15, 1
      %s379 = smul.u32 8, %s25
      %p380 = scmp.lt.s32.totalorder %s24, 1
      %s381 = scalar_select %p380, %s24, 1
      %p382 = scmp.lt.s32.totalorder %s379, 15
      %s383 = scalar_select %p382, %s379, 15
      %s384 = smul.addr %s383, 8
      %s385 = smul.addr %s381, 128
      %s386 = sadd.s32 %s384, %s385
      %s387 = smul.addr %s386, 8
      %s388 = scalar_lea.vmem %s0, %s387
      %p389 = pneg %p55
      %p390 = pneg %p52
      %s391 = smul.u32 %s25, 8
      %s392 = ssub.s32 %s391, 1
      %p393 = scmp.gt.s32.totalorder %s392, 0
      %s394 = scalar_select %p393, %s392, 0
      %p395 = scmp.lt.s32.totalorder %s24, 1
      %s396 = scalar_select %p395, %s24, 1
      %p397 = scmp.lt.s32.totalorder %s394, 15
      %s398 = scalar_select %p397, %s394, 15
      %s399 = smul.addr %s398, 8
      %s400 = smul.addr %s396, 128
      %s401 = sadd.s32 %s399, %s400
      %s402 = smul.addr %s401, 8
      %s403 = scalar_lea.vmem %s1, %s402
      %p404 = pneg %p91
      %p405 = pneg %p88
      %s406 = sadd.s32 %s25, 1
      %s407 = smul.u32 %s406, 8
      %p408 = scmp.lt.s32.totalorder %s407, 15
      %s409 = scalar_select %p408, %s407, 15
      %p410 = scmp.lt.s32.totalorder %s24, 1
      %s411 = scalar_select %p410, %s24, 1
      %p412 = scmp.lt.s32.totalorder %s409, 15
      %s413 = scalar_select %p412, %s409, 15
      %s414 = smul.addr %s413, 8
      %s415 = smul.addr %s411, 128
      %s416 = sadd.s32 %s414, %s415
      %s417 = smul.addr %s416, 8
      %s418 = scalar_lea.vmem %s2, %s417
      %p419 = pneg %p127
      %p420 = pneg %p124
      %p421 = pneg %p148
      %p422 = pneg %p145
      %p423 = pneg %p169
      %p424 = pneg %p166
      %p425 = pneg %p190
      %p426 = pneg %p187
      %p427 = pneg %p211
      %p428 = pneg %p208
      %p429 = pneg %p232
      %p430 = pneg %p229
      %p431 = pneg %p253
      %p432 = pneg %p250
      %p433 = pneg %p281
      %p434 = pneg %p278
      %s435 = smul.u32 64, %s25
      %p436 = scmp.lt.s32.totalorder %s24, 1
      %s437 = scalar_select %p436, %s24, 1
      %p438 = scmp.lt.s32.totalorder %s435, 127
      %s439 = scalar_select %p438, %s435, 127
      %s440 = smul.addr %s437, 128
      %s441 = sadd.s32 %s439, %s440
      %s442 = smul.addr %s441, 8
      %s443 = scalar_lea.vmem %s9, %s442
      %s444 = smul.u32 8, %s25
      %p445 = scmp.lt.s32.totalorder %s24, 1
      %s446 = scalar_select %p445, %s24, 1
      %p447 = scmp.lt.s32.totalorder %s444, 15
      %s448 = scalar_select %p447, %s444, 15
      %s449 = smul.addr %s448, 8
      %s450 = smul.addr %s446, 128
      %s451 = sadd.s32 %s449, %s450
      %s452 = smul.addr %s451, 8
      %s453 = scalar_lea.vmem %s0, %s452
      %s454 = smul.u32 8, %s25
      %s455 = smul.u32 %s25, 8
      %s456 = ssub.s32 %s455, 1
      %p457 = scmp.gt.s32.totalorder %s456, 0
      %s458 = scalar_select %p457, %s456, 0
      %p459 = scmp.lt.s32.totalorder %s24, 1
      %s460 = scalar_select %p459, %s24, 1
      %p461 = scmp.lt.s32.totalorder %s458, 15
      %s462 = scalar_select %p461, %s458, 15
      %s463 = smul.addr %s462, 8
      %s464 = smul.addr %s460, 128
      %s465 = sadd.s32 %s463, %s464
      %s466 = smul.addr %s465, 8
      %s467 = scalar_lea.vmem %s1, %s466
      %s468 = smul.u32 %s25, 8
      %s469 = ssub.s32 %s468, 1
      %p470 = scmp.gt.s32.totalorder %s469, 0
      %s471 = scalar_select %p470, %s469, 0
      %s472 = sadd.s32 %s25, 1
      %s473 = smul.u32 %s472, 8
      %p474 = scmp.lt.s32.totalorder %s473, 15
      %s475 = scalar_select %p474, %s473, 15
      %p476 = scmp.lt.s32.totalorder %s24, 1
      %s477 = scalar_select %p476, %s24, 1
      %p478 = scmp.lt.s32.totalorder %s475, 15
      %s479 = scalar_select %p478, %s475, 15
      %s480 = smul.addr %s479, 8
      %s481 = smul.addr %s477, 128
      %s482 = sadd.s32 %s480, %s481
      %s483 = smul.addr %s482, 8
      %s484 = scalar_lea.vmem %s2, %s483
      %s485 = sadd.s32 %s25, 1
      %s486 = smul.u32 %s485, 8
      %p487 = scmp.lt.s32.totalorder %s486, 15
      %s488 = scalar_select %p487, %s486, 15
      %s489 = smul.u32 64, %s25
      %p490 = scmp.lt.s32.totalorder %s24, 1
      %s491 = scalar_select %p490, %s24, 1
      %p492 = scmp.lt.s32.totalorder %s489, 127
      %s493 = scalar_select %p492, %s489, 127
      %s494 = smul.addr %s491, 128
      %s495 = sadd.s32 %s493, %s494
      %s496 = smul.addr %s495, 8
      %s497 = scalar_lea.vmem %s9, %s496
      %s498 = smul.u32 64, %s25
      %vm499 = vcmask 64512
      %500 = vst.msk [vmem:[#allocation2] sm:$0xff] %vm499, 0.0
      %vm501 = vcmask 58368
      %502 = vst.msk [vmem:[#allocation2 + $0x8] sm:$0x3] %vm501, 0.0
      %503 = vst.msk [vmem:[#allocation2 + $0x10] sm:$0xff] %vm499, 0.0
      %504 = vst.msk [vmem:[#allocation2 + $0x18] sm:$0x3] %vm501, 0.0
      %505 = vst.msk [vmem:[#allocation2 + $0x20] sm:$0xff] %vm499, 0.0
      %506 = vst.msk [vmem:[#allocation2 + $0x28] sm:$0x3] %vm501, 0.0
      %507 = vst.msk [vmem:[#allocation2 + $0x30] sm:$0xff] %vm499, 0.0
      %508 = vst.msk [vmem:[#allocation2 + $0x38] sm:$0x3] %vm501, 0.0
      %509 = vst.msk [vmem:[#allocation2 + $0x40] sm:$0xff] %vm499, 0.0
      %510 = vst.msk [vmem:[#allocation2 + $0x48] sm:$0x3] %vm501, 0.0
      %511 = vst.msk [vmem:[#allocation2 + $0x50] sm:$0xff] %vm499, 0.0
      %512 = vst.msk [vmem:[#allocation2 + $0x58] sm:$0x3] %vm501, 0.0
      %513 = vst.msk [vmem:[#allocation2 + $0x60] sm:$0xff] %vm499, 0.0
      %514 = vst.msk [vmem:[#allocation2 + $0x68] sm:$0x3] %vm501, 0.0
      %515 = vst.msk [vmem:[#allocation2 + $0x70] sm:$0xff] %vm499, 0.0
      %516 = vst.msk [vmem:[#allocation2 + $0x78] sm:$0x3] %vm501, 0.0
      %517 = vst.msk [vmem:[#allocation2 + $0x80] sm:$0xff] %vm499, 0.0
      %518 = vst.msk [vmem:[#allocation2 + $0x88] sm:$0x3] %vm501, 0.0
      %519 = vst.msk [vmem:[#allocation2 + $0x90] sm:$0xff] %vm499, 0.0
      %520 = vst.msk [vmem:[#allocation2 + $0x98] sm:$0x3] %vm501, 0.0
      %521 = vst.msk [vmem:[#allocation2 + $0xa0] sm:$0xff] %vm499, 0.0
      %522 = vst.msk [vmem:[#allocation2 + $0xa8] sm:$0x3] %vm501, 0.0
      %523 = vst.msk [vmem:[#allocation2 + $0xb0] sm:$0xff] %vm499, 0.0
      %524 = vst.msk [vmem:[#allocation2 + $0xb8] sm:$0x3] %vm501, 0.0
      %525 = vst.msk [vmem:[#allocation2 + $0xc0] sm:$0xff] %vm499, 0.0
      %526 = vst.msk [vmem:[#allocation2 + $0xc8] sm:$0x3] %vm501, 0.0
      %527 = vst.msk [vmem:[#allocation2 + $0xd0] sm:$0xff] %vm499, 0.0
      %528 = vst.msk [vmem:[#allocation2 + $0xd8] sm:$0x3] %vm501, 0.0
      %529 = vst.msk [vmem:[#allocation2 + $0xe0] sm:$0xff] %vm499, 0.0
      %530 = vst.msk [vmem:[#allocation2 + $0xe8] sm:$0x3] %vm501, 0.0
      %531 = vst.msk [vmem:[#allocation2 + $0xf0] sm:$0xff] %vm499, 0.0
      %532 = vst.msk [vmem:[#allocation2 + $0xf8] sm:$0x3] %vm501, 0.0
      %533 = vst.msk [vmem:[#allocation2 + $0x100] sm:$0xff] %vm499, 0.0
      %534 = vst.msk [vmem:[#allocation2 + $0x108] sm:$0x3] %vm501, 0.0
      %535 = vst.msk [vmem:[#allocation2 + $0x110] sm:$0xff] %vm499, 0.0
      %536 = vst.msk [vmem:[#allocation2 + $0x118] sm:$0x3] %vm501, 0.0
      %537 = vst.msk [vmem:[#allocation2 + $0x120] sm:$0xff] %vm499, 0.0
      %538 = vst.msk [vmem:[#allocation2 + $0x128] sm:$0x3] %vm501, 0.0
      %539 = vst.msk [vmem:[#allocation2 + $0x130] sm:$0xff] %vm499, 0.0
      %540 = vst.msk [vmem:[#allocation2 + $0x138] sm:$0x3] %vm501, 0.0
      %541 = vst.msk [vmem:[#allocation2 + $0x140] sm:$0xff] %vm499, 0.0
      %542 = vst.msk [vmem:[#allocation2 + $0x148] sm:$0x3] %vm501, 0.0
      %543 = vst.msk [vmem:[#allocation2 + $0x150] sm:$0xff] %vm499, 0.0
      %544 = vst.msk [vmem:[#allocation2 + $0x158] sm:$0x3] %vm501, 0.0
      %545 = vst.msk [vmem:[#allocation2 + $0x160] sm:$0xff] %vm499, 0.0
      %546 = vst.msk [vmem:[#allocation2 + $0x168] sm:$0x3] %vm501, 0.0
      %547 = vst.msk [vmem:[#allocation2 + $0x170] sm:$0xff] %vm499, 0.0
      %548 = vst.msk [vmem:[#allocation2 + $0x178] sm:$0x3] %vm501, 0.0
      %549 = vst.msk [vmem:[#allocation2 + $0x180] sm:$0xff] %vm499, 0.0
      %550 = vst.msk [vmem:[#allocation2 + $0x188] sm:$0x3] %vm501, 0.0
      %551 = vst.msk [vmem:[#allocation2 + $0x190] sm:$0xff] %vm499, 0.0
      %552 = vst.msk [vmem:[#allocation2 + $0x198] sm:$0x3] %vm501, 0.0
      %553 = vst.msk [vmem:[#allocation2 + $0x1a0] sm:$0xff] %vm499, 0.0
      %554 = vst.msk [vmem:[#allocation2 + $0x1a8] sm:$0x3] %vm501, 0.0
      %555 = vst.msk [vmem:[#allocation2 + $0x1b0] sm:$0xff] %vm499, 0.0
      %556 = vst.msk [vmem:[#allocation2 + $0x1b8] sm:$0x3] %vm501, 0.0
      %557 = vst.msk [vmem:[#allocation2 + $0x1c0] sm:$0xff] %vm499, 0.0
      %558 = vst.msk [vmem:[#allocation2 + $0x1c8] sm:$0x3] %vm501, 0.0
      %559 = vst.msk [vmem:[#allocation2 + $0x1d0] sm:$0xff] %vm499, 0.0
      %560 = vst.msk [vmem:[#allocation2 + $0x1d8] sm:$0x3] %vm501, 0.0
      %561 = vst.msk [vmem:[#allocation2 + $0x1e0] sm:$0xff] %vm499, 0.0
      %562 = vst.msk [vmem:[#allocation2 + $0x1e8] sm:$0x3] %vm501, 0.0
      %563 = vst.msk [vmem:[#allocation2 + $0x1f0] sm:$0xff] %vm499, 0.0
      %564 = vst.msk [vmem:[#allocation2 + $0x1f8] sm:$0x3] %vm501, 0.0
      %565 = vst.msk [vmem:[#allocation2 + $0x200] sm:$0xff] %vm499, 0.0
      %566 = vst.msk [vmem:[#allocation2 + $0x208] sm:$0x3] %vm501, 0.0
      %567 = vst.msk [vmem:[#allocation2 + $0x210] sm:$0xff] %vm499, 0.0
      %568 = vst.msk [vmem:[#allocation2 + $0x218] sm:$0x3] %vm501, 0.0
      %569 = vst.msk [vmem:[#allocation2 + $0x220] sm:$0xff] %vm499, 0.0
      %570 = vst.msk [vmem:[#allocation2 + $0x228] sm:$0x3] %vm501, 0.0
      %571 = vst.msk [vmem:[#allocation2 + $0x230] sm:$0xff] %vm499, 0.0
      %572 = vst.msk [vmem:[#allocation2 + $0x238] sm:$0x3] %vm501, 0.0
      %573 = vst.msk [vmem:[#allocation2 + $0x240] sm:$0xff] %vm499, 0.0
      %574 = vst.msk [vmem:[#allocation2 + $0x248] sm:$0x3] %vm501, 0.0
      %575 = vst.msk [vmem:[#allocation2 + $0x250] sm:$0xff] %vm499, 0.0
      %576 = vst.msk [vmem:[#allocation2 + $0x258] sm:$0x3] %vm501, 0.0
      %577 = vst.msk [vmem:[#allocation2 + $0x260] sm:$0xff] %vm499, 0.0
      %578 = vst.msk [vmem:[#allocation2 + $0x268] sm:$0x3] %vm501, 0.0
      %579 = vst.msk [vmem:[#allocation2 + $0x270] sm:$0xff] %vm499, 0.0
      %580 = vst.msk [vmem:[#allocation2 + $0x278] sm:$0x3] %vm501, 0.0
      %581 = vst.msk [vmem:[#allocation2 + $0x280] sm:$0xff] %vm499, 0.0
      %582 = vst.msk [vmem:[#allocation2 + $0x288] sm:$0x3] %vm501, 0.0
      %583 = vst.msk [vmem:[#allocation2 + $0x290] sm:$0xff] %vm499, 0.0
      %584 = vst.msk [vmem:[#allocation2 + $0x298] sm:$0x3] %vm501, 0.0
      %585 = vst.msk [vmem:[#allocation2 + $0x2a0] sm:$0xff] %vm499, 0.0
      %586 = vst.msk [vmem:[#allocation2 + $0x2a8] sm:$0x3] %vm501, 0.0
      %587 = vst.msk [vmem:[#allocation2 + $0x2b0] sm:$0xff] %vm499, 0.0
      %588 = vst.msk [vmem:[#allocation2 + $0x2b8] sm:$0x3] %vm501, 0.0
      %589 = vst.msk [vmem:[#allocation2 + $0x2c0] sm:$0xff] %vm499, 0.0
      %590 = vst.msk [vmem:[#allocation2 + $0x2c8] sm:$0x3] %vm501, 0.0
      %591 = vst.msk [vmem:[#allocation2 + $0x2d0] sm:$0xff] %vm499, 0.0
      %592 = vst.msk [vmem:[#allocation2 + $0x2d8] sm:$0x3] %vm501, 0.0
      %593 = vst.msk [vmem:[#allocation2 + $0x2e0] sm:$0xff] %vm499, 0.0
      %594 = vst.msk [vmem:[#allocation2 + $0x2e8] sm:$0x3] %vm501, 0.0
      %595 = vst.msk [vmem:[#allocation2 + $0x2f0] sm:$0xff] %vm499, 0.0
      %596 = vst.msk [vmem:[#allocation2 + $0x2f8] sm:$0x3] %vm501, 0.0
      %597 = vst.msk [vmem:[#allocation2 + $0x300] sm:$0xff] %vm499, 0.0
      %598 = vst.msk [vmem:[#allocation2 + $0x308] sm:$0x3] %vm501, 0.0
      %599 = vst.msk [vmem:[#allocation2 + $0x310] sm:$0xff] %vm499, 0.0
      %600 = vst.msk [vmem:[#allocation2 + $0x318] sm:$0x3] %vm501, 0.0
      %601 = vst.msk [vmem:[#allocation2 + $0x320] sm:$0xff] %vm499, 0.0
      %602 = vst.msk [vmem:[#allocation2 + $0x328] sm:$0x3] %vm501, 0.0
      %603 = vst.msk [vmem:[#allocation2 + $0x330] sm:$0xff] %vm499, 0.0
      %604 = vst.msk [vmem:[#allocation2 + $0x338] sm:$0x3] %vm501, 0.0
      %605 = vst.msk [vmem:[#allocation2 + $0x340] sm:$0xff] %vm499, 0.0
      %606 = vst.msk [vmem:[#allocation2 + $0x348] sm:$0x3] %vm501, 0.0
      %607 = vst.msk [vmem:[#allocation2 + $0x350] sm:$0xff] %vm499, 0.0
      %608 = vst.msk [vmem:[#allocation2 + $0x358] sm:$0x3] %vm501, 0.0
      %609 = vst.msk [vmem:[#allocation2 + $0x360] sm:$0xff] %vm499, 0.0
      %610 = vst.msk [vmem:[#allocation2 + $0x368] sm:$0x3] %vm501, 0.0
      %611 = vst.msk [vmem:[#allocation2 + $0x370] sm:$0xff] %vm499, 0.0
      %612 = vst.msk [vmem:[#allocation2 + $0x378] sm:$0x3] %vm501, 0.0
      %613 = vst.msk [vmem:[#allocation2 + $0x380] sm:$0xff] %vm499, 0.0
      %614 = vst.msk [vmem:[#allocation2 + $0x388] sm:$0x3] %vm501, 0.0
      %615 = vst.msk [vmem:[#allocation2 + $0x390] sm:$0xff] %vm499, 0.0
      %616 = vst.msk [vmem:[#allocation2 + $0x398] sm:$0x3] %vm501, 0.0
      %617 = vst.msk [vmem:[#allocation2 + $0x3a0] sm:$0xff] %vm499, 0.0
      %618 = vst.msk [vmem:[#allocation2 + $0x3a8] sm:$0x3] %vm501, 0.0
      %619 = vst.msk [vmem:[#allocation2 + $0x3b0] sm:$0xff] %vm499, 0.0
      %620 = vst.msk [vmem:[#allocation2 + $0x3b8] sm:$0x3] %vm501, 0.0
      %621 = vst.msk [vmem:[#allocation2 + $0x3c0] sm:$0xff] %vm499, 0.0
      %622 = vst.msk [vmem:[#allocation2 + $0x3c8] sm:$0x3] %vm501, 0.0
      %623 = vst.msk [vmem:[#allocation2 + $0x3d0] sm:$0xff] %vm499, 0.0
      %624 = vst.msk [vmem:[#allocation2 + $0x3d8] sm:$0x3] %vm501, 0.0
      %625 = vst.msk [vmem:[#allocation2 + $0x3e0] sm:$0xff] %vm499, 0.0
      %626 = vst.msk [vmem:[#allocation2 + $0x3e8] sm:$0x3] %vm501, 0.0
      %627 = vst.msk [vmem:[#allocation2 + $0x3f0] sm:$0xff] %vm499, 0.0
      %628 = vst.msk [vmem:[#allocation2 + $0x3f8] sm:$0x3] %vm501, 0.0
      %629 = vst.msk [vmem:[#allocation2 + $0x400] sm:$0xff] %vm499, 0.0
      %630 = vst.msk [vmem:[#allocation2 + $0x408] sm:$0x3] %vm501, 0.0
      %631 = vst.msk [vmem:[#allocation2 + $0x410] sm:$0xff] %vm499, 0.0
      %632 = vst.msk [vmem:[#allocation2 + $0x418] sm:$0x3] %vm501, 0.0
      %633 = vst.msk [vmem:[#allocation2 + $0x420] sm:$0xff] %vm499, 0.0
      %634 = vst.msk [vmem:[#allocation2 + $0x428] sm:$0x3] %vm501, 0.0
      %635 = vst.msk [vmem:[#allocation2 + $0x430] sm:$0xff] %vm499, 0.0
      %636 = vst.msk [vmem:[#allocation2 + $0x438] sm:$0x3] %vm501, 0.0
      %637 = vst.msk [vmem:[#allocation2 + $0x440] sm:$0xff] %vm499, 0.0
      %638 = vst.msk [vmem:[#allocation2 + $0x448] sm:$0x3] %vm501, 0.0
      %639 = vst.msk [vmem:[#allocation2 + $0x450] sm:$0xff] %vm499, 0.0
      %640 = vst.msk [vmem:[#allocation2 + $0x458] sm:$0x3] %vm501, 0.0
      %641 = vst.msk [vmem:[#allocation2 + $0x460] sm:$0xff] %vm499, 0.0
      %642 = vst.msk [vmem:[#allocation2 + $0x468] sm:$0x3] %vm501, 0.0
      %643 = vst.msk [vmem:[#allocation2 + $0x470] sm:$0xff] %vm499, 0.0
      %644 = vst.msk [vmem:[#allocation2 + $0x478] sm:$0x3] %vm501, 0.0
      %645 = vst.msk [vmem:[#allocation2 + $0x480] sm:$0xff] %vm499, 0.0
      %646 = vst.msk [vmem:[#allocation2 + $0x488] sm:$0x3] %vm501, 0.0
      %647 = vst.msk [vmem:[#allocation2 + $0x490] sm:$0xff] %vm499, 0.0
      %648 = vst.msk [vmem:[#allocation2 + $0x498] sm:$0x3] %vm501, 0.0
      %649 = vst.msk [vmem:[#allocation2 + $0x4a0] sm:$0xff] %vm499, 0.0
      %650 = vst.msk [vmem:[#allocation2 + $0x4a8] sm:$0x3] %vm501, 0.0
      %651 = vst.msk [vmem:[#allocation2 + $0x4b0] sm:$0xff] %vm499, 0.0
      %652 = vst.msk [vmem:[#allocation2 + $0x4b8] sm:$0x3] %vm501, 0.0
      %653 = vst.msk [vmem:[#allocation2 + $0x4c0] sm:$0xff] %vm499, 0.0
      %654 = vst.msk [vmem:[#allocation2 + $0x4c8] sm:$0x3] %vm501, 0.0
      %655 = vst.msk [vmem:[#allocation2 + $0x4d0] sm:$0xff] %vm499, 0.0
      %656 = vst.msk [vmem:[#allocation2 + $0x4d8] sm:$0x3] %vm501, 0.0
      %657 = vst.msk [vmem:[#allocation2 + $0x4e0] sm:$0xff] %vm499, 0.0
      %658 = vst.msk [vmem:[#allocation2 + $0x4e8] sm:$0x3] %vm501, 0.0
      %659 = vst.msk [vmem:[#allocation2 + $0x4f0] sm:$0xff] %vm499, 0.0
      %660 = vst.msk [vmem:[#allocation2 + $0x4f8] sm:$0x3] %vm501, 0.0
      %661 = vst.msk [vmem:[#allocation2 + $0x500] sm:$0xff] %vm499, 0.0
      %662 = vst.msk [vmem:[#allocation2 + $0x508] sm:$0x3] %vm501, 0.0
      %663 = vst.msk [vmem:[#allocation2 + $0x510] sm:$0xff] %vm499, 0.0
      %664 = vst.msk [vmem:[#allocation2 + $0x518] sm:$0x3] %vm501, 0.0
      %665 = vst.msk [vmem:[#allocation2 + $0x520] sm:$0xff] %vm499, 0.0
      %666 = vst.msk [vmem:[#allocation2 + $0x528] sm:$0x3] %vm501, 0.0
      %667 = vst.msk [vmem:[#allocation2 + $0x530] sm:$0xff] %vm499, 0.0
      %668 = vst.msk [vmem:[#allocation2 + $0x538] sm:$0x3] %vm501, 0.0
      %669 = vst.msk [vmem:[#allocation2 + $0x540] sm:$0xff] %vm499, 0.0
      %670 = vst.msk [vmem:[#allocation2 + $0x548] sm:$0x3] %vm501, 0.0
      %671 = vst.msk [vmem:[#allocation2 + $0x550] sm:$0xff] %vm499, 0.0
      %672 = vst.msk [vmem:[#allocation2 + $0x558] sm:$0x3] %vm501, 0.0
      %673 = vst.msk [vmem:[#allocation2 + $0x560] sm:$0xff] %vm499, 0.0
      %674 = vst.msk [vmem:[#allocation2 + $0x568] sm:$0x3] %vm501, 0.0
      %675 = vst.msk [vmem:[#allocation2 + $0x570] sm:$0xff] %vm499, 0.0
      %676 = vst.msk [vmem:[#allocation2 + $0x578] sm:$0x3] %vm501, 0.0
      %677 = vst.msk [vmem:[#allocation2 + $0x580] sm:$0xff] %vm499, 0.0
      %678 = vst.msk [vmem:[#allocation2 + $0x588] sm:$0x3] %vm501, 0.0
      %679 = vst.msk [vmem:[#allocation2 + $0x590] sm:$0xff] %vm499, 0.0
      %680 = vst.msk [vmem:[#allocation2 + $0x598] sm:$0x3] %vm501, 0.0
      %681 = vst.msk [vmem:[#allocation2 + $0x5a0] sm:$0xff] %vm499, 0.0
      %682 = vst.msk [vmem:[#allocation2 + $0x5a8] sm:$0x3] %vm501, 0.0
      %683 = vst.msk [vmem:[#allocation2 + $0x5b0] sm:$0xff] %vm499, 0.0
      %684 = vst.msk [vmem:[#allocation2 + $0x5b8] sm:$0x3] %vm501, 0.0
      %685 = vst.msk [vmem:[#allocation2 + $0x5c0] sm:$0xff] %vm499, 0.0
      %686 = vst.msk [vmem:[#allocation2 + $0x5c8] sm:$0x3] %vm501, 0.0
      %687 = vst.msk [vmem:[#allocation2 + $0x5d0] sm:$0xff] %vm499, 0.0
      %688 = vst.msk [vmem:[#allocation2 + $0x5d8] sm:$0x3] %vm501, 0.0
      %689 = vst.msk [vmem:[#allocation2 + $0x5e0] sm:$0xff] %vm499, 0.0
      %690 = vst.msk [vmem:[#allocation2 + $0x5e8] sm:$0x3] %vm501, 0.0
      %691 = vst.msk [vmem:[#allocation2 + $0x5f0] sm:$0xff] %vm499, 0.0
      %692 = vst.msk [vmem:[#allocation2 + $0x5f8] sm:$0x3] %vm501, 0.0
      %693 = vst.msk [vmem:[#allocation2 + $0x600] sm:$0xff] %vm499, 0.0
      %694 = vst.msk [vmem:[#allocation2 + $0x608] sm:$0x3] %vm501, 0.0
      %695 = vst.msk [vmem:[#allocation2 + $0x610] sm:$0xff] %vm499, 0.0
      %696 = vst.msk [vmem:[#allocation2 + $0x618] sm:$0x3] %vm501, 0.0
      %697 = vst.msk [vmem:[#allocation2 + $0x620] sm:$0xff] %vm499, 0.0
      %698 = vst.msk [vmem:[#allocation2 + $0x628] sm:$0x3] %vm501, 0.0
      %699 = vst.msk [vmem:[#allocation2 + $0x630] sm:$0xff] %vm499, 0.0
      %700 = vst.msk [vmem:[#allocation2 + $0x638] sm:$0x3] %vm501, 0.0
      %v701 = vld [vmem:[%s453] sm:$0xff]
      %v702 = vld [vmem:[%s453 + $0x8] sm:$0xff]
      %v703 = vld [vmem:[%s453 + $0x10] sm:$0xff]
      %v704 = vld [vmem:[%s453 + $0x18] sm:$0xff]
      %v705 = vld [vmem:[%s453 + $0x20] sm:$0xff]
      %v706 = vld [vmem:[%s453 + $0x28] sm:$0xff]
      %v707 = vld [vmem:[%s453 + $0x30] sm:$0xff]
      %v708 = vld [vmem:[%s453 + $0x38] sm:$0xff]
      %v709 = vld [vmem:[%s453 + $0x40] sm:$0xff]
      %v710 = vld [vmem:[%s453 + $0x48] sm:$0xff]
      %v711 = vld [vmem:[%s453 + $0x50] sm:$0xff]
      %v712 = vld [vmem:[%s453 + $0x58] sm:$0xff]
      %v713 = vld [vmem:[%s453 + $0x60] sm:$0xff]
      %v714 = vld [vmem:[%s453 + $0x68] sm:$0xff]
      %v715 = vld [vmem:[%s453 + $0x70] sm:$0xff]
      %v716 = vld [vmem:[%s453 + $0x78] sm:$0xff]
      %v717 = vld [vmem:[%s453 + $0x80] sm:$0xff]
      %v718 = vld [vmem:[%s453 + $0x88] sm:$0xff]
      %v719 = vld [vmem:[%s453 + $0x90] sm:$0xff]
      %v720 = vld [vmem:[%s453 + $0x98] sm:$0xff]
      %v721 = vld [vmem:[%s453 + $0xa0] sm:$0xff]
      %v722 = vld [vmem:[%s453 + $0xa8] sm:$0xff]
      %v723 = vld [vmem:[%s453 + $0xb0] sm:$0xff]
      %v724 = vld [vmem:[%s453 + $0xb8] sm:$0xff]
      %v725 = vld [vmem:[%s453 + $0xc0] sm:$0xff]
      %v726 = vld [vmem:[%s453 + $0xc8] sm:$0xff]
      %v727 = vld [vmem:[%s453 + $0xd0] sm:$0xff]
      %v728 = vld [vmem:[%s453 + $0xd8] sm:$0xff]
      %v729 = vld [vmem:[%s453 + $0xe0] sm:$0xff]
      %v730 = vld [vmem:[%s453 + $0xe8] sm:$0xff]
      %v731 = vld [vmem:[%s453 + $0xf0] sm:$0xff]
      %v732 = vld [vmem:[%s453 + $0xf8] sm:$0xff]
      %v733 = vld [vmem:[%s453 + $0x100] sm:$0xff]
      %v734 = vld [vmem:[%s453 + $0x108] sm:$0xff]
      %v735 = vld [vmem:[%s453 + $0x110] sm:$0xff]
      %v736 = vld [vmem:[%s453 + $0x118] sm:$0xff]
      %v737 = vld [vmem:[%s453 + $0x120] sm:$0xff]
      %v738 = vld [vmem:[%s453 + $0x128] sm:$0xff]
      %v739 = vld [vmem:[%s453 + $0x130] sm:$0xff]
      %v740 = vld [vmem:[%s453 + $0x138] sm:$0xff]
      %v741 = vld [vmem:[%s453 + $0x140] sm:$0xff]
      %v742 = vld [vmem:[%s453 + $0x148] sm:$0xff]
      %v743 = vld [vmem:[%s453 + $0x150] sm:$0xff]
      %v744 = vld [vmem:[%s453 + $0x158] sm:$0xff]
      %v745 = vld [vmem:[%s453 + $0x160] sm:$0xff]
      %v746 = vld [vmem:[%s453 + $0x168] sm:$0xff]
      %v747 = vld [vmem:[%s453 + $0x170] sm:$0xff]
      %v748 = vld [vmem:[%s453 + $0x178] sm:$0xff]
      %v749 = vld [vmem:[%s453 + $0x180] sm:$0xff]
      %v750 = vld [vmem:[%s453 + $0x188] sm:$0xff]
      %v751 = vld [vmem:[%s453 + $0x190] sm:$0xff]
      %v752 = vld [vmem:[%s453 + $0x198] sm:$0xff]
      %v753 = vld [vmem:[%s453 + $0x1a0] sm:$0xff]
      %v754 = vld [vmem:[%s453 + $0x1a8] sm:$0xff]
      %v755 = vld [vmem:[%s453 + $0x1b0] sm:$0xff]
      %v756 = vld [vmem:[%s453 + $0x1b8] sm:$0xff]
      %v757 = vld [vmem:[%s453 + $0x1c0] sm:$0xff]
      %v758 = vld [vmem:[%s453 + $0x1c8] sm:$0xff]
      %v759 = vld [vmem:[%s453 + $0x1d0] sm:$0xff]
      %v760 = vld [vmem:[%s453 + $0x1d8] sm:$0xff]
      %v761 = vld [vmem:[%s453 + $0x1e0] sm:$0xff]
      %v762 = vld [vmem:[%s453 + $0x1e8] sm:$0xff]
      %v763 = vld [vmem:[%s453 + $0x1f0] sm:$0xff]
      %v764 = vld [vmem:[%s453 + $0x1f8] sm:$0xff]
      %v765 = vld [vmem:[%s3] sm:$0xf]
      %v766 = vld [vmem:[%s4] sm:$0x1]
      %v768 = vlaneseq
      %v769 = vshrl.u32 %v768, 7
      %v770 = vsub.s32 0, %v769
      %v771 = vrot.slane %v766, %v770
      %vm773 = vcmask 31744
      %v775 = vsel %vm773, %v701, 0
      %v778 = vsel %vm773, %v702, 0
      %v781 = vsel %vm773, %v703, 0
      %v784 = vsel %vm773, %v704, 0
      %v787 = vsel %vm773, %v705, 0
      %v790 = vsel %vm773, %v706, 0
      %v793 = vsel %vm773, %v707, 0
      %v796 = vsel %vm773, %v708, 0
      %v799 = vsel %vm773, %v709, 0
      %v802 = vsel %vm773, %v710, 0
      %v805 = vsel %vm773, %v711, 0
      %v808 = vsel %vm773, %v712, 0
      %v811 = vsel %vm773, %v713, 0
      %v814 = vsel %vm773, %v714, 0
      %v817 = vsel %vm773, %v715, 0
      %v820 = vsel %vm773, %v716, 0
      %v823 = vsel %vm773, %v717, 0
      %v826 = vsel %vm773, %v718, 0
      %v829 = vsel %vm773, %v719, 0
      %v832 = vsel %vm773, %v720, 0
      %v835 = vsel %vm773, %v721, 0
      %v838 = vsel %vm773, %v722, 0
      %v841 = vsel %vm773, %v723, 0
      %v844 = vsel %vm773, %v724, 0
      %v847 = vsel %vm773, %v725, 0
      %v850 = vsel %vm773, %v726, 0
      %v853 = vsel %vm773, %v727, 0
      %v856 = vsel %vm773, %v728, 0
      %v859 = vsel %vm773, %v729, 0
      %v862 = vsel %vm773, %v730, 0
      %v865 = vsel %vm773, %v731, 0
      %v868 = vsel %vm773, %v732, 0
      %v871 = vsel %vm773, %v733, 0
      %v874 = vsel %vm773, %v734, 0
      %v877 = vsel %vm773, %v735, 0
      %v880 = vsel %vm773, %v736, 0
      %v883 = vsel %vm773, %v737, 0
      %v886 = vsel %vm773, %v738, 0
      %v889 = vsel %vm773, %v739, 0
      %v892 = vsel %vm773, %v740, 0
      %v895 = vsel %vm773, %v741, 0
      %v898 = vsel %vm773, %v742, 0
      %v901 = vsel %vm773, %v743, 0
      %v904 = vsel %vm773, %v744, 0
      %v907 = vsel %vm773, %v745, 0
      %v910 = vsel %vm773, %v746, 0
      %v913 = vsel %vm773, %v747, 0
      %v916 = vsel %vm773, %v748, 0
      %v919 = vsel %vm773, %v749, 0
      %v922 = vsel %vm773, %v750, 0
      %v925 = vsel %vm773, %v751, 0
      %v928 = vsel %vm773, %v752, 0
      %v931 = vsel %vm773, %v753, 0
      %v934 = vsel %vm773, %v754, 0
      %v937 = vsel %vm773, %v755, 0
      %v940 = vsel %vm773, %v756, 0
      %v943 = vsel %vm773, %v757, 0
      %v946 = vsel %vm773, %v758, 0
      %v949 = vsel %vm773, %v759, 0
      %v952 = vsel %vm773, %v760, 0
      %v955 = vsel %vm773, %v761, 0
      %v958 = vsel %vm773, %v762, 0
      %v961 = vsel %vm773, %v763, 0
      %v964 = vsel %vm773, %v764, 0
      %vm966 = vcmask 1043456
      %v968 = vsel %vm966, %v765, 0
      %970 = vmatprep.subr.mxu0 0.0
      %971 = vmatpush1.msra.mxu0 %v968
      %972 = vmatprep.subr.mxu0 0.0
      %973 = vmatpush1.msra.mxu0 0.0
      %974 = vmatprep.subr.mxu0 0.0
      %975 = vmatpush1.msra.mxu0 0.0
      %976 = vmatprep.subr.mxu0 0.0
      %977 = vmatpush1.msra.mxu0 0.0
      %978 = vmatprep.subr.mxu0 0.0
      %979 = vmatpush1.msra.mxu0 0.0
      %980 = vmatprep.subr.mxu0 0.0
      %981 = vmatpush1.msra.mxu0 0.0
      %982 = vmatprep.subr.mxu0 0.0
      %983 = vmatpush1.msra.mxu0 0.0
      %984 = vmatprep.subr.mxu0 0.0
      %985 = vmatpush1.msra.mxu0 0.0
      %986 = vmatprep.subr.mxu0 0.0
      %987 = vmatpush1.msra.mxu0 0.0
      %988 = vmatprep.subr.mxu0 0.0
      %989 = vmatpush1.msra.mxu0 0.0
      %990 = vmatprep.subr.mxu0 0.0
      %991 = vmatpush1.msra.mxu0 0.0
      %992 = vmatprep.subr.mxu0 0.0
      %993 = vmatpush1.msra.mxu0 0.0
      %994 = vmatprep.subr.mxu0 0.0
      %995 = vmatpush1.msra.mxu0 0.0
      %996 = vmatprep.subr.mxu0 0.0
      %997 = vmatpush1.msra.mxu0 0.0
      %998 = vmatprep.subr.mxu0 0.0
      %999 = vmatpush1.msra.mxu0 0.0
      %1000 = vmatprep.subr.mxu0 0.0
      %1001 = vmatpush1.msra.mxu0 0.0
      %1002 = vmatprep.subr.mxu0 0.0
      %1003 = vmatpush1.msra.mxu0 0.0
      %1004 = vmatprep.subr.mxu0 0.0
      %1005 = vmatpush1.msra.mxu0 0.0
      %1006 = vmatprep.subr.mxu0 0.0
      %1007 = vmatpush1.msra.mxu0 0.0
      %1008 = vmatprep.subr.mxu0 0.0
      %1009 = vmatpush1.msra.mxu0 0.0
      %1010 = vmatprep.subr.mxu0 0.0
      %1011 = vmatpush1.msra.mxu0 0.0
      %1012 = vmatprep.subr.mxu0 0.0
      %1013 = vmatpush1.msra.mxu0 0.0
      %1014 = vmatprep.subr.mxu0 0.0
      %1015 = vmatpush1.msra.mxu0 0.0
      %1016 = vmatprep.subr.mxu0 0.0
      %1017 = vmatpush1.msra.mxu0 0.0
      %1018 = vmatprep.subr.mxu0 0.0
      %1019 = vmatpush1.msra.mxu0 0.0
      %1020 = vmatprep.subr.mxu0 0.0
      %1021 = vmatpush1.msra.mxu0 0.0
      %1022 = vmatprep.subr.mxu0 0.0
      %1023 = vmatpush1.msra.mxu0 0.0
      %1024 = vmatprep.subr.mxu0 0.0
      %1025 = vmatpush1.msra.mxu0 0.0
      %1026 = vmatprep.subr.mxu0 0.0
      %1027 = vmatpush1.msra.mxu0 0.0
      %1028 = vmatprep.subr.mxu0 0.0
      %1029 = vmatpush1.msra.mxu0 0.0
      %1030 = vmatprep.subr.mxu0 0.0
      %1031 = vmatpush1.msra.mxu0 0.0
      %1032 = vmatprep.subr.mxu0 0.0
      %1033 = vmatpush1.msra.mxu0 0.0
      %1034 = vmatprep.mubr.f32.mxu0 0.0
      %1035 = vmatmul.mubr.f32.gmra.mrb[0].mxu0 %v775
      %v1036 = vpop.f32.mrb[0].mxu0
      %v1037 = vadd.f32 %v771, %v1036
      %v1038 = vpop.f32.mrb[0].mxu0
      %1039 = vmatprep.mubr.f32.mxu0 0.0
      %1040 = vmatmul.mubr.f32.gmra.mrb[0].mxu0 %v778
      %v1041 = vpop.f32.mrb[0].mxu0
      %v1042 = vadd.f32 %v771, %v1041
      %v1043 = vpop.f32.mrb[0].mxu0
      %1044 = vmatprep.mubr.f32.mxu0 0.0
      %1045 = vmatmul.mubr.f32.gmra.mrb[0].mxu0 %v781
      %v1046 = vpop.f32.mrb[0].mxu0
      %v1047 = vadd.f32 %v771, %v1046
      %v1048 = vpop.f32.mrb[0].mxu0
      %1049 = vmatprep.mubr.f32.mxu0 0.0
      %1050 = vmatmul.mubr.f32.gmra.mrb[0].mxu0 %v784
      %v1051 = vpop.f32.mrb[0].mxu0
      %v1052 = vadd.f32 %v771, %v1051
      %v1053 = vpop.f32.mrb[0].mxu0
      %1054 = vmatprep.mubr.f32.mxu0 0.0
      %1055 = vmatmul.mubr.f32.gmra.mrb[0].mxu0 %v787
      %v1056 = vpop.f32.mrb[0].mxu0
      %v1057 = vadd.f32 %v771, %v1056
      %v1058 = vpop.f32.mrb[0].mxu0
      %1059 = vmatprep.mubr.f32.mxu0 0.0
      %1060 = vmatmul.mubr.f32.gmra.mrb[0].mxu0 %v790
      %v1061 = vpop.f32.mrb[0].mxu0
      %v1062 = vadd.f32 %v771, %v1061
      %v1063 = vpop.f32.mrb[0].mxu0
      %1064 = vmatprep.mubr.f32.mxu0 0.0
      %1065 = vmatmul.mubr.f32.gmra.mrb[0].mxu0 %v793
      %v1066 = vpop.f32.mrb[0].mxu0
      %v1067 = vadd.f32 %v771, %v1066
      %v1068 = vpop.f32.mrb[0].mxu0
      %1069 = vmatprep.mubr.f32.mxu0 0.0
      %1070 = vmatmul.mubr.f32.gmra.mrb[0].mxu0 %v796
      %v1071 = vpop.f32.mrb[0].mxu0
      %v1072 = vadd.f32 %v771, %v1071
      %v1073 = vpop.f32.mrb[0].mxu0
      %1074 = vmatprep.mubr.f32.mxu0 0.0
      %1075 = vmatmul.mubr.f32.gmra.mrb[0].mxu0 %v799
      %v1076 = vpop.f32.mrb[0].mxu0
      %v1077 = vadd.f32 %v771, %v1076
      %v1078 = vpop.f32.mrb[0].mxu0
      %1079 = vmatprep.mubr.f32.mxu0 0.0
      %1080 = vmatmul.mubr.f32.gmra.mrb[0].mxu0 %v802
      %v1081 = vpop.f32.mrb[0].mxu0
      %v1082 = vadd.f32 %v771, %v1081
      %v1083 = vpop.f32.mrb[0].mxu0
      %1084 = vmatprep.mubr.f32.mxu0 0.0
      %1085 = vmatmul.mubr.f32.gmra.mrb[0].mxu0 %v805
      %v1086 = vpop.f32.mrb[0].mxu0
      %v1087 = vadd.f32 %v771, %v1086
      %v1088 = vpop.f32.mrb[0].mxu0
      %1089 = vmatprep.mubr.f32.mxu0 0.0
      %1090 = vmatmul.mubr.f32.gmra.mrb[0].mxu0 %v808
      %v1091 = vpop.f32.mrb[0].mxu0
      %v1092 = vadd.f32 %v771, %v1091
      %v1093 = vpop.f32.mrb[0].mxu0
      %1094 = vmatprep.mubr.f32.mxu0 0.0
      %1095 = vmatmul.mubr.f32.gmra.mrb[0].mxu0 %v811
      %v1096 = vpop.f32.mrb[0].mxu0
      %v1097 = vadd.f32 %v771, %v1096
      %v1098 = vpop.f32.mrb[0].mxu0
      %1099 = vmatprep.mubr.f32.mxu0 0.0
      %1100 = vmatmul.mubr.f32.gmra.mrb[0].mxu0 %v814
      %v1101 = vpop.f32.mrb[0].mxu0
      %v1102 = vadd.f32 %v771, %v1101
      %v1103 = vpop.f32.mrb[0].mxu0
      %1104 = vmatprep.mubr.f32.mxu0 0.0
      %1105 = vmatmul.mubr.f32.gmra.mrb[0].mxu0 %v817
      %v1106 = vpop.f32.mrb[0].mxu0
      %v1107 = vadd.f32 %v771, %v1106
      %v1108 = vpop.f32.mrb[0].mxu0
      %1109 = vmatprep.mubr.f32.mxu0 0.0
      %1110 = vmatmul.mubr.f32.gmra.mrb[0].mxu0 %v820
      %v1111 = vpop.f32.mrb[0].mxu0
      %v1112 = vadd.f32 %v771, %v1111
      %v1113 = vpop.f32.mrb[0].mxu0
      %1114 = vmatprep.mubr.f32.mxu0 0.0
      %1115 = vmatmul.mubr.f32.gmra.mrb[0].mxu0 %v823
      %v1116 = vpop.f32.mrb[0].mxu0
      %v1117 = vadd.f32 %v771, %v1116
      %v1118 = vpop.f32.mrb[0].mxu0
      %1119 = vmatprep.mubr.f32.mxu0 0.0
      %1120 = vmatmul.mubr.f32.gmra.mrb[0].mxu0 %v826
      %v1121 = vpop.f32.mrb[0].mxu0
      %v1122 = vadd.f32 %v771, %v1121
      %v1123 = vpop.f32.mrb[0].mxu0
      %1124 = vmatprep.mubr.f32.mxu0 0.0
      %1125 = vmatmul.mubr.f32.gmra.mrb[0].mxu0 %v829
      %v1126 = vpop.f32.mrb[0].mxu0
      %v1127 = vadd.f32 %v771, %v1126
      %v1128 = vpop.f32.mrb[0].mxu0
      %1129 = vmatprep.mubr.f32.mxu0 0.0
      %1130 = vmatmul.mubr.f32.gmra.mrb[0].mxu0 %v832
      %v1131 = vpop.f32.mrb[0].mxu0
      %v1132 = vadd.f32 %v771, %v1131
      %v1133 = vpop.f32.mrb[0].mxu0
      %1134 = vmatprep.mubr.f32.mxu0 0.0
      %1135 = vmatmul.mubr.f32.gmra.mrb[0].mxu0 %v835
      %v1136 = vpop.f32.mrb[0].mxu0
      %v1137 = vadd.f32 %v771, %v1136
      %v1138 = vpop.f32.mrb[0].mxu0
      %1139 = vmatprep.mubr.f32.mxu0 0.0
      %1140 = vmatmul.mubr.f32.gmra.mrb[0].mxu0 %v838
      %v1141 = vpop.f32.mrb[0].mxu0
      %v1142 = vadd.f32 %v771, %v1141
      %v1143 = vpop.f32.mrb[0].mxu0
      %1144 = vmatprep.mubr.f32.mxu0 0.0
      %1145 = vmatmul.mubr.f32.gmra.mrb[0].mxu0 %v841
      %v1146 = vpop.f32.mrb[0].mxu0
      %v1147 = vadd.f32 %v771, %v1146
      %v1148 = vpop.f32.mrb[0].mxu0
      %1149 = vmatprep.mubr.f32.mxu0 0.0
      %1150 = vmatmul.mubr.f32.gmra.mrb[0].mxu0 %v844
      %v1151 = vpop.f32.mrb[0].mxu0
      %v1152 = vadd.f32 %v771, %v1151
      %v1153 = vpop.f32.mrb[0].mxu0
      %1154 = vmatprep.mubr.f32.mxu0 0.0
      %1155 = vmatmul.mubr.f32.gmra.mrb[0].mxu0 %v847
      %v1156 = vpop.f32.mrb[0].mxu0
      %v1157 = vadd.f32 %v771, %v1156
      %v1158 = vpop.f32.mrb[0].mxu0
      %1159 = vmatprep.mubr.f32.mxu0 0.0
      %1160 = vmatmul.mubr.f32.gmra.mrb[0].mxu0 %v850
      %v1161 = vpop.f32.mrb[0].mxu0
      %v1162 = vadd.f32 %v771, %v1161
      %v1163 = vpop.f32.mrb[0].mxu0
      %1164 = vmatprep.mubr.f32.mxu0 0.0
      %1165 = vmatmul.mubr.f32.gmra.mrb[0].mxu0 %v853
      %v1166 = vpop.f32.mrb[0].mxu0
      %v1167 = vadd.f32 %v771, %v1166
      %v1168 = vpop.f32.mrb[0].mxu0
      %1169 = vmatprep.mubr.f32.mxu0 0.0
      %1170 = vmatmul.mubr.f32.gmra.mrb[0].mxu0 %v856
      %v1171 = vpop.f32.mrb[0].mxu0
      %v1172 = vadd.f32 %v771, %v1171
      %v1173 = vpop.f32.mrb[0].mxu0
      %1174 = vmatprep.mubr.f32.mxu0 0.0
      %1175 = vmatmul.mubr.f32.gmra.mrb[0].mxu0 %v859
      %v1176 = vpop.f32.mrb[0].mxu0
      %v1177 = vadd.f32 %v771, %v1176
      %v1178 = vpop.f32.mrb[0].mxu0
      %1179 = vmatprep.mubr.f32.mxu0 0.0
      %1180 = vmatmul.mubr.f32.gmra.mrb[0].mxu0 %v862
      %v1181 = vpop.f32.mrb[0].mxu0
      %v1182 = vadd.f32 %v771, %v1181
      %v1183 = vpop.f32.mrb[0].mxu0
      %1184 = vmatprep.mubr.f32.mxu0 0.0
      %1185 = vmatmul.mubr.f32.gmra.mrb[0].mxu0 %v865
      %v1186 = vpop.f32.mrb[0].mxu0
      %v1187 = vadd.f32 %v771, %v1186
      %v1188 = vpop.f32.mrb[0].mxu0
      %1189 = vmatprep.mubr.f32.mxu0 0.0
      %1190 = vmatmul.mubr.f32.gmra.mrb[0].mxu0 %v868
      %v1191 = vpop.f32.mrb[0].mxu0
      %v1192 = vadd.f32 %v771, %v1191
      %v1193 = vpop.f32.mrb[0].mxu0
      %1194 = vmatprep.mubr.f32.mxu0 0.0
      %1195 = vmatmul.mubr.f32.gmra.mrb[0].mxu0 %v871
      %v1196 = vpop.f32.mrb[0].mxu0
      %v1197 = vadd.f32 %v771, %v1196
      %v1198 = vpop.f32.mrb[0].mxu0
      %1199 = vmatprep.mubr.f32.mxu0 0.0
      %1200 = vmatmul.mubr.f32.gmra.mrb[0].mxu0 %v874
      %v1201 = vpop.f32.mrb[0].mxu0
      %v1202 = vadd.f32 %v771, %v1201
      %v1203 = vpop.f32.mrb[0].mxu0
      %1204 = vmatprep.mubr.f32.mxu0 0.0
      %1205 = vmatmul.mubr.f32.gmra.mrb[0].mxu0 %v877
      %v1206 = vpop.f32.mrb[0].mxu0
      %v1207 = vadd.f32 %v771, %v1206
      %v1208 = vpop.f32.mrb[0].mxu0
      %1209 = vmatprep.mubr.f32.mxu0 0.0
      %1210 = vmatmul.mubr.f32.gmra.mrb[0].mxu0 %v880
      %v1211 = vpop.f32.mrb[0].mxu0
      %v1212 = vadd.f32 %v771, %v1211
      %v1213 = vpop.f32.mrb[0].mxu0
      %1214 = vmatprep.mubr.f32.mxu0 0.0
      %1215 = vmatmul.mubr.f32.gmra.mrb[0].mxu0 %v883
      %v1216 = vpop.f32.mrb[0].mxu0
      %v1217 = vadd.f32 %v771, %v1216
      %v1218 = vpop.f32.mrb[0].mxu0
      %1219 = vmatprep.mubr.f32.mxu0 0.0
      %1220 = vmatmul.mubr.f32.gmra.mrb[0].mxu0 %v886
      %v1221 = vpop.f32.mrb[0].mxu0
      %v1222 = vadd.f32 %v771, %v1221
      %v1223 = vpop.f32.mrb[0].mxu0
      %1224 = vmatprep.mubr.f32.mxu0 0.0
      %1225 = vmatmul.mubr.f32.gmra.mrb[0].mxu0 %v889
      %v1226 = vpop.f32.mrb[0].mxu0
      %v1227 = vadd.f32 %v771, %v1226
      %v1228 = vpop.f32.mrb[0].mxu0
      %1229 = vmatprep.mubr.f32.mxu0 0.0
      %1230 = vmatmul.mubr.f32.gmra.mrb[0].mxu0 %v892
      %v1231 = vpop.f32.mrb[0].mxu0
      %v1232 = vadd.f32 %v771, %v1231
      %v1233 = vpop.f32.mrb[0].mxu0
      %1234 = vmatprep.mubr.f32.mxu0 0.0
      %1235 = vmatmul.mubr.f32.gmra.mrb[0].mxu0 %v895
      %v1236 = vpop.f32.mrb[0].mxu0
      %v1237 = vadd.f32 %v771, %v1236
      %v1238 = vpop.f32.mrb[0].mxu0
      %1239 = vmatprep.mubr.f32.mxu0 0.0
      %1240 = vmatmul.mubr.f32.gmra.mrb[0].mxu0 %v898
      %v1241 = vpop.f32.mrb[0].mxu0
      %v1242 = vadd.f32 %v771, %v1241
      %v1243 = vpop.f32.mrb[0].mxu0
      %1244 = vmatprep.mubr.f32.mxu0 0.0
      %1245 = vmatmul.mubr.f32.gmra.mrb[0].mxu0 %v901
      %v1246 = vpop.f32.mrb[0].mxu0
      %v1247 = vadd.f32 %v771, %v1246
      %v1248 = vpop.f32.mrb[0].mxu0
      %1249 = vmatprep.mubr.f32.mxu0 0.0
      %1250 = vmatmul.mubr.f32.gmra.mrb[0].mxu0 %v904
      %v1251 = vpop.f32.mrb[0].mxu0
      %v1252 = vadd.f32 %v771, %v1251
      %v1253 = vpop.f32.mrb[0].mxu0
      %1254 = vmatprep.mubr.f32.mxu0 0.0
      %1255 = vmatmul.mubr.f32.gmra.mrb[0].mxu0 %v907
      %v1256 = vpop.f32.mrb[0].mxu0
      %v1257 = vadd.f32 %v771, %v1256
      %v1258 = vpop.f32.mrb[0].mxu0
      %1259 = vmatprep.mubr.f32.mxu0 0.0
      %1260 = vmatmul.mubr.f32.gmra.mrb[0].mxu0 %v910
      %v1261 = vpop.f32.mrb[0].mxu0
      %v1262 = vadd.f32 %v771, %v1261
      %v1263 = vpop.f32.mrb[0].mxu0
      %1264 = vmatprep.mubr.f32.mxu0 0.0
      %1265 = vmatmul.mubr.f32.gmra.mrb[0].mxu0 %v913
      %v1266 = vpop.f32.mrb[0].mxu0
      %v1267 = vadd.f32 %v771, %v1266
      %v1268 = vpop.f32.mrb[0].mxu0
      %1269 = vmatprep.mubr.f32.mxu0 0.0
      %1270 = vmatmul.mubr.f32.gmra.mrb[0].mxu0 %v916
      %v1271 = vpop.f32.mrb[0].mxu0
      %v1272 = vadd.f32 %v771, %v1271
      %v1273 = vpop.f32.mrb[0].mxu0
      %1274 = vmatprep.mubr.f32.mxu0 0.0
      %1275 = vmatmul.mubr.f32.gmra.mrb[0].mxu0 %v919
      %v1276 = vpop.f32.mrb[0].mxu0
      %v1277 = vadd.f32 %v771, %v1276
      %v1278 = vpop.f32.mrb[0].mxu0
      %1279 = vmatprep.mubr.f32.mxu0 0.0
      %1280 = vmatmul.mubr.f32.gmra.mrb[0].mxu0 %v922
      %v1281 = vpop.f32.mrb[0].mxu0
      %v1282 = vadd.f32 %v771, %v1281
      %v1283 = vpop.f32.mrb[0].mxu0
      %1284 = vmatprep.mubr.f32.mxu0 0.0
      %1285 = vmatmul.mubr.f32.gmra.mrb[0].mxu0 %v925
      %v1286 = vpop.f32.mrb[0].mxu0
      %v1287 = vadd.f32 %v771, %v1286
      %v1288 = vpop.f32.mrb[0].mxu0
      %1289 = vmatprep.mubr.f32.mxu0 0.0
      %1290 = vmatmul.mubr.f32.gmra.mrb[0].mxu0 %v928
      %v1291 = vpop.f32.mrb[0].mxu0
      %v1292 = vadd.f32 %v771, %v1291
      %v1293 = vpop.f32.mrb[0].mxu0
      %1294 = vmatprep.mubr.f32.mxu0 0.0
      %1295 = vmatmul.mubr.f32.gmra.mrb[0].mxu0 %v931
      %v1296 = vpop.f32.mrb[0].mxu0
      %v1297 = vadd.f32 %v771, %v1296
      %v1298 = vpop.f32.mrb[0].mxu0
      %1299 = vmatprep.mubr.f32.mxu0 0.0
      %1300 = vmatmul.mubr.f32.gmra.mrb[0].mxu0 %v934
      %v1301 = vpop.f32.mrb[0].mxu0
      %v1302 = vadd.f32 %v771, %v1301
      %v1303 = vpop.f32.mrb[0].mxu0
      %1304 = vmatprep.mubr.f32.mxu0 0.0
      %1305 = vmatmul.mubr.f32.gmra.mrb[0].mxu0 %v937
      %v1306 = vpop.f32.mrb[0].mxu0
      %v1307 = vadd.f32 %v771, %v1306
      %v1308 = vpop.f32.mrb[0].mxu0
      %1309 = vmatprep.mubr.f32.mxu0 0.0
      %1310 = vmatmul.mubr.f32.gmra.mrb[0].mxu0 %v940
      %v1311 = vpop.f32.mrb[0].mxu0
      %v1312 = vadd.f32 %v771, %v1311
      %v1313 = vpop.f32.mrb[0].mxu0
      %1314 = vmatprep.mubr.f32.mxu0 0.0
      %1315 = vmatmul.mubr.f32.gmra.mrb[0].mxu0 %v943
      %v1316 = vpop.f32.mrb[0].mxu0
      %v1317 = vadd.f32 %v771, %v1316
      %v1318 = vpop.f32.mrb[0].mxu0
      %1319 = vmatprep.mubr.f32.mxu0 0.0
      %1320 = vmatmul.mubr.f32.gmra.mrb[0].mxu0 %v946
      %v1321 = vpop.f32.mrb[0].mxu0
      %v1322 = vadd.f32 %v771, %v1321
      %v1323 = vpop.f32.mrb[0].mxu0
      %1324 = vmatprep.mubr.f32.mxu0 0.0
      %1325 = vmatmul.mubr.f32.gmra.mrb[0].mxu0 %v949
      %v1326 = vpop.f32.mrb[0].mxu0
      %v1327 = vadd.f32 %v771, %v1326
      %v1328 = vpop.f32.mrb[0].mxu0
      %1329 = vmatprep.mubr.f32.mxu0 0.0
      %1330 = vmatmul.mubr.f32.gmra.mrb[0].mxu0 %v952
      %v1331 = vpop.f32.mrb[0].mxu0
      %v1332 = vadd.f32 %v771, %v1331
      %v1333 = vpop.f32.mrb[0].mxu0
      %1334 = vmatprep.mubr.f32.mxu0 0.0
      %1335 = vmatmul.mubr.f32.gmra.mrb[0].mxu0 %v955
      %v1336 = vpop.f32.mrb[0].mxu0
      %v1337 = vadd.f32 %v771, %v1336
      %v1338 = vpop.f32.mrb[0].mxu0
      %1339 = vmatprep.mubr.f32.mxu0 0.0
      %1340 = vmatmul.mubr.f32.gmra.mrb[0].mxu0 %v958
      %v1341 = vpop.f32.mrb[0].mxu0
      %v1342 = vadd.f32 %v771, %v1341
      %v1343 = vpop.f32.mrb[0].mxu0
      %1344 = vmatprep.mubr.f32.mxu0 0.0
      %1345 = vmatmul.mubr.f32.gmra.mrb[0].mxu0 %v961
      %v1346 = vpop.f32.mrb[0].mxu0
      %v1347 = vadd.f32 %v771, %v1346
      %v1348 = vpop.f32.mrb[0].mxu0
      %1349 = vmatprep.mubr.f32.mxu0 0.0
      %1350 = vmatmul.mubr.f32.gmra.mrb[0].mxu0 %v964
      %v1351 = vpop.f32.mrb[0].mxu0
      %v1352 = vadd.f32 %v771, %v1351
      %v1353 = vpop.f32.mrb[0].mxu0
      %1354 = vdwg.mxu0
      %v1355 = vmax.f32 %v1037, 0.0
      %v1356 = vmax.f32 %v1042, 0.0
      %v1357 = vmax.f32 %v1047, 0.0
      %v1358 = vmax.f32 %v1052, 0.0
      %v1359 = vmax.f32 %v1057, 0.0
      %v1360 = vmax.f32 %v1062, 0.0
      %v1361 = vmax.f32 %v1067, 0.0
      %v1362 = vmax.f32 %v1072, 0.0
      %v1363 = vmax.f32 %v1077, 0.0
      %v1364 = vmax.f32 %v1082, 0.0
      %v1365 = vmax.f32 %v1087, 0.0
      %v1366 = vmax.f32 %v1092, 0.0
      %v1367 = vmax.f32 %v1097, 0.0
      %v1368 = vmax.f32 %v1102, 0.0
      %v1369 = vmax.f32 %v1107, 0.0
      %v1370 = vmax.f32 %v1112, 0.0
      %v1371 = vmax.f32 %v1117, 0.0
      %v1372 = vmax.f32 %v1122, 0.0
      %v1373 = vmax.f32 %v1127, 0.0
      %v1374 = vmax.f32 %v1132, 0.0
      %v1375 = vmax.f32 %v1137, 0.0
      %v1376 = vmax.f32 %v1142, 0.0
      %v1377 = vmax.f32 %v1147, 0.0
      %v1378 = vmax.f32 %v1152, 0.0
      %v1379 = vmax.f32 %v1157, 0.0
      %v1380 = vmax.f32 %v1162, 0.0
      %v1381 = vmax.f32 %v1167, 0.0
      %v1382 = vmax.f32 %v1172, 0.0
      %v1383 = vmax.f32 %v1177, 0.0
      %v1384 = vmax.f32 %v1182, 0.0
      %v1385 = vmax.f32 %v1187, 0.0
      %v1386 = vmax.f32 %v1192, 0.0
      %v1387 = vmax.f32 %v1197, 0.0
      %v1388 = vmax.f32 %v1202, 0.0
      %v1389 = vmax.f32 %v1207, 0.0
      %v1390 = vmax.f32 %v1212, 0.0
      %v1391 = vmax.f32 %v1217, 0.0
      %v1392 = vmax.f32 %v1222, 0.0
      %v1393 = vmax.f32 %v1227, 0.0
      %v1394 = vmax.f32 %v1232, 0.0
      %v1395 = vmax.f32 %v1237, 0.0
      %v1396 = vmax.f32 %v1242, 0.0
      %v1397 = vmax.f32 %v1247, 0.0
      %v1398 = vmax.f32 %v1252, 0.0
      %v1399 = vmax.f32 %v1257, 0.0
      %v1400 = vmax.f32 %v1262, 0.0
      %v1401 = vmax.f32 %v1267, 0.0
      %v1402 = vmax.f32 %v1272, 0.0
      %v1403 = vmax.f32 %v1277, 0.0
      %v1404 = vmax.f32 %v1282, 0.0
      %v1405 = vmax.f32 %v1287, 0.0
      %v1406 = vmax.f32 %v1292, 0.0
      %v1407 = vmax.f32 %v1297, 0.0
      %v1408 = vmax.f32 %v1302, 0.0
      %v1409 = vmax.f32 %v1307, 0.0
      %v1410 = vmax.f32 %v1312, 0.0
      %v1411 = vmax.f32 %v1317, 0.0
      %v1412 = vmax.f32 %v1322, 0.0
      %v1413 = vmax.f32 %v1327, 0.0
      %v1414 = vmax.f32 %v1332, 0.0
      %v1415 = vmax.f32 %v1337, 0.0
      %v1416 = vmax.f32 %v1342, 0.0
      %v1417 = vmax.f32 %v1347, 0.0
      %v1418 = vmax.f32 %v1352, 0.0
      %v1419 = vmin.f32 %v1355, 6.0
      %v1420 = vmin.f32 %v1356, 6.0
      %v1421 = vmin.f32 %v1357, 6.0
      %v1422 = vmin.f32 %v1358, 6.0
      %v1423 = vmin.f32 %v1359, 6.0
      %v1424 = vmin.f32 %v1360, 6.0
      %v1425 = vmin.f32 %v1361, 6.0
      %v1426 = vmin.f32 %v1362, 6.0
      %v1427 = vmin.f32 %v1363, 6.0
      %v1428 = vmin.f32 %v1364, 6.0
      %v1429 = vmin.f32 %v1365, 6.0
      %v1430 = vmin.f32 %v1366, 6.0
      %v1431 = vmin.f32 %v1367, 6.0
      %v1432 = vmin.f32 %v1368, 6.0
      %v1433 = vmin.f32 %v1369, 6.0
      %v1434 = vmin.f32 %v1370, 6.0
      %v1435 = vmin.f32 %v1371, 6.0
      %v1436 = vmin.f32 %v1372, 6.0
      %v1437 = vmin.f32 %v1373, 6.0
      %v1438 = vmin.f32 %v1374, 6.0
      %v1439 = vmin.f32 %v1375, 6.0
      %v1440 = vmin.f32 %v1376, 6.0
      %v1441 = vmin.f32 %v1377, 6.0
      %v1442 = vmin.f32 %v1378, 6.0
      %v1443 = vmin.f32 %v1379, 6.0
      %v1444 = vmin.f32 %v1380, 6.0
      %v1445 = vmin.f32 %v1381, 6.0
      %v1446 = vmin.f32 %v1382, 6.0
      %v1447 = vmin.f32 %v1383, 6.0
      %v1448 = vmin.f32 %v1384, 6.0
      %v1449 = vmin.f32 %v1385, 6.0
      %v1450 = vmin.f32 %v1386, 6.0
      %v1451 = vmin.f32 %v1387, 6.0
      %v1452 = vmin.f32 %v1388, 6.0
      %v1453 = vmin.f32 %v1389, 6.0
      %v1454 = vmin.f32 %v1390, 6.0
      %v1455 = vmin.f32 %v1391, 6.0
      %v1456 = vmin.f32 %v1392, 6.0
      %v1457 = vmin.f32 %v1393, 6.0
      %v1458 = vmin.f32 %v1394, 6.0
      %v1459 = vmin.f32 %v1395, 6.0
      %v1460 = vmin.f32 %v1396, 6.0
      %v1461 = vmin.f32 %v1397, 6.0
      %v1462 = vmin.f32 %v1398, 6.0
      %v1463 = vmin.f32 %v1399, 6.0
      %v1464 = vmin.f32 %v1400, 6.0
      %v1465 = vmin.f32 %v1401, 6.0
      %v1466 = vmin.f32 %v1402, 6.0
      %v1467 = vmin.f32 %v1403, 6.0
      %v1468 = vmin.f32 %v1404, 6.0
      %v1469 = vmin.f32 %v1405, 6.0
      %v1470 = vmin.f32 %v1406, 6.0
      %v1471 = vmin.f32 %v1407, 6.0
      %v1472 = vmin.f32 %v1408, 6.0
      %v1473 = vmin.f32 %v1409, 6.0
      %v1474 = vmin.f32 %v1410, 6.0
      %v1475 = vmin.f32 %v1411, 6.0
      %v1476 = vmin.f32 %v1412, 6.0
      %v1477 = vmin.f32 %v1413, 6.0
      %v1478 = vmin.f32 %v1414, 6.0
      %v1479 = vmin.f32 %v1415, 6.0
      %v1480 = vmin.f32 %v1416, 6.0
      %v1481 = vmin.f32 %v1417, 6.0
      %v1482 = vmin.f32 %v1418, 6.0
      %s1483 = scalar_lea.vmem [#allocation2], 176
      %1484 = vst.msk [vmem:[%s1483 + $0x1] sm:$0xff] %vm499, %v1419
      %1485 = vst.msk [vmem:[%s1483 + $0x11] sm:$0xff] %vm499, %v1420
      %1486 = vst.msk [vmem:[%s1483 + $0x21] sm:$0xff] %vm499, %v1421
      %1487 = vst.msk [vmem:[%s1483 + $0x31] sm:$0xff] %vm499, %v1422
      %1488 = vst.msk [vmem:[%s1483 + $0x41] sm:$0xff] %vm499, %v1423
      %1489 = vst.msk [vmem:[%s1483 + $0x51] sm:$0xff] %vm499, %v1424
      %1490 = vst.msk [vmem:[%s1483 + $0x61] sm:$0xff] %vm499, %v1425
      %1491 = vst.msk [vmem:[%s1483 + $0x71] sm:$0xff] %vm499, %v1426
      %1492 = vst.msk [vmem:[%s1483 + $0xa1] sm:$0xff] %vm499, %v1427
      %1493 = vst.msk [vmem:[%s1483 + $0xb1] sm:$0xff] %vm499, %v1428
      %1494 = vst.msk [vmem:[%s1483 + $0xc1] sm:$0xff] %vm499, %v1429
      %1495 = vst.msk [vmem:[%s1483 + $0xd1] sm:$0xff] %vm499, %v1430
      %1496 = vst.msk [vmem:[%s1483 + $0xe1] sm:$0xff] %vm499, %v1431
      %1497 = vst.msk [vmem:[%s1483 + $0xf1] sm:$0xff] %vm499, %v1432
      %1498 = vst.msk [vmem:[%s1483 + $0x101] sm:$0xff] %vm499, %v1433
      %1499 = vst.msk [vmem:[%s1483 + $0x111] sm:$0xff] %vm499, %v1434
      %1500 = vst.msk [vmem:[%s1483 + $0x141] sm:$0xff] %vm499, %v1435
      %1501 = vst.msk [vmem:[%s1483 + $0x151] sm:$0xff] %vm499, %v1436
      %1502 = vst.msk [vmem:[%s1483 + $0x161] sm:$0xff] %vm499, %v1437
      %1503 = vst.msk [vmem:[%s1483 + $0x171] sm:$0xff] %vm499, %v1438
      %1504 = vst.msk [vmem:[%s1483 + $0x181] sm:$0xff] %vm499, %v1439
      %1505 = vst.msk [vmem:[%s1483 + $0x191] sm:$0xff] %vm499, %v1440
      %1506 = vst.msk [vmem:[%s1483 + $0x1a1] sm:$0xff] %vm499, %v1441
      %1507 = vst.msk [vmem:[%s1483 + $0x1b1] sm:$0xff] %vm499, %v1442
      %1508 = vst.msk [vmem:[%s1483 + $0x1e1] sm:$0xff] %vm499, %v1443
      %1509 = vst.msk [vmem:[%s1483 + $0x1f1] sm:$0xff] %vm499, %v1444
      %1510 = vst.msk [vmem:[%s1483 + $0x201] sm:$0xff] %vm499, %v1445
      %1511 = vst.msk [vmem:[%s1483 + $0x211] sm:$0xff] %vm499, %v1446
      %1512 = vst.msk [vmem:[%s1483 + $0x221] sm:$0xff] %vm499, %v1447
      %1513 = vst.msk [vmem:[%s1483 + $0x231] sm:$0xff] %vm499, %v1448
      %1514 = vst.msk [vmem:[%s1483 + $0x241] sm:$0xff] %vm499, %v1449
      %1515 = vst.msk [vmem:[%s1483 + $0x251] sm:$0xff] %vm499, %v1450
      %1516 = vst.msk [vmem:[%s1483 + $0x281] sm:$0xff] %vm499, %v1451
      %1517 = vst.msk [vmem:[%s1483 + $0x291] sm:$0xff] %vm499, %v1452
      %1518 = vst.msk [vmem:[%s1483 + $0x2a1] sm:$0xff] %vm499, %v1453
      %1519 = vst.msk [vmem:[%s1483 + $0x2b1] sm:$0xff] %vm499, %v1454
      %1520 = vst.msk [vmem:[%s1483 + $0x2c1] sm:$0xff] %vm499, %v1455
      %1521 = vst.msk [vmem:[%s1483 + $0x2d1] sm:$0xff] %vm499, %v1456
      %1522 = vst.msk [vmem:[%s1483 + $0x2e1] sm:$0xff] %vm499, %v1457
      %1523 = vst.msk [vmem:[%s1483 + $0x2f1] sm:$0xff] %vm499, %v1458
      %1524 = vst.msk [vmem:[%s1483 + $0x321] sm:$0xff] %vm499, %v1459
      %1525 = vst.msk [vmem:[%s1483 + $0x331] sm:$0xff] %vm499, %v1460
      %1526 = vst.msk [vmem:[%s1483 + $0x341] sm:$0xff] %vm499, %v1461
      %1527 = vst.msk [vmem:[%s1483 + $0x351] sm:$0xff] %vm499, %v1462
      %1528 = vst.msk [vmem:[%s1483 + $0x361] sm:$0xff] %vm499, %v1463
      %1529 = vst.msk [vmem:[%s1483 + $0x371] sm:$0xff] %vm499, %v1464
      %1530 = vst.msk [vmem:[%s1483 + $0x381] sm:$0xff] %vm499, %v1465
      %1531 = vst.msk [vmem:[%s1483 + $0x391] sm:$0xff] %vm499, %v1466
      %1532 = vst.msk [vmem:[%s1483 + $0x3c1] sm:$0xff] %vm499, %v1467
      %1533 = vst.msk [vmem:[%s1483 + $0x3d1] sm:$0xff] %vm499, %v1468
      %1534 = vst.msk [vmem:[%s1483 + $0x3e1] sm:$0xff] %vm499, %v1469
      %1535 = vst.msk [vmem:[%s1483 + $0x3f1] sm:$0xff] %vm499, %v1470
      %1536 = vst.msk [vmem:[%s1483 + $0x401] sm:$0xff] %vm499, %v1471
      %1537 = vst.msk [vmem:[%s1483 + $0x411] sm:$0xff] %vm499, %v1472
      %1538 = vst.msk [vmem:[%s1483 + $0x421] sm:$0xff] %vm499, %v1473
      %1539 = vst.msk [vmem:[%s1483 + $0x431] sm:$0xff] %vm499, %v1474
      %1540 = vst.msk [vmem:[%s1483 + $0x461] sm:$0xff] %vm499, %v1475
      %1541 = vst.msk [vmem:[%s1483 + $0x471] sm:$0xff] %vm499, %v1476
      %1542 = vst.msk [vmem:[%s1483 + $0x481] sm:$0xff] %vm499, %v1477
      %1543 = vst.msk [vmem:[%s1483 + $0x491] sm:$0xff] %vm499, %v1478
      %1544 = vst.msk [vmem:[%s1483 + $0x4a1] sm:$0xff] %vm499, %v1479
      %1545 = vst.msk [vmem:[%s1483 + $0x4b1] sm:$0xff] %vm499, %v1480
      %1546 = vst.msk [vmem:[%s1483 + $0x4c1] sm:$0xff] %vm499, %v1481
      %1547 = vst.msk [vmem:[%s1483 + $0x4d1] sm:$0xff] %vm499, %v1482
      %p1548 = scmp.gt.s32.totalorder %s25, 0
      %v1549 = vld [vmem:[%s467] sm:$0xff]
      %v1550 = vld [vmem:[%s467 + $0x8] sm:$0xff]
      %v1551 = vld [vmem:[%s467 + $0x10] sm:$0xff]
      %v1552 = vld [vmem:[%s467 + $0x18] sm:$0xff]
      %v1553 = vld [vmem:[%s467 + $0x20] sm:$0xff]
      %v1554 = vld [vmem:[%s467 + $0x28] sm:$0xff]
      %v1555 = vld [vmem:[%s467 + $0x30] sm:$0xff]
      %v1556 = vld [vmem:[%s467 + $0x38] sm:$0xff]
      %v1557 = vld [vmem:[%s3] sm:$0xf]
      %v1558 = vld [vmem:[%s4] sm:$0x1]
      %v1560 = vlaneseq
      %v1561 = vshrl.u32 %v1560, 7
      %v1562 = vsub.s32 0, %v1561
      %v1563 = vrot.slane %v1558, %v1562
      %v1566 = vsel %vm773, %v1549, 0
      %v1569 = vsel %vm773, %v1550, 0
      %v1572 = vsel %vm773, %v1551, 0
      %v1575 = vsel %vm773, %v1552, 0
      %v1578 = vsel %vm773, %v1553, 0
      %v1581 = vsel %vm773, %v1554, 0
      %v1584 = vsel %vm773, %v1555, 0
      %v1587 = vsel %vm773, %v1556, 0
      %v1590 = vsel %vm966, %v1557, 0
      %1592 = vmatprep.subr.mxu0 0.0
      %1593 = vmatpush1.msra.mxu0 %v1590
      %1594 = vmatprep.subr.mxu0 0.0
      %1595 = vmatpush1.msra.mxu0 0.0
      %1596 = vmatprep.subr.mxu0 0.0
      %1597 = vmatpush1.msra.mxu0 0.0
      %1598 = vmatprep.subr.mxu0 0.0
      %1599 = vmatpush1.msra.mxu0 0.0
      %1600 = vmatprep.subr.mxu0 0.0
      %1601 = vmatpush1.msra.mxu0 0.0
      %1602 = vmatprep.subr.mxu0 0.0
      %1603 = vmatpush1.msra.mxu0 0.0
      %1604 = vmatprep.subr.mxu0 0.0
      %1605 = vmatpush1.msra.mxu0 0.0
      %1606 = vmatprep.subr.mxu0 0.0
      %1607 = vmatpush1.msra.mxu0 0.0
      %1608 = vmatprep.subr.mxu0 0.0
      %1609 = vmatpush1.msra.mxu0 0.0
      %1610 = vmatprep.subr.mxu0 0.0
      %1611 = vmatpush1.msra.mxu0 0.0
      %1612 = vmatprep.subr.mxu0 0.0
      %1613 = vmatpush1.msra.mxu0 0.0
      %1614 = vmatprep.subr.mxu0 0.0
      %1615 = vmatpush1.msra.mxu0 0.0
      %1616 = vmatprep.subr.mxu0 0.0
      %1617 = vmatpush1.msra.mxu0 0.0
      %1618 = vmatprep.subr.mxu0 0.0
      %1619 = vmatpush1.msra.mxu0 0.0
      %1620 = vmatprep.subr.mxu0 0.0
      %1621 = vmatpush1.msra.mxu0 0.0
      %1622 = vmatprep.subr.mxu0 0.0
      %1623 = vmatpush1.msra.mxu0 0.0
      %1624 = vmatprep.subr.mxu0 0.0
      %1625 = vmatpush1.msra.mxu0 0.0
      %1626 = vmatprep.subr.mxu0 0.0
      %1627 = vmatpush1.msra.mxu0 0.0
      %1628 = vmatprep.subr.mxu0 0.0
      %1629 = vmatpush1.msra.mxu0 0.0
      %1630 = vmatprep.subr.mxu0 0.0
      %1631 = vmatpush1.msra.mxu0 0.0
      %1632 = vmatprep.subr.mxu0 0.0
      %1633 = vmatpush1.msra.mxu0 0.0
      %1634 = vmatprep.subr.mxu0 0.0
      %1635 = vmatpush1.msra.mxu0 0.0
      %1636 = vmatprep.subr.mxu0 0.0
      %1637 = vmatpush1.msra.mxu0 0.0
      %1638 = vmatprep.subr.mxu0 0.0
      %1639 = vmatpush1.msra.mxu0 0.0
      %1640 = vmatprep.subr.mxu0 0.0
      %1641 = vmatpush1.msra.mxu0 0.0
      %1642 = vmatprep.subr.mxu0 0.0
      %1643 = vmatpush1.msra.mxu0 0.0
      %1644 = vmatprep.subr.mxu0 0.0
      %1645 = vmatpush1.msra.mxu0 0.0
      %1646 = vmatprep.subr.mxu0 0.0
      %1647 = vmatpush1.msra.mxu0 0.0
      %1648 = vmatprep.subr.mxu0 0.0
      %1649 = vmatpush1.msra.mxu0 0.0
      %1650 = vmatprep.subr.mxu0 0.0
      %1651 = vmatpush1.msra.mxu0 0.0
      %1652 = vmatprep.subr.mxu0 0.0
      %1653 = vmatpush1.msra.mxu0 0.0
      %1654 = vmatprep.subr.mxu0 0.0
      %1655 = vmatpush1.msra.mxu0 0.0
      %1656 = vmatprep.mubr.f32.mxu0 0.0
      %1657 = vmatmul.mubr.f32.gmra.mrb[0].mxu0 %v1566
      %v1658 = vpop.f32.mrb[0].mxu0
      %v1659 = vadd.f32 %v1563, %v1658
      %v1660 = vpop.f32.mrb[0].mxu0
      %1661 = vmatprep.mubr.f32.mxu0 0.0
      %1662 = vmatmul.mubr.f32.gmra.mrb[0].mxu0 %v1569
      %v1663 = vpop.f32.mrb[0].mxu0
      %v1664 = vadd.f32 %v1563, %v1663
      %v1665 = vpop.f32.mrb[0].mxu0
      %1666 = vmatprep.mubr.f32.mxu0 0.0
      %1667 = vmatmul.mubr.f32.gmra.mrb[0].mxu0 %v1572
      %v1668 = vpop.f32.mrb[0].mxu0
      %v1669 = vadd.f32 %v1563, %v1668
      %v1670 = vpop.f32.mrb[0].mxu0
      %1671 = vmatprep.mubr.f32.mxu0 0.0
      %1672 = vmatmul.mubr.f32.gmra.mrb[0].mxu0 %v1575
      %v1673 = vpop.f32.mrb[0].mxu0
      %v1674 = vadd.f32 %v1563, %v1673
      %v1675 = vpop.f32.mrb[0].mxu0
      %1676 = vmatprep.mubr.f32.mxu0 0.0
      %1677 = vmatmul.mubr.f32.gmra.mrb[0].mxu0 %v1578
      %v1678 = vpop.f32.mrb[0].mxu0
      %v1679 = vadd.f32 %v1563, %v1678
      %v1680 = vpop.f32.mrb[0].mxu0
      %1681 = vmatprep.mubr.f32.mxu0 0.0
      %1682 = vmatmul.mubr.f32.gmra.mrb[0].mxu0 %v1581
      %v1683 = vpop.f32.mrb[0].mxu0
      %v1684 = vadd.f32 %v1563, %v1683
      %v1685 = vpop.f32.mrb[0].mxu0
      %1686 = vmatprep.mubr.f32.mxu0 0.0
      %1687 = vmatmul.mubr.f32.gmra.mrb[0].mxu0 %v1584
      %v1688 = vpop.f32.mrb[0].mxu0
      %v1689 = vadd.f32 %v1563, %v1688
      %v1690 = vpop.f32.mrb[0].mxu0
      %1691 = vmatprep.mubr.f32.mxu0 0.0
      %1692 = vmatmul.mubr.f32.gmra.mrb[0].mxu0 %v1587
      %v1693 = vpop.f32.mrb[0].mxu0
      %v1694 = vadd.f32 %v1563, %v1693
      %v1695 = vpop.f32.mrb[0].mxu0
      %1696 = vdwg.mxu0
      %v1697 = vmax.f32 %v1659, 0.0
      %v1698 = vmax.f32 %v1664, 0.0
      %v1699 = vmax.f32 %v1669, 0.0
      %v1700 = vmax.f32 %v1674, 0.0
      %v1701 = vmax.f32 %v1679, 0.0
      %v1702 = vmax.f32 %v1684, 0.0
      %v1703 = vmax.f32 %v1689, 0.0
      %v1704 = vmax.f32 %v1694, 0.0
      %v1705 = vmin.f32 %v1697, 6.0
      %v1706 = vmin.f32 %v1698, 6.0
      %v1707 = vmin.f32 %v1699, 6.0
      %v1708 = vmin.f32 %v1700, 6.0
      %v1709 = vmin.f32 %v1701, 6.0
      %v1710 = vmin.f32 %v1702, 6.0
      %v1711 = vmin.f32 %v1703, 6.0
      %v1712 = vmin.f32 %v1704, 6.0
      %s1713 = scalar_select %p1548, 1, 0
      %v1714 = vstv %s1713
      %vm1715 = vcmp.eq.s32.totalorder %v1714, 1
      %v1716 = vsel %vm1715, %v1705, 0.0
      %v1717 = vsel %vm1715, %v1706, 0.0
      %v1718 = vsel %vm1715, %v1707, 0.0
      %v1719 = vsel %vm1715, %v1708, 0.0
      %v1720 = vsel %vm1715, %v1709, 0.0
      %v1721 = vsel %vm1715, %v1710, 0.0
      %v1722 = vsel %vm1715, %v1711, 0.0
      %v1723 = vsel %vm1715, %v1712, 0.0
      %s1724 = scalar_lea.vmem [#allocation2], 16
      %1725 = vst.msk [vmem:[%s1724 + $0x1] sm:$0xff] %vm499, %v1716
      %1726 = vst.msk [vmem:[%s1724 + $0x11] sm:$0xff] %vm499, %v1717
      %1727 = vst.msk [vmem:[%s1724 + $0x21] sm:$0xff] %vm499, %v1718
      %1728 = vst.msk [vmem:[%s1724 + $0x31] sm:$0xff] %vm499, %v1719
      %1729 = vst.msk [vmem:[%s1724 + $0x41] sm:$0xff] %vm499, %v1720
      %1730 = vst.msk [vmem:[%s1724 + $0x51] sm:$0xff] %vm499, %v1721
      %1731 = vst.msk [vmem:[%s1724 + $0x61] sm:$0xff] %vm499, %v1722
      %1732 = vst.msk [vmem:[%s1724 + $0x71] sm:$0xff] %vm499, %v1723
      %s1733 = sadd.s32 %s25, 1
      %s1734 = smul.u32 %s1733, 8
      %p1735 = scmp.lt.s32.totalorder %s1734, 16
      %v1736 = vld [vmem:[%s484] sm:$0xff]
      %v1737 = vld [vmem:[%s484 + $0x8] sm:$0xff]
      %v1738 = vld [vmem:[%s484 + $0x10] sm:$0xff]
      %v1739 = vld [vmem:[%s484 + $0x18] sm:$0xff]
      %v1740 = vld [vmem:[%s484 + $0x20] sm:$0xff]
      %v1741 = vld [vmem:[%s484 + $0x28] sm:$0xff]
      %v1742 = vld [vmem:[%s484 + $0x30] sm:$0xff]
      %v1743 = vld [vmem:[%s484 + $0x38] sm:$0xff]
      %v1744 = vld [vmem:[%s3] sm:$0xf]
      %v1745 = vld [vmem:[%s4] sm:$0x1]
      %v1747 = vlaneseq
      %v1748 = vshrl.u32 %v1747, 7
      %v1749 = vsub.s32 0, %v1748
      %v1750 = vrot.slane %v1745, %v1749
      %v1753 = vsel %vm773, %v1736, 0
      %v1756 = vsel %vm773, %v1737, 0
      %v1759 = vsel %vm773, %v1738, 0
      %v1762 = vsel %vm773, %v1739, 0
      %v1765 = vsel %vm773, %v1740, 0
      %v1768 = vsel %vm773, %v1741, 0
      %v1771 = vsel %vm773, %v1742, 0
      %v1774 = vsel %vm773, %v1743, 0
      %v1777 = vsel %vm966, %v1744, 0
      %1779 = vmatprep.subr.mxu0 0.0
      %1780 = vmatpush1.msra.mxu0 %v1777
      %1781 = vmatprep.subr.mxu0 0.0
      %1782 = vmatpush1.msra.mxu0 0.0
      %1783 = vmatprep.subr.mxu0 0.0
      %1784 = vmatpush1.msra.mxu0 0.0
      %1785 = vmatprep.subr.mxu0 0.0
      %1786 = vmatpush1.msra.mxu0 0.0
      %1787 = vmatprep.subr.mxu0 0.0
      %1788 = vmatpush1.msra.mxu0 0.0
      %1789 = vmatprep.subr.mxu0 0.0
      %1790 = vmatpush1.msra.mxu0 0.0
      %1791 = vmatprep.subr.mxu0 0.0
      %1792 = vmatpush1.msra.mxu0 0.0
      %1793 = vmatprep.subr.mxu0 0.0
      %1794 = vmatpush1.msra.mxu0 0.0
      %1795 = vmatprep.subr.mxu0 0.0
      %1796 = vmatpush1.msra.mxu0 0.0
      %1797 = vmatprep.subr.mxu0 0.0
      %1798 = vmatpush1.msra.mxu0 0.0
      %1799 = vmatprep.subr.mxu0 0.0
      %1800 = vmatpush1.msra.mxu0 0.0
      %1801 = vmatprep.subr.mxu0 0.0
      %1802 = vmatpush1.msra.mxu0 0.0
      %1803 = vmatprep.subr.mxu0 0.0
      %1804 = vmatpush1.msra.mxu0 0.0
      %1805 = vmatprep.subr.mxu0 0.0
      %1806 = vmatpush1.msra.mxu0 0.0
      %1807 = vmatprep.subr.mxu0 0.0
      %1808 = vmatpush1.msra.mxu0 0.0
      %1809 = vmatprep.subr.mxu0 0.0
      %1810 = vmatpush1.msra.mxu0 0.0
      %1811 = vmatprep.subr.mxu0 0.0
      %1812 = vmatpush1.msra.mxu0 0.0
      %1813 = vmatprep.subr.mxu0 0.0
      %1814 = vmatpush1.msra.mxu0 0.0
      %1815 = vmatprep.subr.mxu0 0.0
      %1816 = vmatpush1.msra.mxu0 0.0
      %1817 = vmatprep.subr.mxu0 0.0
      %1818 = vmatpush1.msra.mxu0 0.0
      %1819 = vmatprep.subr.mxu0 0.0
      %1820 = vmatpush1.msra.mxu0 0.0
      %1821 = vmatprep.subr.mxu0 0.0
      %1822 = vmatpush1.msra.mxu0 0.0
      %1823 = vmatprep.subr.mxu0 0.0
      %1824 = vmatpush1.msra.mxu0 0.0
      %1825 = vmatprep.subr.mxu0 0.0
      %1826 = vmatpush1.msra.mxu0 0.0
      %1827 = vmatprep.subr.mxu0 0.0
      %1828 = vmatpush1.msra.mxu0 0.0
      %1829 = vmatprep.subr.mxu0 0.0
      %1830 = vmatpush1.msra.mxu0 0.0
      %1831 = vmatprep.subr.mxu0 0.0
      %1832 = vmatpush1.msra.mxu0 0.0
      %1833 = vmatprep.subr.mxu0 0.0
      %1834 = vmatpush1.msra.mxu0 0.0
      %1835 = vmatprep.subr.mxu0 0.0
      %1836 = vmatpush1.msra.mxu0 0.0
      %1837 = vmatprep.subr.mxu0 0.0
      %1838 = vmatpush1.msra.mxu0 0.0
      %1839 = vmatprep.subr.mxu0 0.0
      %1840 = vmatpush1.msra.mxu0 0.0
      %1841 = vmatprep.subr.mxu0 0.0
      %1842 = vmatpush1.msra.mxu0 0.0
      %1843 = vmatprep.mubr.f32.mxu0 0.0
      %1844 = vmatmul.mubr.f32.gmra.mrb[0].mxu0 %v1753
      %v1845 = vpop.f32.mrb[0].mxu0
      %v1846 = vadd.f32 %v1750, %v1845
      %v1847 = vpop.f32.mrb[0].mxu0
      %1848 = vmatprep.mubr.f32.mxu0 0.0
      %1849 = vmatmul.mubr.f32.gmra.mrb[0].mxu0 %v1756
      %v1850 = vpop.f32.mrb[0].mxu0
      %v1851 = vadd.f32 %v1750, %v1850
      %v1852 = vpop.f32.mrb[0].mxu0
      %1853 = vmatprep.mubr.f32.mxu0 0.0
      %1854 = vmatmul.mubr.f32.gmra.mrb[0].mxu0 %v1759
      %v1855 = vpop.f32.mrb[0].mxu0
      %v1856 = vadd.f32 %v1750, %v1855
      %v1857 = vpop.f32.mrb[0].mxu0
      %1858 = vmatprep.mubr.f32.mxu0 0.0
      %1859 = vmatmul.mubr.f32.gmra.mrb[0].mxu0 %v1762
      %v1860 = vpop.f32.mrb[0].mxu0
      %v1861 = vadd.f32 %v1750, %v1860
      %v1862 = vpop.f32.mrb[0].mxu0
      %1863 = vmatprep.mubr.f32.mxu0 0.0
      %1864 = vmatmul.mubr.f32.gmra.mrb[0].mxu0 %v1765
      %v1865 = vpop.f32.mrb[0].mxu0
      %v1866 = vadd.f32 %v1750, %v1865
      %v1867 = vpop.f32.mrb[0].mxu0
      %1868 = vmatprep.mubr.f32.mxu0 0.0
      %1869 = vmatmul.mubr.f32.gmra.mrb[0].mxu0 %v1768
      %v1870 = vpop.f32.mrb[0].mxu0
      %v1871 = vadd.f32 %v1750, %v1870
      %v1872 = vpop.f32.mrb[0].mxu0
      %1873 = vmatprep.mubr.f32.mxu0 0.0
      %1874 = vmatmul.mubr.f32.gmra.mrb[0].mxu0 %v1771
      %v1875 = vpop.f32.mrb[0].mxu0
      %v1876 = vadd.f32 %v1750, %v1875
      %v1877 = vpop.f32.mrb[0].mxu0
      %1878 = vmatprep.mubr.f32.mxu0 0.0
      %1879 = vmatmul.mubr.f32.gmra.mrb[0].mxu0 %v1774
      %v1880 = vpop.f32.mrb[0].mxu0
      %v1881 = vadd.f32 %v1750, %v1880
      %v1882 = vpop.f32.mrb[0].mxu0
      %1883 = vdwg.mxu0
      %v1884 = vmax.f32 %v1846, 0.0
      %v1885 = vmax.f32 %v1851, 0.0
      %v1886 = vmax.f32 %v1856, 0.0
      %v1887 = vmax.f32 %v1861, 0.0
      %v1888 = vmax.f32 %v1866, 0.0
      %v1889 = vmax.f32 %v1871, 0.0
      %v1890 = vmax.f32 %v1876, 0.0
      %v1891 = vmax.f32 %v1881, 0.0
      %v1892 = vmin.f32 %v1884, 6.0
      %v1893 = vmin.f32 %v1885, 6.0
      %v1894 = vmin.f32 %v1886, 6.0
      %v1895 = vmin.f32 %v1887, 6.0
      %v1896 = vmin.f32 %v1888, 6.0
      %v1897 = vmin.f32 %v1889, 6.0
      %v1898 = vmin.f32 %v1890, 6.0
      %v1899 = vmin.f32 %v1891, 6.0
      %s1900 = scalar_select %p1735, 1, 0
      %v1901 = vstv %s1900
      %vm1902 = vcmp.eq.s32.totalorder %v1901, 1
      %v1903 = vsel %vm1902, %v1892, 0.0
      %v1904 = vsel %vm1902, %v1893, 0.0
      %v1905 = vsel %vm1902, %v1894, 0.0
      %v1906 = vsel %vm1902, %v1895, 0.0
      %v1907 = vsel %vm1902, %v1896, 0.0
      %v1908 = vsel %vm1902, %v1897, 0.0
      %v1909 = vsel %vm1902, %v1898, 0.0
      %v1910 = vsel %vm1902, %v1899, 0.0
      %s1911 = scalar_lea.vmem [#allocation2], 1456
      %1912 = vst.msk [vmem:[%s1911 + $0x1] sm:$0xff] %vm499, %v1903
      %1913 = vst.msk [vmem:[%s1911 + $0x11] sm:$0xff] %vm499, %v1904
      %1914 = vst.msk [vmem:[%s1911 + $0x21] sm:$0xff] %vm499, %v1905
      %1915 = vst.msk [vmem:[%s1911 + $0x31] sm:$0xff] %vm499, %v1906
      %1916 = vst.msk [vmem:[%s1911 + $0x41] sm:$0xff] %vm499, %v1907
      %1917 = vst.msk [vmem:[%s1911 + $0x51] sm:$0xff] %vm499, %v1908
      %1918 = vst.msk [vmem:[%s1911 + $0x61] sm:$0xff] %vm499, %v1909
      %1919 = vst.msk [vmem:[%s1911 + $0x71] sm:$0xff] %vm499, %v1910
      %v1920 = vld [vmem:[#allocation2] sm:$0xff]
      %v1921 = vld [vmem:[#allocation2 + $0x10] sm:$0xff]
      %v1922 = vld [vmem:[#allocation2 + $0x20] sm:$0xff]
      %v1923 = vld [vmem:[#allocation2 + $0x30] sm:$0xff]
      %v1924 = vld [vmem:[#allocation2 + $0x40] sm:$0xff]
      %v1925 = vld [vmem:[#allocation2 + $0x50] sm:$0xff]
      %v1926 = vld [vmem:[#allocation2 + $0x60] sm:$0xff]
      %v1927 = vld [vmem:[#allocation2 + $0x70] sm:$0xff]
      %v1928 = vld [vmem:[#allocation2 + $0xa0] sm:$0xff]
      %v1929 = vld [vmem:[#allocation2 + $0xb0] sm:$0xff]
      %v1930 = vld [vmem:[#allocation2 + $0xc0] sm:$0xff]
      %v1931 = vld [vmem:[#allocation2 + $0xd0] sm:$0xff]
      %v1932 = vld [vmem:[#allocation2 + $0xe0] sm:$0xff]
      %v1933 = vld [vmem:[#allocation2 + $0xf0] sm:$0xff]
      %v1934 = vld [vmem:[#allocation2 + $0x100] sm:$0xff]
      %v1935 = vld [vmem:[#allocation2 + $0x110] sm:$0xff]
      %v1936 = vld [vmem:[#allocation2 + $0x140] sm:$0xff]
      %v1937 = vld [vmem:[#allocation2 + $0x150] sm:$0xff]
      %v1938 = vld [vmem:[#allocation2 + $0x160] sm:$0xff]
      %v1939 = vld [vmem:[#allocation2 + $0x170] sm:$0xff]
      %v1940 = vld [vmem:[#allocation2 + $0x180] sm:$0xff]
      %v1941 = vld [vmem:[#allocation2 + $0x190] sm:$0xff]
      %v1942 = vld [vmem:[#allocation2 + $0x1a0] sm:$0xff]
      %v1943 = vld [vmem:[#allocation2 + $0x1b0] sm:$0xff]
      %v1944 = vld [vmem:[#allocation2 + $0x1e0] sm:$0xff]
      %v1945 = vld [vmem:[#allocation2 + $0x1f0] sm:$0xff]
      %v1946 = vld [vmem:[#allocation2 + $0x200] sm:$0xff]
      %v1947 = vld [vmem:[#allocation2 + $0x210] sm:$0xff]
      %v1948 = vld [vmem:[#allocation2 + $0x220] sm:$0xff]
      %v1949 = vld [vmem:[#allocation2 + $0x230] sm:$0xff]
      %v1950 = vld [vmem:[#allocation2 + $0x240] sm:$0xff]
      %v1951 = vld [vmem:[#allocation2 + $0x250] sm:$0xff]
      %v1952 = vld [vmem:[#allocation2 + $0x280] sm:$0xff]
      %v1953 = vld [vmem:[#allocation2 + $0x290] sm:$0xff]
      %v1954 = vld [vmem:[#allocation2 + $0x2a0] sm:$0xff]
      %v1955 = vld [vmem:[#allocation2 + $0x2b0] sm:$0xff]
      %v1956 = vld [vmem:[#allocation2 + $0x2c0] sm:$0xff]
      %v1957 = vld [vmem:[#allocation2 + $0x2d0] sm:$0xff]
      %v1958 = vld [vmem:[#allocation2 + $0x2e0] sm:$0xff]
      %v1959 = vld [vmem:[#allocation2 + $0x2f0] sm:$0xff]
      %v1960 = vld [vmem:[#allocation2 + $0x320] sm:$0xff]
      %v1961 = vld [vmem:[#allocation2 + $0x330] sm:$0xff]
      %v1962 = vld [vmem:[#allocation2 + $0x340] sm:$0xff]
      %v1963 = vld [vmem:[#allocation2 + $0x350] sm:$0xff]
      %v1964 = vld [vmem:[#allocation2 + $0x360] sm:$0xff]
      %v1965 = vld [vmem:[#allocation2 + $0x370] sm:$0xff]
      %v1966 = vld [vmem:[#allocation2 + $0x380] sm:$0xff]
      %v1967 = vld [vmem:[#allocation2 + $0x390] sm:$0xff]
      %v1968 = vld [vmem:[#allocation2 + $0x3c0] sm:$0xff]
      %v1969 = vld [vmem:[#allocation2 + $0x3d0] sm:$0xff]
      %v1970 = vld [vmem:[#allocation2 + $0x3e0] sm:$0xff]
      %v1971 = vld [vmem:[#allocation2 + $0x3f0] sm:$0xff]
      %v1972 = vld [vmem:[#allocation2 + $0x400] sm:$0xff]
      %v1973 = vld [vmem:[#allocation2 + $0x410] sm:$0xff]
      %v1974 = vld [vmem:[#allocation2 + $0x420] sm:$0xff]
      %v1975 = vld [vmem:[#allocation2 + $0x430] sm:$0xff]
      %v1976 = vld [vmem:[#allocation2 + $0x460] sm:$0xff]
      %v1977 = vld [vmem:[#allocation2 + $0x470] sm:$0xff]
      %v1978 = vld [vmem:[#allocation2 + $0x480] sm:$0xff]
      %v1979 = vld [vmem:[#allocation2 + $0x490] sm:$0xff]
      %v1980 = vld [vmem:[#allocation2 + $0x4a0] sm:$0xff]
      %v1981 = vld [vmem:[#allocation2 + $0x4b0] sm:$0xff]
      %v1982 = vld [vmem:[#allocation2 + $0x4c0] sm:$0xff]
      %v1983 = vld [vmem:[#allocation2 + $0x4d0] sm:$0xff]
      %v1984 = vld [vmem:[%s5] sm:$0x1]
      %v1985 = vlaneseq
      %v1986 = vshrl.u32 %v1985, 7
      %v1987 = vsub.s32 0, %v1986
      %v1988 = vrot.slane %v1984, %v1987
      %v1989 = vmul.f32 %v1920, %v1988
      %v1990 = vmul.f32 %v1921, %v1988
      %v1991 = vmul.f32 %v1922, %v1988
      %v1992 = vmul.f32 %v1923, %v1988
      %v1993 = vmul.f32 %v1924, %v1988
      %v1994 = vmul.f32 %v1925, %v1988
      %v1995 = vmul.f32 %v1926, %v1988
      %v1996 = vmul.f32 %v1927, %v1988
      %v1997 = vmul.f32 %v1928, %v1988
      %v1998 = vmul.f32 %v1929, %v1988
      %v1999 = vmul.f32 %v1930, %v1988
      %v2000 = vmul.f32 %v1931, %v1988
      %v2001 = vmul.f32 %v1932, %v1988
      %v2002 = vmul.f32 %v1933, %v1988
      %v2003 = vmul.f32 %v1934, %v1988
      %v2004 = vmul.f32 %v1935, %v1988
      %v2005 = vmul.f32 %v1936, %v1988
      %v2006 = vmul.f32 %v1937, %v1988
      %v2007 = vmul.f32 %v1938, %v1988
      %v2008 = vmul.f32 %v1939, %v1988
      %v2009 = vmul.f32 %v1940, %v1988
      %v2010 = vmul.f32 %v1941, %v1988
      %v2011 = vmul.f32 %v1942, %v1988
      %v2012 = vmul.f32 %v1943, %v1988
      %v2013 = vmul.f32 %v1944, %v1988
      %v2014 = vmul.f32 %v1945, %v1988
      %v2015 = vmul.f32 %v1946, %v1988
      %v2016 = vmul.f32 %v1947, %v1988
      %v2017 = vmul.f32 %v1948, %v1988
      %v2018 = vmul.f32 %v1949, %v1988
      %v2019 = vmul.f32 %v1950, %v1988
      %v2020 = vmul.f32 %v1951, %v1988
      %v2021 = vmul.f32 %v1952, %v1988
      %v2022 = vmul.f32 %v1953, %v1988
      %v2023 = vmul.f32 %v1954, %v1988
      %v2024 = vmul.f32 %v1955, %v1988
      %v2025 = vmul.f32 %v1956, %v1988
      %v2026 = vmul.f32 %v1957, %v1988
      %v2027 = vmul.f32 %v1958, %v1988
      %v2028 = vmul.f32 %v1959, %v1988
      %v2029 = vmul.f32 %v1960, %v1988
      %v2030 = vmul.f32 %v1961, %v1988
      %v2031 = vmul.f32 %v1962, %v1988
      %v2032 = vmul.f32 %v1963, %v1988
      %v2033 = vmul.f32 %v1964, %v1988
      %v2034 = vmul.f32 %v1965, %v1988
      %v2035 = vmul.f32 %v1966, %v1988
      %v2036 = vmul.f32 %v1967, %v1988
      %v2037 = vmul.f32 %v1968, %v1988
      %v2038 = vmul.f32 %v1969, %v1988
      %v2039 = vmul.f32 %v1970, %v1988
      %v2040 = vmul.f32 %v1971, %v1988
      %v2041 = vmul.f32 %v1972, %v1988
      %v2042 = vmul.f32 %v1973, %v1988
      %v2043 = vmul.f32 %v1974, %v1988
      %v2044 = vmul.f32 %v1975, %v1988
      %v2045 = vmul.f32 %v1976, %v1988
      %v2046 = vmul.f32 %v1977, %v1988
      %v2047 = vmul.f32 %v1978, %v1988
      %v2048 = vmul.f32 %v1979, %v1988
      %v2049 = vmul.f32 %v1980, %v1988
      %v2050 = vmul.f32 %v1981, %v1988
      %v2051 = vmul.f32 %v1982, %v1988
      %v2052 = vmul.f32 %v1983, %v1988
      %v2053 = vadd.f32 %v1989, 0.0
      %v2054 = vadd.f32 %v1990, 0.0
      %v2055 = vadd.f32 %v1991, 0.0
      %v2056 = vadd.f32 %v1992, 0.0
      %v2057 = vadd.f32 %v1993, 0.0
      %v2058 = vadd.f32 %v1994, 0.0
      %v2059 = vadd.f32 %v1995, 0.0
      %v2060 = vadd.f32 %v1996, 0.0
      %v2061 = vadd.f32 %v1997, 0.0
      %v2062 = vadd.f32 %v1998, 0.0
      %v2063 = vadd.f32 %v1999, 0.0
      %v2064 = vadd.f32 %v2000, 0.0
      %v2065 = vadd.f32 %v2001, 0.0
      %v2066 = vadd.f32 %v2002, 0.0
      %v2067 = vadd.f32 %v2003, 0.0
      %v2068 = vadd.f32 %v2004, 0.0
      %v2069 = vadd.f32 %v2005, 0.0
      %v2070 = vadd.f32 %v2006, 0.0
      %v2071 = vadd.f32 %v2007, 0.0
      %v2072 = vadd.f32 %v2008, 0.0
      %v2073 = vadd.f32 %v2009, 0.0
      %v2074 = vadd.f32 %v2010, 0.0
      %v2075 = vadd.f32 %v2011, 0.0
      %v2076 = vadd.f32 %v2012, 0.0
      %v2077 = vadd.f32 %v2013, 0.0
      %v2078 = vadd.f32 %v2014, 0.0
      %v2079 = vadd.f32 %v2015, 0.0
      %v2080 = vadd.f32 %v2016, 0.0
      %v2081 = vadd.f32 %v2017, 0.0
      %v2082 = vadd.f32 %v2018, 0.0
      %v2083 = vadd.f32 %v2019, 0.0
      %v2084 = vadd.f32 %v2020, 0.0
      %v2085 = vadd.f32 %v2021, 0.0
      %v2086 = vadd.f32 %v2022, 0.0
      %v2087 = vadd.f32 %v2023, 0.0
      %v2088 = vadd.f32 %v2024, 0.0
      %v2089 = vadd.f32 %v2025, 0.0
      %v2090 = vadd.f32 %v2026, 0.0
      %v2091 = vadd.f32 %v2027, 0.0
      %v2092 = vadd.f32 %v2028, 0.0
      %v2093 = vadd.f32 %v2029, 0.0
      %v2094 = vadd.f32 %v2030, 0.0
      %v2095 = vadd.f32 %v2031, 0.0
      %v2096 = vadd.f32 %v2032, 0.0
      %v2097 = vadd.f32 %v2033, 0.0
      %v2098 = vadd.f32 %v2034, 0.0
      %v2099 = vadd.f32 %v2035, 0.0
      %v2100 = vadd.f32 %v2036, 0.0
      %v2101 = vadd.f32 %v2037, 0.0
      %v2102 = vadd.f32 %v2038, 0.0
      %v2103 = vadd.f32 %v2039, 0.0
      %v2104 = vadd.f32 %v2040, 0.0
      %v2105 = vadd.f32 %v2041, 0.0
      %v2106 = vadd.f32 %v2042, 0.0
      %v2107 = vadd.f32 %v2043, 0.0
      %v2108 = vadd.f32 %v2044, 0.0
      %v2109 = vadd.f32 %v2045, 0.0
      %v2110 = vadd.f32 %v2046, 0.0
      %v2111 = vadd.f32 %v2047, 0.0
      %v2112 = vadd.f32 %v2048, 0.0
      %v2113 = vadd.f32 %v2049, 0.0
      %v2114 = vadd.f32 %v2050, 0.0
      %v2115 = vadd.f32 %v2051, 0.0
      %v2116 = vadd.f32 %v2052, 0.0
      %v2117 = vld [vmem:[#allocation2 + $0x1] sm:$0xff]
      %v2118 = vld [vmem:[#allocation2 + $0x11] sm:$0xff]
      %v2119 = vld [vmem:[#allocation2 + $0x21] sm:$0xff]
      %v2120 = vld [vmem:[#allocation2 + $0x31] sm:$0xff]
      %v2121 = vld [vmem:[#allocation2 + $0x41] sm:$0xff]
      %v2122 = vld [vmem:[#allocation2 + $0x51] sm:$0xff]
      %v2123 = vld [vmem:[#allocation2 + $0x61] sm:$0xff]
      %v2124 = vld [vmem:[#allocation2 + $0x71] sm:$0xff]
      %v2125 = vld [vmem:[#allocation2 + $0xa1] sm:$0xff]
      %v2126 = vld [vmem:[#allocation2 + $0xb1] sm:$0xff]
      %v2127 = vld [vmem:[#allocation2 + $0xc1] sm:$0xff]
      %v2128 = vld [vmem:[#allocation2 + $0xd1] sm:$0xff]
      %v2129 = vld [vmem:[#allocation2 + $0xe1] sm:$0xff]
      %v2130 = vld [vmem:[#allocation2 + $0xf1] sm:$0xff]
      %v2131 = vld [vmem:[#allocation2 + $0x101] sm:$0xff]
      %v2132 = vld [vmem:[#allocation2 + $0x111] sm:$0xff]
      %v2133 = vld [vmem:[#allocation2 + $0x141] sm:$0xff]
      %v2134 = vld [vmem:[#allocation2 + $0x151] sm:$0xff]
      %v2135 = vld [vmem:[#allocation2 + $0x161] sm:$0xff]
      %v2136 = vld [vmem:[#allocation2 + $0x171] sm:$0xff]
      %v2137 = vld [vmem:[#allocation2 + $0x181] sm:$0xff]
      %v2138 = vld [vmem:[#allocation2 + $0x191] sm:$0xff]
      %v2139 = vld [vmem:[#allocation2 + $0x1a1] sm:$0xff]
      %v2140 = vld [vmem:[#allocation2 + $0x1b1] sm:$0xff]
      %v2141 = vld [vmem:[#allocation2 + $0x1e1] sm:$0xff]
      %v2142 = vld [vmem:[#allocation2 + $0x1f1] sm:$0xff]
      %v2143 = vld [vmem:[#allocation2 + $0x201] sm:$0xff]
      %v2144 = vld [vmem:[#allocation2 + $0x211] sm:$0xff]
      %v2145 = vld [vmem:[#allocation2 + $0x221] sm:$0xff]
      %v2146 = vld [vmem:[#allocation2 + $0x231] sm:$0xff]
      %v2147 = vld [vmem:[#allocation2 + $0x241] sm:$0xff]
      %v2148 = vld [vmem:[#allocation2 + $0x251] sm:$0xff]
      %v2149 = vld [vmem:[#allocation2 + $0x281] sm:$0xff]
      %v2150 = vld [vmem:[#allocation2 + $0x291] sm:$0xff]
      %v2151 = vld [vmem:[#allocation2 + $0x2a1] sm:$0xff]
      %v2152 = vld [vmem:[#allocation2 + $0x2b1] sm:$0xff]
      %v2153 = vld [vmem:[#allocation2 + $0x2c1] sm:$0xff]
      %v2154 = vld [vmem:[#allocation2 + $0x2d1] sm:$0xff]
      %v2155 = vld [vmem:[#allocation2 + $0x2e1] sm:$0xff]
      %v2156 = vld [vmem:[#allocation2 + $0x2f1] sm:$0xff]
      %v2157 = vld [vmem:[#allocation2 + $0x321] sm:$0xff]
      %v2158 = vld [vmem:[#allocation2 + $0x331] sm:$0xff]
      %v2159 = vld [vmem:[#allocation2 + $0x341] sm:$0xff]
      %v2160 = vld [vmem:[#allocation2 + $0x351] sm:$0xff]
      %v2161 = vld [vmem:[#allocation2 + $0x361] sm:$0xff]
      %v2162 = vld [vmem:[#allocation2 + $0x371] sm:$0xff]
      %v2163 = vld [vmem:[#allocation2 + $0x381] sm:$0xff]
      %v2164 = vld [vmem:[#allocation2 + $0x391] sm:$0xff]
      %v2165 = vld [vmem:[#allocation2 + $0x3c1] sm:$0xff]
      %v2166 = vld [vmem:[#allocation2 + $0x3d1] sm:$0xff]
      %v2167 = vld [vmem:[#allocation2 + $0x3e1] sm:$0xff]
      %v2168 = vld [vmem:[#allocation2 + $0x3f1] sm:$0xff]
      %v2169 = vld [vmem:[#allocation2 + $0x401] sm:$0xff]
      %v2170 = vld [vmem:[#allocation2 + $0x411] sm:$0xff]
      %v2171 = vld [vmem:[#allocation2 + $0x421] sm:$0xff]
      %v2172 = vld [vmem:[#allocation2 + $0x431] sm:$0xff]
      %v2173 = vld [vmem:[#allocation2 + $0x461] sm:$0xff]
      %v2174 = vld [vmem:[#allocation2 + $0x471] sm:$0xff]
      %v2175 = vld [vmem:[#allocation2 + $0x481] sm:$0xff]
      %v2176 = vld [vmem:[#allocation2 + $0x491] sm:$0xff]
      %v2177 = vld [vmem:[#allocation2 + $0x4a1] sm:$0xff]
      %v2178 = vld [vmem:[#allocation2 + $0x4b1] sm:$0xff]
      %v2179 = vld [vmem:[#allocation2 + $0x4c1] sm:$0xff]
      %v2180 = vld [vmem:[#allocation2 + $0x4d1] sm:$0xff]
      %v2181 = vld [vmem:[%s5 + $0x1] sm:$0x1]
      %v2182 = vlaneseq
      %v2183 = vshrl.u32 %v2182, 7
      %v2184 = vsub.s32 0, %v2183
      %v2185 = vrot.slane %v2181, %v2184
      %v2186 = vmul.f32 %v2117, %v2185
      %v2187 = vmul.f32 %v2118, %v2185
      %v2188 = vmul.f32 %v2119, %v2185
      %v2189 = vmul.f32 %v2120, %v2185
      %v2190 = vmul.f32 %v2121, %v2185
      %v2191 = vmul.f32 %v2122, %v2185
      %v2192 = vmul.f32 %v2123, %v2185
      %v2193 = vmul.f32 %v2124, %v2185
      %v2194 = vmul.f32 %v2125, %v2185
      %v2195 = vmul.f32 %v2126, %v2185
      %v2196 = vmul.f32 %v2127, %v2185
      %v2197 = vmul.f32 %v2128, %v2185
      %v2198 = vmul.f32 %v2129, %v2185
      %v2199 = vmul.f32 %v2130, %v2185
      %v2200 = vmul.f32 %v2131, %v2185
      %v2201 = vmul.f32 %v2132, %v2185
      %v2202 = vmul.f32 %v2133, %v2185
      %v2203 = vmul.f32 %v2134, %v2185
      %v2204 = vmul.f32 %v2135, %v2185
      %v2205 = vmul.f32 %v2136, %v2185
      %v2206 = vmul.f32 %v2137, %v2185
      %v2207 = vmul.f32 %v2138, %v2185
      %v2208 = vmul.f32 %v2139, %v2185
      %v2209 = vmul.f32 %v2140, %v2185
      %v2210 = vmul.f32 %v2141, %v2185
      %v2211 = vmul.f32 %v2142, %v2185
      %v2212 = vmul.f32 %v2143, %v2185
      %v2213 = vmul.f32 %v2144, %v2185
      %v2214 = vmul.f32 %v2145, %v2185
      %v2215 = vmul.f32 %v2146, %v2185
      %v2216 = vmul.f32 %v2147, %v2185
      %v2217 = vmul.f32 %v2148, %v2185
      %v2218 = vmul.f32 %v2149, %v2185
      %v2219 = vmul.f32 %v2150, %v2185
      %v2220 = vmul.f32 %v2151, %v2185
      %v2221 = vmul.f32 %v2152, %v2185
      %v2222 = vmul.f32 %v2153, %v2185
      %v2223 = vmul.f32 %v2154, %v2185
      %v2224 = vmul.f32 %v2155, %v2185
      %v2225 = vmul.f32 %v2156, %v2185
      %v2226 = vmul.f32 %v2157, %v2185
      %v2227 = vmul.f32 %v2158, %v2185
      %v2228 = vmul.f32 %v2159, %v2185
      %v2229 = vmul.f32 %v2160, %v2185
      %v2230 = vmul.f32 %v2161, %v2185
      %v2231 = vmul.f32 %v2162, %v2185
      %v2232 = vmul.f32 %v2163, %v2185
      %v2233 = vmul.f32 %v2164, %v2185
      %v2234 = vmul.f32 %v2165, %v2185
      %v2235 = vmul.f32 %v2166, %v2185
      %v2236 = vmul.f32 %v2167, %v2185
      %v2237 = vmul.f32 %v2168, %v2185
      %v2238 = vmul.f32 %v2169, %v2185
      %v2239 = vmul.f32 %v2170, %v2185
      %v2240 = vmul.f32 %v2171, %v2185
      %v2241 = vmul.f32 %v2172, %v2185
      %v2242 = vmul.f32 %v2173, %v2185
      %v2243 = vmul.f32 %v2174, %v2185
      %v2244 = vmul.f32 %v2175, %v2185
      %v2245 = vmul.f32 %v2176, %v2185
      %v2246 = vmul.f32 %v2177, %v2185
      %v2247 = vmul.f32 %v2178, %v2185
      %v2248 = vmul.f32 %v2179, %v2185
      %v2249 = vmul.f32 %v2180, %v2185
      %v2250 = vadd.f32 %v2053, %v2186
      %v2251 = vadd.f32 %v2054, %v2187
      %v2252 = vadd.f32 %v2055, %v2188
      %v2253 = vadd.f32 %v2056, %v2189
      %v2254 = vadd.f32 %v2057, %v2190
      %v2255 = vadd.f32 %v2058, %v2191
      %v2256 = vadd.f32 %v2059, %v2192
      %v2257 = vadd.f32 %v2060, %v2193
      %v2258 = vadd.f32 %v2061, %v2194
      %v2259 = vadd.f32 %v2062, %v2195
      %v2260 = vadd.f32 %v2063, %v2196
      %v2261 = vadd.f32 %v2064, %v2197
      %v2262 = vadd.f32 %v2065, %v2198
      %v2263 = vadd.f32 %v2066, %v2199
      %v2264 = vadd.f32 %v2067, %v2200
      %v2265 = vadd.f32 %v2068, %v2201
      %v2266 = vadd.f32 %v2069, %v2202
      %v2267 = vadd.f32 %v2070, %v2203
      %v2268 = vadd.f32 %v2071, %v2204
      %v2269 = vadd.f32 %v2072, %v2205
      %v2270 = vadd.f32 %v2073, %v2206
      %v2271 = vadd.f32 %v2074, %v2207
      %v2272 = vadd.f32 %v2075, %v2208
      %v2273 = vadd.f32 %v2076, %v2209
      %v2274 = vadd.f32 %v2077, %v2210
      %v2275 = vadd.f32 %v2078, %v2211
      %v2276 = vadd.f32 %v2079, %v2212
      %v2277 = vadd.f32 %v2080, %v2213
      %v2278 = vadd.f32 %v2081, %v2214
      %v2279 = vadd.f32 %v2082, %v2215
      %v2280 = vadd.f32 %v2083, %v2216
      %v2281 = vadd.f32 %v2084, %v2217
      %v2282 = vadd.f32 %v2085, %v2218
      %v2283 = vadd.f32 %v2086, %v2219
      %v2284 = vadd.f32 %v2087, %v2220
      %v2285 = vadd.f32 %v2088, %v2221
      %v2286 = vadd.f32 %v2089, %v2222
      %v2287 = vadd.f32 %v2090, %v2223
      %v2288 = vadd.f32 %v2091, %v2224
      %v2289 = vadd.f32 %v2092, %v2225
      %v2290 = vadd.f32 %v2093, %v2226
      %v2291 = vadd.f32 %v2094, %v2227
      %v2292 = vadd.f32 %v2095, %v2228
      %v2293 = vadd.f32 %v2096, %v2229
      %v2294 = vadd.f32 %v2097, %v2230
      %v2295 = vadd.f32 %v2098, %v2231
      %v2296 = vadd.f32 %v2099, %v2232
      %v2297 = vadd.f32 %v2100, %v2233
      %v2298 = vadd.f32 %v2101, %v2234
      %v2299 = vadd.f32 %v2102, %v2235
      %v2300 = vadd.f32 %v2103, %v2236
      %v2301 = vadd.f32 %v2104, %v2237
      %v2302 = vadd.f32 %v2105, %v2238
      %v2303 = vadd.f32 %v2106, %v2239
      %v2304 = vadd.f32 %v2107, %v2240
      %v2305 = vadd.f32 %v2108, %v2241
      %v2306 = vadd.f32 %v2109, %v2242
      %v2307 = vadd.f32 %v2110, %v2243
      %v2308 = vadd.f32 %v2111, %v2244
      %v2309 = vadd.f32 %v2112, %v2245
      %v2310 = vadd.f32 %v2113, %v2246
      %v2311 = vadd.f32 %v2114, %v2247
      %v2312 = vadd.f32 %v2115, %v2248
      %v2313 = vadd.f32 %v2116, %v2249
      %v2314 = vld [vmem:[#allocation2 + $0x2] sm:$0xff]
      %v2315 = vld [vmem:[#allocation2 + $0x12] sm:$0xff]
      %v2316 = vld [vmem:[#allocation2 + $0x22] sm:$0xff]
      %v2317 = vld [vmem:[#allocation2 + $0x32] sm:$0xff]
      %v2318 = vld [vmem:[#allocation2 + $0x42] sm:$0xff]
      %v2319 = vld [vmem:[#allocation2 + $0x52] sm:$0xff]
      %v2320 = vld [vmem:[#allocation2 + $0x62] sm:$0xff]
      %v2321 = vld [vmem:[#allocation2 + $0x72] sm:$0xff]
      %v2322 = vld [vmem:[#allocation2 + $0xa2] sm:$0xff]
      %v2323 = vld [vmem:[#allocation2 + $0xb2] sm:$0xff]
      %v2324 = vld [vmem:[#allocation2 + $0xc2] sm:$0xff]
      %v2325 = vld [vmem:[#allocation2 + $0xd2] sm:$0xff]
      %v2326 = vld [vmem:[#allocation2 + $0xe2] sm:$0xff]
      %v2327 = vld [vmem:[#allocation2 + $0xf2] sm:$0xff]
      %v2328 = vld [vmem:[#allocation2 + $0x102] sm:$0xff]
      %v2329 = vld [vmem:[#allocation2 + $0x112] sm:$0xff]
      %v2330 = vld [vmem:[#allocation2 + $0x142] sm:$0xff]
      %v2331 = vld [vmem:[#allocation2 + $0x152] sm:$0xff]
      %v2332 = vld [vmem:[#allocation2 + $0x162] sm:$0xff]
      %v2333 = vld [vmem:[#allocation2 + $0x172] sm:$0xff]
      %v2334 = vld [vmem:[#allocation2 + $0x182] sm:$0xff]
      %v2335 = vld [vmem:[#allocation2 + $0x192] sm:$0xff]
      %v2336 = vld [vmem:[#allocation2 + $0x1a2] sm:$0xff]
      %v2337 = vld [vmem:[#allocation2 + $0x1b2] sm:$0xff]
      %v2338 = vld [vmem:[#allocation2 + $0x1e2] sm:$0xff]
      %v2339 = vld [vmem:[#allocation2 + $0x1f2] sm:$0xff]
      %v2340 = vld [vmem:[#allocation2 + $0x202] sm:$0xff]
      %v2341 = vld [vmem:[#allocation2 + $0x212] sm:$0xff]
      %v2342 = vld [vmem:[#allocation2 + $0x222] sm:$0xff]
      %v2343 = vld [vmem:[#allocation2 + $0x232] sm:$0xff]
      %v2344 = vld [vmem:[#allocation2 + $0x242] sm:$0xff]
      %v2345 = vld [vmem:[#allocation2 + $0x252] sm:$0xff]
      %v2346 = vld [vmem:[#allocation2 + $0x282] sm:$0xff]
      %v2347 = vld [vmem:[#allocation2 + $0x292] sm:$0xff]
      %v2348 = vld [vmem:[#allocation2 + $0x2a2] sm:$0xff]
      %v2349 = vld [vmem:[#allocation2 + $0x2b2] sm:$0xff]
      %v2350 = vld [vmem:[#allocation2 + $0x2c2] sm:$0xff]
      %v2351 = vld [vmem:[#allocation2 + $0x2d2] sm:$0xff]
      %v2352 = vld [vmem:[#allocation2 + $0x2e2] sm:$0xff]
      %v2353 = vld [vmem:[#allocation2 + $0x2f2] sm:$0xff]
      %v2354 = vld [vmem:[#allocation2 + $0x322] sm:$0xff]
      %v2355 = vld [vmem:[#allocation2 + $0x332] sm:$0xff]
      %v2356 = vld [vmem:[#allocation2 + $0x342] sm:$0xff]
      %v2357 = vld [vmem:[#allocation2 + $0x352] sm:$0xff]
      %v2358 = vld [vmem:[#allocation2 + $0x362] sm:$0xff]
      %v2359 = vld [vmem:[#allocation2 + $0x372] sm:$0xff]
      %v2360 = vld [vmem:[#allocation2 + $0x382] sm:$0xff]
      %v2361 = vld [vmem:[#allocation2 + $0x392] sm:$0xff]
      %v2362 = vld [vmem:[#allocation2 + $0x3c2] sm:$0xff]
      %v2363 = vld [vmem:[#allocation2 + $0x3d2] sm:$0xff]
      %v2364 = vld [vmem:[#allocation2 + $0x3e2] sm:$0xff]
      %v2365 = vld [vmem:[#allocation2 + $0x3f2] sm:$0xff]
      %v2366 = vld [vmem:[#allocation2 + $0x402] sm:$0xff]
      %v2367 = vld [vmem:[#allocation2 + $0x412] sm:$0xff]
      %v2368 = vld [vmem:[#allocation2 + $0x422] sm:$0xff]
      %v2369 = vld [vmem:[#allocation2 + $0x432] sm:$0xff]
      %v2370 = vld [vmem:[#allocation2 + $0x462] sm:$0xff]
      %v2371 = vld [vmem:[#allocation2 + $0x472] sm:$0xff]
      %v2372 = vld [vmem:[#allocation2 + $0x482] sm:$0xff]
      %v2373 = vld [vmem:[#allocation2 + $0x492] sm:$0xff]
      %v2374 = vld [vmem:[#allocation2 + $0x4a2] sm:$0xff]
      %v2375 = vld [vmem:[#allocation2 + $0x4b2] sm:$0xff]
      %v2376 = vld [vmem:[#allocation2 + $0x4c2] sm:$0xff]
      %v2377 = vld [vmem:[#allocation2 + $0x4d2] sm:$0xff]
      %v2378 = vld [vmem:[%s5 + $0x2] sm:$0x1]
      %v2379 = vlaneseq
      %v2380 = vshrl.u32 %v2379, 7
      %v2381 = vsub.s32 0, %v2380
      %v2382 = vrot.slane %v2378, %v2381
      %v2383 = vmul.f32 %v2314, %v2382
      %v2384 = vmul.f32 %v2315, %v2382
      %v2385 = vmul.f32 %v2316, %v2382
      %v2386 = vmul.f32 %v2317, %v2382
      %v2387 = vmul.f32 %v2318, %v2382
      %v2388 = vmul.f32 %v2319, %v2382
      %v2389 = vmul.f32 %v2320, %v2382
      %v2390 = vmul.f32 %v2321, %v2382
      %v2391 = vmul.f32 %v2322, %v2382
      %v2392 = vmul.f32 %v2323, %v2382
      %v2393 = vmul.f32 %v2324, %v2382
      %v2394 = vmul.f32 %v2325, %v2382
      %v2395 = vmul.f32 %v2326, %v2382
      %v2396 = vmul.f32 %v2327, %v2382
      %v2397 = vmul.f32 %v2328, %v2382
      %v2398 = vmul.f32 %v2329, %v2382
      %v2399 = vmul.f32 %v2330, %v2382
      %v2400 = vmul.f32 %v2331, %v2382
      %v2401 = vmul.f32 %v2332, %v2382
      %v2402 = vmul.f32 %v2333, %v2382
      %v2403 = vmul.f32 %v2334, %v2382
      %v2404 = vmul.f32 %v2335, %v2382
      %v2405 = vmul.f32 %v2336, %v2382
      %v2406 = vmul.f32 %v2337, %v2382
      %v2407 = vmul.f32 %v2338, %v2382
      %v2408 = vmul.f32 %v2339, %v2382
      %v2409 = vmul.f32 %v2340, %v2382
      %v2410 = vmul.f32 %v2341, %v2382
      %v2411 = vmul.f32 %v2342, %v2382
      %v2412 = vmul.f32 %v2343, %v2382
      %v2413 = vmul.f32 %v2344, %v2382
      %v2414 = vmul.f32 %v2345, %v2382
      %v2415 = vmul.f32 %v2346, %v2382
      %v2416 = vmul.f32 %v2347, %v2382
      %v2417 = vmul.f32 %v2348, %v2382
      %v2418 = vmul.f32 %v2349, %v2382
      %v2419 = vmul.f32 %v2350, %v2382
      %v2420 = vmul.f32 %v2351, %v2382
      %v2421 = vmul.f32 %v2352, %v2382
      %v2422 = vmul.f32 %v2353, %v2382
      %v2423 = vmul.f32 %v2354, %v2382
      %v2424 = vmul.f32 %v2355, %v2382
      %v2425 = vmul.f32 %v2356, %v2382
      %v2426 = vmul.f32 %v2357, %v2382
      %v2427 = vmul.f32 %v2358, %v2382
      %v2428 = vmul.f32 %v2359, %v2382
      %v2429 = vmul.f32 %v2360, %v2382
      %v2430 = vmul.f32 %v2361, %v2382
      %v2431 = vmul.f32 %v2362, %v2382
      %v2432 = vmul.f32 %v2363, %v2382
      %v2433 = vmul.f32 %v2364, %v2382
      %v2434 = vmul.f32 %v2365, %v2382
      %v2435 = vmul.f32 %v2366, %v2382
      %v2436 = vmul.f32 %v2367, %v2382
      %v2437 = vmul.f32 %v2368, %v2382
      %v2438 = vmul.f32 %v2369, %v2382
      %v2439 = vmul.f32 %v2370, %v2382
      %v2440 = vmul.f32 %v2371, %v2382
      %v2441 = vmul.f32 %v2372, %v2382
      %v2442 = vmul.f32 %v2373, %v2382
      %v2443 = vmul.f32 %v2374, %v2382
      %v2444 = vmul.f32 %v2375, %v2382
      %v2445 = vmul.f32 %v2376, %v2382
      %v2446 = vmul.f32 %v2377, %v2382
      %v2447 = vadd.f32 %v2250, %v2383
      %v2448 = vadd.f32 %v2251, %v2384
      %v2449 = vadd.f32 %v2252, %v2385
      %v2450 = vadd.f32 %v2253, %v2386
      %v2451 = vadd.f32 %v2254, %v2387
      %v2452 = vadd.f32 %v2255, %v2388
      %v2453 = vadd.f32 %v2256, %v2389
      %v2454 = vadd.f32 %v2257, %v2390
      %v2455 = vadd.f32 %v2258, %v2391
      %v2456 = vadd.f32 %v2259, %v2392
      %v2457 = vadd.f32 %v2260, %v2393
      %v2458 = vadd.f32 %v2261, %v2394
      %v2459 = vadd.f32 %v2262, %v2395
      %v2460 = vadd.f32 %v2263, %v2396
      %v2461 = vadd.f32 %v2264, %v2397
      %v2462 = vadd.f32 %v2265, %v2398
      %v2463 = vadd.f32 %v2266, %v2399
      %v2464 = vadd.f32 %v2267, %v2400
      %v2465 = vadd.f32 %v2268, %v2401
      %v2466 = vadd.f32 %v2269, %v2402
      %v2467 = vadd.f32 %v2270, %v2403
      %v2468 = vadd.f32 %v2271, %v2404
      %v2469 = vadd.f32 %v2272, %v2405
      %v2470 = vadd.f32 %v2273, %v2406
      %v2471 = vadd.f32 %v2274, %v2407
      %v2472 = vadd.f32 %v2275, %v2408
      %v2473 = vadd.f32 %v2276, %v2409
      %v2474 = vadd.f32 %v2277, %v2410
      %v2475 = vadd.f32 %v2278, %v2411
      %v2476 = vadd.f32 %v2279, %v2412
      %v2477 = vadd.f32 %v2280, %v2413
      %v2478 = vadd.f32 %v2281, %v2414
      %v2479 = vadd.f32 %v2282, %v2415
      %v2480 = vadd.f32 %v2283, %v2416
      %v2481 = vadd.f32 %v2284, %v2417
      %v2482 = vadd.f32 %v2285, %v2418
      %v2483 = vadd.f32 %v2286, %v2419
      %v2484 = vadd.f32 %v2287, %v2420
      %v2485 = vadd.f32 %v2288, %v2421
      %v2486 = vadd.f32 %v2289, %v2422
      %v2487 = vadd.f32 %v2290, %v2423
      %v2488 = vadd.f32 %v2291, %v2424
      %v2489 = vadd.f32 %v2292, %v2425
      %v2490 = vadd.f32 %v2293, %v2426
      %v2491 = vadd.f32 %v2294, %v2427
      %v2492 = vadd.f32 %v2295, %v2428
      %v2493 = vadd.f32 %v2296, %v2429
      %v2494 = vadd.f32 %v2297, %v2430
      %v2495 = vadd.f32 %v2298, %v2431
      %v2496 = vadd.f32 %v2299, %v2432
      %v2497 = vadd.f32 %v2300, %v2433
      %v2498 = vadd.f32 %v2301, %v2434
      %v2499 = vadd.f32 %v2302, %v2435
      %v2500 = vadd.f32 %v2303, %v2436
      %v2501 = vadd.f32 %v2304, %v2437
      %v2502 = vadd.f32 %v2305, %v2438
      %v2503 = vadd.f32 %v2306, %v2439
      %v2504 = vadd.f32 %v2307, %v2440
      %v2505 = vadd.f32 %v2308, %v2441
      %v2506 = vadd.f32 %v2309, %v2442
      %v2507 = vadd.f32 %v2310, %v2443
      %v2508 = vadd.f32 %v2311, %v2444
      %v2509 = vadd.f32 %v2312, %v2445
      %v2510 = vadd.f32 %v2313, %v2446
      %v2511 = vld [vmem:[%s1724] sm:$0xff]
      %v2512 = vld [vmem:[%s1724 + $0x10] sm:$0xff]
      %v2513 = vld [vmem:[%s1724 + $0x20] sm:$0xff]
      %v2514 = vld [vmem:[%s1724 + $0x30] sm:$0xff]
      %v2515 = vld [vmem:[%s1724 + $0x40] sm:$0xff]
      %v2516 = vld [vmem:[%s1724 + $0x50] sm:$0xff]
      %v2517 = vld [vmem:[%s1724 + $0x60] sm:$0xff]
      %v2518 = vld [vmem:[%s1724 + $0x70] sm:$0xff]
      %v2519 = vld [vmem:[%s1724 + $0xa0] sm:$0xff]
      %v2520 = vld [vmem:[%s1724 + $0xb0] sm:$0xff]
      %v2521 = vld [vmem:[%s1724 + $0xc0] sm:$0xff]
      %v2522 = vld [vmem:[%s1724 + $0xd0] sm:$0xff]
      %v2523 = vld [vmem:[%s1724 + $0xe0] sm:$0xff]
      %v2524 = vld [vmem:[%s1724 + $0xf0] sm:$0xff]
      %v2525 = vld [vmem:[%s1724 + $0x100] sm:$0xff]
      %v2526 = vld [vmem:[%s1724 + $0x110] sm:$0xff]
      %v2527 = vld [vmem:[%s1724 + $0x140] sm:$0xff]
      %v2528 = vld [vmem:[%s1724 + $0x150] sm:$0xff]
      %v2529 = vld [vmem:[%s1724 + $0x160] sm:$0xff]
      %v2530 = vld [vmem:[%s1724 + $0x170] sm:$0xff]
      %v2531 = vld [vmem:[%s1724 + $0x180] sm:$0xff]
      %v2532 = vld [vmem:[%s1724 + $0x190] sm:$0xff]
      %v2533 = vld [vmem:[%s1724 + $0x1a0] sm:$0xff]
      %v2534 = vld [vmem:[%s1724 + $0x1b0] sm:$0xff]
      %v2535 = vld [vmem:[%s1724 + $0x1e0] sm:$0xff]
      %v2536 = vld [vmem:[%s1724 + $0x1f0] sm:$0xff]
      %v2537 = vld [vmem:[%s1724 + $0x200] sm:$0xff]
      %v2538 = vld [vmem:[%s1724 + $0x210] sm:$0xff]
      %v2539 = vld [vmem:[%s1724 + $0x220] sm:$0xff]
      %v2540 = vld [vmem:[%s1724 + $0x230] sm:$0xff]
      %v2541 = vld [vmem:[%s1724 + $0x240] sm:$0xff]
      %v2542 = vld [vmem:[%s1724 + $0x250] sm:$0xff]
      %v2543 = vld [vmem:[%s1724 + $0x280] sm:$0xff]
      %v2544 = vld [vmem:[%s1724 + $0x290] sm:$0xff]
      %v2545 = vld [vmem:[%s1724 + $0x2a0] sm:$0xff]
      %v2546 = vld [vmem:[%s1724 + $0x2b0] sm:$0xff]
      %v2547 = vld [vmem:[%s1724 + $0x2c0] sm:$0xff]
      %v2548 = vld [vmem:[%s1724 + $0x2d0] sm:$0xff]
      %v2549 = vld [vmem:[%s1724 + $0x2e0] sm:$0xff]
      %v2550 = vld [vmem:[%s1724 + $0x2f0] sm:$0xff]
      %v2551 = vld [vmem:[%s1724 + $0x320] sm:$0xff]
      %v2552 = vld [vmem:[%s1724 + $0x330] sm:$0xff]
      %v2553 = vld [vmem:[%s1724 + $0x340] sm:$0xff]
      %v2554 = vld [vmem:[%s1724 + $0x350] sm:$0xff]
      %v2555 = vld [vmem:[%s1724 + $0x360] sm:$0xff]
      %v2556 = vld [vmem:[%s1724 + $0x370] sm:$0xff]
      %v2557 = vld [vmem:[%s1724 + $0x380] sm:$0xff]
      %v2558 = vld [vmem:[%s1724 + $0x390] sm:$0xff]
      %v2559 = vld [vmem:[%s1724 + $0x3c0] sm:$0xff]
      %v2560 = vld [vmem:[%s1724 + $0x3d0] sm:$0xff]
      %v2561 = vld [vmem:[%s1724 + $0x3e0] sm:$0xff]
      %v2562 = vld [vmem:[%s1724 + $0x3f0] sm:$0xff]
      %v2563 = vld [vmem:[%s1724 + $0x400] sm:$0xff]
      %v2564 = vld [vmem:[%s1724 + $0x410] sm:$0xff]
      %v2565 = vld [vmem:[%s1724 + $0x420] sm:$0xff]
      %v2566 = vld [vmem:[%s1724 + $0x430] sm:$0xff]
      %v2567 = vld [vmem:[%s1724 + $0x460] sm:$0xff]
      %v2568 = vld [vmem:[%s1724 + $0x470] sm:$0xff]
      %v2569 = vld [vmem:[%s1724 + $0x480] sm:$0xff]
      %v2570 = vld [vmem:[%s1724 + $0x490] sm:$0xff]
      %v2571 = vld [vmem:[%s1724 + $0x4a0] sm:$0xff]
      %v2572 = vld [vmem:[%s1724 + $0x4b0] sm:$0xff]
      %v2573 = vld [vmem:[%s1724 + $0x4c0] sm:$0xff]
      %v2574 = vld [vmem:[%s1724 + $0x4d0] sm:$0xff]
      %v2575 = vld [vmem:[%s5 + $0x3] sm:$0x1]
      %v2576 = vlaneseq
      %v2577 = vshrl.u32 %v2576, 7
      %v2578 = vsub.s32 0, %v2577
      %v2579 = vrot.slane %v2575, %v2578
      %v2580 = vmul.f32 %v2511, %v2579
      %v2581 = vmul.f32 %v2512, %v2579
      %v2582 = vmul.f32 %v2513, %v2579
      %v2583 = vmul.f32 %v2514, %v2579
      %v2584 = vmul.f32 %v2515, %v2579
      %v2585 = vmul.f32 %v2516, %v2579
      %v2586 = vmul.f32 %v2517, %v2579
      %v2587 = vmul.f32 %v2518, %v2579
      %v2588 = vmul.f32 %v2519, %v2579
      %v2589 = vmul.f32 %v2520, %v2579
      %v2590 = vmul.f32 %v2521, %v2579
      %v2591 = vmul.f32 %v2522, %v2579
      %v2592 = vmul.f32 %v2523, %v2579
      %v2593 = vmul.f32 %v2524, %v2579
      %v2594 = vmul.f32 %v2525, %v2579
      %v2595 = vmul.f32 %v2526, %v2579
      %v2596 = vmul.f32 %v2527, %v2579
      %v2597 = vmul.f32 %v2528, %v2579
      %v2598 = vmul.f32 %v2529, %v2579
      %v2599 = vmul.f32 %v2530, %v2579
      %v2600 = vmul.f32 %v2531, %v2579
      %v2601 = vmul.f32 %v2532, %v2579
      %v2602 = vmul.f32 %v2533, %v2579
      %v2603 = vmul.f32 %v2534, %v2579
      %v2604 = vmul.f32 %v2535, %v2579
      %v2605 = vmul.f32 %v2536, %v2579
      %v2606 = vmul.f32 %v2537, %v2579
      %v2607 = vmul.f32 %v2538, %v2579
      %v2608 = vmul.f32 %v2539, %v2579
      %v2609 = vmul.f32 %v2540, %v2579
      %v2610 = vmul.f32 %v2541, %v2579
      %v2611 = vmul.f32 %v2542, %v2579
      %v2612 = vmul.f32 %v2543, %v2579
      %v2613 = vmul.f32 %v2544, %v2579
      %v2614 = vmul.f32 %v2545, %v2579
      %v2615 = vmul.f32 %v2546, %v2579
      %v2616 = vmul.f32 %v2547, %v2579
      %v2617 = vmul.f32 %v2548, %v2579
      %v2618 = vmul.f32 %v2549, %v2579
      %v2619 = vmul.f32 %v2550, %v2579
      %v2620 = vmul.f32 %v2551, %v2579
      %v2621 = vmul.f32 %v2552, %v2579
      %v2622 = vmul.f32 %v2553, %v2579
      %v2623 = vmul.f32 %v2554, %v2579
      %v2624 = vmul.f32 %v2555, %v2579
      %v2625 = vmul.f32 %v2556, %v2579
      %v2626 = vmul.f32 %v2557, %v2579
      %v2627 = vmul.f32 %v2558, %v2579
      %v2628 = vmul.f32 %v2559, %v2579
      %v2629 = vmul.f32 %v2560, %v2579
      %v2630 = vmul.f32 %v2561, %v2579
      %v2631 = vmul.f32 %v2562, %v2579
      %v2632 = vmul.f32 %v2563, %v2579
      %v2633 = vmul.f32 %v2564, %v2579
      %v2634 = vmul.f32 %v2565, %v2579
      %v2635 = vmul.f32 %v2566, %v2579
      %v2636 = vmul.f32 %v2567, %v2579
      %v2637 = vmul.f32 %v2568, %v2579
      %v2638 = vmul.f32 %v2569, %v2579
      %v2639 = vmul.f32 %v2570, %v2579
      %v2640 = vmul.f32 %v2571, %v2579
      %v2641 = vmul.f32 %v2572, %v2579
      %v2642 = vmul.f32 %v2573, %v2579
      %v2643 = vmul.f32 %v2574, %v2579
      %v2644 = vadd.f32 %v2447, %v2580
      %v2645 = vadd.f32 %v2448, %v2581
      %v2646 = vadd.f32 %v2449, %v2582
      %v2647 = vadd.f32 %v2450, %v2583
      %v2648 = vadd.f32 %v2451, %v2584
      %v2649 = vadd.f32 %v2452, %v2585
      %v2650 = vadd.f32 %v2453, %v2586
      %v2651 = vadd.f32 %v2454, %v2587
      %v2652 = vadd.f32 %v2455, %v2588
      %v2653 = vadd.f32 %v2456, %v2589
      %v2654 = vadd.f32 %v2457, %v2590
      %v2655 = vadd.f32 %v2458, %v2591
      %v2656 = vadd.f32 %v2459, %v2592
      %v2657 = vadd.f32 %v2460, %v2593
      %v2658 = vadd.f32 %v2461, %v2594
      %v2659 = vadd.f32 %v2462, %v2595
      %v2660 = vadd.f32 %v2463, %v2596
      %v2661 = vadd.f32 %v2464, %v2597
      %v2662 = vadd.f32 %v2465, %v2598
      %v2663 = vadd.f32 %v2466, %v2599
      %v2664 = vadd.f32 %v2467, %v2600
      %v2665 = vadd.f32 %v2468, %v2601
      %v2666 = vadd.f32 %v2469, %v2602
      %v2667 = vadd.f32 %v2470, %v2603
      %v2668 = vadd.f32 %v2471, %v2604
      %v2669 = vadd.f32 %v2472, %v2605
      %v2670 = vadd.f32 %v2473, %v2606
      %v2671 = vadd.f32 %v2474, %v2607
      %v2672 = vadd.f32 %v2475, %v2608
      %v2673 = vadd.f32 %v2476, %v2609
      %v2674 = vadd.f32 %v2477, %v2610
      %v2675 = vadd.f32 %v2478, %v2611
      %v2676 = vadd.f32 %v2479, %v2612
      %v2677 = vadd.f32 %v2480, %v2613
      %v2678 = vadd.f32 %v2481, %v2614
      %v2679 = vadd.f32 %v2482, %v2615
      %v2680 = vadd.f32 %v2483, %v2616
      %v2681 = vadd.f32 %v2484, %v2617
      %v2682 = vadd.f32 %v2485, %v2618
      %v2683 = vadd.f32 %v2486, %v2619
      %v2684 = vadd.f32 %v2487, %v2620
      %v2685 = vadd.f32 %v2488, %v2621
      %v2686 = vadd.f32 %v2489, %v2622
      %v2687 = vadd.f32 %v2490, %v2623
      %v2688 = vadd.f32 %v2491, %v2624
      %v2689 = vadd.f32 %v2492, %v2625
      %v2690 = vadd.f32 %v2493, %v2626
      %v2691 = vadd.f32 %v2494, %v2627
      %v2692 = vadd.f32 %v2495, %v2628
      %v2693 = vadd.f32 %v2496, %v2629
      %v2694 = vadd.f32 %v2497, %v2630
      %v2695 = vadd.f32 %v2498, %v2631
      %v2696 = vadd.f32 %v2499, %v2632
      %v2697 = vadd.f32 %v2500, %v2633
      %v2698 = vadd.f32 %v2501, %v2634
      %v2699 = vadd.f32 %v2502, %v2635
      %v2700 = vadd.f32 %v2503, %v2636
      %v2701 = vadd.f32 %v2504, %v2637
      %v2702 = vadd.f32 %v2505, %v2638
      %v2703 = vadd.f32 %v2506, %v2639
      %v2704 = vadd.f32 %v2507, %v2640
      %v2705 = vadd.f32 %v2508, %v2641
      %v2706 = vadd.f32 %v2509, %v2642
      %v2707 = vadd.f32 %v2510, %v2643
      %v2708 = vld [vmem:[%s1724 + $0x1] sm:$0xff]
      %v2709 = vld [vmem:[%s1724 + $0x11] sm:$0xff]
      %v2710 = vld [vmem:[%s1724 + $0x21] sm:$0xff]
      %v2711 = vld [vmem:[%s1724 + $0x31] sm:$0xff]
      %v2712 = vld [vmem:[%s1724 + $0x41] sm:$0xff]
      %v2713 = vld [vmem:[%s1724 + $0x51] sm:$0xff]
      %v2714 = vld [vmem:[%s1724 + $0x61] sm:$0xff]
      %v2715 = vld [vmem:[%s1724 + $0x71] sm:$0xff]
      %v2716 = vld [vmem:[%s1724 + $0xa1] sm:$0xff]
      %v2717 = vld [vmem:[%s1724 + $0xb1] sm:$0xff]
      %v2718 = vld [vmem:[%s1724 + $0xc1] sm:$0xff]
      %v2719 = vld [vmem:[%s1724 + $0xd1] sm:$0xff]
      %v2720 = vld [vmem:[%s1724 + $0xe1] sm:$0xff]
      %v2721 = vld [vmem:[%s1724 + $0xf1] sm:$0xff]
      %v2722 = vld [vmem:[%s1724 + $0x101] sm:$0xff]
      %v2723 = vld [vmem:[%s1724 + $0x111] sm:$0xff]
      %v2724 = vld [vmem:[%s1724 + $0x141] sm:$0xff]
      %v2725 = vld [vmem:[%s1724 + $0x151] sm:$0xff]
      %v2726 = vld [vmem:[%s1724 + $0x161] sm:$0xff]
      %v2727 = vld [vmem:[%s1724 + $0x171] sm:$0xff]
      %v2728 = vld [vmem:[%s1724 + $0x181] sm:$0xff]
      %v2729 = vld [vmem:[%s1724 + $0x191] sm:$0xff]
      %v2730 = vld [vmem:[%s1724 + $0x1a1] sm:$0xff]
      %v2731 = vld [vmem:[%s1724 + $0x1b1] sm:$0xff]
      %v2732 = vld [vmem:[%s1724 + $0x1e1] sm:$0xff]
      %v2733 = vld [vmem:[%s1724 + $0x1f1] sm:$0xff]
      %v2734 = vld [vmem:[%s1724 + $0x201] sm:$0xff]
      %v2735 = vld [vmem:[%s1724 + $0x211] sm:$0xff]
      %v2736 = vld [vmem:[%s1724 + $0x221] sm:$0xff]
      %v2737 = vld [vmem:[%s1724 + $0x231] sm:$0xff]
      %v2738 = vld [vmem:[%s1724 + $0x241] sm:$0xff]
      %v2739 = vld [vmem:[%s1724 + $0x251] sm:$0xff]
      %v2740 = vld [vmem:[%s1724 + $0x281] sm:$0xff]
      %v2741 = vld [vmem:[%s1724 + $0x291] sm:$0xff]
      %v2742 = vld [vmem:[%s1724 + $0x2a1] sm:$0xff]
      %v2743 = vld [vmem:[%s1724 + $0x2b1] sm:$0xff]
      %v2744 = vld [vmem:[%s1724 + $0x2c1] sm:$0xff]
      %v2745 = vld [vmem:[%s1724 + $0x2d1] sm:$0xff]
      %v2746 = vld [vmem:[%s1724 + $0x2e1] sm:$0xff]
      %v2747 = vld [vmem:[%s1724 + $0x2f1] sm:$0xff]
      %v2748 = vld [vmem:[%s1724 + $0x321] sm:$0xff]
      %v2749 = vld [vmem:[%s1724 + $0x331] sm:$0xff]
      %v2750 = vld [vmem:[%s1724 + $0x341] sm:$0xff]
      %v2751 = vld [vmem:[%s1724 + $0x351] sm:$0xff]
      %v2752 = vld [vmem:[%s1724 + $0x361] sm:$0xff]
      %v2753 = vld [vmem:[%s1724 + $0x371] sm:$0xff]
      %v2754 = vld [vmem:[%s1724 + $0x381] sm:$0xff]
      %v2755 = vld [vmem:[%s1724 + $0x391] sm:$0xff]
      %v2756 = vld [vmem:[%s1724 + $0x3c1] sm:$0xff]
      %v2757 = vld [vmem:[%s1724 + $0x3d1] sm:$0xff]
      %v2758 = vld [vmem:[%s1724 + $0x3e1] sm:$0xff]
      %v2759 = vld [vmem:[%s1724 + $0x3f1] sm:$0xff]
      %v2760 = vld [vmem:[%s1724 + $0x401] sm:$0xff]
      %v2761 = vld [vmem:[%s1724 + $0x411] sm:$0xff]
      %v2762 = vld [vmem:[%s1724 + $0x421] sm:$0xff]
      %v2763 = vld [vmem:[%s1724 + $0x431] sm:$0xff]
      %v2764 = vld [vmem:[%s1724 + $0x461] sm:$0xff]
      %v2765 = vld [vmem:[%s1724 + $0x471] sm:$0xff]
      %v2766 = vld [vmem:[%s1724 + $0x481] sm:$0xff]
      %v2767 = vld [vmem:[%s1724 + $0x491] sm:$0xff]
      %v2768 = vld [vmem:[%s1724 + $0x4a1] sm:$0xff]
      %v2769 = vld [vmem:[%s1724 + $0x4b1] sm:$0xff]
      %v2770 = vld [vmem:[%s1724 + $0x4c1] sm:$0xff]
      %v2771 = vld [vmem:[%s1724 + $0x4d1] sm:$0xff]
      %v2772 = vld [vmem:[%s5 + $0x4] sm:$0x1]
      %v2773 = vlaneseq
      %v2774 = vshrl.u32 %v2773, 7
      %v2775 = vsub.s32 0, %v2774
      %v2776 = vrot.slane %v2772, %v2775
      %v2777 = vmul.f32 %v2708, %v2776
      %v2778 = vmul.f32 %v2709, %v2776
      %v2779 = vmul.f32 %v2710, %v2776
      %v2780 = vmul.f32 %v2711, %v2776
      %v2781 = vmul.f32 %v2712, %v2776
      %v2782 = vmul.f32 %v2713, %v2776
      %v2783 = vmul.f32 %v2714, %v2776
      %v2784 = vmul.f32 %v2715, %v2776
      %v2785 = vmul.f32 %v2716, %v2776
      %v2786 = vmul.f32 %v2717, %v2776
      %v2787 = vmul.f32 %v2718, %v2776
      %v2788 = vmul.f32 %v2719, %v2776
      %v2789 = vmul.f32 %v2720, %v2776
      %v2790 = vmul.f32 %v2721, %v2776
      %v2791 = vmul.f32 %v2722, %v2776
      %v2792 = vmul.f32 %v2723, %v2776
      %v2793 = vmul.f32 %v2724, %v2776
      %v2794 = vmul.f32 %v2725, %v2776
      %v2795 = vmul.f32 %v2726, %v2776
      %v2796 = vmul.f32 %v2727, %v2776
      %v2797 = vmul.f32 %v2728, %v2776
      %v2798 = vmul.f32 %v2729, %v2776
      %v2799 = vmul.f32 %v2730, %v2776
      %v2800 = vmul.f32 %v2731, %v2776
      %v2801 = vmul.f32 %v2732, %v2776
      %v2802 = vmul.f32 %v2733, %v2776
      %v2803 = vmul.f32 %v2734, %v2776
      %v2804 = vmul.f32 %v2735, %v2776
      %v2805 = vmul.f32 %v2736, %v2776
      %v2806 = vmul.f32 %v2737, %v2776
      %v2807 = vmul.f32 %v2738, %v2776
      %v2808 = vmul.f32 %v2739, %v2776
      %v2809 = vmul.f32 %v2740, %v2776
      %v2810 = vmul.f32 %v2741, %v2776
      %v2811 = vmul.f32 %v2742, %v2776
      %v2812 = vmul.f32 %v2743, %v2776
      %v2813 = vmul.f32 %v2744, %v2776
      %v2814 = vmul.f32 %v2745, %v2776
      %v2815 = vmul.f32 %v2746, %v2776
      %v2816 = vmul.f32 %v2747, %v2776
      %v2817 = vmul.f32 %v2748, %v2776
      %v2818 = vmul.f32 %v2749, %v2776
      %v2819 = vmul.f32 %v2750, %v2776
      %v2820 = vmul.f32 %v2751, %v2776
      %v2821 = vmul.f32 %v2752, %v2776
      %v2822 = vmul.f32 %v2753, %v2776
      %v2823 = vmul.f32 %v2754, %v2776
      %v2824 = vmul.f32 %v2755, %v2776
      %v2825 = vmul.f32 %v2756, %v2776
      %v2826 = vmul.f32 %v2757, %v2776
      %v2827 = vmul.f32 %v2758, %v2776
      %v2828 = vmul.f32 %v2759, %v2776
      %v2829 = vmul.f32 %v2760, %v2776
      %v2830 = vmul.f32 %v2761, %v2776
      %v2831 = vmul.f32 %v2762, %v2776
      %v2832 = vmul.f32 %v2763, %v2776
      %v2833 = vmul.f32 %v2764, %v2776
      %v2834 = vmul.f32 %v2765, %v2776
      %v2835 = vmul.f32 %v2766, %v2776
      %v2836 = vmul.f32 %v2767, %v2776
      %v2837 = vmul.f32 %v2768, %v2776
      %v2838 = vmul.f32 %v2769, %v2776
      %v2839 = vmul.f32 %v2770, %v2776
      %v2840 = vmul.f32 %v2771, %v2776
      %v2841 = vadd.f32 %v2644, %v2777
      %v2842 = vadd.f32 %v2645, %v2778
      %v2843 = vadd.f32 %v2646, %v2779
      %v2844 = vadd.f32 %v2647, %v2780
      %v2845 = vadd.f32 %v2648, %v2781
      %v2846 = vadd.f32 %v2649, %v2782
      %v2847 = vadd.f32 %v2650, %v2783
      %v2848 = vadd.f32 %v2651, %v2784
      %v2849 = vadd.f32 %v2652, %v2785
      %v2850 = vadd.f32 %v2653, %v2786
      %v2851 = vadd.f32 %v2654, %v2787
      %v2852 = vadd.f32 %v2655, %v2788
      %v2853 = vadd.f32 %v2656, %v2789
      %v2854 = vadd.f32 %v2657, %v2790
      %v2855 = vadd.f32 %v2658, %v2791
      %v2856 = vadd.f32 %v2659, %v2792
      %v2857 = vadd.f32 %v2660, %v2793
      %v2858 = vadd.f32 %v2661, %v2794
      %v2859 = vadd.f32 %v2662, %v2795
      %v2860 = vadd.f32 %v2663, %v2796
      %v2861 = vadd.f32 %v2664, %v2797
      %v2862 = vadd.f32 %v2665, %v2798
      %v2863 = vadd.f32 %v2666, %v2799
      %v2864 = vadd.f32 %v2667, %v2800
      %v2865 = vadd.f32 %v2668, %v2801
      %v2866 = vadd.f32 %v2669, %v2802
      %v2867 = vadd.f32 %v2670, %v2803
      %v2868 = vadd.f32 %v2671, %v2804
      %v2869 = vadd.f32 %v2672, %v2805
      %v2870 = vadd.f32 %v2673, %v2806
      %v2871 = vadd.f32 %v2674, %v2807
      %v2872 = vadd.f32 %v2675, %v2808
      %v2873 = vadd.f32 %v2676, %v2809
      %v2874 = vadd.f32 %v2677, %v2810
      %v2875 = vadd.f32 %v2678, %v2811
      %v2876 = vadd.f32 %v2679, %v2812
      %v2877 = vadd.f32 %v2680, %v2813
      %v2878 = vadd.f32 %v2681, %v2814
      %v2879 = vadd.f32 %v2682, %v2815
      %v2880 = vadd.f32 %v2683, %v2816
      %v2881 = vadd.f32 %v2684, %v2817
      %v2882 = vadd.f32 %v2685, %v2818
      %v2883 = vadd.f32 %v2686, %v2819
      %v2884 = vadd.f32 %v2687, %v2820
      %v2885 = vadd.f32 %v2688, %v2821
      %v2886 = vadd.f32 %v2689, %v2822
      %v2887 = vadd.f32 %v2690, %v2823
      %v2888 = vadd.f32 %v2691, %v2824
      %v2889 = vadd.f32 %v2692, %v2825
      %v2890 = vadd.f32 %v2693, %v2826
      %v2891 = vadd.f32 %v2694, %v2827
      %v2892 = vadd.f32 %v2695, %v2828
      %v2893 = vadd.f32 %v2696, %v2829
      %v2894 = vadd.f32 %v2697, %v2830
      %v2895 = vadd.f32 %v2698, %v2831
      %v2896 = vadd.f32 %v2699, %v2832
      %v2897 = vadd.f32 %v2700, %v2833
      %v2898 = vadd.f32 %v2701, %v2834
      %v2899 = vadd.f32 %v2702, %v2835
      %v2900 = vadd.f32 %v2703, %v2836
      %v2901 = vadd.f32 %v2704, %v2837
      %v2902 = vadd.f32 %v2705, %v2838
      %v2903 = vadd.f32 %v2706, %v2839
      %v2904 = vadd.f32 %v2707, %v2840
      %v2905 = vld [vmem:[%s1724 + $0x2] sm:$0xff]
      %v2906 = vld [vmem:[%s1724 + $0x12] sm:$0xff]
      %v2907 = vld [vmem:[%s1724 + $0x22] sm:$0xff]
      %v2908 = vld [vmem:[%s1724 + $0x32] sm:$0xff]
      %v2909 = vld [vmem:[%s1724 + $0x42] sm:$0xff]
      %v2910 = vld [vmem:[%s1724 + $0x52] sm:$0xff]
      %v2911 = vld [vmem:[%s1724 + $0x62] sm:$0xff]
      %v2912 = vld [vmem:[%s1724 + $0x72] sm:$0xff]
      %v2913 = vld [vmem:[%s1724 + $0xa2] sm:$0xff]
      %v2914 = vld [vmem:[%s1724 + $0xb2] sm:$0xff]
      %v2915 = vld [vmem:[%s1724 + $0xc2] sm:$0xff]
      %v2916 = vld [vmem:[%s1724 + $0xd2] sm:$0xff]
      %v2917 = vld [vmem:[%s1724 + $0xe2] sm:$0xff]
      %v2918 = vld [vmem:[%s1724 + $0xf2] sm:$0xff]
      %v2919 = vld [vmem:[%s1724 + $0x102] sm:$0xff]
      %v2920 = vld [vmem:[%s1724 + $0x112] sm:$0xff]
      %v2921 = vld [vmem:[%s1724 + $0x142] sm:$0xff]
      %v2922 = vld [vmem:[%s1724 + $0x152] sm:$0xff]
      %v2923 = vld [vmem:[%s1724 + $0x162] sm:$0xff]
      %v2924 = vld [vmem:[%s1724 + $0x172] sm:$0xff]
      %v2925 = vld [vmem:[%s1724 + $0x182] sm:$0xff]
      %v2926 = vld [vmem:[%s1724 + $0x192] sm:$0xff]
      %v2927 = vld [vmem:[%s1724 + $0x1a2] sm:$0xff]
      %v2928 = vld [vmem:[%s1724 + $0x1b2] sm:$0xff]
      %v2929 = vld [vmem:[%s1724 + $0x1e2] sm:$0xff]
      %v2930 = vld [vmem:[%s1724 + $0x1f2] sm:$0xff]
      %v2931 = vld [vmem:[%s1724 + $0x202] sm:$0xff]
      %v2932 = vld [vmem:[%s1724 + $0x212] sm:$0xff]
      %v2933 = vld [vmem:[%s1724 + $0x222] sm:$0xff]
      %v2934 = vld [vmem:[%s1724 + $0x232] sm:$0xff]
      %v2935 = vld [vmem:[%s1724 + $0x242] sm:$0xff]
      %v2936 = vld [vmem:[%s1724 + $0x252] sm:$0xff]
      %v2937 = vld [vmem:[%s1724 + $0x282] sm:$0xff]
      %v2938 = vld [vmem:[%s1724 + $0x292] sm:$0xff]
      %v2939 = vld [vmem:[%s1724 + $0x2a2] sm:$0xff]
      %v2940 = vld [vmem:[%s1724 + $0x2b2] sm:$0xff]
      %v2941 = vld [vmem:[%s1724 + $0x2c2] sm:$0xff]
      %v2942 = vld [vmem:[%s1724 + $0x2d2] sm:$0xff]
      %v2943 = vld [vmem:[%s1724 + $0x2e2] sm:$0xff]
      %v2944 = vld [vmem:[%s1724 + $0x2f2] sm:$0xff]
      %v2945 = vld [vmem:[%s1724 + $0x322] sm:$0xff]
      %v2946 = vld [vmem:[%s1724 + $0x332] sm:$0xff]
      %v2947 = vld [vmem:[%s1724 + $0x342] sm:$0xff]
      %v2948 = vld [vmem:[%s1724 + $0x352] sm:$0xff]
      %v2949 = vld [vmem:[%s1724 + $0x362] sm:$0xff]
      %v2950 = vld [vmem:[%s1724 + $0x372] sm:$0xff]
      %v2951 = vld [vmem:[%s1724 + $0x382] sm:$0xff]
      %v2952 = vld [vmem:[%s1724 + $0x392] sm:$0xff]
      %v2953 = vld [vmem:[%s1724 + $0x3c2] sm:$0xff]
      %v2954 = vld [vmem:[%s1724 + $0x3d2] sm:$0xff]
      %v2955 = vld [vmem:[%s1724 + $0x3e2] sm:$0xff]
      %v2956 = vld [vmem:[%s1724 + $0x3f2] sm:$0xff]
      %v2957 = vld [vmem:[%s1724 + $0x402] sm:$0xff]
      %v2958 = vld [vmem:[%s1724 + $0x412] sm:$0xff]
      %v2959 = vld [vmem:[%s1724 + $0x422] sm:$0xff]
      %v2960 = vld [vmem:[%s1724 + $0x432] sm:$0xff]
      %v2961 = vld [vmem:[%s1724 + $0x462] sm:$0xff]
      %v2962 = vld [vmem:[%s1724 + $0x472] sm:$0xff]
      %v2963 = vld [vmem:[%s1724 + $0x482] sm:$0xff]
      %v2964 = vld [vmem:[%s1724 + $0x492] sm:$0xff]
      %v2965 = vld [vmem:[%s1724 + $0x4a2] sm:$0xff]
      %v2966 = vld [vmem:[%s1724 + $0x4b2] sm:$0xff]
      %v2967 = vld [vmem:[%s1724 + $0x4c2] sm:$0xff]
      %v2968 = vld [vmem:[%s1724 + $0x4d2] sm:$0xff]
      %v2969 = vld [vmem:[%s5 + $0x5] sm:$0x1]
      %v2970 = vlaneseq
      %v2971 = vshrl.u32 %v2970, 7
      %v2972 = vsub.s32 0, %v2971
      %v2973 = vrot.slane %v2969, %v2972
      %v2974 = vmul.f32 %v2905, %v2973
      %v2975 = vmul.f32 %v2906, %v2973
      %v2976 = vmul.f32 %v2907, %v2973
      %v2977 = vmul.f32 %v2908, %v2973
      %v2978 = vmul.f32 %v2909, %v2973
      %v2979 = vmul.f32 %v2910, %v2973
      %v2980 = vmul.f32 %v2911, %v2973
      %v2981 = vmul.f32 %v2912, %v2973
      %v2982 = vmul.f32 %v2913, %v2973
      %v2983 = vmul.f32 %v2914, %v2973
      %v2984 = vmul.f32 %v2915, %v2973
      %v2985 = vmul.f32 %v2916, %v2973
      %v2986 = vmul.f32 %v2917, %v2973
      %v2987 = vmul.f32 %v2918, %v2973
      %v2988 = vmul.f32 %v2919, %v2973
      %v2989 = vmul.f32 %v2920, %v2973
      %v2990 = vmul.f32 %v2921, %v2973
      %v2991 = vmul.f32 %v2922, %v2973
      %v2992 = vmul.f32 %v2923, %v2973
      %v2993 = vmul.f32 %v2924, %v2973
      %v2994 = vmul.f32 %v2925, %v2973
      %v2995 = vmul.f32 %v2926, %v2973
      %v2996 = vmul.f32 %v2927, %v2973
      %v2997 = vmul.f32 %v2928, %v2973
      %v2998 = vmul.f32 %v2929, %v2973
      %v2999 = vmul.f32 %v2930, %v2973
      %v3000 = vmul.f32 %v2931, %v2973
      %v3001 = vmul.f32 %v2932, %v2973
      %v3002 = vmul.f32 %v2933, %v2973
      %v3003 = vmul.f32 %v2934, %v2973
      %v3004 = vmul.f32 %v2935, %v2973
      %v3005 = vmul.f32 %v2936, %v2973
      %v3006 = vmul.f32 %v2937, %v2973
      %v3007 = vmul.f32 %v2938, %v2973
      %v3008 = vmul.f32 %v2939, %v2973
      %v3009 = vmul.f32 %v2940, %v2973
      %v3010 = vmul.f32 %v2941, %v2973
      %v3011 = vmul.f32 %v2942, %v2973
      %v3012 = vmul.f32 %v2943, %v2973
      %v3013 = vmul.f32 %v2944, %v2973
      %v3014 = vmul.f32 %v2945, %v2973
      %v3015 = vmul.f32 %v2946, %v2973
      %v3016 = vmul.f32 %v2947, %v2973
      %v3017 = vmul.f32 %v2948, %v2973
      %v3018 = vmul.f32 %v2949, %v2973
      %v3019 = vmul.f32 %v2950, %v2973
      %v3020 = vmul.f32 %v2951, %v2973
      %v3021 = vmul.f32 %v2952, %v2973
      %v3022 = vmul.f32 %v2953, %v2973
      %v3023 = vmul.f32 %v2954, %v2973
      %v3024 = vmul.f32 %v2955, %v2973
      %v3025 = vmul.f32 %v2956, %v2973
      %v3026 = vmul.f32 %v2957, %v2973
      %v3027 = vmul.f32 %v2958, %v2973
      %v3028 = vmul.f32 %v2959, %v2973
      %v3029 = vmul.f32 %v2960, %v2973
      %v3030 = vmul.f32 %v2961, %v2973
      %v3031 = vmul.f32 %v2962, %v2973
      %v3032 = vmul.f32 %v2963, %v2973
      %v3033 = vmul.f32 %v2964, %v2973
      %v3034 = vmul.f32 %v2965, %v2973
      %v3035 = vmul.f32 %v2966, %v2973
      %v3036 = vmul.f32 %v2967, %v2973
      %v3037 = vmul.f32 %v2968, %v2973
      %v3038 = vadd.f32 %v2841, %v2974
      %v3039 = vadd.f32 %v2842, %v2975
      %v3040 = vadd.f32 %v2843, %v2976
      %v3041 = vadd.f32 %v2844, %v2977
      %v3042 = vadd.f32 %v2845, %v2978
      %v3043 = vadd.f32 %v2846, %v2979
      %v3044 = vadd.f32 %v2847, %v2980
      %v3045 = vadd.f32 %v2848, %v2981
      %v3046 = vadd.f32 %v2849, %v2982
      %v3047 = vadd.f32 %v2850, %v2983
      %v3048 = vadd.f32 %v2851, %v2984
      %v3049 = vadd.f32 %v2852, %v2985
      %v3050 = vadd.f32 %v2853, %v2986
      %v3051 = vadd.f32 %v2854, %v2987
      %v3052 = vadd.f32 %v2855, %v2988
      %v3053 = vadd.f32 %v2856, %v2989
      %v3054 = vadd.f32 %v2857, %v2990
      %v3055 = vadd.f32 %v2858, %v2991
      %v3056 = vadd.f32 %v2859, %v2992
      %v3057 = vadd.f32 %v2860, %v2993
      %v3058 = vadd.f32 %v2861, %v2994
      %v3059 = vadd.f32 %v2862, %v2995
      %v3060 = vadd.f32 %v2863, %v2996
      %v3061 = vadd.f32 %v2864, %v2997
      %v3062 = vadd.f32 %v2865, %v2998
      %v3063 = vadd.f32 %v2866, %v2999
      %v3064 = vadd.f32 %v2867, %v3000
      %v3065 = vadd.f32 %v2868, %v3001
      %v3066 = vadd.f32 %v2869, %v3002
      %v3067 = vadd.f32 %v2870, %v3003
      %v3068 = vadd.f32 %v2871, %v3004
      %v3069 = vadd.f32 %v2872, %v3005
      %v3070 = vadd.f32 %v2873, %v3006
      %v3071 = vadd.f32 %v2874, %v3007
      %v3072 = vadd.f32 %v2875, %v3008
      %v3073 = vadd.f32 %v2876, %v3009
      %v3074 = vadd.f32 %v2877, %v3010
      %v3075 = vadd.f32 %v2878, %v3011
      %v3076 = vadd.f32 %v2879, %v3012
      %v3077 = vadd.f32 %v2880, %v3013
      %v3078 = vadd.f32 %v2881, %v3014
      %v3079 = vadd.f32 %v2882, %v3015
      %v3080 = vadd.f32 %v2883, %v3016
      %v3081 = vadd.f32 %v2884, %v3017
      %v3082 = vadd.f32 %v2885, %v3018
      %v3083 = vadd.f32 %v2886, %v3019
      %v3084 = vadd.f32 %v2887, %v3020
      %v3085 = vadd.f32 %v2888, %v3021
      %v3086 = vadd.f32 %v2889, %v3022
      %v3087 = vadd.f32 %v2890, %v3023
      %v3088 = vadd.f32 %v2891, %v3024
      %v3089 = vadd.f32 %v2892, %v3025
      %v3090 = vadd.f32 %v2893, %v3026
      %v3091 = vadd.f32 %v2894, %v3027
      %v3092 = vadd.f32 %v2895, %v3028
      %v3093 = vadd.f32 %v2896, %v3029
      %v3094 = vadd.f32 %v2897, %v3030
      %v3095 = vadd.f32 %v2898, %v3031
      %v3096 = vadd.f32 %v2899, %v3032
      %v3097 = vadd.f32 %v2900, %v3033
      %v3098 = vadd.f32 %v2901, %v3034
      %v3099 = vadd.f32 %v2902, %v3035
      %v3100 = vadd.f32 %v2903, %v3036
      %v3101 = vadd.f32 %v2904, %v3037
      %s3102 = scalar_lea.vmem [#allocation2], 32
      %v3103 = vld [vmem:[%s3102] sm:$0xff]
      %v3104 = vld [vmem:[%s3102 + $0x10] sm:$0xff]
      %v3105 = vld [vmem:[%s3102 + $0x20] sm:$0xff]
      %v3106 = vld [vmem:[%s3102 + $0x30] sm:$0xff]
      %v3107 = vld [vmem:[%s3102 + $0x40] sm:$0xff]
      %v3108 = vld [vmem:[%s3102 + $0x50] sm:$0xff]
      %v3109 = vld [vmem:[%s3102 + $0x60] sm:$0xff]
      %v3110 = vld [vmem:[%s3102 + $0x70] sm:$0xff]
      %v3111 = vld [vmem:[%s3102 + $0xa0] sm:$0xff]
      %v3112 = vld [vmem:[%s3102 + $0xb0] sm:$0xff]
      %v3113 = vld [vmem:[%s3102 + $0xc0] sm:$0xff]
      %v3114 = vld [vmem:[%s3102 + $0xd0] sm:$0xff]
      %v3115 = vld [vmem:[%s3102 + $0xe0] sm:$0xff]
      %v3116 = vld [vmem:[%s3102 + $0xf0] sm:$0xff]
      %v3117 = vld [vmem:[%s3102 + $0x100] sm:$0xff]
      %v3118 = vld [vmem:[%s3102 + $0x110] sm:$0xff]
      %v3119 = vld [vmem:[%s3102 + $0x140] sm:$0xff]
      %v3120 = vld [vmem:[%s3102 + $0x150] sm:$0xff]
      %v3121 = vld [vmem:[%s3102 + $0x160] sm:$0xff]
      %v3122 = vld [vmem:[%s3102 + $0x170] sm:$0xff]
      %v3123 = vld [vmem:[%s3102 + $0x180] sm:$0xff]
      %v3124 = vld [vmem:[%s3102 + $0x190] sm:$0xff]
      %v3125 = vld [vmem:[%s3102 + $0x1a0] sm:$0xff]
      %v3126 = vld [vmem:[%s3102 + $0x1b0] sm:$0xff]
      %v3127 = vld [vmem:[%s3102 + $0x1e0] sm:$0xff]
      %v3128 = vld [vmem:[%s3102 + $0x1f0] sm:$0xff]
      %v3129 = vld [vmem:[%s3102 + $0x200] sm:$0xff]
      %v3130 = vld [vmem:[%s3102 + $0x210] sm:$0xff]
      %v3131 = vld [vmem:[%s3102 + $0x220] sm:$0xff]
      %v3132 = vld [vmem:[%s3102 + $0x230] sm:$0xff]
      %v3133 = vld [vmem:[%s3102 + $0x240] sm:$0xff]
      %v3134 = vld [vmem:[%s3102 + $0x250] sm:$0xff]
      %v3135 = vld [vmem:[%s3102 + $0x280] sm:$0xff]
      %v3136 = vld [vmem:[%s3102 + $0x290] sm:$0xff]
      %v3137 = vld [vmem:[%s3102 + $0x2a0] sm:$0xff]
      %v3138 = vld [vmem:[%s3102 + $0x2b0] sm:$0xff]
      %v3139 = vld [vmem:[%s3102 + $0x2c0] sm:$0xff]
      %v3140 = vld [vmem:[%s3102 + $0x2d0] sm:$0xff]
      %v3141 = vld [vmem:[%s3102 + $0x2e0] sm:$0xff]
      %v3142 = vld [vmem:[%s3102 + $0x2f0] sm:$0xff]
      %v3143 = vld [vmem:[%s3102 + $0x320] sm:$0xff]
      %v3144 = vld [vmem:[%s3102 + $0x330] sm:$0xff]
      %v3145 = vld [vmem:[%s3102 + $0x340] sm:$0xff]
      %v3146 = vld [vmem:[%s3102 + $0x350] sm:$0xff]
      %v3147 = vld [vmem:[%s3102 + $0x360] sm:$0xff]
      %v3148 = vld [vmem:[%s3102 + $0x370] sm:$0xff]
      %v3149 = vld [vmem:[%s3102 + $0x380] sm:$0xff]
      %v3150 = vld [vmem:[%s3102 + $0x390] sm:$0xff]
      %v3151 = vld [vmem:[%s3102 + $0x3c0] sm:$0xff]
      %v3152 = vld [vmem:[%s3102 + $0x3d0] sm:$0xff]
      %v3153 = vld [vmem:[%s3102 + $0x3e0] sm:$0xff]
      %v3154 = vld [vmem:[%s3102 + $0x3f0] sm:$0xff]
      %v3155 = vld [vmem:[%s3102 + $0x400] sm:$0xff]
      %v3156 = vld [vmem:[%s3102 + $0x410] sm:$0xff]
      %v3157 = vld [vmem:[%s3102 + $0x420] sm:$0xff]
      %v3158 = vld [vmem:[%s3102 + $0x430] sm:$0xff]
      %v3159 = vld [vmem:[%s3102 + $0x460] sm:$0xff]
      %v3160 = vld [vmem:[%s3102 + $0x470] sm:$0xff]
      %v3161 = vld [vmem:[%s3102 + $0x480] sm:$0xff]
      %v3162 = vld [vmem:[%s3102 + $0x490] sm:$0xff]
      %v3163 = vld [vmem:[%s3102 + $0x4a0] sm:$0xff]
      %v3164 = vld [vmem:[%s3102 + $0x4b0] sm:$0xff]
      %v3165 = vld [vmem:[%s3102 + $0x4c0] sm:$0xff]
      %v3166 = vld [vmem:[%s3102 + $0x4d0] sm:$0xff]
      %v3167 = vld [vmem:[%s5 + $0x6] sm:$0x1]
      %v3168 = vlaneseq
      %v3169 = vshrl.u32 %v3168, 7
      %v3170 = vsub.s32 0, %v3169
      %v3171 = vrot.slane %v3167, %v3170
      %v3172 = vmul.f32 %v3103, %v3171
      %v3173 = vmul.f32 %v3104, %v3171
      %v3174 = vmul.f32 %v3105, %v3171
      %v3175 = vmul.f32 %v3106, %v3171
      %v3176 = vmul.f32 %v3107, %v3171
      %v3177 = vmul.f32 %v3108, %v3171
      %v3178 = vmul.f32 %v3109, %v3171
      %v3179 = vmul.f32 %v3110, %v3171
      %v3180 = vmul.f32 %v3111, %v3171
      %v3181 = vmul.f32 %v3112, %v3171
      %v3182 = vmul.f32 %v3113, %v3171
      %v3183 = vmul.f32 %v3114, %v3171
      %v3184 = vmul.f32 %v3115, %v3171
      %v3185 = vmul.f32 %v3116, %v3171
      %v3186 = vmul.f32 %v3117, %v3171
      %v3187 = vmul.f32 %v3118, %v3171
      %v3188 = vmul.f32 %v3119, %v3171
      %v3189 = vmul.f32 %v3120, %v3171
      %v3190 = vmul.f32 %v3121, %v3171
      %v3191 = vmul.f32 %v3122, %v3171
      %v3192 = vmul.f32 %v3123, %v3171
      %v3193 = vmul.f32 %v3124, %v3171
      %v3194 = vmul.f32 %v3125, %v3171
      %v3195 = vmul.f32 %v3126, %v3171
      %v3196 = vmul.f32 %v3127, %v3171
      %v3197 = vmul.f32 %v3128, %v3171
      %v3198 = vmul.f32 %v3129, %v3171
      %v3199 = vmul.f32 %v3130, %v3171
      %v3200 = vmul.f32 %v3131, %v3171
      %v3201 = vmul.f32 %v3132, %v3171
      %v3202 = vmul.f32 %v3133, %v3171
      %v3203 = vmul.f32 %v3134, %v3171
      %v3204 = vmul.f32 %v3135, %v3171
      %v3205 = vmul.f32 %v3136, %v3171
      %v3206 = vmul.f32 %v3137, %v3171
      %v3207 = vmul.f32 %v3138, %v3171
      %v3208 = vmul.f32 %v3139, %v3171
      %v3209 = vmul.f32 %v3140, %v3171
      %v3210 = vmul.f32 %v3141, %v3171
      %v3211 = vmul.f32 %v3142, %v3171
      %v3212 = vmul.f32 %v3143, %v3171
      %v3213 = vmul.f32 %v3144, %v3171
      %v3214 = vmul.f32 %v3145, %v3171
      %v3215 = vmul.f32 %v3146, %v3171
      %v3216 = vmul.f32 %v3147, %v3171
      %v3217 = vmul.f32 %v3148, %v3171
      %v3218 = vmul.f32 %v3149, %v3171
      %v3219 = vmul.f32 %v3150, %v3171
      %v3220 = vmul.f32 %v3151, %v3171
      %v3221 = vmul.f32 %v3152, %v3171
      %v3222 = vmul.f32 %v3153, %v3171
      %v3223 = vmul.f32 %v3154, %v3171
      %v3224 = vmul.f32 %v3155, %v3171
      %v3225 = vmul.f32 %v3156, %v3171
      %v3226 = vmul.f32 %v3157, %v3171
      %v3227 = vmul.f32 %v3158, %v3171
      %v3228 = vmul.f32 %v3159, %v3171
      %v3229 = vmul.f32 %v3160, %v3171
      %v3230 = vmul.f32 %v3161, %v3171
      %v3231 = vmul.f32 %v3162, %v3171
      %v3232 = vmul.f32 %v3163, %v3171
      %v3233 = vmul.f32 %v3164, %v3171
      %v3234 = vmul.f32 %v3165, %v3171
      %v3235 = vmul.f32 %v3166, %v3171
      %v3236 = vadd.f32 %v3038, %v3172
      %v3237 = vadd.f32 %v3039, %v3173
      %v3238 = vadd.f32 %v3040, %v3174
      %v3239 = vadd.f32 %v3041, %v3175
      %v3240 = vadd.f32 %v3042, %v3176
      %v3241 = vadd.f32 %v3043, %v3177
      %v3242 = vadd.f32 %v3044, %v3178
      %v3243 = vadd.f32 %v3045, %v3179
      %v3244 = vadd.f32 %v3046, %v3180
      %v3245 = vadd.f32 %v3047, %v3181
      %v3246 = vadd.f32 %v3048, %v3182
      %v3247 = vadd.f32 %v3049, %v3183
      %v3248 = vadd.f32 %v3050, %v3184
      %v3249 = vadd.f32 %v3051, %v3185
      %v3250 = vadd.f32 %v3052, %v3186
      %v3251 = vadd.f32 %v3053, %v3187
      %v3252 = vadd.f32 %v3054, %v3188
      %v3253 = vadd.f32 %v3055, %v3189
      %v3254 = vadd.f32 %v3056, %v3190
      %v3255 = vadd.f32 %v3057, %v3191
      %v3256 = vadd.f32 %v3058, %v3192
      %v3257 = vadd.f32 %v3059, %v3193
      %v3258 = vadd.f32 %v3060, %v3194
      %v3259 = vadd.f32 %v3061, %v3195
      %v3260 = vadd.f32 %v3062, %v3196
      %v3261 = vadd.f32 %v3063, %v3197
      %v3262 = vadd.f32 %v3064, %v3198
      %v3263 = vadd.f32 %v3065, %v3199
      %v3264 = vadd.f32 %v3066, %v3200
      %v3265 = vadd.f32 %v3067, %v3201
      %v3266 = vadd.f32 %v3068, %v3202
      %v3267 = vadd.f32 %v3069, %v3203
      %v3268 = vadd.f32 %v3070, %v3204
      %v3269 = vadd.f32 %v3071, %v3205
      %v3270 = vadd.f32 %v3072, %v3206
      %v3271 = vadd.f32 %v3073, %v3207
      %v3272 = vadd.f32 %v3074, %v3208
      %v3273 = vadd.f32 %v3075, %v3209
      %v3274 = vadd.f32 %v3076, %v3210
      %v3275 = vadd.f32 %v3077, %v3211
      %v3276 = vadd.f32 %v3078, %v3212
      %v3277 = vadd.f32 %v3079, %v3213
      %v3278 = vadd.f32 %v3080, %v3214
      %v3279 = vadd.f32 %v3081, %v3215
      %v3280 = vadd.f32 %v3082, %v3216
      %v3281 = vadd.f32 %v3083, %v3217
      %v3282 = vadd.f32 %v3084, %v3218
      %v3283 = vadd.f32 %v3085, %v3219
      %v3284 = vadd.f32 %v3086, %v3220
      %v3285 = vadd.f32 %v3087, %v3221
      %v3286 = vadd.f32 %v3088, %v3222
      %v3287 = vadd.f32 %v3089, %v3223
      %v3288 = vadd.f32 %v3090, %v3224
      %v3289 = vadd.f32 %v3091, %v3225
      %v3290 = vadd.f32 %v3092, %v3226
      %v3291 = vadd.f32 %v3093, %v3227
      %v3292 = vadd.f32 %v3094, %v3228
      %v3293 = vadd.f32 %v3095, %v3229
      %v3294 = vadd.f32 %v3096, %v3230
      %v3295 = vadd.f32 %v3097, %v3231
      %v3296 = vadd.f32 %v3098, %v3232
      %v3297 = vadd.f32 %v3099, %v3233
      %v3298 = vadd.f32 %v3100, %v3234
      %v3299 = vadd.f32 %v3101, %v3235
      %v3300 = vld [vmem:[%s3102 + $0x1] sm:$0xff]
      %v3301 = vld [vmem:[%s3102 + $0x11] sm:$0xff]
      %v3302 = vld [vmem:[%s3102 + $0x21] sm:$0xff]
      %v3303 = vld [vmem:[%s3102 + $0x31] sm:$0xff]
      %v3304 = vld [vmem:[%s3102 + $0x41] sm:$0xff]
      %v3305 = vld [vmem:[%s3102 + $0x51] sm:$0xff]
      %v3306 = vld [vmem:[%s3102 + $0x61] sm:$0xff]
      %v3307 = vld [vmem:[%s3102 + $0x71] sm:$0xff]
      %v3308 = vld [vmem:[%s3102 + $0xa1] sm:$0xff]
      %v3309 = vld [vmem:[%s3102 + $0xb1] sm:$0xff]
      %v3310 = vld [vmem:[%s3102 + $0xc1] sm:$0xff]
      %v3311 = vld [vmem:[%s3102 + $0xd1] sm:$0xff]
      %v3312 = vld [vmem:[%s3102 + $0xe1] sm:$0xff]
      %v3313 = vld [vmem:[%s3102 + $0xf1] sm:$0xff]
      %v3314 = vld [vmem:[%s3102 + $0x101] sm:$0xff]
      %v3315 = vld [vmem:[%s3102 + $0x111] sm:$0xff]
      %v3316 = vld [vmem:[%s3102 + $0x141] sm:$0xff]
      %v3317 = vld [vmem:[%s3102 + $0x151] sm:$0xff]
      %v3318 = vld [vmem:[%s3102 + $0x161] sm:$0xff]
      %v3319 = vld [vmem:[%s3102 + $0x171] sm:$0xff]
      %v3320 = vld [vmem:[%s3102 + $0x181] sm:$0xff]
      %v3321 = vld [vmem:[%s3102 + $0x191] sm:$0xff]
      %v3322 = vld [vmem:[%s3102 + $0x1a1] sm:$0xff]
      %v3323 = vld [vmem:[%s3102 + $0x1b1] sm:$0xff]
      %v3324 = vld [vmem:[%s3102 + $0x1e1] sm:$0xff]
      %v3325 = vld [vmem:[%s3102 + $0x1f1] sm:$0xff]
      %v3326 = vld [vmem:[%s3102 + $0x201] sm:$0xff]
      %v3327 = vld [vmem:[%s3102 + $0x211] sm:$0xff]
      %v3328 = vld [vmem:[%s3102 + $0x221] sm:$0xff]
      %v3329 = vld [vmem:[%s3102 + $0x231] sm:$0xff]
      %v3330 = vld [vmem:[%s3102 + $0x241] sm:$0xff]
      %v3331 = vld [vmem:[%s3102 + $0x251] sm:$0xff]
      %v3332 = vld [vmem:[%s3102 + $0x281] sm:$0xff]
      %v3333 = vld [vmem:[%s3102 + $0x291] sm:$0xff]
      %v3334 = vld [vmem:[%s3102 + $0x2a1] sm:$0xff]
      %v3335 = vld [vmem:[%s3102 + $0x2b1] sm:$0xff]
      %v3336 = vld [vmem:[%s3102 + $0x2c1] sm:$0xff]
      %v3337 = vld [vmem:[%s3102 + $0x2d1] sm:$0xff]
      %v3338 = vld [vmem:[%s3102 + $0x2e1] sm:$0xff]
      %v3339 = vld [vmem:[%s3102 + $0x2f1] sm:$0xff]
      %v3340 = vld [vmem:[%s3102 + $0x321] sm:$0xff]
      %v3341 = vld [vmem:[%s3102 + $0x331] sm:$0xff]
      %v3342 = vld [vmem:[%s3102 + $0x341] sm:$0xff]
      %v3343 = vld [vmem:[%s3102 + $0x351] sm:$0xff]
      %v3344 = vld [vmem:[%s3102 + $0x361] sm:$0xff]
      %v3345 = vld [vmem:[%s3102 + $0x371] sm:$0xff]
      %v3346 = vld [vmem:[%s3102 + $0x381] sm:$0xff]
      %v3347 = vld [vmem:[%s3102 + $0x391] sm:$0xff]
      %v3348 = vld [vmem:[%s3102 + $0x3c1] sm:$0xff]
      %v3349 = vld [vmem:[%s3102 + $0x3d1] sm:$0xff]
      %v3350 = vld [vmem:[%s3102 + $0x3e1] sm:$0xff]
      %v3351 = vld [vmem:[%s3102 + $0x3f1] sm:$0xff]
      %v3352 = vld [vmem:[%s3102 + $0x401] sm:$0xff]
      %v3353 = vld [vmem:[%s3102 + $0x411] sm:$0xff]
      %v3354 = vld [vmem:[%s3102 + $0x421] sm:$0xff]
      %v3355 = vld [vmem:[%s3102 + $0x431] sm:$0xff]
      %v3356 = vld [vmem:[%s3102 + $0x461] sm:$0xff]
      %v3357 = vld [vmem:[%s3102 + $0x471] sm:$0xff]
      %v3358 = vld [vmem:[%s3102 + $0x481] sm:$0xff]
      %v3359 = vld [vmem:[%s3102 + $0x491] sm:$0xff]
      %v3360 = vld [vmem:[%s3102 + $0x4a1] sm:$0xff]
      %v3361 = vld [vmem:[%s3102 + $0x4b1] sm:$0xff]
      %v3362 = vld [vmem:[%s3102 + $0x4c1] sm:$0xff]
      %v3363 = vld [vmem:[%s3102 + $0x4d1] sm:$0xff]
      %v3364 = vld [vmem:[%s5 + $0x7] sm:$0x1]
      %v3365 = vlaneseq
      %v3366 = vshrl.u32 %v3365, 7
      %v3367 = vsub.s32 0, %v3366
      %v3368 = vrot.slane %v3364, %v3367
      %v3369 = vmul.f32 %v3300, %v3368
      %v3370 = vmul.f32 %v3301, %v3368
      %v3371 = vmul.f32 %v3302, %v3368
      %v3372 = vmul.f32 %v3303, %v3368
      %v3373 = vmul.f32 %v3304, %v3368
      %v3374 = vmul.f32 %v3305, %v3368
      %v3375 = vmul.f32 %v3306, %v3368
      %v3376 = vmul.f32 %v3307, %v3368
      %v3377 = vmul.f32 %v3308, %v3368
      %v3378 = vmul.f32 %v3309, %v3368
      %v3379 = vmul.f32 %v3310, %v3368
      %v3380 = vmul.f32 %v3311, %v3368
      %v3381 = vmul.f32 %v3312, %v3368
      %v3382 = vmul.f32 %v3313, %v3368
      %v3383 = vmul.f32 %v3314, %v3368
      %v3384 = vmul.f32 %v3315, %v3368
      %v3385 = vmul.f32 %v3316, %v3368
      %v3386 = vmul.f32 %v3317, %v3368
      %v3387 = vmul.f32 %v3318, %v3368
      %v3388 = vmul.f32 %v3319, %v3368
      %v3389 = vmul.f32 %v3320, %v3368
      %v3390 = vmul.f32 %v3321, %v3368
      %v3391 = vmul.f32 %v3322, %v3368
      %v3392 = vmul.f32 %v3323, %v3368
      %v3393 = vmul.f32 %v3324, %v3368
      %v3394 = vmul.f32 %v3325, %v3368
      %v3395 = vmul.f32 %v3326, %v3368
      %v3396 = vmul.f32 %v3327, %v3368
      %v3397 = vmul.f32 %v3328, %v3368
      %v3398 = vmul.f32 %v3329, %v3368
      %v3399 = vmul.f32 %v3330, %v3368
      %v3400 = vmul.f32 %v3331, %v3368
      %v3401 = vmul.f32 %v3332, %v3368
      %v3402 = vmul.f32 %v3333, %v3368
      %v3403 = vmul.f32 %v3334, %v3368
      %v3404 = vmul.f32 %v3335, %v3368
      %v3405 = vmul.f32 %v3336, %v3368
      %v3406 = vmul.f32 %v3337, %v3368
      %v3407 = vmul.f32 %v3338, %v3368
      %v3408 = vmul.f32 %v3339, %v3368
      %v3409 = vmul.f32 %v3340, %v3368
      %v3410 = vmul.f32 %v3341, %v3368
      %v3411 = vmul.f32 %v3342, %v3368
      %v3412 = vmul.f32 %v3343, %v3368
      %v3413 = vmul.f32 %v3344, %v3368
      %v3414 = vmul.f32 %v3345, %v3368
      %v3415 = vmul.f32 %v3346, %v3368
      %v3416 = vmul.f32 %v3347, %v3368
      %v3417 = vmul.f32 %v3348, %v3368
      %v3418 = vmul.f32 %v3349, %v3368
      %v3419 = vmul.f32 %v3350, %v3368
      %v3420 = vmul.f32 %v3351, %v3368
      %v3421 = vmul.f32 %v3352, %v3368
      %v3422 = vmul.f32 %v3353, %v3368
      %v3423 = vmul.f32 %v3354, %v3368
      %v3424 = vmul.f32 %v3355, %v3368
      %v3425 = vmul.f32 %v3356, %v3368
      %v3426 = vmul.f32 %v3357, %v3368
      %v3427 = vmul.f32 %v3358, %v3368
      %v3428 = vmul.f32 %v3359, %v3368
      %v3429 = vmul.f32 %v3360, %v3368
      %v3430 = vmul.f32 %v3361, %v3368
      %v3431 = vmul.f32 %v3362, %v3368
      %v3432 = vmul.f32 %v3363, %v3368
      %v3433 = vadd.f32 %v3236, %v3369
      %v3434 = vadd.f32 %v3237, %v3370
      %v3435 = vadd.f32 %v3238, %v3371
      %v3436 = vadd.f32 %v3239, %v3372
      %v3437 = vadd.f32 %v3240, %v3373
      %v3438 = vadd.f32 %v3241, %v3374
      %v3439 = vadd.f32 %v3242, %v3375
      %v3440 = vadd.f32 %v3243, %v3376
      %v3441 = vadd.f32 %v3244, %v3377
      %v3442 = vadd.f32 %v3245, %v3378
      %v3443 = vadd.f32 %v3246, %v3379
      %v3444 = vadd.f32 %v3247, %v3380
      %v3445 = vadd.f32 %v3248, %v3381
      %v3446 = vadd.f32 %v3249, %v3382
      %v3447 = vadd.f32 %v3250, %v3383
      %v3448 = vadd.f32 %v3251, %v3384
      %v3449 = vadd.f32 %v3252, %v3385
      %v3450 = vadd.f32 %v3253, %v3386
      %v3451 = vadd.f32 %v3254, %v3387
      %v3452 = vadd.f32 %v3255, %v3388
      %v3453 = vadd.f32 %v3256, %v3389
      %v3454 = vadd.f32 %v3257, %v3390
      %v3455 = vadd.f32 %v3258, %v3391
      %v3456 = vadd.f32 %v3259, %v3392
      %v3457 = vadd.f32 %v3260, %v3393
      %v3458 = vadd.f32 %v3261, %v3394
      %v3459 = vadd.f32 %v3262, %v3395
      %v3460 = vadd.f32 %v3263, %v3396
      %v3461 = vadd.f32 %v3264, %v3397
      %v3462 = vadd.f32 %v3265, %v3398
      %v3463 = vadd.f32 %v3266, %v3399
      %v3464 = vadd.f32 %v3267, %v3400
      %v3465 = vadd.f32 %v3268, %v3401
      %v3466 = vadd.f32 %v3269, %v3402
      %v3467 = vadd.f32 %v3270, %v3403
      %v3468 = vadd.f32 %v3271, %v3404
      %v3469 = vadd.f32 %v3272, %v3405
      %v3470 = vadd.f32 %v3273, %v3406
      %v3471 = vadd.f32 %v3274, %v3407
      %v3472 = vadd.f32 %v3275, %v3408
      %v3473 = vadd.f32 %v3276, %v3409
      %v3474 = vadd.f32 %v3277, %v3410
      %v3475 = vadd.f32 %v3278, %v3411
      %v3476 = vadd.f32 %v3279, %v3412
      %v3477 = vadd.f32 %v3280, %v3413
      %v3478 = vadd.f32 %v3281, %v3414
      %v3479 = vadd.f32 %v3282, %v3415
      %v3480 = vadd.f32 %v3283, %v3416
      %v3481 = vadd.f32 %v3284, %v3417
      %v3482 = vadd.f32 %v3285, %v3418
      %v3483 = vadd.f32 %v3286, %v3419
      %v3484 = vadd.f32 %v3287, %v3420
      %v3485 = vadd.f32 %v3288, %v3421
      %v3486 = vadd.f32 %v3289, %v3422
      %v3487 = vadd.f32 %v3290, %v3423
      %v3488 = vadd.f32 %v3291, %v3424
      %v3489 = vadd.f32 %v3292, %v3425
      %v3490 = vadd.f32 %v3293, %v3426
      %v3491 = vadd.f32 %v3294, %v3427
      %v3492 = vadd.f32 %v3295, %v3428
      %v3493 = vadd.f32 %v3296, %v3429
      %v3494 = vadd.f32 %v3297, %v3430
      %v3495 = vadd.f32 %v3298, %v3431
      %v3496 = vadd.f32 %v3299, %v3432
      %v3497 = vld [vmem:[%s3102 + $0x2] sm:$0xff]
      %v3498 = vld [vmem:[%s3102 + $0x12] sm:$0xff]
      %v3499 = vld [vmem:[%s3102 + $0x22] sm:$0xff]
      %v3500 = vld [vmem:[%s3102 + $0x32] sm:$0xff]
      %v3501 = vld [vmem:[%s3102 + $0x42] sm:$0xff]
      %v3502 = vld [vmem:[%s3102 + $0x52] sm:$0xff]
      %v3503 = vld [vmem:[%s3102 + $0x62] sm:$0xff]
      %v3504 = vld [vmem:[%s3102 + $0x72] sm:$0xff]
      %v3505 = vld [vmem:[%s3102 + $0xa2] sm:$0xff]
      %v3506 = vld [vmem:[%s3102 + $0xb2] sm:$0xff]
      %v3507 = vld [vmem:[%s3102 + $0xc2] sm:$0xff]
      %v3508 = vld [vmem:[%s3102 + $0xd2] sm:$0xff]
      %v3509 = vld [vmem:[%s3102 + $0xe2] sm:$0xff]
      %v3510 = vld [vmem:[%s3102 + $0xf2] sm:$0xff]
      %v3511 = vld [vmem:[%s3102 + $0x102] sm:$0xff]
      %v3512 = vld [vmem:[%s3102 + $0x112] sm:$0xff]
      %v3513 = vld [vmem:[%s3102 + $0x142] sm:$0xff]
      %v3514 = vld [vmem:[%s3102 + $0x152] sm:$0xff]
      %v3515 = vld [vmem:[%s3102 + $0x162] sm:$0xff]
      %v3516 = vld [vmem:[%s3102 + $0x172] sm:$0xff]
      %v3517 = vld [vmem:[%s3102 + $0x182] sm:$0xff]
      %v3518 = vld [vmem:[%s3102 + $0x192] sm:$0xff]
      %v3519 = vld [vmem:[%s3102 + $0x1a2] sm:$0xff]
      %v3520 = vld [vmem:[%s3102 + $0x1b2] sm:$0xff]
      %v3521 = vld [vmem:[%s3102 + $0x1e2] sm:$0xff]
      %v3522 = vld [vmem:[%s3102 + $0x1f2] sm:$0xff]
      %v3523 = vld [vmem:[%s3102 + $0x202] sm:$0xff]
      %v3524 = vld [vmem:[%s3102 + $0x212] sm:$0xff]
      %v3525 = vld [vmem:[%s3102 + $0x222] sm:$0xff]
      %v3526 = vld [vmem:[%s3102 + $0x232] sm:$0xff]
      %v3527 = vld [vmem:[%s3102 + $0x242] sm:$0xff]
      %v3528 = vld [vmem:[%s3102 + $0x252] sm:$0xff]
      %v3529 = vld [vmem:[%s3102 + $0x282] sm:$0xff]
      %v3530 = vld [vmem:[%s3102 + $0x292] sm:$0xff]
      %v3531 = vld [vmem:[%s3102 + $0x2a2] sm:$0xff]
      %v3532 = vld [vmem:[%s3102 + $0x2b2] sm:$0xff]
      %v3533 = vld [vmem:[%s3102 + $0x2c2] sm:$0xff]
      %v3534 = vld [vmem:[%s3102 + $0x2d2] sm:$0xff]
      %v3535 = vld [vmem:[%s3102 + $0x2e2] sm:$0xff]
      %v3536 = vld [vmem:[%s3102 + $0x2f2] sm:$0xff]
      %v3537 = vld [vmem:[%s3102 + $0x322] sm:$0xff]
      %v3538 = vld [vmem:[%s3102 + $0x332] sm:$0xff]
      %v3539 = vld [vmem:[%s3102 + $0x342] sm:$0xff]
      %v3540 = vld [vmem:[%s3102 + $0x352] sm:$0xff]
      %v3541 = vld [vmem:[%s3102 + $0x362] sm:$0xff]
      %v3542 = vld [vmem:[%s3102 + $0x372] sm:$0xff]
      %v3543 = vld [vmem:[%s3102 + $0x382] sm:$0xff]
      %v3544 = vld [vmem:[%s3102 + $0x392] sm:$0xff]
      %v3545 = vld [vmem:[%s3102 + $0x3c2] sm:$0xff]
      %v3546 = vld [vmem:[%s3102 + $0x3d2] sm:$0xff]
      %v3547 = vld [vmem:[%s3102 + $0x3e2] sm:$0xff]
      %v3548 = vld [vmem:[%s3102 + $0x3f2] sm:$0xff]
      %v3549 = vld [vmem:[%s3102 + $0x402] sm:$0xff]
      %v3550 = vld [vmem:[%s3102 + $0x412] sm:$0xff]
      %v3551 = vld [vmem:[%s3102 + $0x422] sm:$0xff]
      %v3552 = vld [vmem:[%s3102 + $0x432] sm:$0xff]
      %v3553 = vld [vmem:[%s3102 + $0x462] sm:$0xff]
      %v3554 = vld [vmem:[%s3102 + $0x472] sm:$0xff]
      %v3555 = vld [vmem:[%s3102 + $0x482] sm:$0xff]
      %v3556 = vld [vmem:[%s3102 + $0x492] sm:$0xff]
      %v3557 = vld [vmem:[%s3102 + $0x4a2] sm:$0xff]
      %v3558 = vld [vmem:[%s3102 + $0x4b2] sm:$0xff]
      %v3559 = vld [vmem:[%s3102 + $0x4c2] sm:$0xff]
      %v3560 = vld [vmem:[%s3102 + $0x4d2] sm:$0xff]
      %v3561 = vld [vmem:[%s5 + $0x8] sm:$0x1]
      %v3562 = vlaneseq
      %v3563 = vshrl.u32 %v3562, 7
      %v3564 = vsub.s32 0, %v3563
      %v3565 = vrot.slane %v3561, %v3564
      %v3566 = vmul.f32 %v3497, %v3565
      %v3567 = vmul.f32 %v3498, %v3565
      %v3568 = vmul.f32 %v3499, %v3565
      %v3569 = vmul.f32 %v3500, %v3565
      %v3570 = vmul.f32 %v3501, %v3565
      %v3571 = vmul.f32 %v3502, %v3565
      %v3572 = vmul.f32 %v3503, %v3565
      %v3573 = vmul.f32 %v3504, %v3565
      %v3574 = vmul.f32 %v3505, %v3565
      %v3575 = vmul.f32 %v3506, %v3565
      %v3576 = vmul.f32 %v3507, %v3565
      %v3577 = vmul.f32 %v3508, %v3565
      %v3578 = vmul.f32 %v3509, %v3565
      %v3579 = vmul.f32 %v3510, %v3565
      %v3580 = vmul.f32 %v3511, %v3565
      %v3581 = vmul.f32 %v3512, %v3565
      %v3582 = vmul.f32 %v3513, %v3565
      %v3583 = vmul.f32 %v3514, %v3565
      %v3584 = vmul.f32 %v3515, %v3565
      %v3585 = vmul.f32 %v3516, %v3565
      %v3586 = vmul.f32 %v3517, %v3565
      %v3587 = vmul.f32 %v3518, %v3565
      %v3588 = vmul.f32 %v3519, %v3565
      %v3589 = vmul.f32 %v3520, %v3565
      %v3590 = vmul.f32 %v3521, %v3565
      %v3591 = vmul.f32 %v3522, %v3565
      %v3592 = vmul.f32 %v3523, %v3565
      %v3593 = vmul.f32 %v3524, %v3565
      %v3594 = vmul.f32 %v3525, %v3565
      %v3595 = vmul.f32 %v3526, %v3565
      %v3596 = vmul.f32 %v3527, %v3565
      %v3597 = vmul.f32 %v3528, %v3565
      %v3598 = vmul.f32 %v3529, %v3565
      %v3599 = vmul.f32 %v3530, %v3565
      %v3600 = vmul.f32 %v3531, %v3565
      %v3601 = vmul.f32 %v3532, %v3565
      %v3602 = vmul.f32 %v3533, %v3565
      %v3603 = vmul.f32 %v3534, %v3565
      %v3604 = vmul.f32 %v3535, %v3565
      %v3605 = vmul.f32 %v3536, %v3565
      %v3606 = vmul.f32 %v3537, %v3565
      %v3607 = vmul.f32 %v3538, %v3565
      %v3608 = vmul.f32 %v3539, %v3565
      %v3609 = vmul.f32 %v3540, %v3565
      %v3610 = vmul.f32 %v3541, %v3565
      %v3611 = vmul.f32 %v3542, %v3565
      %v3612 = vmul.f32 %v3543, %v3565
      %v3613 = vmul.f32 %v3544, %v3565
      %v3614 = vmul.f32 %v3545, %v3565
      %v3615 = vmul.f32 %v3546, %v3565
      %v3616 = vmul.f32 %v3547, %v3565
      %v3617 = vmul.f32 %v3548, %v3565
      %v3618 = vmul.f32 %v3549, %v3565
      %v3619 = vmul.f32 %v3550, %v3565
      %v3620 = vmul.f32 %v3551, %v3565
      %v3621 = vmul.f32 %v3552, %v3565
      %v3622 = vmul.f32 %v3553, %v3565
      %v3623 = vmul.f32 %v3554, %v3565
      %v3624 = vmul.f32 %v3555, %v3565
      %v3625 = vmul.f32 %v3556, %v3565
      %v3626 = vmul.f32 %v3557, %v3565
      %v3627 = vmul.f32 %v3558, %v3565
      %v3628 = vmul.f32 %v3559, %v3565
      %v3629 = vmul.f32 %v3560, %v3565
      %v3630 = vadd.f32 %v3433, %v3566
      %v3631 = vadd.f32 %v3434, %v3567
      %v3632 = vadd.f32 %v3435, %v3568
      %v3633 = vadd.f32 %v3436, %v3569
      %v3634 = vadd.f32 %v3437, %v3570
      %v3635 = vadd.f32 %v3438, %v3571
      %v3636 = vadd.f32 %v3439, %v3572
      %v3637 = vadd.f32 %v3440, %v3573
      %v3638 = vadd.f32 %v3441, %v3574
      %v3639 = vadd.f32 %v3442, %v3575
      %v3640 = vadd.f32 %v3443, %v3576
      %v3641 = vadd.f32 %v3444, %v3577
      %v3642 = vadd.f32 %v3445, %v3578
      %v3643 = vadd.f32 %v3446, %v3579
      %v3644 = vadd.f32 %v3447, %v3580
      %v3645 = vadd.f32 %v3448, %v3581
      %v3646 = vadd.f32 %v3449, %v3582
      %v3647 = vadd.f32 %v3450, %v3583
      %v3648 = vadd.f32 %v3451, %v3584
      %v3649 = vadd.f32 %v3452, %v3585
      %v3650 = vadd.f32 %v3453, %v3586
      %v3651 = vadd.f32 %v3454, %v3587
      %v3652 = vadd.f32 %v3455, %v3588
      %v3653 = vadd.f32 %v3456, %v3589
      %v3654 = vadd.f32 %v3457, %v3590
      %v3655 = vadd.f32 %v3458, %v3591
      %v3656 = vadd.f32 %v3459, %v3592
      %v3657 = vadd.f32 %v3460, %v3593
      %v3658 = vadd.f32 %v3461, %v3594
      %v3659 = vadd.f32 %v3462, %v3595
      %v3660 = vadd.f32 %v3463, %v3596
      %v3661 = vadd.f32 %v3464, %v3597
      %v3662 = vadd.f32 %v3465, %v3598
      %v3663 = vadd.f32 %v3466, %v3599
      %v3664 = vadd.f32 %v3467, %v3600
      %v3665 = vadd.f32 %v3468, %v3601
      %v3666 = vadd.f32 %v3469, %v3602
      %v3667 = vadd.f32 %v3470, %v3603
      %v3668 = vadd.f32 %v3471, %v3604
      %v3669 = vadd.f32 %v3472, %v3605
      %v3670 = vadd.f32 %v3473, %v3606
      %v3671 = vadd.f32 %v3474, %v3607
      %v3672 = vadd.f32 %v3475, %v3608
      %v3673 = vadd.f32 %v3476, %v3609
      %v3674 = vadd.f32 %v3477, %v3610
      %v3675 = vadd.f32 %v3478, %v3611
      %v3676 = vadd.f32 %v3479, %v3612
      %v3677 = vadd.f32 %v3480, %v3613
      %v3678 = vadd.f32 %v3481, %v3614
      %v3679 = vadd.f32 %v3482, %v3615
      %v3680 = vadd.f32 %v3483, %v3616
      %v3681 = vadd.f32 %v3484, %v3617
      %v3682 = vadd.f32 %v3485, %v3618
      %v3683 = vadd.f32 %v3486, %v3619
      %v3684 = vadd.f32 %v3487, %v3620
      %v3685 = vadd.f32 %v3488, %v3621
      %v3686 = vadd.f32 %v3489, %v3622
      %v3687 = vadd.f32 %v3490, %v3623
      %v3688 = vadd.f32 %v3491, %v3624
      %v3689 = vadd.f32 %v3492, %v3625
      %v3690 = vadd.f32 %v3493, %v3626
      %v3691 = vadd.f32 %v3494, %v3627
      %v3692 = vadd.f32 %v3495, %v3628
      %v3693 = vadd.f32 %v3496, %v3629
      %s3694 = scalar_lea.vmem [#allocation2], 160
      %v3695 = vld [vmem:[%s3694] sm:$0xff]
      %v3696 = vld [vmem:[%s3694 + $0x10] sm:$0xff]
      %v3697 = vld [vmem:[%s3694 + $0x20] sm:$0xff]
      %v3698 = vld [vmem:[%s3694 + $0x30] sm:$0xff]
      %v3699 = vld [vmem:[%s3694 + $0x40] sm:$0xff]
      %v3700 = vld [vmem:[%s3694 + $0x50] sm:$0xff]
      %v3701 = vld [vmem:[%s3694 + $0x60] sm:$0xff]
      %v3702 = vld [vmem:[%s3694 + $0x70] sm:$0xff]
      %v3703 = vld [vmem:[%s3694 + $0xa0] sm:$0xff]
      %v3704 = vld [vmem:[%s3694 + $0xb0] sm:$0xff]
      %v3705 = vld [vmem:[%s3694 + $0xc0] sm:$0xff]
      %v3706 = vld [vmem:[%s3694 + $0xd0] sm:$0xff]
      %v3707 = vld [vmem:[%s3694 + $0xe0] sm:$0xff]
      %v3708 = vld [vmem:[%s3694 + $0xf0] sm:$0xff]
      %v3709 = vld [vmem:[%s3694 + $0x100] sm:$0xff]
      %v3710 = vld [vmem:[%s3694 + $0x110] sm:$0xff]
      %v3711 = vld [vmem:[%s3694 + $0x140] sm:$0xff]
      %v3712 = vld [vmem:[%s3694 + $0x150] sm:$0xff]
      %v3713 = vld [vmem:[%s3694 + $0x160] sm:$0xff]
      %v3714 = vld [vmem:[%s3694 + $0x170] sm:$0xff]
      %v3715 = vld [vmem:[%s3694 + $0x180] sm:$0xff]
      %v3716 = vld [vmem:[%s3694 + $0x190] sm:$0xff]
      %v3717 = vld [vmem:[%s3694 + $0x1a0] sm:$0xff]
      %v3718 = vld [vmem:[%s3694 + $0x1b0] sm:$0xff]
      %v3719 = vld [vmem:[%s3694 + $0x1e0] sm:$0xff]
      %v3720 = vld [vmem:[%s3694 + $0x1f0] sm:$0xff]
      %v3721 = vld [vmem:[%s3694 + $0x200] sm:$0xff]
      %v3722 = vld [vmem:[%s3694 + $0x210] sm:$0xff]
      %v3723 = vld [vmem:[%s3694 + $0x220] sm:$0xff]
      %v3724 = vld [vmem:[%s3694 + $0x230] sm:$0xff]
      %v3725 = vld [vmem:[%s3694 + $0x240] sm:$0xff]
      %v3726 = vld [vmem:[%s3694 + $0x250] sm:$0xff]
      %v3727 = vld [vmem:[%s3694 + $0x280] sm:$0xff]
      %v3728 = vld [vmem:[%s3694 + $0x290] sm:$0xff]
      %v3729 = vld [vmem:[%s3694 + $0x2a0] sm:$0xff]
      %v3730 = vld [vmem:[%s3694 + $0x2b0] sm:$0xff]
      %v3731 = vld [vmem:[%s3694 + $0x2c0] sm:$0xff]
      %v3732 = vld [vmem:[%s3694 + $0x2d0] sm:$0xff]
      %v3733 = vld [vmem:[%s3694 + $0x2e0] sm:$0xff]
      %v3734 = vld [vmem:[%s3694 + $0x2f0] sm:$0xff]
      %v3735 = vld [vmem:[%s3694 + $0x320] sm:$0xff]
      %v3736 = vld [vmem:[%s3694 + $0x330] sm:$0xff]
      %v3737 = vld [vmem:[%s3694 + $0x340] sm:$0xff]
      %v3738 = vld [vmem:[%s3694 + $0x350] sm:$0xff]
      %v3739 = vld [vmem:[%s3694 + $0x360] sm:$0xff]
      %v3740 = vld [vmem:[%s3694 + $0x370] sm:$0xff]
      %v3741 = vld [vmem:[%s3694 + $0x380] sm:$0xff]
      %v3742 = vld [vmem:[%s3694 + $0x390] sm:$0xff]
      %v3743 = vld [vmem:[%s3694 + $0x3c0] sm:$0xff]
      %v3744 = vld [vmem:[%s3694 + $0x3d0] sm:$0xff]
      %v3745 = vld [vmem:[%s3694 + $0x3e0] sm:$0xff]
      %v3746 = vld [vmem:[%s3694 + $0x3f0] sm:$0xff]
      %v3747 = vld [vmem:[%s3694 + $0x400] sm:$0xff]
      %v3748 = vld [vmem:[%s3694 + $0x410] sm:$0xff]
      %v3749 = vld [vmem:[%s3694 + $0x420] sm:$0xff]
      %v3750 = vld [vmem:[%s3694 + $0x430] sm:$0xff]
      %v3751 = vld [vmem:[%s3694 + $0x460] sm:$0xff]
      %v3752 = vld [vmem:[%s3694 + $0x470] sm:$0xff]
      %v3753 = vld [vmem:[%s3694 + $0x480] sm:$0xff]
      %v3754 = vld [vmem:[%s3694 + $0x490] sm:$0xff]
      %v3755 = vld [vmem:[%s3694 + $0x4a0] sm:$0xff]
      %v3756 = vld [vmem:[%s3694 + $0x4b0] sm:$0xff]
      %v3757 = vld [vmem:[%s3694 + $0x4c0] sm:$0xff]
      %v3758 = vld [vmem:[%s3694 + $0x4d0] sm:$0xff]
      %v3759 = vld [vmem:[%s5 + $0x9] sm:$0x1]
      %v3760 = vlaneseq
      %v3761 = vshrl.u32 %v3760, 7
      %v3762 = vsub.s32 0, %v3761
      %v3763 = vrot.slane %v3759, %v3762
      %v3764 = vmul.f32 %v3695, %v3763
      %v3765 = vmul.f32 %v3696, %v3763
      %v3766 = vmul.f32 %v3697, %v3763
      %v3767 = vmul.f32 %v3698, %v3763
      %v3768 = vmul.f32 %v3699, %v3763
      %v3769 = vmul.f32 %v3700, %v3763
      %v3770 = vmul.f32 %v3701, %v3763
      %v3771 = vmul.f32 %v3702, %v3763
      %v3772 = vmul.f32 %v3703, %v3763
      %v3773 = vmul.f32 %v3704, %v3763
      %v3774 = vmul.f32 %v3705, %v3763
      %v3775 = vmul.f32 %v3706, %v3763
      %v3776 = vmul.f32 %v3707, %v3763
      %v3777 = vmul.f32 %v3708, %v3763
      %v3778 = vmul.f32 %v3709, %v3763
      %v3779 = vmul.f32 %v3710, %v3763
      %v3780 = vmul.f32 %v3711, %v3763
      %v3781 = vmul.f32 %v3712, %v3763
      %v3782 = vmul.f32 %v3713, %v3763
      %v3783 = vmul.f32 %v3714, %v3763
      %v3784 = vmul.f32 %v3715, %v3763
      %v3785 = vmul.f32 %v3716, %v3763
      %v3786 = vmul.f32 %v3717, %v3763
      %v3787 = vmul.f32 %v3718, %v3763
      %v3788 = vmul.f32 %v3719, %v3763
      %v3789 = vmul.f32 %v3720, %v3763
      %v3790 = vmul.f32 %v3721, %v3763
      %v3791 = vmul.f32 %v3722, %v3763
      %v3792 = vmul.f32 %v3723, %v3763
      %v3793 = vmul.f32 %v3724, %v3763
      %v3794 = vmul.f32 %v3725, %v3763
      %v3795 = vmul.f32 %v3726, %v3763
      %v3796 = vmul.f32 %v3727, %v3763
      %v3797 = vmul.f32 %v3728, %v3763
      %v3798 = vmul.f32 %v3729, %v3763
      %v3799 = vmul.f32 %v3730, %v3763
      %v3800 = vmul.f32 %v3731, %v3763
      %v3801 = vmul.f32 %v3732, %v3763
      %v3802 = vmul.f32 %v3733, %v3763
      %v3803 = vmul.f32 %v3734, %v3763
      %v3804 = vmul.f32 %v3735, %v3763
      %v3805 = vmul.f32 %v3736, %v3763
      %v3806 = vmul.f32 %v3737, %v3763
      %v3807 = vmul.f32 %v3738, %v3763
      %v3808 = vmul.f32 %v3739, %v3763
      %v3809 = vmul.f32 %v3740, %v3763
      %v3810 = vmul.f32 %v3741, %v3763
      %v3811 = vmul.f32 %v3742, %v3763
      %v3812 = vmul.f32 %v3743, %v3763
      %v3813 = vmul.f32 %v3744, %v3763
      %v3814 = vmul.f32 %v3745, %v3763
      %v3815 = vmul.f32 %v3746, %v3763
      %v3816 = vmul.f32 %v3747, %v3763
      %v3817 = vmul.f32 %v3748, %v3763
      %v3818 = vmul.f32 %v3749, %v3763
      %v3819 = vmul.f32 %v3750, %v3763
      %v3820 = vmul.f32 %v3751, %v3763
      %v3821 = vmul.f32 %v3752, %v3763
      %v3822 = vmul.f32 %v3753, %v3763
      %v3823 = vmul.f32 %v3754, %v3763
      %v3824 = vmul.f32 %v3755, %v3763
      %v3825 = vmul.f32 %v3756, %v3763
      %v3826 = vmul.f32 %v3757, %v3763
      %v3827 = vmul.f32 %v3758, %v3763
      %v3828 = vadd.f32 %v3630, %v3764
      %v3829 = vadd.f32 %v3631, %v3765
      %v3830 = vadd.f32 %v3632, %v3766
      %v3831 = vadd.f32 %v3633, %v3767
      %v3832 = vadd.f32 %v3634, %v3768
      %v3833 = vadd.f32 %v3635, %v3769
      %v3834 = vadd.f32 %v3636, %v3770
      %v3835 = vadd.f32 %v3637, %v3771
      %v3836 = vadd.f32 %v3638, %v3772
      %v3837 = vadd.f32 %v3639, %v3773
      %v3838 = vadd.f32 %v3640, %v3774
      %v3839 = vadd.f32 %v3641, %v3775
      %v3840 = vadd.f32 %v3642, %v3776
      %v3841 = vadd.f32 %v3643, %v3777
      %v3842 = vadd.f32 %v3644, %v3778
      %v3843 = vadd.f32 %v3645, %v3779
      %v3844 = vadd.f32 %v3646, %v3780
      %v3845 = vadd.f32 %v3647, %v3781
      %v3846 = vadd.f32 %v3648, %v3782
      %v3847 = vadd.f32 %v3649, %v3783
      %v3848 = vadd.f32 %v3650, %v3784
      %v3849 = vadd.f32 %v3651, %v3785
      %v3850 = vadd.f32 %v3652, %v3786
      %v3851 = vadd.f32 %v3653, %v3787
      %v3852 = vadd.f32 %v3654, %v3788
      %v3853 = vadd.f32 %v3655, %v3789
      %v3854 = vadd.f32 %v3656, %v3790
      %v3855 = vadd.f32 %v3657, %v3791
      %v3856 = vadd.f32 %v3658, %v3792
      %v3857 = vadd.f32 %v3659, %v3793
      %v3858 = vadd.f32 %v3660, %v3794
      %v3859 = vadd.f32 %v3661, %v3795
      %v3860 = vadd.f32 %v3662, %v3796
      %v3861 = vadd.f32 %v3663, %v3797
      %v3862 = vadd.f32 %v3664, %v3798
      %v3863 = vadd.f32 %v3665, %v3799
      %v3864 = vadd.f32 %v3666, %v3800
      %v3865 = vadd.f32 %v3667, %v3801
      %v3866 = vadd.f32 %v3668, %v3802
      %v3867 = vadd.f32 %v3669, %v3803
      %v3868 = vadd.f32 %v3670, %v3804
      %v3869 = vadd.f32 %v3671, %v3805
      %v3870 = vadd.f32 %v3672, %v3806
      %v3871 = vadd.f32 %v3673, %v3807
      %v3872 = vadd.f32 %v3674, %v3808
      %v3873 = vadd.f32 %v3675, %v3809
      %v3874 = vadd.f32 %v3676, %v3810
      %v3875 = vadd.f32 %v3677, %v3811
      %v3876 = vadd.f32 %v3678, %v3812
      %v3877 = vadd.f32 %v3679, %v3813
      %v3878 = vadd.f32 %v3680, %v3814
      %v3879 = vadd.f32 %v3681, %v3815
      %v3880 = vadd.f32 %v3682, %v3816
      %v3881 = vadd.f32 %v3683, %v3817
      %v3882 = vadd.f32 %v3684, %v3818
      %v3883 = vadd.f32 %v3685, %v3819
      %v3884 = vadd.f32 %v3686, %v3820
      %v3885 = vadd.f32 %v3687, %v3821
      %v3886 = vadd.f32 %v3688, %v3822
      %v3887 = vadd.f32 %v3689, %v3823
      %v3888 = vadd.f32 %v3690, %v3824
      %v3889 = vadd.f32 %v3691, %v3825
      %v3890 = vadd.f32 %v3692, %v3826
      %v3891 = vadd.f32 %v3693, %v3827
      %v3892 = vld [vmem:[%s3694 + $0x1] sm:$0xff]
      %v3893 = vld [vmem:[%s3694 + $0x11] sm:$0xff]
      %v3894 = vld [vmem:[%s3694 + $0x21] sm:$0xff]
      %v3895 = vld [vmem:[%s3694 + $0x31] sm:$0xff]
      %v3896 = vld [vmem:[%s3694 + $0x41] sm:$0xff]
      %v3897 = vld [vmem:[%s3694 + $0x51] sm:$0xff]
      %v3898 = vld [vmem:[%s3694 + $0x61] sm:$0xff]
      %v3899 = vld [vmem:[%s3694 + $0x71] sm:$0xff]
      %v3900 = vld [vmem:[%s3694 + $0xa1] sm:$0xff]
      %v3901 = vld [vmem:[%s3694 + $0xb1] sm:$0xff]
      %v3902 = vld [vmem:[%s3694 + $0xc1] sm:$0xff]
      %v3903 = vld [vmem:[%s3694 + $0xd1] sm:$0xff]
      %v3904 = vld [vmem:[%s3694 + $0xe1] sm:$0xff]
      %v3905 = vld [vmem:[%s3694 + $0xf1] sm:$0xff]
      %v3906 = vld [vmem:[%s3694 + $0x101] sm:$0xff]
      %v3907 = vld [vmem:[%s3694 + $0x111] sm:$0xff]
      %v3908 = vld [vmem:[%s3694 + $0x141] sm:$0xff]
      %v3909 = vld [vmem:[%s3694 + $0x151] sm:$0xff]
      %v3910 = vld [vmem:[%s3694 + $0x161] sm:$0xff]
      %v3911 = vld [vmem:[%s3694 + $0x171] sm:$0xff]
      %v3912 = vld [vmem:[%s3694 + $0x181] sm:$0xff]
      %v3913 = vld [vmem:[%s3694 + $0x191] sm:$0xff]
      %v3914 = vld [vmem:[%s3694 + $0x1a1] sm:$0xff]
      %v3915 = vld [vmem:[%s3694 + $0x1b1] sm:$0xff]
      %v3916 = vld [vmem:[%s3694 + $0x1e1] sm:$0xff]
      %v3917 = vld [vmem:[%s3694 + $0x1f1] sm:$0xff]
      %v3918 = vld [vmem:[%s3694 + $0x201] sm:$0xff]
      %v3919 = vld [vmem:[%s3694 + $0x211] sm:$0xff]
      %v3920 = vld [vmem:[%s3694 + $0x221] sm:$0xff]
      %v3921 = vld [vmem:[%s3694 + $0x231] sm:$0xff]
      %v3922 = vld [vmem:[%s3694 + $0x241] sm:$0xff]
      %v3923 = vld [vmem:[%s3694 + $0x251] sm:$0xff]
      %v3924 = vld [vmem:[%s3694 + $0x281] sm:$0xff]
      %v3925 = vld [vmem:[%s3694 + $0x291] sm:$0xff]
      %v3926 = vld [vmem:[%s3694 + $0x2a1] sm:$0xff]
      %v3927 = vld [vmem:[%s3694 + $0x2b1] sm:$0xff]
      %v3928 = vld [vmem:[%s3694 + $0x2c1] sm:$0xff]
      %v3929 = vld [vmem:[%s3694 + $0x2d1] sm:$0xff]
      %v3930 = vld [vmem:[%s3694 + $0x2e1] sm:$0xff]
      %v3931 = vld [vmem:[%s3694 + $0x2f1] sm:$0xff]
      %v3932 = vld [vmem:[%s3694 + $0x321] sm:$0xff]
      %v3933 = vld [vmem:[%s3694 + $0x331] sm:$0xff]
      %v3934 = vld [vmem:[%s3694 + $0x341] sm:$0xff]
      %v3935 = vld [vmem:[%s3694 + $0x351] sm:$0xff]
      %v3936 = vld [vmem:[%s3694 + $0x361] sm:$0xff]
      %v3937 = vld [vmem:[%s3694 + $0x371] sm:$0xff]
      %v3938 = vld [vmem:[%s3694 + $0x381] sm:$0xff]
      %v3939 = vld [vmem:[%s3694 + $0x391] sm:$0xff]
      %v3940 = vld [vmem:[%s3694 + $0x3c1] sm:$0xff]
      %v3941 = vld [vmem:[%s3694 + $0x3d1] sm:$0xff]
      %v3942 = vld [vmem:[%s3694 + $0x3e1] sm:$0xff]
      %v3943 = vld [vmem:[%s3694 + $0x3f1] sm:$0xff]
      %v3944 = vld [vmem:[%s3694 + $0x401] sm:$0xff]
      %v3945 = vld [vmem:[%s3694 + $0x411] sm:$0xff]
      %v3946 = vld [vmem:[%s3694 + $0x421] sm:$0xff]
      %v3947 = vld [vmem:[%s3694 + $0x431] sm:$0xff]
      %v3948 = vld [vmem:[%s3694 + $0x461] sm:$0xff]
      %v3949 = vld [vmem:[%s3694 + $0x471] sm:$0xff]
      %v3950 = vld [vmem:[%s3694 + $0x481] sm:$0xff]
      %v3951 = vld [vmem:[%s3694 + $0x491] sm:$0xff]
      %v3952 = vld [vmem:[%s3694 + $0x4a1] sm:$0xff]
      %v3953 = vld [vmem:[%s3694 + $0x4b1] sm:$0xff]
      %v3954 = vld [vmem:[%s3694 + $0x4c1] sm:$0xff]
      %v3955 = vld [vmem:[%s3694 + $0x4d1] sm:$0xff]
      %v3956 = vld [vmem:[%s5 + $0xa] sm:$0x1]
      %v3957 = vlaneseq
      %v3958 = vshrl.u32 %v3957, 7
      %v3959 = vsub.s32 0, %v3958
      %v3960 = vrot.slane %v3956, %v3959
      %v3961 = vmul.f32 %v3892, %v3960
      %v3962 = vmul.f32 %v3893, %v3960
      %v3963 = vmul.f32 %v3894, %v3960
      %v3964 = vmul.f32 %v3895, %v3960
      %v3965 = vmul.f32 %v3896, %v3960
      %v3966 = vmul.f32 %v3897, %v3960
      %v3967 = vmul.f32 %v3898, %v3960
      %v3968 = vmul.f32 %v3899, %v3960
      %v3969 = vmul.f32 %v3900, %v3960
      %v3970 = vmul.f32 %v3901, %v3960
      %v3971 = vmul.f32 %v3902, %v3960
      %v3972 = vmul.f32 %v3903, %v3960
      %v3973 = vmul.f32 %v3904, %v3960
      %v3974 = vmul.f32 %v3905, %v3960
      %v3975 = vmul.f32 %v3906, %v3960
      %v3976 = vmul.f32 %v3907, %v3960
      %v3977 = vmul.f32 %v3908, %v3960
      %v3978 = vmul.f32 %v3909, %v3960
      %v3979 = vmul.f32 %v3910, %v3960
      %v3980 = vmul.f32 %v3911, %v3960
      %v3981 = vmul.f32 %v3912, %v3960
      %v3982 = vmul.f32 %v3913, %v3960
      %v3983 = vmul.f32 %v3914, %v3960
      %v3984 = vmul.f32 %v3915, %v3960
      %v3985 = vmul.f32 %v3916, %v3960
      %v3986 = vmul.f32 %v3917, %v3960
      %v3987 = vmul.f32 %v3918, %v3960
      %v3988 = vmul.f32 %v3919, %v3960
      %v3989 = vmul.f32 %v3920, %v3960
      %v3990 = vmul.f32 %v3921, %v3960
      %v3991 = vmul.f32 %v3922, %v3960
      %v3992 = vmul.f32 %v3923, %v3960
      %v3993 = vmul.f32 %v3924, %v3960
      %v3994 = vmul.f32 %v3925, %v3960
      %v3995 = vmul.f32 %v3926, %v3960
      %v3996 = vmul.f32 %v3927, %v3960
      %v3997 = vmul.f32 %v3928, %v3960
      %v3998 = vmul.f32 %v3929, %v3960
      %v3999 = vmul.f32 %v3930, %v3960
      %v4000 = vmul.f32 %v3931, %v3960
      %v4001 = vmul.f32 %v3932, %v3960
      %v4002 = vmul.f32 %v3933, %v3960
      %v4003 = vmul.f32 %v3934, %v3960
      %v4004 = vmul.f32 %v3935, %v3960
      %v4005 = vmul.f32 %v3936, %v3960
      %v4006 = vmul.f32 %v3937, %v3960
      %v4007 = vmul.f32 %v3938, %v3960
      %v4008 = vmul.f32 %v3939, %v3960
      %v4009 = vmul.f32 %v3940, %v3960
      %v4010 = vmul.f32 %v3941, %v3960
      %v4011 = vmul.f32 %v3942, %v3960
      %v4012 = vmul.f32 %v3943, %v3960
      %v4013 = vmul.f32 %v3944, %v3960
      %v4014 = vmul.f32 %v3945, %v3960
      %v4015 = vmul.f32 %v3946, %v3960
      %v4016 = vmul.f32 %v3947, %v3960
      %v4017 = vmul.f32 %v3948, %v3960
      %v4018 = vmul.f32 %v3949, %v3960
      %v4019 = vmul.f32 %v3950, %v3960
      %v4020 = vmul.f32 %v3951, %v3960
      %v4021 = vmul.f32 %v3952, %v3960
      %v4022 = vmul.f32 %v3953, %v3960
      %v4023 = vmul.f32 %v3954, %v3960
      %v4024 = vmul.f32 %v3955, %v3960
      %v4025 = vadd.f32 %v3828, %v3961
      %v4026 = vadd.f32 %v3829, %v3962
      %v4027 = vadd.f32 %v3830, %v3963
      %v4028 = vadd.f32 %v3831, %v3964
      %v4029 = vadd.f32 %v3832, %v3965
      %v4030 = vadd.f32 %v3833, %v3966
      %v4031 = vadd.f32 %v3834, %v3967
      %v4032 = vadd.f32 %v3835, %v3968
      %v4033 = vadd.f32 %v3836, %v3969
      %v4034 = vadd.f32 %v3837, %v3970
      %v4035 = vadd.f32 %v3838, %v3971
      %v4036 = vadd.f32 %v3839, %v3972
      %v4037 = vadd.f32 %v3840, %v3973
      %v4038 = vadd.f32 %v3841, %v3974
      %v4039 = vadd.f32 %v3842, %v3975
      %v4040 = vadd.f32 %v3843, %v3976
      %v4041 = vadd.f32 %v3844, %v3977
      %v4042 = vadd.f32 %v3845, %v3978
      %v4043 = vadd.f32 %v3846, %v3979
      %v4044 = vadd.f32 %v3847, %v3980
      %v4045 = vadd.f32 %v3848, %v3981
      %v4046 = vadd.f32 %v3849, %v3982
      %v4047 = vadd.f32 %v3850, %v3983
      %v4048 = vadd.f32 %v3851, %v3984
      %v4049 = vadd.f32 %v3852, %v3985
      %v4050 = vadd.f32 %v3853, %v3986
      %v4051 = vadd.f32 %v3854, %v3987
      %v4052 = vadd.f32 %v3855, %v3988
      %v4053 = vadd.f32 %v3856, %v3989
      %v4054 = vadd.f32 %v3857, %v3990
      %v4055 = vadd.f32 %v3858, %v3991
      %v4056 = vadd.f32 %v3859, %v3992
      %v4057 = vadd.f32 %v3860, %v3993
      %v4058 = vadd.f32 %v3861, %v3994
      %v4059 = vadd.f32 %v3862, %v3995
      %v4060 = vadd.f32 %v3863, %v3996
      %v4061 = vadd.f32 %v3864, %v3997
      %v4062 = vadd.f32 %v3865, %v3998
      %v4063 = vadd.f32 %v3866, %v3999
      %v4064 = vadd.f32 %v3867, %v4000
      %v4065 = vadd.f32 %v3868, %v4001
      %v4066 = vadd.f32 %v3869, %v4002
      %v4067 = vadd.f32 %v3870, %v4003
      %v4068 = vadd.f32 %v3871, %v4004
      %v4069 = vadd.f32 %v3872, %v4005
      %v4070 = vadd.f32 %v3873, %v4006
      %v4071 = vadd.f32 %v3874, %v4007
      %v4072 = vadd.f32 %v3875, %v4008
      %v4073 = vadd.f32 %v3876, %v4009
      %v4074 = vadd.f32 %v3877, %v4010
      %v4075 = vadd.f32 %v3878, %v4011
      %v4076 = vadd.f32 %v3879, %v4012
      %v4077 = vadd.f32 %v3880, %v4013
      %v4078 = vadd.f32 %v3881, %v4014
      %v4079 = vadd.f32 %v3882, %v4015
      %v4080 = vadd.f32 %v3883, %v4016
      %v4081 = vadd.f32 %v3884, %v4017
      %v4082 = vadd.f32 %v3885, %v4018
      %v4083 = vadd.f32 %v3886, %v4019
      %v4084 = vadd.f32 %v3887, %v4020
      %v4085 = vadd.f32 %v3888, %v4021
      %v4086 = vadd.f32 %v3889, %v4022
      %v4087 = vadd.f32 %v3890, %v4023
      %v4088 = vadd.f32 %v3891, %v4024
      %v4089 = vld [vmem:[%s3694 + $0x2] sm:$0xff]
      %v4090 = vld [vmem:[%s3694 + $0x12] sm:$0xff]
      %v4091 = vld [vmem:[%s3694 + $0x22] sm:$0xff]
      %v4092 = vld [vmem:[%s3694 + $0x32] sm:$0xff]
      %v4093 = vld [vmem:[%s3694 + $0x42] sm:$0xff]
      %v4094 = vld [vmem:[%s3694 + $0x52] sm:$0xff]
      %v4095 = vld [vmem:[%s3694 + $0x62] sm:$0xff]
      %v4096 = vld [vmem:[%s3694 + $0x72] sm:$0xff]
      %v4097 = vld [vmem:[%s3694 + $0xa2] sm:$0xff]
      %v4098 = vld [vmem:[%s3694 + $0xb2] sm:$0xff]
      %v4099 = vld [vmem:[%s3694 + $0xc2] sm:$0xff]
      %v4100 = vld [vmem:[%s3694 + $0xd2] sm:$0xff]
      %v4101 = vld [vmem:[%s3694 + $0xe2] sm:$0xff]
      %v4102 = vld [vmem:[%s3694 + $0xf2] sm:$0xff]
      %v4103 = vld [vmem:[%s3694 + $0x102] sm:$0xff]
      %v4104 = vld [vmem:[%s3694 + $0x112] sm:$0xff]
      %v4105 = vld [vmem:[%s3694 + $0x142] sm:$0xff]
      %v4106 = vld [vmem:[%s3694 + $0x152] sm:$0xff]
      %v4107 = vld [vmem:[%s3694 + $0x162] sm:$0xff]
      %v4108 = vld [vmem:[%s3694 + $0x172] sm:$0xff]
      %v4109 = vld [vmem:[%s3694 + $0x182] sm:$0xff]
      %v4110 = vld [vmem:[%s3694 + $0x192] sm:$0xff]
      %v4111 = vld [vmem:[%s3694 + $0x1a2] sm:$0xff]
      %v4112 = vld [vmem:[%s3694 + $0x1b2] sm:$0xff]
      %v4113 = vld [vmem:[%s3694 + $0x1e2] sm:$0xff]
      %v4114 = vld [vmem:[%s3694 + $0x1f2] sm:$0xff]
      %v4115 = vld [vmem:[%s3694 + $0x202] sm:$0xff]
      %v4116 = vld [vmem:[%s3694 + $0x212] sm:$0xff]
      %v4117 = vld [vmem:[%s3694 + $0x222] sm:$0xff]
      %v4118 = vld [vmem:[%s3694 + $0x232] sm:$0xff]
      %v4119 = vld [vmem:[%s3694 + $0x242] sm:$0xff]
      %v4120 = vld [vmem:[%s3694 + $0x252] sm:$0xff]
      %v4121 = vld [vmem:[%s3694 + $0x282] sm:$0xff]
      %v4122 = vld [vmem:[%s3694 + $0x292] sm:$0xff]
      %v4123 = vld [vmem:[%s3694 + $0x2a2] sm:$0xff]
      %v4124 = vld [vmem:[%s3694 + $0x2b2] sm:$0xff]
      %v4125 = vld [vmem:[%s3694 + $0x2c2] sm:$0xff]
      %v4126 = vld [vmem:[%s3694 + $0x2d2] sm:$0xff]
      %v4127 = vld [vmem:[%s3694 + $0x2e2] sm:$0xff]
      %v4128 = vld [vmem:[%s3694 + $0x2f2] sm:$0xff]
      %v4129 = vld [vmem:[%s3694 + $0x322] sm:$0xff]
      %v4130 = vld [vmem:[%s3694 + $0x332] sm:$0xff]
      %v4131 = vld [vmem:[%s3694 + $0x342] sm:$0xff]
      %v4132 = vld [vmem:[%s3694 + $0x352] sm:$0xff]
      %v4133 = vld [vmem:[%s3694 + $0x362] sm:$0xff]
      %v4134 = vld [vmem:[%s3694 + $0x372] sm:$0xff]
      %v4135 = vld [vmem:[%s3694 + $0x382] sm:$0xff]
      %v4136 = vld [vmem:[%s3694 + $0x392] sm:$0xff]
      %v4137 = vld [vmem:[%s3694 + $0x3c2] sm:$0xff]
      %v4138 = vld [vmem:[%s3694 + $0x3d2] sm:$0xff]
      %v4139 = vld [vmem:[%s3694 + $0x3e2] sm:$0xff]
      %v4140 = vld [vmem:[%s3694 + $0x3f2] sm:$0xff]
      %v4141 = vld [vmem:[%s3694 + $0x402] sm:$0xff]
      %v4142 = vld [vmem:[%s3694 + $0x412] sm:$0xff]
      %v4143 = vld [vmem:[%s3694 + $0x422] sm:$0xff]
      %v4144 = vld [vmem:[%s3694 + $0x432] sm:$0xff]
      %v4145 = vld [vmem:[%s3694 + $0x462] sm:$0xff]
      %v4146 = vld [vmem:[%s3694 + $0x472] sm:$0xff]
      %v4147 = vld [vmem:[%s3694 + $0x482] sm:$0xff]
      %v4148 = vld [vmem:[%s3694 + $0x492] sm:$0xff]
      %v4149 = vld [vmem:[%s3694 + $0x4a2] sm:$0xff]
      %v4150 = vld [vmem:[%s3694 + $0x4b2] sm:$0xff]
      %v4151 = vld [vmem:[%s3694 + $0x4c2] sm:$0xff]
      %v4152 = vld [vmem:[%s3694 + $0x4d2] sm:$0xff]
      %v4153 = vld [vmem:[%s5 + $0xb] sm:$0x1]
      %v4154 = vlaneseq
      %v4155 = vshrl.u32 %v4154, 7
      %v4156 = vsub.s32 0, %v4155
      %v4157 = vrot.slane %v4153, %v4156
      %v4158 = vmul.f32 %v4089, %v4157
      %v4159 = vmul.f32 %v4090, %v4157
      %v4160 = vmul.f32 %v4091, %v4157
      %v4161 = vmul.f32 %v4092, %v4157
      %v4162 = vmul.f32 %v4093, %v4157
      %v4163 = vmul.f32 %v4094, %v4157
      %v4164 = vmul.f32 %v4095, %v4157
      %v4165 = vmul.f32 %v4096, %v4157
      %v4166 = vmul.f32 %v4097, %v4157
      %v4167 = vmul.f32 %v4098, %v4157
      %v4168 = vmul.f32 %v4099, %v4157
      %v4169 = vmul.f32 %v4100, %v4157
      %v4170 = vmul.f32 %v4101, %v4157
      %v4171 = vmul.f32 %v4102, %v4157
      %v4172 = vmul.f32 %v4103, %v4157
      %v4173 = vmul.f32 %v4104, %v4157
      %v4174 = vmul.f32 %v4105, %v4157
      %v4175 = vmul.f32 %v4106, %v4157
      %v4176 = vmul.f32 %v4107, %v4157
      %v4177 = vmul.f32 %v4108, %v4157
      %v4178 = vmul.f32 %v4109, %v4157
      %v4179 = vmul.f32 %v4110, %v4157
      %v4180 = vmul.f32 %v4111, %v4157
      %v4181 = vmul.f32 %v4112, %v4157
      %v4182 = vmul.f32 %v4113, %v4157
      %v4183 = vmul.f32 %v4114, %v4157
      %v4184 = vmul.f32 %v4115, %v4157
      %v4185 = vmul.f32 %v4116, %v4157
      %v4186 = vmul.f32 %v4117, %v4157
      %v4187 = vmul.f32 %v4118, %v4157
      %v4188 = vmul.f32 %v4119, %v4157
      %v4189 = vmul.f32 %v4120, %v4157
      %v4190 = vmul.f32 %v4121, %v4157
      %v4191 = vmul.f32 %v4122, %v4157
      %v4192 = vmul.f32 %v4123, %v4157
      %v4193 = vmul.f32 %v4124, %v4157
      %v4194 = vmul.f32 %v4125, %v4157
      %v4195 = vmul.f32 %v4126, %v4157
      %v4196 = vmul.f32 %v4127, %v4157
      %v4197 = vmul.f32 %v4128, %v4157
      %v4198 = vmul.f32 %v4129, %v4157
      %v4199 = vmul.f32 %v4130, %v4157
      %v4200 = vmul.f32 %v4131, %v4157
      %v4201 = vmul.f32 %v4132, %v4157
      %v4202 = vmul.f32 %v4133, %v4157
      %v4203 = vmul.f32 %v4134, %v4157
      %v4204 = vmul.f32 %v4135, %v4157
      %v4205 = vmul.f32 %v4136, %v4157
      %v4206 = vmul.f32 %v4137, %v4157
      %v4207 = vmul.f32 %v4138, %v4157
      %v4208 = vmul.f32 %v4139, %v4157
      %v4209 = vmul.f32 %v4140, %v4157
      %v4210 = vmul.f32 %v4141, %v4157
      %v4211 = vmul.f32 %v4142, %v4157
      %v4212 = vmul.f32 %v4143, %v4157
      %v4213 = vmul.f32 %v4144, %v4157
      %v4214 = vmul.f32 %v4145, %v4157
      %v4215 = vmul.f32 %v4146, %v4157
      %v4216 = vmul.f32 %v4147, %v4157
      %v4217 = vmul.f32 %v4148, %v4157
      %v4218 = vmul.f32 %v4149, %v4157
      %v4219 = vmul.f32 %v4150, %v4157
      %v4220 = vmul.f32 %v4151, %v4157
      %v4221 = vmul.f32 %v4152, %v4157
      %v4222 = vadd.f32 %v4025, %v4158
      %v4223 = vadd.f32 %v4026, %v4159
      %v4224 = vadd.f32 %v4027, %v4160
      %v4225 = vadd.f32 %v4028, %v4161
      %v4226 = vadd.f32 %v4029, %v4162
      %v4227 = vadd.f32 %v4030, %v4163
      %v4228 = vadd.f32 %v4031, %v4164
      %v4229 = vadd.f32 %v4032, %v4165
      %v4230 = vadd.f32 %v4033, %v4166
      %v4231 = vadd.f32 %v4034, %v4167
      %v4232 = vadd.f32 %v4035, %v4168
      %v4233 = vadd.f32 %v4036, %v4169
      %v4234 = vadd.f32 %v4037, %v4170
      %v4235 = vadd.f32 %v4038, %v4171
      %v4236 = vadd.f32 %v4039, %v4172
      %v4237 = vadd.f32 %v4040, %v4173
      %v4238 = vadd.f32 %v4041, %v4174
      %v4239 = vadd.f32 %v4042, %v4175
      %v4240 = vadd.f32 %v4043, %v4176
      %v4241 = vadd.f32 %v4044, %v4177
      %v4242 = vadd.f32 %v4045, %v4178
      %v4243 = vadd.f32 %v4046, %v4179
      %v4244 = vadd.f32 %v4047, %v4180
      %v4245 = vadd.f32 %v4048, %v4181
      %v4246 = vadd.f32 %v4049, %v4182
      %v4247 = vadd.f32 %v4050, %v4183
      %v4248 = vadd.f32 %v4051, %v4184
      %v4249 = vadd.f32 %v4052, %v4185
      %v4250 = vadd.f32 %v4053, %v4186
      %v4251 = vadd.f32 %v4054, %v4187
      %v4252 = vadd.f32 %v4055, %v4188
      %v4253 = vadd.f32 %v4056, %v4189
      %v4254 = vadd.f32 %v4057, %v4190
      %v4255 = vadd.f32 %v4058, %v4191
      %v4256 = vadd.f32 %v4059, %v4192
      %v4257 = vadd.f32 %v4060, %v4193
      %v4258 = vadd.f32 %v4061, %v4194
      %v4259 = vadd.f32 %v4062, %v4195
      %v4260 = vadd.f32 %v4063, %v4196
      %v4261 = vadd.f32 %v4064, %v4197
      %v4262 = vadd.f32 %v4065, %v4198
      %v4263 = vadd.f32 %v4066, %v4199
      %v4264 = vadd.f32 %v4067, %v4200
      %v4265 = vadd.f32 %v4068, %v4201
      %v4266 = vadd.f32 %v4069, %v4202
      %v4267 = vadd.f32 %v4070, %v4203
      %v4268 = vadd.f32 %v4071, %v4204
      %v4269 = vadd.f32 %v4072, %v4205
      %v4270 = vadd.f32 %v4073, %v4206
      %v4271 = vadd.f32 %v4074, %v4207
      %v4272 = vadd.f32 %v4075, %v4208
      %v4273 = vadd.f32 %v4076, %v4209
      %v4274 = vadd.f32 %v4077, %v4210
      %v4275 = vadd.f32 %v4078, %v4211
      %v4276 = vadd.f32 %v4079, %v4212
      %v4277 = vadd.f32 %v4080, %v4213
      %v4278 = vadd.f32 %v4081, %v4214
      %v4279 = vadd.f32 %v4082, %v4215
      %v4280 = vadd.f32 %v4083, %v4216
      %v4281 = vadd.f32 %v4084, %v4217
      %v4282 = vadd.f32 %v4085, %v4218
      %v4283 = vadd.f32 %v4086, %v4219
      %v4284 = vadd.f32 %v4087, %v4220
      %v4285 = vadd.f32 %v4088, %v4221
      %v4286 = vld [vmem:[%s1483] sm:$0xff]
      %v4287 = vld [vmem:[%s1483 + $0x10] sm:$0xff]
      %v4288 = vld [vmem:[%s1483 + $0x20] sm:$0xff]
      %v4289 = vld [vmem:[%s1483 + $0x30] sm:$0xff]
      %v4290 = vld [vmem:[%s1483 + $0x40] sm:$0xff]
      %v4291 = vld [vmem:[%s1483 + $0x50] sm:$0xff]
      %v4292 = vld [vmem:[%s1483 + $0x60] sm:$0xff]
      %v4293 = vld [vmem:[%s1483 + $0x70] sm:$0xff]
      %v4294 = vld [vmem:[%s1483 + $0xa0] sm:$0xff]
      %v4295 = vld [vmem:[%s1483 + $0xb0] sm:$0xff]
      %v4296 = vld [vmem:[%s1483 + $0xc0] sm:$0xff]
      %v4297 = vld [vmem:[%s1483 + $0xd0] sm:$0xff]
      %v4298 = vld [vmem:[%s1483 + $0xe0] sm:$0xff]
      %v4299 = vld [vmem:[%s1483 + $0xf0] sm:$0xff]
      %v4300 = vld [vmem:[%s1483 + $0x100] sm:$0xff]
      %v4301 = vld [vmem:[%s1483 + $0x110] sm:$0xff]
      %v4302 = vld [vmem:[%s1483 + $0x140] sm:$0xff]
      %v4303 = vld [vmem:[%s1483 + $0x150] sm:$0xff]
      %v4304 = vld [vmem:[%s1483 + $0x160] sm:$0xff]
      %v4305 = vld [vmem:[%s1483 + $0x170] sm:$0xff]
      %v4306 = vld [vmem:[%s1483 + $0x180] sm:$0xff]
      %v4307 = vld [vmem:[%s1483 + $0x190] sm:$0xff]
      %v4308 = vld [vmem:[%s1483 + $0x1a0] sm:$0xff]
      %v4309 = vld [vmem:[%s1483 + $0x1b0] sm:$0xff]
      %v4310 = vld [vmem:[%s1483 + $0x1e0] sm:$0xff]
      %v4311 = vld [vmem:[%s1483 + $0x1f0] sm:$0xff]
      %v4312 = vld [vmem:[%s1483 + $0x200] sm:$0xff]
      %v4313 = vld [vmem:[%s1483 + $0x210] sm:$0xff]
      %v4314 = vld [vmem:[%s1483 + $0x220] sm:$0xff]
      %v4315 = vld [vmem:[%s1483 + $0x230] sm:$0xff]
      %v4316 = vld [vmem:[%s1483 + $0x240] sm:$0xff]
      %v4317 = vld [vmem:[%s1483 + $0x250] sm:$0xff]
      %v4318 = vld [vmem:[%s1483 + $0x280] sm:$0xff]
      %v4319 = vld [vmem:[%s1483 + $0x290] sm:$0xff]
      %v4320 = vld [vmem:[%s1483 + $0x2a0] sm:$0xff]
      %v4321 = vld [vmem:[%s1483 + $0x2b0] sm:$0xff]
      %v4322 = vld [vmem:[%s1483 + $0x2c0] sm:$0xff]
      %v4323 = vld [vmem:[%s1483 + $0x2d0] sm:$0xff]
      %v4324 = vld [vmem:[%s1483 + $0x2e0] sm:$0xff]
      %v4325 = vld [vmem:[%s1483 + $0x2f0] sm:$0xff]
      %v4326 = vld [vmem:[%s1483 + $0x320] sm:$0xff]
      %v4327 = vld [vmem:[%s1483 + $0x330] sm:$0xff]
      %v4328 = vld [vmem:[%s1483 + $0x340] sm:$0xff]
      %v4329 = vld [vmem:[%s1483 + $0x350] sm:$0xff]
      %v4330 = vld [vmem:[%s1483 + $0x360] sm:$0xff]
      %v4331 = vld [vmem:[%s1483 + $0x370] sm:$0xff]
      %v4332 = vld [vmem:[%s1483 + $0x380] sm:$0xff]
      %v4333 = vld [vmem:[%s1483 + $0x390] sm:$0xff]
      %v4334 = vld [vmem:[%s1483 + $0x3c0] sm:$0xff]
      %v4335 = vld [vmem:[%s1483 + $0x3d0] sm:$0xff]
      %v4336 = vld [vmem:[%s1483 + $0x3e0] sm:$0xff]
      %v4337 = vld [vmem:[%s1483 + $0x3f0] sm:$0xff]
      %v4338 = vld [vmem:[%s1483 + $0x400] sm:$0xff]
      %v4339 = vld [vmem:[%s1483 + $0x410] sm:$0xff]
      %v4340 = vld [vmem:[%s1483 + $0x420] sm:$0xff]
      %v4341 = vld [vmem:[%s1483 + $0x430] sm:$0xff]
      %v4342 = vld [vmem:[%s1483 + $0x460] sm:$0xff]
      %v4343 = vld [vmem:[%s1483 + $0x470] sm:$0xff]
      %v4344 = vld [vmem:[%s1483 + $0x480] sm:$0xff]
      %v4345 = vld [vmem:[%s1483 + $0x490] sm:$0xff]
      %v4346 = vld [vmem:[%s1483 + $0x4a0] sm:$0xff]
      %v4347 = vld [vmem:[%s1483 + $0x4b0] sm:$0xff]
      %v4348 = vld [vmem:[%s1483 + $0x4c0] sm:$0xff]
      %v4349 = vld [vmem:[%s1483 + $0x4d0] sm:$0xff]
      %v4350 = vld [vmem:[%s5 + $0xc] sm:$0x1]
      %v4351 = vlaneseq
      %v4352 = vshrl.u32 %v4351, 7
      %v4353 = vsub.s32 0, %v4352
      %v4354 = vrot.slane %v4350, %v4353
      %v4355 = vmul.f32 %v4286, %v4354
      %v4356 = vmul.f32 %v4287, %v4354
      %v4357 = vmul.f32 %v4288, %v4354
      %v4358 = vmul.f32 %v4289, %v4354
      %v4359 = vmul.f32 %v4290, %v4354
      %v4360 = vmul.f32 %v4291, %v4354
      %v4361 = vmul.f32 %v4292, %v4354
      %v4362 = vmul.f32 %v4293, %v4354
      %v4363 = vmul.f32 %v4294, %v4354
      %v4364 = vmul.f32 %v4295, %v4354
      %v4365 = vmul.f32 %v4296, %v4354
      %v4366 = vmul.f32 %v4297, %v4354
      %v4367 = vmul.f32 %v4298, %v4354
      %v4368 = vmul.f32 %v4299, %v4354
      %v4369 = vmul.f32 %v4300, %v4354
      %v4370 = vmul.f32 %v4301, %v4354
      %v4371 = vmul.f32 %v4302, %v4354
      %v4372 = vmul.f32 %v4303, %v4354
      %v4373 = vmul.f32 %v4304, %v4354
      %v4374 = vmul.f32 %v4305, %v4354
      %v4375 = vmul.f32 %v4306, %v4354
      %v4376 = vmul.f32 %v4307, %v4354
      %v4377 = vmul.f32 %v4308, %v4354
      %v4378 = vmul.f32 %v4309, %v4354
      %v4379 = vmul.f32 %v4310, %v4354
      %v4380 = vmul.f32 %v4311, %v4354
      %v4381 = vmul.f32 %v4312, %v4354
      %v4382 = vmul.f32 %v4313, %v4354
      %v4383 = vmul.f32 %v4314, %v4354
      %v4384 = vmul.f32 %v4315, %v4354
      %v4385 = vmul.f32 %v4316, %v4354
      %v4386 = vmul.f32 %v4317, %v4354
      %v4387 = vmul.f32 %v4318, %v4354
      %v4388 = vmul.f32 %v4319, %v4354
      %v4389 = vmul.f32 %v4320, %v4354
      %v4390 = vmul.f32 %v4321, %v4354
      %v4391 = vmul.f32 %v4322, %v4354
      %v4392 = vmul.f32 %v4323, %v4354
      %v4393 = vmul.f32 %v4324, %v4354
      %v4394 = vmul.f32 %v4325, %v4354
      %v4395 = vmul.f32 %v4326, %v4354
      %v4396 = vmul.f32 %v4327, %v4354
      %v4397 = vmul.f32 %v4328, %v4354
      %v4398 = vmul.f32 %v4329, %v4354
      %v4399 = vmul.f32 %v4330, %v4354
      %v4400 = vmul.f32 %v4331, %v4354
      %v4401 = vmul.f32 %v4332, %v4354
      %v4402 = vmul.f32 %v4333, %v4354
      %v4403 = vmul.f32 %v4334, %v4354
      %v4404 = vmul.f32 %v4335, %v4354
      %v4405 = vmul.f32 %v4336, %v4354
      %v4406 = vmul.f32 %v4337, %v4354
      %v4407 = vmul.f32 %v4338, %v4354
      %v4408 = vmul.f32 %v4339, %v4354
      %v4409 = vmul.f32 %v4340, %v4354
      %v4410 = vmul.f32 %v4341, %v4354
      %v4411 = vmul.f32 %v4342, %v4354
      %v4412 = vmul.f32 %v4343, %v4354
      %v4413 = vmul.f32 %v4344, %v4354
      %v4414 = vmul.f32 %v4345, %v4354
      %v4415 = vmul.f32 %v4346, %v4354
      %v4416 = vmul.f32 %v4347, %v4354
      %v4417 = vmul.f32 %v4348, %v4354
      %v4418 = vmul.f32 %v4349, %v4354
      %v4419 = vadd.f32 %v4222, %v4355
      %v4420 = vadd.f32 %v4223, %v4356
      %v4421 = vadd.f32 %v4224, %v4357
      %v4422 = vadd.f32 %v4225, %v4358
      %v4423 = vadd.f32 %v4226, %v4359
      %v4424 = vadd.f32 %v4227, %v4360
      %v4425 = vadd.f32 %v4228, %v4361
      %v4426 = vadd.f32 %v4229, %v4362
      %v4427 = vadd.f32 %v4230, %v4363
      %v4428 = vadd.f32 %v4231, %v4364
      %v4429 = vadd.f32 %v4232, %v4365
      %v4430 = vadd.f32 %v4233, %v4366
      %v4431 = vadd.f32 %v4234, %v4367
      %v4432 = vadd.f32 %v4235, %v4368
      %v4433 = vadd.f32 %v4236, %v4369
      %v4434 = vadd.f32 %v4237, %v4370
      %v4435 = vadd.f32 %v4238, %v4371
      %v4436 = vadd.f32 %v4239, %v4372
      %v4437 = vadd.f32 %v4240, %v4373
      %v4438 = vadd.f32 %v4241, %v4374
      %v4439 = vadd.f32 %v4242, %v4375
      %v4440 = vadd.f32 %v4243, %v4376
      %v4441 = vadd.f32 %v4244, %v4377
      %v4442 = vadd.f32 %v4245, %v4378
      %v4443 = vadd.f32 %v4246, %v4379
      %v4444 = vadd.f32 %v4247, %v4380
      %v4445 = vadd.f32 %v4248, %v4381
      %v4446 = vadd.f32 %v4249, %v4382
      %v4447 = vadd.f32 %v4250, %v4383
      %v4448 = vadd.f32 %v4251, %v4384
      %v4449 = vadd.f32 %v4252, %v4385
      %v4450 = vadd.f32 %v4253, %v4386
      %v4451 = vadd.f32 %v4254, %v4387
      %v4452 = vadd.f32 %v4255, %v4388
      %v4453 = vadd.f32 %v4256, %v4389
      %v4454 = vadd.f32 %v4257, %v4390
      %v4455 = vadd.f32 %v4258, %v4391
      %v4456 = vadd.f32 %v4259, %v4392
      %v4457 = vadd.f32 %v4260, %v4393
      %v4458 = vadd.f32 %v4261, %v4394
      %v4459 = vadd.f32 %v4262, %v4395
      %v4460 = vadd.f32 %v4263, %v4396
      %v4461 = vadd.f32 %v4264, %v4397
      %v4462 = vadd.f32 %v4265, %v4398
      %v4463 = vadd.f32 %v4266, %v4399
      %v4464 = vadd.f32 %v4267, %v4400
      %v4465 = vadd.f32 %v4268, %v4401
      %v4466 = vadd.f32 %v4269, %v4402
      %v4467 = vadd.f32 %v4270, %v4403
      %v4468 = vadd.f32 %v4271, %v4404
      %v4469 = vadd.f32 %v4272, %v4405
      %v4470 = vadd.f32 %v4273, %v4406
      %v4471 = vadd.f32 %v4274, %v4407
      %v4472 = vadd.f32 %v4275, %v4408
      %v4473 = vadd.f32 %v4276, %v4409
      %v4474 = vadd.f32 %v4277, %v4410
      %v4475 = vadd.f32 %v4278, %v4411
      %v4476 = vadd.f32 %v4279, %v4412
      %v4477 = vadd.f32 %v4280, %v4413
      %v4478 = vadd.f32 %v4281, %v4414
      %v4479 = vadd.f32 %v4282, %v4415
      %v4480 = vadd.f32 %v4283, %v4416
      %v4481 = vadd.f32 %v4284, %v4417
      %v4482 = vadd.f32 %v4285, %v4418
      %v4483 = vld [vmem:[%s1483 + $0x1] sm:$0xff]
      %v4484 = vld [vmem:[%s1483 + $0x11] sm:$0xff]
      %v4485 = vld [vmem:[%s1483 + $0x21] sm:$0xff]
      %v4486 = vld [vmem:[%s1483 + $0x31] sm:$0xff]
      %v4487 = vld [vmem:[%s1483 + $0x41] sm:$0xff]
      %v4488 = vld [vmem:[%s1483 + $0x51] sm:$0xff]
      %v4489 = vld [vmem:[%s1483 + $0x61] sm:$0xff]
      %v4490 = vld [vmem:[%s1483 + $0x71] sm:$0xff]
      %v4491 = vld [vmem:[%s1483 + $0xa1] sm:$0xff]
      %v4492 = vld [vmem:[%s1483 + $0xb1] sm:$0xff]
      %v4493 = vld [vmem:[%s1483 + $0xc1] sm:$0xff]
      %v4494 = vld [vmem:[%s1483 + $0xd1] sm:$0xff]
      %v4495 = vld [vmem:[%s1483 + $0xe1] sm:$0xff]
      %v4496 = vld [vmem:[%s1483 + $0xf1] sm:$0xff]
      %v4497 = vld [vmem:[%s1483 + $0x101] sm:$0xff]
      %v4498 = vld [vmem:[%s1483 + $0x111] sm:$0xff]
      %v4499 = vld [vmem:[%s1483 + $0x141] sm:$0xff]
      %v4500 = vld [vmem:[%s1483 + $0x151] sm:$0xff]
      %v4501 = vld [vmem:[%s1483 + $0x161] sm:$0xff]
      %v4502 = vld [vmem:[%s1483 + $0x171] sm:$0xff]
      %v4503 = vld [vmem:[%s1483 + $0x181] sm:$0xff]
      %v4504 = vld [vmem:[%s1483 + $0x191] sm:$0xff]
      %v4505 = vld [vmem:[%s1483 + $0x1a1] sm:$0xff]
      %v4506 = vld [vmem:[%s1483 + $0x1b1] sm:$0xff]
      %v4507 = vld [vmem:[%s1483 + $0x1e1] sm:$0xff]
      %v4508 = vld [vmem:[%s1483 + $0x1f1] sm:$0xff]
      %v4509 = vld [vmem:[%s1483 + $0x201] sm:$0xff]
      %v4510 = vld [vmem:[%s1483 + $0x211] sm:$0xff]
      %v4511 = vld [vmem:[%s1483 + $0x221] sm:$0xff]
      %v4512 = vld [vmem:[%s1483 + $0x231] sm:$0xff]
      %v4513 = vld [vmem:[%s1483 + $0x241] sm:$0xff]
      %v4514 = vld [vmem:[%s1483 + $0x251] sm:$0xff]
      %v4515 = vld [vmem:[%s1483 + $0x281] sm:$0xff]
      %v4516 = vld [vmem:[%s1483 + $0x291] sm:$0xff]
      %v4517 = vld [vmem:[%s1483 + $0x2a1] sm:$0xff]
      %v4518 = vld [vmem:[%s1483 + $0x2b1] sm:$0xff]
      %v4519 = vld [vmem:[%s1483 + $0x2c1] sm:$0xff]
      %v4520 = vld [vmem:[%s1483 + $0x2d1] sm:$0xff]
      %v4521 = vld [vmem:[%s1483 + $0x2e1] sm:$0xff]
      %v4522 = vld [vmem:[%s1483 + $0x2f1] sm:$0xff]
      %v4523 = vld [vmem:[%s1483 + $0x321] sm:$0xff]
      %v4524 = vld [vmem:[%s1483 + $0x331] sm:$0xff]
      %v4525 = vld [vmem:[%s1483 + $0x341] sm:$0xff]
      %v4526 = vld [vmem:[%s1483 + $0x351] sm:$0xff]
      %v4527 = vld [vmem:[%s1483 + $0x361] sm:$0xff]
      %v4528 = vld [vmem:[%s1483 + $0x371] sm:$0xff]
      %v4529 = vld [vmem:[%s1483 + $0x381] sm:$0xff]
      %v4530 = vld [vmem:[%s1483 + $0x391] sm:$0xff]
      %v4531 = vld [vmem:[%s1483 + $0x3c1] sm:$0xff]
      %v4532 = vld [vmem:[%s1483 + $0x3d1] sm:$0xff]
      %v4533 = vld [vmem:[%s1483 + $0x3e1] sm:$0xff]
      %v4534 = vld [vmem:[%s1483 + $0x3f1] sm:$0xff]
      %v4535 = vld [vmem:[%s1483 + $0x401] sm:$0xff]
      %v4536 = vld [vmem:[%s1483 + $0x411] sm:$0xff]
      %v4537 = vld [vmem:[%s1483 + $0x421] sm:$0xff]
      %v4538 = vld [vmem:[%s1483 + $0x431] sm:$0xff]
      %v4539 = vld [vmem:[%s1483 + $0x461] sm:$0xff]
      %v4540 = vld [vmem:[%s1483 + $0x471] sm:$0xff]
      %v4541 = vld [vmem:[%s1483 + $0x481] sm:$0xff]
      %v4542 = vld [vmem:[%s1483 + $0x491] sm:$0xff]
      %v4543 = vld [vmem:[%s1483 + $0x4a1] sm:$0xff]
      %v4544 = vld [vmem:[%s1483 + $0x4b1] sm:$0xff]
      %v4545 = vld [vmem:[%s1483 + $0x4c1] sm:$0xff]
      %v4546 = vld [vmem:[%s1483 + $0x4d1] sm:$0xff]
      %v4547 = vld [vmem:[%s5 + $0xd] sm:$0x1]
      %v4548 = vlaneseq
      %v4549 = vshrl.u32 %v4548, 7
      %v4550 = vsub.s32 0, %v4549
      %v4551 = vrot.slane %v4547, %v4550
      %v4552 = vmul.f32 %v4483, %v4551
      %v4553 = vmul.f32 %v4484, %v4551
      %v4554 = vmul.f32 %v4485, %v4551
      %v4555 = vmul.f32 %v4486, %v4551
      %v4556 = vmul.f32 %v4487, %v4551
      %v4557 = vmul.f32 %v4488, %v4551
      %v4558 = vmul.f32 %v4489, %v4551
      %v4559 = vmul.f32 %v4490, %v4551
      %v4560 = vmul.f32 %v4491, %v4551
      %v4561 = vmul.f32 %v4492, %v4551
      %v4562 = vmul.f32 %v4493, %v4551
      %v4563 = vmul.f32 %v4494, %v4551
      %v4564 = vmul.f32 %v4495, %v4551
      %v4565 = vmul.f32 %v4496, %v4551
      %v4566 = vmul.f32 %v4497, %v4551
      %v4567 = vmul.f32 %v4498, %v4551
      %v4568 = vmul.f32 %v4499, %v4551
      %v4569 = vmul.f32 %v4500, %v4551
      %v4570 = vmul.f32 %v4501, %v4551
      %v4571 = vmul.f32 %v4502, %v4551
      %v4572 = vmul.f32 %v4503, %v4551
      %v4573 = vmul.f32 %v4504, %v4551
      %v4574 = vmul.f32 %v4505, %v4551
      %v4575 = vmul.f32 %v4506, %v4551
      %v4576 = vmul.f32 %v4507, %v4551
      %v4577 = vmul.f32 %v4508, %v4551
      %v4578 = vmul.f32 %v4509, %v4551
      %v4579 = vmul.f32 %v4510, %v4551
      %v4580 = vmul.f32 %v4511, %v4551
      %v4581 = vmul.f32 %v4512, %v4551
      %v4582 = vmul.f32 %v4513, %v4551
      %v4583 = vmul.f32 %v4514, %v4551
      %v4584 = vmul.f32 %v4515, %v4551
      %v4585 = vmul.f32 %v4516, %v4551
      %v4586 = vmul.f32 %v4517, %v4551
      %v4587 = vmul.f32 %v4518, %v4551
      %v4588 = vmul.f32 %v4519, %v4551
      %v4589 = vmul.f32 %v4520, %v4551
      %v4590 = vmul.f32 %v4521, %v4551
      %v4591 = vmul.f32 %v4522, %v4551
      %v4592 = vmul.f32 %v4523, %v4551
      %v4593 = vmul.f32 %v4524, %v4551
      %v4594 = vmul.f32 %v4525, %v4551
      %v4595 = vmul.f32 %v4526, %v4551
      %v4596 = vmul.f32 %v4527, %v4551
      %v4597 = vmul.f32 %v4528, %v4551
      %v4598 = vmul.f32 %v4529, %v4551
      %v4599 = vmul.f32 %v4530, %v4551
      %v4600 = vmul.f32 %v4531, %v4551
      %v4601 = vmul.f32 %v4532, %v4551
      %v4602 = vmul.f32 %v4533, %v4551
      %v4603 = vmul.f32 %v4534, %v4551
      %v4604 = vmul.f32 %v4535, %v4551
      %v4605 = vmul.f32 %v4536, %v4551
      %v4606 = vmul.f32 %v4537, %v4551
      %v4607 = vmul.f32 %v4538, %v4551
      %v4608 = vmul.f32 %v4539, %v4551
      %v4609 = vmul.f32 %v4540, %v4551
      %v4610 = vmul.f32 %v4541, %v4551
      %v4611 = vmul.f32 %v4542, %v4551
      %v4612 = vmul.f32 %v4543, %v4551
      %v4613 = vmul.f32 %v4544, %v4551
      %v4614 = vmul.f32 %v4545, %v4551
      %v4615 = vmul.f32 %v4546, %v4551
      %v4616 = vadd.f32 %v4419, %v4552
      %v4617 = vadd.f32 %v4420, %v4553
      %v4618 = vadd.f32 %v4421, %v4554
      %v4619 = vadd.f32 %v4422, %v4555
      %v4620 = vadd.f32 %v4423, %v4556
      %v4621 = vadd.f32 %v4424, %v4557
      %v4622 = vadd.f32 %v4425, %v4558
      %v4623 = vadd.f32 %v4426, %v4559
      %v4624 = vadd.f32 %v4427, %v4560
      %v4625 = vadd.f32 %v4428, %v4561
      %v4626 = vadd.f32 %v4429, %v4562
      %v4627 = vadd.f32 %v4430, %v4563
      %v4628 = vadd.f32 %v4431, %v4564
      %v4629 = vadd.f32 %v4432, %v4565
      %v4630 = vadd.f32 %v4433, %v4566
      %v4631 = vadd.f32 %v4434, %v4567
      %v4632 = vadd.f32 %v4435, %v4568
      %v4633 = vadd.f32 %v4436, %v4569
      %v4634 = vadd.f32 %v4437, %v4570
      %v4635 = vadd.f32 %v4438, %v4571
      %v4636 = vadd.f32 %v4439, %v4572
      %v4637 = vadd.f32 %v4440, %v4573
      %v4638 = vadd.f32 %v4441, %v4574
      %v4639 = vadd.f32 %v4442, %v4575
      %v4640 = vadd.f32 %v4443, %v4576
      %v4641 = vadd.f32 %v4444, %v4577
      %v4642 = vadd.f32 %v4445, %v4578
      %v4643 = vadd.f32 %v4446, %v4579
      %v4644 = vadd.f32 %v4447, %v4580
      %v4645 = vadd.f32 %v4448, %v4581
      %v4646 = vadd.f32 %v4449, %v4582
      %v4647 = vadd.f32 %v4450, %v4583
      %v4648 = vadd.f32 %v4451, %v4584
      %v4649 = vadd.f32 %v4452, %v4585
      %v4650 = vadd.f32 %v4453, %v4586
      %v4651 = vadd.f32 %v4454, %v4587
      %v4652 = vadd.f32 %v4455, %v4588
      %v4653 = vadd.f32 %v4456, %v4589
      %v4654 = vadd.f32 %v4457, %v4590
      %v4655 = vadd.f32 %v4458, %v4591
      %v4656 = vadd.f32 %v4459, %v4592
      %v4657 = vadd.f32 %v4460, %v4593
      %v4658 = vadd.f32 %v4461, %v4594
      %v4659 = vadd.f32 %v4462, %v4595
      %v4660 = vadd.f32 %v4463, %v4596
      %v4661 = vadd.f32 %v4464, %v4597
      %v4662 = vadd.f32 %v4465, %v4598
      %v4663 = vadd.f32 %v4466, %v4599
      %v4664 = vadd.f32 %v4467, %v4600
      %v4665 = vadd.f32 %v4468, %v4601
      %v4666 = vadd.f32 %v4469, %v4602
      %v4667 = vadd.f32 %v4470, %v4603
      %v4668 = vadd.f32 %v4471, %v4604
      %v4669 = vadd.f32 %v4472, %v4605
      %v4670 = vadd.f32 %v4473, %v4606
      %v4671 = vadd.f32 %v4474, %v4607
      %v4672 = vadd.f32 %v4475, %v4608
      %v4673 = vadd.f32 %v4476, %v4609
      %v4674 = vadd.f32 %v4477, %v4610
      %v4675 = vadd.f32 %v4478, %v4611
      %v4676 = vadd.f32 %v4479, %v4612
      %v4677 = vadd.f32 %v4480, %v4613
      %v4678 = vadd.f32 %v4481, %v4614
      %v4679 = vadd.f32 %v4482, %v4615
      %v4680 = vld [vmem:[%s1483 + $0x2] sm:$0xff]
      %v4681 = vld [vmem:[%s1483 + $0x12] sm:$0xff]
      %v4682 = vld [vmem:[%s1483 + $0x22] sm:$0xff]
      %v4683 = vld [vmem:[%s1483 + $0x32] sm:$0xff]
      %v4684 = vld [vmem:[%s1483 + $0x42] sm:$0xff]
      %v4685 = vld [vmem:[%s1483 + $0x52] sm:$0xff]
      %v4686 = vld [vmem:[%s1483 + $0x62] sm:$0xff]
      %v4687 = vld [vmem:[%s1483 + $0x72] sm:$0xff]
      %v4688 = vld [vmem:[%s1483 + $0xa2] sm:$0xff]
      %v4689 = vld [vmem:[%s1483 + $0xb2] sm:$0xff]
      %v4690 = vld [vmem:[%s1483 + $0xc2] sm:$0xff]
      %v4691 = vld [vmem:[%s1483 + $0xd2] sm:$0xff]
      %v4692 = vld [vmem:[%s1483 + $0xe2] sm:$0xff]
      %v4693 = vld [vmem:[%s1483 + $0xf2] sm:$0xff]
      %v4694 = vld [vmem:[%s1483 + $0x102] sm:$0xff]
      %v4695 = vld [vmem:[%s1483 + $0x112] sm:$0xff]
      %v4696 = vld [vmem:[%s1483 + $0x142] sm:$0xff]
      %v4697 = vld [vmem:[%s1483 + $0x152] sm:$0xff]
      %v4698 = vld [vmem:[%s1483 + $0x162] sm:$0xff]
      %v4699 = vld [vmem:[%s1483 + $0x172] sm:$0xff]
      %v4700 = vld [vmem:[%s1483 + $0x182] sm:$0xff]
      %v4701 = vld [vmem:[%s1483 + $0x192] sm:$0xff]
      %v4702 = vld [vmem:[%s1483 + $0x1a2] sm:$0xff]
      %v4703 = vld [vmem:[%s1483 + $0x1b2] sm:$0xff]
      %v4704 = vld [vmem:[%s1483 + $0x1e2] sm:$0xff]
      %v4705 = vld [vmem:[%s1483 + $0x1f2] sm:$0xff]
      %v4706 = vld [vmem:[%s1483 + $0x202] sm:$0xff]
      %v4707 = vld [vmem:[%s1483 + $0x212] sm:$0xff]
      %v4708 = vld [vmem:[%s1483 + $0x222] sm:$0xff]
      %v4709 = vld [vmem:[%s1483 + $0x232] sm:$0xff]
      %v4710 = vld [vmem:[%s1483 + $0x242] sm:$0xff]
      %v4711 = vld [vmem:[%s1483 + $0x252] sm:$0xff]
      %v4712 = vld [vmem:[%s1483 + $0x282] sm:$0xff]
      %v4713 = vld [vmem:[%s1483 + $0x292] sm:$0xff]
      %v4714 = vld [vmem:[%s1483 + $0x2a2] sm:$0xff]
      %v4715 = vld [vmem:[%s1483 + $0x2b2] sm:$0xff]
      %v4716 = vld [vmem:[%s1483 + $0x2c2] sm:$0xff]
      %v4717 = vld [vmem:[%s1483 + $0x2d2] sm:$0xff]
      %v4718 = vld [vmem:[%s1483 + $0x2e2] sm:$0xff]
      %v4719 = vld [vmem:[%s1483 + $0x2f2] sm:$0xff]
      %v4720 = vld [vmem:[%s1483 + $0x322] sm:$0xff]
      %v4721 = vld [vmem:[%s1483 + $0x332] sm:$0xff]
      %v4722 = vld [vmem:[%s1483 + $0x342] sm:$0xff]
      %v4723 = vld [vmem:[%s1483 + $0x352] sm:$0xff]
      %v4724 = vld [vmem:[%s1483 + $0x362] sm:$0xff]
      %v4725 = vld [vmem:[%s1483 + $0x372] sm:$0xff]
      %v4726 = vld [vmem:[%s1483 + $0x382] sm:$0xff]
      %v4727 = vld [vmem:[%s1483 + $0x392] sm:$0xff]
      %v4728 = vld [vmem:[%s1483 + $0x3c2] sm:$0xff]
      %v4729 = vld [vmem:[%s1483 + $0x3d2] sm:$0xff]
      %v4730 = vld [vmem:[%s1483 + $0x3e2] sm:$0xff]
      %v4731 = vld [vmem:[%s1483 + $0x3f2] sm:$0xff]
      %v4732 = vld [vmem:[%s1483 + $0x402] sm:$0xff]
      %v4733 = vld [vmem:[%s1483 + $0x412] sm:$0xff]
      %v4734 = vld [vmem:[%s1483 + $0x422] sm:$0xff]
      %v4735 = vld [vmem:[%s1483 + $0x432] sm:$0xff]
      %v4736 = vld [vmem:[%s1483 + $0x462] sm:$0xff]
      %v4737 = vld [vmem:[%s1483 + $0x472] sm:$0xff]
      %v4738 = vld [vmem:[%s1483 + $0x482] sm:$0xff]
      %v4739 = vld [vmem:[%s1483 + $0x492] sm:$0xff]
      %v4740 = vld [vmem:[%s1483 + $0x4a2] sm:$0xff]
      %v4741 = vld [vmem:[%s1483 + $0x4b2] sm:$0xff]
      %v4742 = vld [vmem:[%s1483 + $0x4c2] sm:$0xff]
      %v4743 = vld [vmem:[%s1483 + $0x4d2] sm:$0xff]
      %v4744 = vld [vmem:[%s5 + $0xe] sm:$0x1]
      %v4745 = vlaneseq
      %v4746 = vshrl.u32 %v4745, 7
      %v4747 = vsub.s32 0, %v4746
      %v4748 = vrot.slane %v4744, %v4747
      %v4749 = vmul.f32 %v4680, %v4748
      %v4750 = vmul.f32 %v4681, %v4748
      %v4751 = vmul.f32 %v4682, %v4748
      %v4752 = vmul.f32 %v4683, %v4748
      %v4753 = vmul.f32 %v4684, %v4748
      %v4754 = vmul.f32 %v4685, %v4748
      %v4755 = vmul.f32 %v4686, %v4748
      %v4756 = vmul.f32 %v4687, %v4748
      %v4757 = vmul.f32 %v4688, %v4748
      %v4758 = vmul.f32 %v4689, %v4748
      %v4759 = vmul.f32 %v4690, %v4748
      %v4760 = vmul.f32 %v4691, %v4748
      %v4761 = vmul.f32 %v4692, %v4748
      %v4762 = vmul.f32 %v4693, %v4748
      %v4763 = vmul.f32 %v4694, %v4748
      %v4764 = vmul.f32 %v4695, %v4748
      %v4765 = vmul.f32 %v4696, %v4748
      %v4766 = vmul.f32 %v4697, %v4748
      %v4767 = vmul.f32 %v4698, %v4748
      %v4768 = vmul.f32 %v4699, %v4748
      %v4769 = vmul.f32 %v4700, %v4748
      %v4770 = vmul.f32 %v4701, %v4748
      %v4771 = vmul.f32 %v4702, %v4748
      %v4772 = vmul.f32 %v4703, %v4748
      %v4773 = vmul.f32 %v4704, %v4748
      %v4774 = vmul.f32 %v4705, %v4748
      %v4775 = vmul.f32 %v4706, %v4748
      %v4776 = vmul.f32 %v4707, %v4748
      %v4777 = vmul.f32 %v4708, %v4748
      %v4778 = vmul.f32 %v4709, %v4748
      %v4779 = vmul.f32 %v4710, %v4748
      %v4780 = vmul.f32 %v4711, %v4748
      %v4781 = vmul.f32 %v4712, %v4748
      %v4782 = vmul.f32 %v4713, %v4748
      %v4783 = vmul.f32 %v4714, %v4748
      %v4784 = vmul.f32 %v4715, %v4748
      %v4785 = vmul.f32 %v4716, %v4748
      %v4786 = vmul.f32 %v4717, %v4748
      %v4787 = vmul.f32 %v4718, %v4748
      %v4788 = vmul.f32 %v4719, %v4748
      %v4789 = vmul.f32 %v4720, %v4748
      %v4790 = vmul.f32 %v4721, %v4748
      %v4791 = vmul.f32 %v4722, %v4748
      %v4792 = vmul.f32 %v4723, %v4748
      %v4793 = vmul.f32 %v4724, %v4748
      %v4794 = vmul.f32 %v4725, %v4748
      %v4795 = vmul.f32 %v4726, %v4748
      %v4796 = vmul.f32 %v4727, %v4748
      %v4797 = vmul.f32 %v4728, %v4748
      %v4798 = vmul.f32 %v4729, %v4748
      %v4799 = vmul.f32 %v4730, %v4748
      %v4800 = vmul.f32 %v4731, %v4748
      %v4801 = vmul.f32 %v4732, %v4748
      %v4802 = vmul.f32 %v4733, %v4748
      %v4803 = vmul.f32 %v4734, %v4748
      %v4804 = vmul.f32 %v4735, %v4748
      %v4805 = vmul.f32 %v4736, %v4748
      %v4806 = vmul.f32 %v4737, %v4748
      %v4807 = vmul.f32 %v4738, %v4748
      %v4808 = vmul.f32 %v4739, %v4748
      %v4809 = vmul.f32 %v4740, %v4748
      %v4810 = vmul.f32 %v4741, %v4748
      %v4811 = vmul.f32 %v4742, %v4748
      %v4812 = vmul.f32 %v4743, %v4748
      %v4813 = vadd.f32 %v4616, %v4749
      %v4814 = vadd.f32 %v4617, %v4750
      %v4815 = vadd.f32 %v4618, %v4751
      %v4816 = vadd.f32 %v4619, %v4752
      %v4817 = vadd.f32 %v4620, %v4753
      %v4818 = vadd.f32 %v4621, %v4754
      %v4819 = vadd.f32 %v4622, %v4755
      %v4820 = vadd.f32 %v4623, %v4756
      %v4821 = vadd.f32 %v4624, %v4757
      %v4822 = vadd.f32 %v4625, %v4758
      %v4823 = vadd.f32 %v4626, %v4759
      %v4824 = vadd.f32 %v4627, %v4760
      %v4825 = vadd.f32 %v4628, %v4761
      %v4826 = vadd.f32 %v4629, %v4762
      %v4827 = vadd.f32 %v4630, %v4763
      %v4828 = vadd.f32 %v4631, %v4764
      %v4829 = vadd.f32 %v4632, %v4765
      %v4830 = vadd.f32 %v4633, %v4766
      %v4831 = vadd.f32 %v4634, %v4767
      %v4832 = vadd.f32 %v4635, %v4768
      %v4833 = vadd.f32 %v4636, %v4769
      %v4834 = vadd.f32 %v4637, %v4770
      %v4835 = vadd.f32 %v4638, %v4771
      %v4836 = vadd.f32 %v4639, %v4772
      %v4837 = vadd.f32 %v4640, %v4773
      %v4838 = vadd.f32 %v4641, %v4774
      %v4839 = vadd.f32 %v4642, %v4775
      %v4840 = vadd.f32 %v4643, %v4776
      %v4841 = vadd.f32 %v4644, %v4777
      %v4842 = vadd.f32 %v4645, %v4778
      %v4843 = vadd.f32 %v4646, %v4779
      %v4844 = vadd.f32 %v4647, %v4780
      %v4845 = vadd.f32 %v4648, %v4781
      %v4846 = vadd.f32 %v4649, %v4782
      %v4847 = vadd.f32 %v4650, %v4783
      %v4848 = vadd.f32 %v4651, %v4784
      %v4849 = vadd.f32 %v4652, %v4785
      %v4850 = vadd.f32 %v4653, %v4786
      %v4851 = vadd.f32 %v4654, %v4787
      %v4852 = vadd.f32 %v4655, %v4788
      %v4853 = vadd.f32 %v4656, %v4789
      %v4854 = vadd.f32 %v4657, %v4790
      %v4855 = vadd.f32 %v4658, %v4791
      %v4856 = vadd.f32 %v4659, %v4792
      %v4857 = vadd.f32 %v4660, %v4793
      %v4858 = vadd.f32 %v4661, %v4794
      %v4859 = vadd.f32 %v4662, %v4795
      %v4860 = vadd.f32 %v4663, %v4796
      %v4861 = vadd.f32 %v4664, %v4797
      %v4862 = vadd.f32 %v4665, %v4798
      %v4863 = vadd.f32 %v4666, %v4799
      %v4864 = vadd.f32 %v4667, %v4800
      %v4865 = vadd.f32 %v4668, %v4801
      %v4866 = vadd.f32 %v4669, %v4802
      %v4867 = vadd.f32 %v4670, %v4803
      %v4868 = vadd.f32 %v4671, %v4804
      %v4869 = vadd.f32 %v4672, %v4805
      %v4870 = vadd.f32 %v4673, %v4806
      %v4871 = vadd.f32 %v4674, %v4807
      %v4872 = vadd.f32 %v4675, %v4808
      %v4873 = vadd.f32 %v4676, %v4809
      %v4874 = vadd.f32 %v4677, %v4810
      %v4875 = vadd.f32 %v4678, %v4811
      %v4876 = vadd.f32 %v4679, %v4812
      %s4877 = scalar_lea.vmem [#allocation2], 192
      %v4878 = vld [vmem:[%s4877] sm:$0xff]
      %v4879 = vld [vmem:[%s4877 + $0x10] sm:$0xff]
      %v4880 = vld [vmem:[%s4877 + $0x20] sm:$0xff]
      %v4881 = vld [vmem:[%s4877 + $0x30] sm:$0xff]
      %v4882 = vld [vmem:[%s4877 + $0x40] sm:$0xff]
      %v4883 = vld [vmem:[%s4877 + $0x50] sm:$0xff]
      %v4884 = vld [vmem:[%s4877 + $0x60] sm:$0xff]
      %v4885 = vld [vmem:[%s4877 + $0x70] sm:$0xff]
      %v4886 = vld [vmem:[%s4877 + $0xa0] sm:$0xff]
      %v4887 = vld [vmem:[%s4877 + $0xb0] sm:$0xff]
      %v4888 = vld [vmem:[%s4877 + $0xc0] sm:$0xff]
      %v4889 = vld [vmem:[%s4877 + $0xd0] sm:$0xff]
      %v4890 = vld [vmem:[%s4877 + $0xe0] sm:$0xff]
      %v4891 = vld [vmem:[%s4877 + $0xf0] sm:$0xff]
      %v4892 = vld [vmem:[%s4877 + $0x100] sm:$0xff]
      %v4893 = vld [vmem:[%s4877 + $0x110] sm:$0xff]
      %v4894 = vld [vmem:[%s4877 + $0x140] sm:$0xff]
      %v4895 = vld [vmem:[%s4877 + $0x150] sm:$0xff]
      %v4896 = vld [vmem:[%s4877 + $0x160] sm:$0xff]
      %v4897 = vld [vmem:[%s4877 + $0x170] sm:$0xff]
      %v4898 = vld [vmem:[%s4877 + $0x180] sm:$0xff]
      %v4899 = vld [vmem:[%s4877 + $0x190] sm:$0xff]
      %v4900 = vld [vmem:[%s4877 + $0x1a0] sm:$0xff]
      %v4901 = vld [vmem:[%s4877 + $0x1b0] sm:$0xff]
      %v4902 = vld [vmem:[%s4877 + $0x1e0] sm:$0xff]
      %v4903 = vld [vmem:[%s4877 + $0x1f0] sm:$0xff]
      %v4904 = vld [vmem:[%s4877 + $0x200] sm:$0xff]
      %v4905 = vld [vmem:[%s4877 + $0x210] sm:$0xff]
      %v4906 = vld [vmem:[%s4877 + $0x220] sm:$0xff]
      %v4907 = vld [vmem:[%s4877 + $0x230] sm:$0xff]
      %v4908 = vld [vmem:[%s4877 + $0x240] sm:$0xff]
      %v4909 = vld [vmem:[%s4877 + $0x250] sm:$0xff]
      %v4910 = vld [vmem:[%s4877 + $0x280] sm:$0xff]
      %v4911 = vld [vmem:[%s4877 + $0x290] sm:$0xff]
      %v4912 = vld [vmem:[%s4877 + $0x2a0] sm:$0xff]
      %v4913 = vld [vmem:[%s4877 + $0x2b0] sm:$0xff]
      %v4914 = vld [vmem:[%s4877 + $0x2c0] sm:$0xff]
      %v4915 = vld [vmem:[%s4877 + $0x2d0] sm:$0xff]
      %v4916 = vld [vmem:[%s4877 + $0x2e0] sm:$0xff]
      %v4917 = vld [vmem:[%s4877 + $0x2f0] sm:$0xff]
      %v4918 = vld [vmem:[%s4877 + $0x320] sm:$0xff]
      %v4919 = vld [vmem:[%s4877 + $0x330] sm:$0xff]
      %v4920 = vld [vmem:[%s4877 + $0x340] sm:$0xff]
      %v4921 = vld [vmem:[%s4877 + $0x350] sm:$0xff]
      %v4922 = vld [vmem:[%s4877 + $0x360] sm:$0xff]
      %v4923 = vld [vmem:[%s4877 + $0x370] sm:$0xff]
      %v4924 = vld [vmem:[%s4877 + $0x380] sm:$0xff]
      %v4925 = vld [vmem:[%s4877 + $0x390] sm:$0xff]
      %v4926 = vld [vmem:[%s4877 + $0x3c0] sm:$0xff]
      %v4927 = vld [vmem:[%s4877 + $0x3d0] sm:$0xff]
      %v4928 = vld [vmem:[%s4877 + $0x3e0] sm:$0xff]
      %v4929 = vld [vmem:[%s4877 + $0x3f0] sm:$0xff]
      %v4930 = vld [vmem:[%s4877 + $0x400] sm:$0xff]
      %v4931 = vld [vmem:[%s4877 + $0x410] sm:$0xff]
      %v4932 = vld [vmem:[%s4877 + $0x420] sm:$0xff]
      %v4933 = vld [vmem:[%s4877 + $0x430] sm:$0xff]
      %v4934 = vld [vmem:[%s4877 + $0x460] sm:$0xff]
      %v4935 = vld [vmem:[%s4877 + $0x470] sm:$0xff]
      %v4936 = vld [vmem:[%s4877 + $0x480] sm:$0xff]
      %v4937 = vld [vmem:[%s4877 + $0x490] sm:$0xff]
      %v4938 = vld [vmem:[%s4877 + $0x4a0] sm:$0xff]
      %v4939 = vld [vmem:[%s4877 + $0x4b0] sm:$0xff]
      %v4940 = vld [vmem:[%s4877 + $0x4c0] sm:$0xff]
      %v4941 = vld [vmem:[%s4877 + $0x4d0] sm:$0xff]
      %v4942 = vld [vmem:[%s5 + $0xf] sm:$0x1]
      %v4943 = vlaneseq
      %v4944 = vshrl.u32 %v4943, 7
      %v4945 = vsub.s32 0, %v4944
      %v4946 = vrot.slane %v4942, %v4945
      %v4947 = vmul.f32 %v4878, %v4946
      %v4948 = vmul.f32 %v4879, %v4946
      %v4949 = vmul.f32 %v4880, %v4946
      %v4950 = vmul.f32 %v4881, %v4946
      %v4951 = vmul.f32 %v4882, %v4946
      %v4952 = vmul.f32 %v4883, %v4946
      %v4953 = vmul.f32 %v4884, %v4946
      %v4954 = vmul.f32 %v4885, %v4946
      %v4955 = vmul.f32 %v4886, %v4946
      %v4956 = vmul.f32 %v4887, %v4946
      %v4957 = vmul.f32 %v4888, %v4946
      %v4958 = vmul.f32 %v4889, %v4946
      %v4959 = vmul.f32 %v4890, %v4946
      %v4960 = vmul.f32 %v4891, %v4946
      %v4961 = vmul.f32 %v4892, %v4946
      %v4962 = vmul.f32 %v4893, %v4946
      %v4963 = vmul.f32 %v4894, %v4946
      %v4964 = vmul.f32 %v4895, %v4946
      %v4965 = vmul.f32 %v4896, %v4946
      %v4966 = vmul.f32 %v4897, %v4946
      %v4967 = vmul.f32 %v4898, %v4946
      %v4968 = vmul.f32 %v4899, %v4946
      %v4969 = vmul.f32 %v4900, %v4946
      %v4970 = vmul.f32 %v4901, %v4946
      %v4971 = vmul.f32 %v4902, %v4946
      %v4972 = vmul.f32 %v4903, %v4946
      %v4973 = vmul.f32 %v4904, %v4946
      %v4974 = vmul.f32 %v4905, %v4946
      %v4975 = vmul.f32 %v4906, %v4946
      %v4976 = vmul.f32 %v4907, %v4946
      %v4977 = vmul.f32 %v4908, %v4946
      %v4978 = vmul.f32 %v4909, %v4946
      %v4979 = vmul.f32 %v4910, %v4946
      %v4980 = vmul.f32 %v4911, %v4946
      %v4981 = vmul.f32 %v4912, %v4946
      %v4982 = vmul.f32 %v4913, %v4946
      %v4983 = vmul.f32 %v4914, %v4946
      %v4984 = vmul.f32 %v4915, %v4946
      %v4985 = vmul.f32 %v4916, %v4946
      %v4986 = vmul.f32 %v4917, %v4946
      %v4987 = vmul.f32 %v4918, %v4946
      %v4988 = vmul.f32 %v4919, %v4946
      %v4989 = vmul.f32 %v4920, %v4946
      %v4990 = vmul.f32 %v4921, %v4946
      %v4991 = vmul.f32 %v4922, %v4946
      %v4992 = vmul.f32 %v4923, %v4946
      %v4993 = vmul.f32 %v4924, %v4946
      %v4994 = vmul.f32 %v4925, %v4946
      %v4995 = vmul.f32 %v4926, %v4946
      %v4996 = vmul.f32 %v4927, %v4946
      %v4997 = vmul.f32 %v4928, %v4946
      %v4998 = vmul.f32 %v4929, %v4946
      %v4999 = vmul.f32 %v4930, %v4946
      %v5000 = vmul.f32 %v4931, %v4946
      %v5001 = vmul.f32 %v4932, %v4946
      %v5002 = vmul.f32 %v4933, %v4946
      %v5003 = vmul.f32 %v4934, %v4946
      %v5004 = vmul.f32 %v4935, %v4946
      %v5005 = vmul.f32 %v4936, %v4946
      %v5006 = vmul.f32 %v4937, %v4946
      %v5007 = vmul.f32 %v4938, %v4946
      %v5008 = vmul.f32 %v4939, %v4946
      %v5009 = vmul.f32 %v4940, %v4946
      %v5010 = vmul.f32 %v4941, %v4946
      %v5011 = vadd.f32 %v4813, %v4947
      %v5012 = vadd.f32 %v4814, %v4948
      %v5013 = vadd.f32 %v4815, %v4949
      %v5014 = vadd.f32 %v4816, %v4950
      %v5015 = vadd.f32 %v4817, %v4951
      %v5016 = vadd.f32 %v4818, %v4952
      %v5017 = vadd.f32 %v4819, %v4953
      %v5018 = vadd.f32 %v4820, %v4954
      %v5019 = vadd.f32 %v4821, %v4955
      %v5020 = vadd.f32 %v4822, %v4956
      %v5021 = vadd.f32 %v4823, %v4957
      %v5022 = vadd.f32 %v4824, %v4958
      %v5023 = vadd.f32 %v4825, %v4959
      %v5024 = vadd.f32 %v4826, %v4960
      %v5025 = vadd.f32 %v4827, %v4961
      %v5026 = vadd.f32 %v4828, %v4962
      %v5027 = vadd.f32 %v4829, %v4963
      %v5028 = vadd.f32 %v4830, %v4964
      %v5029 = vadd.f32 %v4831, %v4965
      %v5030 = vadd.f32 %v4832, %v4966
      %v5031 = vadd.f32 %v4833, %v4967
      %v5032 = vadd.f32 %v4834, %v4968
      %v5033 = vadd.f32 %v4835, %v4969
      %v5034 = vadd.f32 %v4836, %v4970
      %v5035 = vadd.f32 %v4837, %v4971
      %v5036 = vadd.f32 %v4838, %v4972
      %v5037 = vadd.f32 %v4839, %v4973
      %v5038 = vadd.f32 %v4840, %v4974
      %v5039 = vadd.f32 %v4841, %v4975
      %v5040 = vadd.f32 %v4842, %v4976
      %v5041 = vadd.f32 %v4843, %v4977
      %v5042 = vadd.f32 %v4844, %v4978
      %v5043 = vadd.f32 %v4845, %v4979
      %v5044 = vadd.f32 %v4846, %v4980
      %v5045 = vadd.f32 %v4847, %v4981
      %v5046 = vadd.f32 %v4848, %v4982
      %v5047 = vadd.f32 %v4849, %v4983
      %v5048 = vadd.f32 %v4850, %v4984
      %v5049 = vadd.f32 %v4851, %v4985
      %v5050 = vadd.f32 %v4852, %v4986
      %v5051 = vadd.f32 %v4853, %v4987
      %v5052 = vadd.f32 %v4854, %v4988
      %v5053 = vadd.f32 %v4855, %v4989
      %v5054 = vadd.f32 %v4856, %v4990
      %v5055 = vadd.f32 %v4857, %v4991
      %v5056 = vadd.f32 %v4858, %v4992
      %v5057 = vadd.f32 %v4859, %v4993
      %v5058 = vadd.f32 %v4860, %v4994
      %v5059 = vadd.f32 %v4861, %v4995
      %v5060 = vadd.f32 %v4862, %v4996
      %v5061 = vadd.f32 %v4863, %v4997
      %v5062 = vadd.f32 %v4864, %v4998
      %v5063 = vadd.f32 %v4865, %v4999
      %v5064 = vadd.f32 %v4866, %v5000
      %v5065 = vadd.f32 %v4867, %v5001
      %v5066 = vadd.f32 %v4868, %v5002
      %v5067 = vadd.f32 %v4869, %v5003
      %v5068 = vadd.f32 %v4870, %v5004
      %v5069 = vadd.f32 %v4871, %v5005
      %v5070 = vadd.f32 %v4872, %v5006
      %v5071 = vadd.f32 %v4873, %v5007
      %v5072 = vadd.f32 %v4874, %v5008
      %v5073 = vadd.f32 %v4875, %v5009
      %v5074 = vadd.f32 %v4876, %v5010
      %v5075 = vld [vmem:[%s4877 + $0x1] sm:$0xff]
      %v5076 = vld [vmem:[%s4877 + $0x11] sm:$0xff]
      %v5077 = vld [vmem:[%s4877 + $0x21] sm:$0xff]
      %v5078 = vld [vmem:[%s4877 + $0x31] sm:$0xff]
      %v5079 = vld [vmem:[%s4877 + $0x41] sm:$0xff]
      %v5080 = vld [vmem:[%s4877 + $0x51] sm:$0xff]
      %v5081 = vld [vmem:[%s4877 + $0x61] sm:$0xff]
      %v5082 = vld [vmem:[%s4877 + $0x71] sm:$0xff]
      %v5083 = vld [vmem:[%s4877 + $0xa1] sm:$0xff]
      %v5084 = vld [vmem:[%s4877 + $0xb1] sm:$0xff]
      %v5085 = vld [vmem:[%s4877 + $0xc1] sm:$0xff]
      %v5086 = vld [vmem:[%s4877 + $0xd1] sm:$0xff]
      %v5087 = vld [vmem:[%s4877 + $0xe1] sm:$0xff]
      %v5088 = vld [vmem:[%s4877 + $0xf1] sm:$0xff]
      %v5089 = vld [vmem:[%s4877 + $0x101] sm:$0xff]
      %v5090 = vld [vmem:[%s4877 + $0x111] sm:$0xff]
      %v5091 = vld [vmem:[%s4877 + $0x141] sm:$0xff]
      %v5092 = vld [vmem:[%s4877 + $0x151] sm:$0xff]
      %v5093 = vld [vmem:[%s4877 + $0x161] sm:$0xff]
      %v5094 = vld [vmem:[%s4877 + $0x171] sm:$0xff]
      %v5095 = vld [vmem:[%s4877 + $0x181] sm:$0xff]
      %v5096 = vld [vmem:[%s4877 + $0x191] sm:$0xff]
      %v5097 = vld [vmem:[%s4877 + $0x1a1] sm:$0xff]
      %v5098 = vld [vmem:[%s4877 + $0x1b1] sm:$0xff]
      %v5099 = vld [vmem:[%s4877 + $0x1e1] sm:$0xff]
      %v5100 = vld [vmem:[%s4877 + $0x1f1] sm:$0xff]
      %v5101 = vld [vmem:[%s4877 + $0x201] sm:$0xff]
      %v5102 = vld [vmem:[%s4877 + $0x211] sm:$0xff]
      %v5103 = vld [vmem:[%s4877 + $0x221] sm:$0xff]
      %v5104 = vld [vmem:[%s4877 + $0x231] sm:$0xff]
      %v5105 = vld [vmem:[%s4877 + $0x241] sm:$0xff]
      %v5106 = vld [vmem:[%s4877 + $0x251] sm:$0xff]
      %v5107 = vld [vmem:[%s4877 + $0x281] sm:$0xff]
      %v5108 = vld [vmem:[%s4877 + $0x291] sm:$0xff]
      %v5109 = vld [vmem:[%s4877 + $0x2a1] sm:$0xff]
      %v5110 = vld [vmem:[%s4877 + $0x2b1] sm:$0xff]
      %v5111 = vld [vmem:[%s4877 + $0x2c1] sm:$0xff]
      %v5112 = vld [vmem:[%s4877 + $0x2d1] sm:$0xff]
      %v5113 = vld [vmem:[%s4877 + $0x2e1] sm:$0xff]
      %v5114 = vld [vmem:[%s4877 + $0x2f1] sm:$0xff]
      %v5115 = vld [vmem:[%s4877 + $0x321] sm:$0xff]
      %v5116 = vld [vmem:[%s4877 + $0x331] sm:$0xff]
      %v5117 = vld [vmem:[%s4877 + $0x341] sm:$0xff]
      %v5118 = vld [vmem:[%s4877 + $0x351] sm:$0xff]
      %v5119 = vld [vmem:[%s4877 + $0x361] sm:$0xff]
      %v5120 = vld [vmem:[%s4877 + $0x371] sm:$0xff]
      %v5121 = vld [vmem:[%s4877 + $0x381] sm:$0xff]
      %v5122 = vld [vmem:[%s4877 + $0x391] sm:$0xff]
      %v5123 = vld [vmem:[%s4877 + $0x3c1] sm:$0xff]
      %v5124 = vld [vmem:[%s4877 + $0x3d1] sm:$0xff]
      %v5125 = vld [vmem:[%s4877 + $0x3e1] sm:$0xff]
      %v5126 = vld [vmem:[%s4877 + $0x3f1] sm:$0xff]
      %v5127 = vld [vmem:[%s4877 + $0x401] sm:$0xff]
      %v5128 = vld [vmem:[%s4877 + $0x411] sm:$0xff]
      %v5129 = vld [vmem:[%s4877 + $0x421] sm:$0xff]
      %v5130 = vld [vmem:[%s4877 + $0x431] sm:$0xff]
      %v5131 = vld [vmem:[%s4877 + $0x461] sm:$0xff]
      %v5132 = vld [vmem:[%s4877 + $0x471] sm:$0xff]
      %v5133 = vld [vmem:[%s4877 + $0x481] sm:$0xff]
      %v5134 = vld [vmem:[%s4877 + $0x491] sm:$0xff]
      %v5135 = vld [vmem:[%s4877 + $0x4a1] sm:$0xff]
      %v5136 = vld [vmem:[%s4877 + $0x4b1] sm:$0xff]
      %v5137 = vld [vmem:[%s4877 + $0x4c1] sm:$0xff]
      %v5138 = vld [vmem:[%s4877 + $0x4d1] sm:$0xff]
      %v5139 = vld [vmem:[%s5 + $0x10] sm:$0x1]
      %v5140 = vlaneseq
      %v5141 = vshrl.u32 %v5140, 7
      %v5142 = vsub.s32 0, %v5141
      %v5143 = vrot.slane %v5139, %v5142
      %v5144 = vmul.f32 %v5075, %v5143
      %v5145 = vmul.f32 %v5076, %v5143
      %v5146 = vmul.f32 %v5077, %v5143
      %v5147 = vmul.f32 %v5078, %v5143
      %v5148 = vmul.f32 %v5079, %v5143
      %v5149 = vmul.f32 %v5080, %v5143
      %v5150 = vmul.f32 %v5081, %v5143
      %v5151 = vmul.f32 %v5082, %v5143
      %v5152 = vmul.f32 %v5083, %v5143
      %v5153 = vmul.f32 %v5084, %v5143
      %v5154 = vmul.f32 %v5085, %v5143
      %v5155 = vmul.f32 %v5086, %v5143
      %v5156 = vmul.f32 %v5087, %v5143
      %v5157 = vmul.f32 %v5088, %v5143
      %v5158 = vmul.f32 %v5089, %v5143
      %v5159 = vmul.f32 %v5090, %v5143
      %v5160 = vmul.f32 %v5091, %v5143
      %v5161 = vmul.f32 %v5092, %v5143
      %v5162 = vmul.f32 %v5093, %v5143
      %v5163 = vmul.f32 %v5094, %v5143
      %v5164 = vmul.f32 %v5095, %v5143
      %v5165 = vmul.f32 %v5096, %v5143
      %v5166 = vmul.f32 %v5097, %v5143
      %v5167 = vmul.f32 %v5098, %v5143
      %v5168 = vmul.f32 %v5099, %v5143
      %v5169 = vmul.f32 %v5100, %v5143
      %v5170 = vmul.f32 %v5101, %v5143
      %v5171 = vmul.f32 %v5102, %v5143
      %v5172 = vmul.f32 %v5103, %v5143
      %v5173 = vmul.f32 %v5104, %v5143
      %v5174 = vmul.f32 %v5105, %v5143
      %v5175 = vmul.f32 %v5106, %v5143
      %v5176 = vmul.f32 %v5107, %v5143
      %v5177 = vmul.f32 %v5108, %v5143
      %v5178 = vmul.f32 %v5109, %v5143
      %v5179 = vmul.f32 %v5110, %v5143
      %v5180 = vmul.f32 %v5111, %v5143
      %v5181 = vmul.f32 %v5112, %v5143
      %v5182 = vmul.f32 %v5113, %v5143
      %v5183 = vmul.f32 %v5114, %v5143
      %v5184 = vmul.f32 %v5115, %v5143
      %v5185 = vmul.f32 %v5116, %v5143
      %v5186 = vmul.f32 %v5117, %v5143
      %v5187 = vmul.f32 %v5118, %v5143
      %v5188 = vmul.f32 %v5119, %v5143
      %v5189 = vmul.f32 %v5120, %v5143
      %v5190 = vmul.f32 %v5121, %v5143
      %v5191 = vmul.f32 %v5122, %v5143
      %v5192 = vmul.f32 %v5123, %v5143
      %v5193 = vmul.f32 %v5124, %v5143
      %v5194 = vmul.f32 %v5125, %v5143
      %v5195 = vmul.f32 %v5126, %v5143
      %v5196 = vmul.f32 %v5127, %v5143
      %v5197 = vmul.f32 %v5128, %v5143
      %v5198 = vmul.f32 %v5129, %v5143
      %v5199 = vmul.f32 %v5130, %v5143
      %v5200 = vmul.f32 %v5131, %v5143
      %v5201 = vmul.f32 %v5132, %v5143
      %v5202 = vmul.f32 %v5133, %v5143
      %v5203 = vmul.f32 %v5134, %v5143
      %v5204 = vmul.f32 %v5135, %v5143
      %v5205 = vmul.f32 %v5136, %v5143
      %v5206 = vmul.f32 %v5137, %v5143
      %v5207 = vmul.f32 %v5138, %v5143
      %v5208 = vadd.f32 %v5011, %v5144
      %v5209 = vadd.f32 %v5012, %v5145
      %v5210 = vadd.f32 %v5013, %v5146
      %v5211 = vadd.f32 %v5014, %v5147
      %v5212 = vadd.f32 %v5015, %v5148
      %v5213 = vadd.f32 %v5016, %v5149
      %v5214 = vadd.f32 %v5017, %v5150
      %v5215 = vadd.f32 %v5018, %v5151
      %v5216 = vadd.f32 %v5019, %v5152
      %v5217 = vadd.f32 %v5020, %v5153
      %v5218 = vadd.f32 %v5021, %v5154
      %v5219 = vadd.f32 %v5022, %v5155
      %v5220 = vadd.f32 %v5023, %v5156
      %v5221 = vadd.f32 %v5024, %v5157
      %v5222 = vadd.f32 %v5025, %v5158
      %v5223 = vadd.f32 %v5026, %v5159
      %v5224 = vadd.f32 %v5027, %v5160
      %v5225 = vadd.f32 %v5028, %v5161
      %v5226 = vadd.f32 %v5029, %v5162
      %v5227 = vadd.f32 %v5030, %v5163
      %v5228 = vadd.f32 %v5031, %v5164
      %v5229 = vadd.f32 %v5032, %v5165
      %v5230 = vadd.f32 %v5033, %v5166
      %v5231 = vadd.f32 %v5034, %v5167
      %v5232 = vadd.f32 %v5035, %v5168
      %v5233 = vadd.f32 %v5036, %v5169
      %v5234 = vadd.f32 %v5037, %v5170
      %v5235 = vadd.f32 %v5038, %v5171
      %v5236 = vadd.f32 %v5039, %v5172
      %v5237 = vadd.f32 %v5040, %v5173
      %v5238 = vadd.f32 %v5041, %v5174
      %v5239 = vadd.f32 %v5042, %v5175
      %v5240 = vadd.f32 %v5043, %v5176
      %v5241 = vadd.f32 %v5044, %v5177
      %v5242 = vadd.f32 %v5045, %v5178
      %v5243 = vadd.f32 %v5046, %v5179
      %v5244 = vadd.f32 %v5047, %v5180
      %v5245 = vadd.f32 %v5048, %v5181
      %v5246 = vadd.f32 %v5049, %v5182
      %v5247 = vadd.f32 %v5050, %v5183
      %v5248 = vadd.f32 %v5051, %v5184
      %v5249 = vadd.f32 %v5052, %v5185
      %v5250 = vadd.f32 %v5053, %v5186
      %v5251 = vadd.f32 %v5054, %v5187
      %v5252 = vadd.f32 %v5055, %v5188
      %v5253 = vadd.f32 %v5056, %v5189
      %v5254 = vadd.f32 %v5057, %v5190
      %v5255 = vadd.f32 %v5058, %v5191
      %v5256 = vadd.f32 %v5059, %v5192
      %v5257 = vadd.f32 %v5060, %v5193
      %v5258 = vadd.f32 %v5061, %v5194
      %v5259 = vadd.f32 %v5062, %v5195
      %v5260 = vadd.f32 %v5063, %v5196
      %v5261 = vadd.f32 %v5064, %v5197
      %v5262 = vadd.f32 %v5065, %v5198
      %v5263 = vadd.f32 %v5066, %v5199
      %v5264 = vadd.f32 %v5067, %v5200
      %v5265 = vadd.f32 %v5068, %v5201
      %v5266 = vadd.f32 %v5069, %v5202
      %v5267 = vadd.f32 %v5070, %v5203
      %v5268 = vadd.f32 %v5071, %v5204
      %v5269 = vadd.f32 %v5072, %v5205
      %v5270 = vadd.f32 %v5073, %v5206
      %v5271 = vadd.f32 %v5074, %v5207
      %v5272 = vld [vmem:[%s4877 + $0x2] sm:$0xff]
      %v5273 = vld [vmem:[%s4877 + $0x12] sm:$0xff]
      %v5274 = vld [vmem:[%s4877 + $0x22] sm:$0xff]
      %v5275 = vld [vmem:[%s4877 + $0x32] sm:$0xff]
      %v5276 = vld [vmem:[%s4877 + $0x42] sm:$0xff]
      %v5277 = vld [vmem:[%s4877 + $0x52] sm:$0xff]
      %v5278 = vld [vmem:[%s4877 + $0x62] sm:$0xff]
      %v5279 = vld [vmem:[%s4877 + $0x72] sm:$0xff]
      %v5280 = vld [vmem:[%s4877 + $0xa2] sm:$0xff]
      %v5281 = vld [vmem:[%s4877 + $0xb2] sm:$0xff]
      %v5282 = vld [vmem:[%s4877 + $0xc2] sm:$0xff]
      %v5283 = vld [vmem:[%s4877 + $0xd2] sm:$0xff]
      %v5284 = vld [vmem:[%s4877 + $0xe2] sm:$0xff]
      %v5285 = vld [vmem:[%s4877 + $0xf2] sm:$0xff]
      %v5286 = vld [vmem:[%s4877 + $0x102] sm:$0xff]
      %v5287 = vld [vmem:[%s4877 + $0x112] sm:$0xff]
      %v5288 = vld [vmem:[%s4877 + $0x142] sm:$0xff]
      %v5289 = vld [vmem:[%s4877 + $0x152] sm:$0xff]
      %v5290 = vld [vmem:[%s4877 + $0x162] sm:$0xff]
      %v5291 = vld [vmem:[%s4877 + $0x172] sm:$0xff]
      %v5292 = vld [vmem:[%s4877 + $0x182] sm:$0xff]
      %v5293 = vld [vmem:[%s4877 + $0x192] sm:$0xff]
      %v5294 = vld [vmem:[%s4877 + $0x1a2] sm:$0xff]
      %v5295 = vld [vmem:[%s4877 + $0x1b2] sm:$0xff]
      %v5296 = vld [vmem:[%s4877 + $0x1e2] sm:$0xff]
      %v5297 = vld [vmem:[%s4877 + $0x1f2] sm:$0xff]
      %v5298 = vld [vmem:[%s4877 + $0x202] sm:$0xff]
      %v5299 = vld [vmem:[%s4877 + $0x212] sm:$0xff]
      %v5300 = vld [vmem:[%s4877 + $0x222] sm:$0xff]
      %v5301 = vld [vmem:[%s4877 + $0x232] sm:$0xff]
      %v5302 = vld [vmem:[%s4877 + $0x242] sm:$0xff]
      %v5303 = vld [vmem:[%s4877 + $0x252] sm:$0xff]
      %v5304 = vld [vmem:[%s4877 + $0x282] sm:$0xff]
      %v5305 = vld [vmem:[%s4877 + $0x292] sm:$0xff]
      %v5306 = vld [vmem:[%s4877 + $0x2a2] sm:$0xff]
      %v5307 = vld [vmem:[%s4877 + $0x2b2] sm:$0xff]
      %v5308 = vld [vmem:[%s4877 + $0x2c2] sm:$0xff]
      %v5309 = vld [vmem:[%s4877 + $0x2d2] sm:$0xff]
      %v5310 = vld [vmem:[%s4877 + $0x2e2] sm:$0xff]
      %v5311 = vld [vmem:[%s4877 + $0x2f2] sm:$0xff]
      %v5312 = vld [vmem:[%s4877 + $0x322] sm:$0xff]
      %v5313 = vld [vmem:[%s4877 + $0x332] sm:$0xff]
      %v5314 = vld [vmem:[%s4877 + $0x342] sm:$0xff]
      %v5315 = vld [vmem:[%s4877 + $0x352] sm:$0xff]
      %v5316 = vld [vmem:[%s4877 + $0x362] sm:$0xff]
      %v5317 = vld [vmem:[%s4877 + $0x372] sm:$0xff]
      %v5318 = vld [vmem:[%s4877 + $0x382] sm:$0xff]
      %v5319 = vld [vmem:[%s4877 + $0x392] sm:$0xff]
      %v5320 = vld [vmem:[%s4877 + $0x3c2] sm:$0xff]
      %v5321 = vld [vmem:[%s4877 + $0x3d2] sm:$0xff]
      %v5322 = vld [vmem:[%s4877 + $0x3e2] sm:$0xff]
      %v5323 = vld [vmem:[%s4877 + $0x3f2] sm:$0xff]
      %v5324 = vld [vmem:[%s4877 + $0x402] sm:$0xff]
      %v5325 = vld [vmem:[%s4877 + $0x412] sm:$0xff]
      %v5326 = vld [vmem:[%s4877 + $0x422] sm:$0xff]
      %v5327 = vld [vmem:[%s4877 + $0x432] sm:$0xff]
      %v5328 = vld [vmem:[%s4877 + $0x462] sm:$0xff]
      %v5329 = vld [vmem:[%s4877 + $0x472] sm:$0xff]
      %v5330 = vld [vmem:[%s4877 + $0x482] sm:$0xff]
      %v5331 = vld [vmem:[%s4877 + $0x492] sm:$0xff]
      %v5332 = vld [vmem:[%s4877 + $0x4a2] sm:$0xff]
      %v5333 = vld [vmem:[%s4877 + $0x4b2] sm:$0xff]
      %v5334 = vld [vmem:[%s4877 + $0x4c2] sm:$0xff]
      %v5335 = vld [vmem:[%s4877 + $0x4d2] sm:$0xff]
      %v5336 = vld [vmem:[%s5 + $0x11] sm:$0x1]
      %v5337 = vlaneseq
      %v5338 = vshrl.u32 %v5337, 7
      %v5339 = vsub.s32 0, %v5338
      %v5340 = vrot.slane %v5336, %v5339
      %v5341 = vmul.f32 %v5272, %v5340
      %v5342 = vmul.f32 %v5273, %v5340
      %v5343 = vmul.f32 %v5274, %v5340
      %v5344 = vmul.f32 %v5275, %v5340
      %v5345 = vmul.f32 %v5276, %v5340
      %v5346 = vmul.f32 %v5277, %v5340
      %v5347 = vmul.f32 %v5278, %v5340
      %v5348 = vmul.f32 %v5279, %v5340
      %v5349 = vmul.f32 %v5280, %v5340
      %v5350 = vmul.f32 %v5281, %v5340
      %v5351 = vmul.f32 %v5282, %v5340
      %v5352 = vmul.f32 %v5283, %v5340
      %v5353 = vmul.f32 %v5284, %v5340
      %v5354 = vmul.f32 %v5285, %v5340
      %v5355 = vmul.f32 %v5286, %v5340
      %v5356 = vmul.f32 %v5287, %v5340
      %v5357 = vmul.f32 %v5288, %v5340
      %v5358 = vmul.f32 %v5289, %v5340
      %v5359 = vmul.f32 %v5290, %v5340
      %v5360 = vmul.f32 %v5291, %v5340
      %v5361 = vmul.f32 %v5292, %v5340
      %v5362 = vmul.f32 %v5293, %v5340
      %v5363 = vmul.f32 %v5294, %v5340
      %v5364 = vmul.f32 %v5295, %v5340
      %v5365 = vmul.f32 %v5296, %v5340
      %v5366 = vmul.f32 %v5297, %v5340
      %v5367 = vmul.f32 %v5298, %v5340
      %v5368 = vmul.f32 %v5299, %v5340
      %v5369 = vmul.f32 %v5300, %v5340
      %v5370 = vmul.f32 %v5301, %v5340
      %v5371 = vmul.f32 %v5302, %v5340
      %v5372 = vmul.f32 %v5303, %v5340
      %v5373 = vmul.f32 %v5304, %v5340
      %v5374 = vmul.f32 %v5305, %v5340
      %v5375 = vmul.f32 %v5306, %v5340
      %v5376 = vmul.f32 %v5307, %v5340
      %v5377 = vmul.f32 %v5308, %v5340
      %v5378 = vmul.f32 %v5309, %v5340
      %v5379 = vmul.f32 %v5310, %v5340
      %v5380 = vmul.f32 %v5311, %v5340
      %v5381 = vmul.f32 %v5312, %v5340
      %v5382 = vmul.f32 %v5313, %v5340
      %v5383 = vmul.f32 %v5314, %v5340
      %v5384 = vmul.f32 %v5315, %v5340
      %v5385 = vmul.f32 %v5316, %v5340
      %v5386 = vmul.f32 %v5317, %v5340
      %v5387 = vmul.f32 %v5318, %v5340
      %v5388 = vmul.f32 %v5319, %v5340
      %v5389 = vmul.f32 %v5320, %v5340
      %v5390 = vmul.f32 %v5321, %v5340
      %v5391 = vmul.f32 %v5322, %v5340
      %v5392 = vmul.f32 %v5323, %v5340
      %v5393 = vmul.f32 %v5324, %v5340
      %v5394 = vmul.f32 %v5325, %v5340
      %v5395 = vmul.f32 %v5326, %v5340
      %v5396 = vmul.f32 %v5327, %v5340
      %v5397 = vmul.f32 %v5328, %v5340
      %v5398 = vmul.f32 %v5329, %v5340
      %v5399 = vmul.f32 %v5330, %v5340
      %v5400 = vmul.f32 %v5331, %v5340
      %v5401 = vmul.f32 %v5332, %v5340
      %v5402 = vmul.f32 %v5333, %v5340
      %v5403 = vmul.f32 %v5334, %v5340
      %v5404 = vmul.f32 %v5335, %v5340
      %v5405 = vadd.f32 %v5208, %v5341
      %v5406 = vadd.f32 %v5209, %v5342
      %v5407 = vadd.f32 %v5210, %v5343
      %v5408 = vadd.f32 %v5211, %v5344
      %v5409 = vadd.f32 %v5212, %v5345
      %v5410 = vadd.f32 %v5213, %v5346
      %v5411 = vadd.f32 %v5214, %v5347
      %v5412 = vadd.f32 %v5215, %v5348
      %v5413 = vadd.f32 %v5216, %v5349
      %v5414 = vadd.f32 %v5217, %v5350
      %v5415 = vadd.f32 %v5218, %v5351
      %v5416 = vadd.f32 %v5219, %v5352
      %v5417 = vadd.f32 %v5220, %v5353
      %v5418 = vadd.f32 %v5221, %v5354
      %v5419 = vadd.f32 %v5222, %v5355
      %v5420 = vadd.f32 %v5223, %v5356
      %v5421 = vadd.f32 %v5224, %v5357
      %v5422 = vadd.f32 %v5225, %v5358
      %v5423 = vadd.f32 %v5226, %v5359
      %v5424 = vadd.f32 %v5227, %v5360
      %v5425 = vadd.f32 %v5228, %v5361
      %v5426 = vadd.f32 %v5229, %v5362
      %v5427 = vadd.f32 %v5230, %v5363
      %v5428 = vadd.f32 %v5231, %v5364
      %v5429 = vadd.f32 %v5232, %v5365
      %v5430 = vadd.f32 %v5233, %v5366
      %v5431 = vadd.f32 %v5234, %v5367
      %v5432 = vadd.f32 %v5235, %v5368
      %v5433 = vadd.f32 %v5236, %v5369
      %v5434 = vadd.f32 %v5237, %v5370
      %v5435 = vadd.f32 %v5238, %v5371
      %v5436 = vadd.f32 %v5239, %v5372
      %v5437 = vadd.f32 %v5240, %v5373
      %v5438 = vadd.f32 %v5241, %v5374
      %v5439 = vadd.f32 %v5242, %v5375
      %v5440 = vadd.f32 %v5243, %v5376
      %v5441 = vadd.f32 %v5244, %v5377
      %v5442 = vadd.f32 %v5245, %v5378
      %v5443 = vadd.f32 %v5246, %v5379
      %v5444 = vadd.f32 %v5247, %v5380
      %v5445 = vadd.f32 %v5248, %v5381
      %v5446 = vadd.f32 %v5249, %v5382
      %v5447 = vadd.f32 %v5250, %v5383
      %v5448 = vadd.f32 %v5251, %v5384
      %v5449 = vadd.f32 %v5252, %v5385
      %v5450 = vadd.f32 %v5253, %v5386
      %v5451 = vadd.f32 %v5254, %v5387
      %v5452 = vadd.f32 %v5255, %v5388
      %v5453 = vadd.f32 %v5256, %v5389
      %v5454 = vadd.f32 %v5257, %v5390
      %v5455 = vadd.f32 %v5258, %v5391
      %v5456 = vadd.f32 %v5259, %v5392
      %v5457 = vadd.f32 %v5260, %v5393
      %v5458 = vadd.f32 %v5261, %v5394
      %v5459 = vadd.f32 %v5262, %v5395
      %v5460 = vadd.f32 %v5263, %v5396
      %v5461 = vadd.f32 %v5264, %v5397
      %v5462 = vadd.f32 %v5265, %v5398
      %v5463 = vadd.f32 %v5266, %v5399
      %v5464 = vadd.f32 %v5267, %v5400
      %v5465 = vadd.f32 %v5268, %v5401
      %v5466 = vadd.f32 %v5269, %v5402
      %v5467 = vadd.f32 %v5270, %v5403
      %v5468 = vadd.f32 %v5271, %v5404
      %s5469 = scalar_lea.vmem [#allocation2], 320
      %v5470 = vld [vmem:[%s5469] sm:$0xff]
      %v5471 = vld [vmem:[%s5469 + $0x10] sm:$0xff]
      %v5472 = vld [vmem:[%s5469 + $0x20] sm:$0xff]
      %v5473 = vld [vmem:[%s5469 + $0x30] sm:$0xff]
      %v5474 = vld [vmem:[%s5469 + $0x40] sm:$0xff]
      %v5475 = vld [vmem:[%s5469 + $0x50] sm:$0xff]
      %v5476 = vld [vmem:[%s5469 + $0x60] sm:$0xff]
      %v5477 = vld [vmem:[%s5469 + $0x70] sm:$0xff]
      %v5478 = vld [vmem:[%s5469 + $0xa0] sm:$0xff]
      %v5479 = vld [vmem:[%s5469 + $0xb0] sm:$0xff]
      %v5480 = vld [vmem:[%s5469 + $0xc0] sm:$0xff]
      %v5481 = vld [vmem:[%s5469 + $0xd0] sm:$0xff]
      %v5482 = vld [vmem:[%s5469 + $0xe0] sm:$0xff]
      %v5483 = vld [vmem:[%s5469 + $0xf0] sm:$0xff]
      %v5484 = vld [vmem:[%s5469 + $0x100] sm:$0xff]
      %v5485 = vld [vmem:[%s5469 + $0x110] sm:$0xff]
      %v5486 = vld [vmem:[%s5469 + $0x140] sm:$0xff]
      %v5487 = vld [vmem:[%s5469 + $0x150] sm:$0xff]
      %v5488 = vld [vmem:[%s5469 + $0x160] sm:$0xff]
      %v5489 = vld [vmem:[%s5469 + $0x170] sm:$0xff]
      %v5490 = vld [vmem:[%s5469 + $0x180] sm:$0xff]
      %v5491 = vld [vmem:[%s5469 + $0x190] sm:$0xff]
      %v5492 = vld [vmem:[%s5469 + $0x1a0] sm:$0xff]
      %v5493 = vld [vmem:[%s5469 + $0x1b0] sm:$0xff]
      %v5494 = vld [vmem:[%s5469 + $0x1e0] sm:$0xff]
      %v5495 = vld [vmem:[%s5469 + $0x1f0] sm:$0xff]
      %v5496 = vld [vmem:[%s5469 + $0x200] sm:$0xff]
      %v5497 = vld [vmem:[%s5469 + $0x210] sm:$0xff]
      %v5498 = vld [vmem:[%s5469 + $0x220] sm:$0xff]
      %v5499 = vld [vmem:[%s5469 + $0x230] sm:$0xff]
      %v5500 = vld [vmem:[%s5469 + $0x240] sm:$0xff]
      %v5501 = vld [vmem:[%s5469 + $0x250] sm:$0xff]
      %v5502 = vld [vmem:[%s5469 + $0x280] sm:$0xff]
      %v5503 = vld [vmem:[%s5469 + $0x290] sm:$0xff]
      %v5504 = vld [vmem:[%s5469 + $0x2a0] sm:$0xff]
      %v5505 = vld [vmem:[%s5469 + $0x2b0] sm:$0xff]
      %v5506 = vld [vmem:[%s5469 + $0x2c0] sm:$0xff]
      %v5507 = vld [vmem:[%s5469 + $0x2d0] sm:$0xff]
      %v5508 = vld [vmem:[%s5469 + $0x2e0] sm:$0xff]
      %v5509 = vld [vmem:[%s5469 + $0x2f0] sm:$0xff]
      %v5510 = vld [vmem:[%s5469 + $0x320] sm:$0xff]
      %v5511 = vld [vmem:[%s5469 + $0x330] sm:$0xff]
      %v5512 = vld [vmem:[%s5469 + $0x340] sm:$0xff]
      %v5513 = vld [vmem:[%s5469 + $0x350] sm:$0xff]
      %v5514 = vld [vmem:[%s5469 + $0x360] sm:$0xff]
      %v5515 = vld [vmem:[%s5469 + $0x370] sm:$0xff]
      %v5516 = vld [vmem:[%s5469 + $0x380] sm:$0xff]
      %v5517 = vld [vmem:[%s5469 + $0x390] sm:$0xff]
      %v5518 = vld [vmem:[%s5469 + $0x3c0] sm:$0xff]
      %v5519 = vld [vmem:[%s5469 + $0x3d0] sm:$0xff]
      %v5520 = vld [vmem:[%s5469 + $0x3e0] sm:$0xff]
      %v5521 = vld [vmem:[%s5469 + $0x3f0] sm:$0xff]
      %v5522 = vld [vmem:[%s5469 + $0x400] sm:$0xff]
      %v5523 = vld [vmem:[%s5469 + $0x410] sm:$0xff]
      %v5524 = vld [vmem:[%s5469 + $0x420] sm:$0xff]
      %v5525 = vld [vmem:[%s5469 + $0x430] sm:$0xff]
      %v5526 = vld [vmem:[%s5469 + $0x460] sm:$0xff]
      %v5527 = vld [vmem:[%s5469 + $0x470] sm:$0xff]
      %v5528 = vld [vmem:[%s5469 + $0x480] sm:$0xff]
      %v5529 = vld [vmem:[%s5469 + $0x490] sm:$0xff]
      %v5530 = vld [vmem:[%s5469 + $0x4a0] sm:$0xff]
      %v5531 = vld [vmem:[%s5469 + $0x4b0] sm:$0xff]
      %v5532 = vld [vmem:[%s5469 + $0x4c0] sm:$0xff]
      %v5533 = vld [vmem:[%s5469 + $0x4d0] sm:$0xff]
      %v5534 = vld [vmem:[%s5 + $0x12] sm:$0x1]
      %v5535 = vlaneseq
      %v5536 = vshrl.u32 %v5535, 7
      %v5537 = vsub.s32 0, %v5536
      %v5538 = vrot.slane %v5534, %v5537
      %v5539 = vmul.f32 %v5470, %v5538
      %v5540 = vmul.f32 %v5471, %v5538
      %v5541 = vmul.f32 %v5472, %v5538
      %v5542 = vmul.f32 %v5473, %v5538
      %v5543 = vmul.f32 %v5474, %v5538
      %v5544 = vmul.f32 %v5475, %v5538
      %v5545 = vmul.f32 %v5476, %v5538
      %v5546 = vmul.f32 %v5477, %v5538
      %v5547 = vmul.f32 %v5478, %v5538
      %v5548 = vmul.f32 %v5479, %v5538
      %v5549 = vmul.f32 %v5480, %v5538
      %v5550 = vmul.f32 %v5481, %v5538
      %v5551 = vmul.f32 %v5482, %v5538
      %v5552 = vmul.f32 %v5483, %v5538
      %v5553 = vmul.f32 %v5484, %v5538
      %v5554 = vmul.f32 %v5485, %v5538
      %v5555 = vmul.f32 %v5486, %v5538
      %v5556 = vmul.f32 %v5487, %v5538
      %v5557 = vmul.f32 %v5488, %v5538
      %v5558 = vmul.f32 %v5489, %v5538
      %v5559 = vmul.f32 %v5490, %v5538
      %v5560 = vmul.f32 %v5491, %v5538
      %v5561 = vmul.f32 %v5492, %v5538
      %v5562 = vmul.f32 %v5493, %v5538
      %v5563 = vmul.f32 %v5494, %v5538
      %v5564 = vmul.f32 %v5495, %v5538
      %v5565 = vmul.f32 %v5496, %v5538
      %v5566 = vmul.f32 %v5497, %v5538
      %v5567 = vmul.f32 %v5498, %v5538
      %v5568 = vmul.f32 %v5499, %v5538
      %v5569 = vmul.f32 %v5500, %v5538
      %v5570 = vmul.f32 %v5501, %v5538
      %v5571 = vmul.f32 %v5502, %v5538
      %v5572 = vmul.f32 %v5503, %v5538
      %v5573 = vmul.f32 %v5504, %v5538
      %v5574 = vmul.f32 %v5505, %v5538
      %v5575 = vmul.f32 %v5506, %v5538
      %v5576 = vmul.f32 %v5507, %v5538
      %v5577 = vmul.f32 %v5508, %v5538
      %v5578 = vmul.f32 %v5509, %v5538
      %v5579 = vmul.f32 %v5510, %v5538
      %v5580 = vmul.f32 %v5511, %v5538
      %v5581 = vmul.f32 %v5512, %v5538
      %v5582 = vmul.f32 %v5513, %v5538
      %v5583 = vmul.f32 %v5514, %v5538
      %v5584 = vmul.f32 %v5515, %v5538
      %v5585 = vmul.f32 %v5516, %v5538
      %v5586 = vmul.f32 %v5517, %v5538
      %v5587 = vmul.f32 %v5518, %v5538
      %v5588 = vmul.f32 %v5519, %v5538
      %v5589 = vmul.f32 %v5520, %v5538
      %v5590 = vmul.f32 %v5521, %v5538
      %v5591 = vmul.f32 %v5522, %v5538
      %v5592 = vmul.f32 %v5523, %v5538
      %v5593 = vmul.f32 %v5524, %v5538
      %v5594 = vmul.f32 %v5525, %v5538
      %v5595 = vmul.f32 %v5526, %v5538
      %v5596 = vmul.f32 %v5527, %v5538
      %v5597 = vmul.f32 %v5528, %v5538
      %v5598 = vmul.f32 %v5529, %v5538
      %v5599 = vmul.f32 %v5530, %v5538
      %v5600 = vmul.f32 %v5531, %v5538
      %v5601 = vmul.f32 %v5532, %v5538
      %v5602 = vmul.f32 %v5533, %v5538
      %v5603 = vadd.f32 %v5405, %v5539
      %v5604 = vadd.f32 %v5406, %v5540
      %v5605 = vadd.f32 %v5407, %v5541
      %v5606 = vadd.f32 %v5408, %v5542
      %v5607 = vadd.f32 %v5409, %v5543
      %v5608 = vadd.f32 %v5410, %v5544
      %v5609 = vadd.f32 %v5411, %v5545
      %v5610 = vadd.f32 %v5412, %v5546
      %v5611 = vadd.f32 %v5413, %v5547
      %v5612 = vadd.f32 %v5414, %v5548
      %v5613 = vadd.f32 %v5415, %v5549
      %v5614 = vadd.f32 %v5416, %v5550
      %v5615 = vadd.f32 %v5417, %v5551
      %v5616 = vadd.f32 %v5418, %v5552
      %v5617 = vadd.f32 %v5419, %v5553
      %v5618 = vadd.f32 %v5420, %v5554
      %v5619 = vadd.f32 %v5421, %v5555
      %v5620 = vadd.f32 %v5422, %v5556
      %v5621 = vadd.f32 %v5423, %v5557
      %v5622 = vadd.f32 %v5424, %v5558
      %v5623 = vadd.f32 %v5425, %v5559
      %v5624 = vadd.f32 %v5426, %v5560
      %v5625 = vadd.f32 %v5427, %v5561
      %v5626 = vadd.f32 %v5428, %v5562
      %v5627 = vadd.f32 %v5429, %v5563
      %v5628 = vadd.f32 %v5430, %v5564
      %v5629 = vadd.f32 %v5431, %v5565
      %v5630 = vadd.f32 %v5432, %v5566
      %v5631 = vadd.f32 %v5433, %v5567
      %v5632 = vadd.f32 %v5434, %v5568
      %v5633 = vadd.f32 %v5435, %v5569
      %v5634 = vadd.f32 %v5436, %v5570
      %v5635 = vadd.f32 %v5437, %v5571
      %v5636 = vadd.f32 %v5438, %v5572
      %v5637 = vadd.f32 %v5439, %v5573
      %v5638 = vadd.f32 %v5440, %v5574
      %v5639 = vadd.f32 %v5441, %v5575
      %v5640 = vadd.f32 %v5442, %v5576
      %v5641 = vadd.f32 %v5443, %v5577
      %v5642 = vadd.f32 %v5444, %v5578
      %v5643 = vadd.f32 %v5445, %v5579
      %v5644 = vadd.f32 %v5446, %v5580
      %v5645 = vadd.f32 %v5447, %v5581
      %v5646 = vadd.f32 %v5448, %v5582
      %v5647 = vadd.f32 %v5449, %v5583
      %v5648 = vadd.f32 %v5450, %v5584
      %v5649 = vadd.f32 %v5451, %v5585
      %v5650 = vadd.f32 %v5452, %v5586
      %v5651 = vadd.f32 %v5453, %v5587
      %v5652 = vadd.f32 %v5454, %v5588
      %v5653 = vadd.f32 %v5455, %v5589
      %v5654 = vadd.f32 %v5456, %v5590
      %v5655 = vadd.f32 %v5457, %v5591
      %v5656 = vadd.f32 %v5458, %v5592
      %v5657 = vadd.f32 %v5459, %v5593
      %v5658 = vadd.f32 %v5460, %v5594
      %v5659 = vadd.f32 %v5461, %v5595
      %v5660 = vadd.f32 %v5462, %v5596
      %v5661 = vadd.f32 %v5463, %v5597
      %v5662 = vadd.f32 %v5464, %v5598
      %v5663 = vadd.f32 %v5465, %v5599
      %v5664 = vadd.f32 %v5466, %v5600
      %v5665 = vadd.f32 %v5467, %v5601
      %v5666 = vadd.f32 %v5468, %v5602
      %v5667 = vld [vmem:[%s5469 + $0x1] sm:$0xff]
      %v5668 = vld [vmem:[%s5469 + $0x11] sm:$0xff]
      %v5669 = vld [vmem:[%s5469 + $0x21] sm:$0xff]
      %v5670 = vld [vmem:[%s5469 + $0x31] sm:$0xff]
      %v5671 = vld [vmem:[%s5469 + $0x41] sm:$0xff]
      %v5672 = vld [vmem:[%s5469 + $0x51] sm:$0xff]
      %v5673 = vld [vmem:[%s5469 + $0x61] sm:$0xff]
      %v5674 = vld [vmem:[%s5469 + $0x71] sm:$0xff]
      %v5675 = vld [vmem:[%s5469 + $0xa1] sm:$0xff]
      %v5676 = vld [vmem:[%s5469 + $0xb1] sm:$0xff]
      %v5677 = vld [vmem:[%s5469 + $0xc1] sm:$0xff]
      %v5678 = vld [vmem:[%s5469 + $0xd1] sm:$0xff]
      %v5679 = vld [vmem:[%s5469 + $0xe1] sm:$0xff]
      %v5680 = vld [vmem:[%s5469 + $0xf1] sm:$0xff]
      %v5681 = vld [vmem:[%s5469 + $0x101] sm:$0xff]
      %v5682 = vld [vmem:[%s5469 + $0x111] sm:$0xff]
      %v5683 = vld [vmem:[%s5469 + $0x141] sm:$0xff]
      %v5684 = vld [vmem:[%s5469 + $0x151] sm:$0xff]
      %v5685 = vld [vmem:[%s5469 + $0x161] sm:$0xff]
      %v5686 = vld [vmem:[%s5469 + $0x171] sm:$0xff]
      %v5687 = vld [vmem:[%s5469 + $0x181] sm:$0xff]
      %v5688 = vld [vmem:[%s5469 + $0x191] sm:$0xff]
      %v5689 = vld [vmem:[%s5469 + $0x1a1] sm:$0xff]
      %v5690 = vld [vmem:[%s5469 + $0x1b1] sm:$0xff]
      %v5691 = vld [vmem:[%s5469 + $0x1e1] sm:$0xff]
      %v5692 = vld [vmem:[%s5469 + $0x1f1] sm:$0xff]
      %v5693 = vld [vmem:[%s5469 + $0x201] sm:$0xff]
      %v5694 = vld [vmem:[%s5469 + $0x211] sm:$0xff]
      %v5695 = vld [vmem:[%s5469 + $0x221] sm:$0xff]
      %v5696 = vld [vmem:[%s5469 + $0x231] sm:$0xff]
      %v5697 = vld [vmem:[%s5469 + $0x241] sm:$0xff]
      %v5698 = vld [vmem:[%s5469 + $0x251] sm:$0xff]
      %v5699 = vld [vmem:[%s5469 + $0x281] sm:$0xff]
      %v5700 = vld [vmem:[%s5469 + $0x291] sm:$0xff]
      %v5701 = vld [vmem:[%s5469 + $0x2a1] sm:$0xff]
      %v5702 = vld [vmem:[%s5469 + $0x2b1] sm:$0xff]
      %v5703 = vld [vmem:[%s5469 + $0x2c1] sm:$0xff]
      %v5704 = vld [vmem:[%s5469 + $0x2d1] sm:$0xff]
      %v5705 = vld [vmem:[%s5469 + $0x2e1] sm:$0xff]
      %v5706 = vld [vmem:[%s5469 + $0x2f1] sm:$0xff]
      %v5707 = vld [vmem:[%s5469 + $0x321] sm:$0xff]
      %v5708 = vld [vmem:[%s5469 + $0x331] sm:$0xff]
      %v5709 = vld [vmem:[%s5469 + $0x341] sm:$0xff]
      %v5710 = vld [vmem:[%s5469 + $0x351] sm:$0xff]
      %v5711 = vld [vmem:[%s5469 + $0x361] sm:$0xff]
      %v5712 = vld [vmem:[%s5469 + $0x371] sm:$0xff]
      %v5713 = vld [vmem:[%s5469 + $0x381] sm:$0xff]
      %v5714 = vld [vmem:[%s5469 + $0x391] sm:$0xff]
      %v5715 = vld [vmem:[%s5469 + $0x3c1] sm:$0xff]
      %v5716 = vld [vmem:[%s5469 + $0x3d1] sm:$0xff]
      %v5717 = vld [vmem:[%s5469 + $0x3e1] sm:$0xff]
      %v5718 = vld [vmem:[%s5469 + $0x3f1] sm:$0xff]
      %v5719 = vld [vmem:[%s5469 + $0x401] sm:$0xff]
      %v5720 = vld [vmem:[%s5469 + $0x411] sm:$0xff]
      %v5721 = vld [vmem:[%s5469 + $0x421] sm:$0xff]
      %v5722 = vld [vmem:[%s5469 + $0x431] sm:$0xff]
      %v5723 = vld [vmem:[%s5469 + $0x461] sm:$0xff]
      %v5724 = vld [vmem:[%s5469 + $0x471] sm:$0xff]
      %v5725 = vld [vmem:[%s5469 + $0x481] sm:$0xff]
      %v5726 = vld [vmem:[%s5469 + $0x491] sm:$0xff]
      %v5727 = vld [vmem:[%s5469 + $0x4a1] sm:$0xff]
      %v5728 = vld [vmem:[%s5469 + $0x4b1] sm:$0xff]
      %v5729 = vld [vmem:[%s5469 + $0x4c1] sm:$0xff]
      %v5730 = vld [vmem:[%s5469 + $0x4d1] sm:$0xff]
      %v5731 = vld [vmem:[%s5 + $0x13] sm:$0x1]
      %v5732 = vlaneseq
      %v5733 = vshrl.u32 %v5732, 7
      %v5734 = vsub.s32 0, %v5733
      %v5735 = vrot.slane %v5731, %v5734
      %v5736 = vmul.f32 %v5667, %v5735
      %v5737 = vmul.f32 %v5668, %v5735
      %v5738 = vmul.f32 %v5669, %v5735
      %v5739 = vmul.f32 %v5670, %v5735
      %v5740 = vmul.f32 %v5671, %v5735
      %v5741 = vmul.f32 %v5672, %v5735
      %v5742 = vmul.f32 %v5673, %v5735
      %v5743 = vmul.f32 %v5674, %v5735
      %v5744 = vmul.f32 %v5675, %v5735
      %v5745 = vmul.f32 %v5676, %v5735
      %v5746 = vmul.f32 %v5677, %v5735
      %v5747 = vmul.f32 %v5678, %v5735
      %v5748 = vmul.f32 %v5679, %v5735
      %v5749 = vmul.f32 %v5680, %v5735
      %v5750 = vmul.f32 %v5681, %v5735
      %v5751 = vmul.f32 %v5682, %v5735
      %v5752 = vmul.f32 %v5683, %v5735
      %v5753 = vmul.f32 %v5684, %v5735
      %v5754 = vmul.f32 %v5685, %v5735
      %v5755 = vmul.f32 %v5686, %v5735
      %v5756 = vmul.f32 %v5687, %v5735
      %v5757 = vmul.f32 %v5688, %v5735
      %v5758 = vmul.f32 %v5689, %v5735
      %v5759 = vmul.f32 %v5690, %v5735
      %v5760 = vmul.f32 %v5691, %v5735
      %v5761 = vmul.f32 %v5692, %v5735
      %v5762 = vmul.f32 %v5693, %v5735
      %v5763 = vmul.f32 %v5694, %v5735
      %v5764 = vmul.f32 %v5695, %v5735
      %v5765 = vmul.f32 %v5696, %v5735
      %v5766 = vmul.f32 %v5697, %v5735
      %v5767 = vmul.f32 %v5698, %v5735
      %v5768 = vmul.f32 %v5699, %v5735
      %v5769 = vmul.f32 %v5700, %v5735
      %v5770 = vmul.f32 %v5701, %v5735
      %v5771 = vmul.f32 %v5702, %v5735
      %v5772 = vmul.f32 %v5703, %v5735
      %v5773 = vmul.f32 %v5704, %v5735
      %v5774 = vmul.f32 %v5705, %v5735
      %v5775 = vmul.f32 %v5706, %v5735
      %v5776 = vmul.f32 %v5707, %v5735
      %v5777 = vmul.f32 %v5708, %v5735
      %v5778 = vmul.f32 %v5709, %v5735
      %v5779 = vmul.f32 %v5710, %v5735
      %v5780 = vmul.f32 %v5711, %v5735
      %v5781 = vmul.f32 %v5712, %v5735
      %v5782 = vmul.f32 %v5713, %v5735
      %v5783 = vmul.f32 %v5714, %v5735
      %v5784 = vmul.f32 %v5715, %v5735
      %v5785 = vmul.f32 %v5716, %v5735
      %v5786 = vmul.f32 %v5717, %v5735
      %v5787 = vmul.f32 %v5718, %v5735
      %v5788 = vmul.f32 %v5719, %v5735
      %v5789 = vmul.f32 %v5720, %v5735
      %v5790 = vmul.f32 %v5721, %v5735
      %v5791 = vmul.f32 %v5722, %v5735
      %v5792 = vmul.f32 %v5723, %v5735
      %v5793 = vmul.f32 %v5724, %v5735
      %v5794 = vmul.f32 %v5725, %v5735
      %v5795 = vmul.f32 %v5726, %v5735
      %v5796 = vmul.f32 %v5727, %v5735
      %v5797 = vmul.f32 %v5728, %v5735
      %v5798 = vmul.f32 %v5729, %v5735
      %v5799 = vmul.f32 %v5730, %v5735
      %v5800 = vadd.f32 %v5603, %v5736
      %v5801 = vadd.f32 %v5604, %v5737
      %v5802 = vadd.f32 %v5605, %v5738
      %v5803 = vadd.f32 %v5606, %v5739
      %v5804 = vadd.f32 %v5607, %v5740
      %v5805 = vadd.f32 %v5608, %v5741
      %v5806 = vadd.f32 %v5609, %v5742
      %v5807 = vadd.f32 %v5610, %v5743
      %v5808 = vadd.f32 %v5611, %v5744
      %v5809 = vadd.f32 %v5612, %v5745
      %v5810 = vadd.f32 %v5613, %v5746
      %v5811 = vadd.f32 %v5614, %v5747
      %v5812 = vadd.f32 %v5615, %v5748
      %v5813 = vadd.f32 %v5616, %v5749
      %v5814 = vadd.f32 %v5617, %v5750
      %v5815 = vadd.f32 %v5618, %v5751
      %v5816 = vadd.f32 %v5619, %v5752
      %v5817 = vadd.f32 %v5620, %v5753
      %v5818 = vadd.f32 %v5621, %v5754
      %v5819 = vadd.f32 %v5622, %v5755
      %v5820 = vadd.f32 %v5623, %v5756
      %v5821 = vadd.f32 %v5624, %v5757
      %v5822 = vadd.f32 %v5625, %v5758
      %v5823 = vadd.f32 %v5626, %v5759
      %v5824 = vadd.f32 %v5627, %v5760
      %v5825 = vadd.f32 %v5628, %v5761
      %v5826 = vadd.f32 %v5629, %v5762
      %v5827 = vadd.f32 %v5630, %v5763
      %v5828 = vadd.f32 %v5631, %v5764
      %v5829 = vadd.f32 %v5632, %v5765
      %v5830 = vadd.f32 %v5633, %v5766
      %v5831 = vadd.f32 %v5634, %v5767
      %v5832 = vadd.f32 %v5635, %v5768
      %v5833 = vadd.f32 %v5636, %v5769
      %v5834 = vadd.f32 %v5637, %v5770
      %v5835 = vadd.f32 %v5638, %v5771
      %v5836 = vadd.f32 %v5639, %v5772
      %v5837 = vadd.f32 %v5640, %v5773
      %v5838 = vadd.f32 %v5641, %v5774
      %v5839 = vadd.f32 %v5642, %v5775
      %v5840 = vadd.f32 %v5643, %v5776
      %v5841 = vadd.f32 %v5644, %v5777
      %v5842 = vadd.f32 %v5645, %v5778
      %v5843 = vadd.f32 %v5646, %v5779
      %v5844 = vadd.f32 %v5647, %v5780
      %v5845 = vadd.f32 %v5648, %v5781
      %v5846 = vadd.f32 %v5649, %v5782
      %v5847 = vadd.f32 %v5650, %v5783
      %v5848 = vadd.f32 %v5651, %v5784
      %v5849 = vadd.f32 %v5652, %v5785
      %v5850 = vadd.f32 %v5653, %v5786
      %v5851 = vadd.f32 %v5654, %v5787
      %v5852 = vadd.f32 %v5655, %v5788
      %v5853 = vadd.f32 %v5656, %v5789
      %v5854 = vadd.f32 %v5657, %v5790
      %v5855 = vadd.f32 %v5658, %v5791
      %v5856 = vadd.f32 %v5659, %v5792
      %v5857 = vadd.f32 %v5660, %v5793
      %v5858 = vadd.f32 %v5661, %v5794
      %v5859 = vadd.f32 %v5662, %v5795
      %v5860 = vadd.f32 %v5663, %v5796
      %v5861 = vadd.f32 %v5664, %v5797
      %v5862 = vadd.f32 %v5665, %v5798
      %v5863 = vadd.f32 %v5666, %v5799
      %v5864 = vld [vmem:[%s5469 + $0x2] sm:$0xff]
      %v5865 = vld [vmem:[%s5469 + $0x12] sm:$0xff]
      %v5866 = vld [vmem:[%s5469 + $0x22] sm:$0xff]
      %v5867 = vld [vmem:[%s5469 + $0x32] sm:$0xff]
      %v5868 = vld [vmem:[%s5469 + $0x42] sm:$0xff]
      %v5869 = vld [vmem:[%s5469 + $0x52] sm:$0xff]
      %v5870 = vld [vmem:[%s5469 + $0x62] sm:$0xff]
      %v5871 = vld [vmem:[%s5469 + $0x72] sm:$0xff]
      %v5872 = vld [vmem:[%s5469 + $0xa2] sm:$0xff]
      %v5873 = vld [vmem:[%s5469 + $0xb2] sm:$0xff]
      %v5874 = vld [vmem:[%s5469 + $0xc2] sm:$0xff]
      %v5875 = vld [vmem:[%s5469 + $0xd2] sm:$0xff]
      %v5876 = vld [vmem:[%s5469 + $0xe2] sm:$0xff]
      %v5877 = vld [vmem:[%s5469 + $0xf2] sm:$0xff]
      %v5878 = vld [vmem:[%s5469 + $0x102] sm:$0xff]
      %v5879 = vld [vmem:[%s5469 + $0x112] sm:$0xff]
      %v5880 = vld [vmem:[%s5469 + $0x142] sm:$0xff]
      %v5881 = vld [vmem:[%s5469 + $0x152] sm:$0xff]
      %v5882 = vld [vmem:[%s5469 + $0x162] sm:$0xff]
      %v5883 = vld [vmem:[%s5469 + $0x172] sm:$0xff]
      %v5884 = vld [vmem:[%s5469 + $0x182] sm:$0xff]
      %v5885 = vld [vmem:[%s5469 + $0x192] sm:$0xff]
      %v5886 = vld [vmem:[%s5469 + $0x1a2] sm:$0xff]
      %v5887 = vld [vmem:[%s5469 + $0x1b2] sm:$0xff]
      %v5888 = vld [vmem:[%s5469 + $0x1e2] sm:$0xff]
      %v5889 = vld [vmem:[%s5469 + $0x1f2] sm:$0xff]
      %v5890 = vld [vmem:[%s5469 + $0x202] sm:$0xff]
      %v5891 = vld [vmem:[%s5469 + $0x212] sm:$0xff]
      %v5892 = vld [vmem:[%s5469 + $0x222] sm:$0xff]
      %v5893 = vld [vmem:[%s5469 + $0x232] sm:$0xff]
      %v5894 = vld [vmem:[%s5469 + $0x242] sm:$0xff]
      %v5895 = vld [vmem:[%s5469 + $0x252] sm:$0xff]
      %v5896 = vld [vmem:[%s5469 + $0x282] sm:$0xff]
      %v5897 = vld [vmem:[%s5469 + $0x292] sm:$0xff]
      %v5898 = vld [vmem:[%s5469 + $0x2a2] sm:$0xff]
      %v5899 = vld [vmem:[%s5469 + $0x2b2] sm:$0xff]
      %v5900 = vld [vmem:[%s5469 + $0x2c2] sm:$0xff]
      %v5901 = vld [vmem:[%s5469 + $0x2d2] sm:$0xff]
      %v5902 = vld [vmem:[%s5469 + $0x2e2] sm:$0xff]
      %v5903 = vld [vmem:[%s5469 + $0x2f2] sm:$0xff]
      %v5904 = vld [vmem:[%s5469 + $0x322] sm:$0xff]
      %v5905 = vld [vmem:[%s5469 + $0x332] sm:$0xff]
      %v5906 = vld [vmem:[%s5469 + $0x342] sm:$0xff]
      %v5907 = vld [vmem:[%s5469 + $0x352] sm:$0xff]
      %v5908 = vld [vmem:[%s5469 + $0x362] sm:$0xff]
      %v5909 = vld [vmem:[%s5469 + $0x372] sm:$0xff]
      %v5910 = vld [vmem:[%s5469 + $0x382] sm:$0xff]
      %v5911 = vld [vmem:[%s5469 + $0x392] sm:$0xff]
      %v5912 = vld [vmem:[%s5469 + $0x3c2] sm:$0xff]
      %v5913 = vld [vmem:[%s5469 + $0x3d2] sm:$0xff]
      %v5914 = vld [vmem:[%s5469 + $0x3e2] sm:$0xff]
      %v5915 = vld [vmem:[%s5469 + $0x3f2] sm:$0xff]
      %v5916 = vld [vmem:[%s5469 + $0x402] sm:$0xff]
      %v5917 = vld [vmem:[%s5469 + $0x412] sm:$0xff]
      %v5918 = vld [vmem:[%s5469 + $0x422] sm:$0xff]
      %v5919 = vld [vmem:[%s5469 + $0x432] sm:$0xff]
      %v5920 = vld [vmem:[%s5469 + $0x462] sm:$0xff]
      %v5921 = vld [vmem:[%s5469 + $0x472] sm:$0xff]
      %v5922 = vld [vmem:[%s5469 + $0x482] sm:$0xff]
      %v5923 = vld [vmem:[%s5469 + $0x492] sm:$0xff]
      %v5924 = vld [vmem:[%s5469 + $0x4a2] sm:$0xff]
      %v5925 = vld [vmem:[%s5469 + $0x4b2] sm:$0xff]
      %v5926 = vld [vmem:[%s5469 + $0x4c2] sm:$0xff]
      %v5927 = vld [vmem:[%s5469 + $0x4d2] sm:$0xff]
      %v5928 = vld [vmem:[%s5 + $0x14] sm:$0x1]
      %v5929 = vlaneseq
      %v5930 = vshrl.u32 %v5929, 7
      %v5931 = vsub.s32 0, %v5930
      %v5932 = vrot.slane %v5928, %v5931
      %v5933 = vmul.f32 %v5864, %v5932
      %v5934 = vmul.f32 %v5865, %v5932
      %v5935 = vmul.f32 %v5866, %v5932
      %v5936 = vmul.f32 %v5867, %v5932
      %v5937 = vmul.f32 %v5868, %v5932
      %v5938 = vmul.f32 %v5869, %v5932
      %v5939 = vmul.f32 %v5870, %v5932
      %v5940 = vmul.f32 %v5871, %v5932
      %v5941 = vmul.f32 %v5872, %v5932
      %v5942 = vmul.f32 %v5873, %v5932
      %v5943 = vmul.f32 %v5874, %v5932
      %v5944 = vmul.f32 %v5875, %v5932
      %v5945 = vmul.f32 %v5876, %v5932
      %v5946 = vmul.f32 %v5877, %v5932
      %v5947 = vmul.f32 %v5878, %v5932
      %v5948 = vmul.f32 %v5879, %v5932
      %v5949 = vmul.f32 %v5880, %v5932
      %v5950 = vmul.f32 %v5881, %v5932
      %v5951 = vmul.f32 %v5882, %v5932
      %v5952 = vmul.f32 %v5883, %v5932
      %v5953 = vmul.f32 %v5884, %v5932
      %v5954 = vmul.f32 %v5885, %v5932
      %v5955 = vmul.f32 %v5886, %v5932
      %v5956 = vmul.f32 %v5887, %v5932
      %v5957 = vmul.f32 %v5888, %v5932
      %v5958 = vmul.f32 %v5889, %v5932
      %v5959 = vmul.f32 %v5890, %v5932
      %v5960 = vmul.f32 %v5891, %v5932
      %v5961 = vmul.f32 %v5892, %v5932
      %v5962 = vmul.f32 %v5893, %v5932
      %v5963 = vmul.f32 %v5894, %v5932
      %v5964 = vmul.f32 %v5895, %v5932
      %v5965 = vmul.f32 %v5896, %v5932
      %v5966 = vmul.f32 %v5897, %v5932
      %v5967 = vmul.f32 %v5898, %v5932
      %v5968 = vmul.f32 %v5899, %v5932
      %v5969 = vmul.f32 %v5900, %v5932
      %v5970 = vmul.f32 %v5901, %v5932
      %v5971 = vmul.f32 %v5902, %v5932
      %v5972 = vmul.f32 %v5903, %v5932
      %v5973 = vmul.f32 %v5904, %v5932
      %v5974 = vmul.f32 %v5905, %v5932
      %v5975 = vmul.f32 %v5906, %v5932
      %v5976 = vmul.f32 %v5907, %v5932
      %v5977 = vmul.f32 %v5908, %v5932
      %v5978 = vmul.f32 %v5909, %v5932
      %v5979 = vmul.f32 %v5910, %v5932
      %v5980 = vmul.f32 %v5911, %v5932
      %v5981 = vmul.f32 %v5912, %v5932
      %v5982 = vmul.f32 %v5913, %v5932
      %v5983 = vmul.f32 %v5914, %v5932
      %v5984 = vmul.f32 %v5915, %v5932
      %v5985 = vmul.f32 %v5916, %v5932
      %v5986 = vmul.f32 %v5917, %v5932
      %v5987 = vmul.f32 %v5918, %v5932
      %v5988 = vmul.f32 %v5919, %v5932
      %v5989 = vmul.f32 %v5920, %v5932
      %v5990 = vmul.f32 %v5921, %v5932
      %v5991 = vmul.f32 %v5922, %v5932
      %v5992 = vmul.f32 %v5923, %v5932
      %v5993 = vmul.f32 %v5924, %v5932
      %v5994 = vmul.f32 %v5925, %v5932
      %v5995 = vmul.f32 %v5926, %v5932
      %v5996 = vmul.f32 %v5927, %v5932
      %v5997 = vadd.f32 %v5800, %v5933
      %v5998 = vadd.f32 %v5801, %v5934
      %v5999 = vadd.f32 %v5802, %v5935
      %v6000 = vadd.f32 %v5803, %v5936
      %v6001 = vadd.f32 %v5804, %v5937
      %v6002 = vadd.f32 %v5805, %v5938
      %v6003 = vadd.f32 %v5806, %v5939
      %v6004 = vadd.f32 %v5807, %v5940
      %v6005 = vadd.f32 %v5808, %v5941
      %v6006 = vadd.f32 %v5809, %v5942
      %v6007 = vadd.f32 %v5810, %v5943
      %v6008 = vadd.f32 %v5811, %v5944
      %v6009 = vadd.f32 %v5812, %v5945
      %v6010 = vadd.f32 %v5813, %v5946
      %v6011 = vadd.f32 %v5814, %v5947
      %v6012 = vadd.f32 %v5815, %v5948
      %v6013 = vadd.f32 %v5816, %v5949
      %v6014 = vadd.f32 %v5817, %v5950
      %v6015 = vadd.f32 %v5818, %v5951
      %v6016 = vadd.f32 %v5819, %v5952
      %v6017 = vadd.f32 %v5820, %v5953
      %v6018 = vadd.f32 %v5821, %v5954
      %v6019 = vadd.f32 %v5822, %v5955
      %v6020 = vadd.f32 %v5823, %v5956
      %v6021 = vadd.f32 %v5824, %v5957
      %v6022 = vadd.f32 %v5825, %v5958
      %v6023 = vadd.f32 %v5826, %v5959
      %v6024 = vadd.f32 %v5827, %v5960
      %v6025 = vadd.f32 %v5828, %v5961
      %v6026 = vadd.f32 %v5829, %v5962
      %v6027 = vadd.f32 %v5830, %v5963
      %v6028 = vadd.f32 %v5831, %v5964
      %v6029 = vadd.f32 %v5832, %v5965
      %v6030 = vadd.f32 %v5833, %v5966
      %v6031 = vadd.f32 %v5834, %v5967
      %v6032 = vadd.f32 %v5835, %v5968
      %v6033 = vadd.f32 %v5836, %v5969
      %v6034 = vadd.f32 %v5837, %v5970
      %v6035 = vadd.f32 %v5838, %v5971
      %v6036 = vadd.f32 %v5839, %v5972
      %v6037 = vadd.f32 %v5840, %v5973
      %v6038 = vadd.f32 %v5841, %v5974
      %v6039 = vadd.f32 %v5842, %v5975
      %v6040 = vadd.f32 %v5843, %v5976
      %v6041 = vadd.f32 %v5844, %v5977
      %v6042 = vadd.f32 %v5845, %v5978
      %v6043 = vadd.f32 %v5846, %v5979
      %v6044 = vadd.f32 %v5847, %v5980
      %v6045 = vadd.f32 %v5848, %v5981
      %v6046 = vadd.f32 %v5849, %v5982
      %v6047 = vadd.f32 %v5850, %v5983
      %v6048 = vadd.f32 %v5851, %v5984
      %v6049 = vadd.f32 %v5852, %v5985
      %v6050 = vadd.f32 %v5853, %v5986
      %v6051 = vadd.f32 %v5854, %v5987
      %v6052 = vadd.f32 %v5855, %v5988
      %v6053 = vadd.f32 %v5856, %v5989
      %v6054 = vadd.f32 %v5857, %v5990
      %v6055 = vadd.f32 %v5858, %v5991
      %v6056 = vadd.f32 %v5859, %v5992
      %v6057 = vadd.f32 %v5860, %v5993
      %v6058 = vadd.f32 %v5861, %v5994
      %v6059 = vadd.f32 %v5862, %v5995
      %v6060 = vadd.f32 %v5863, %v5996
      %s6061 = scalar_lea.vmem [#allocation2], 336
      %v6062 = vld [vmem:[%s6061] sm:$0xff]
      %v6063 = vld [vmem:[%s6061 + $0x10] sm:$0xff]
      %v6064 = vld [vmem:[%s6061 + $0x20] sm:$0xff]
      %v6065 = vld [vmem:[%s6061 + $0x30] sm:$0xff]
      %v6066 = vld [vmem:[%s6061 + $0x40] sm:$0xff]
      %v6067 = vld [vmem:[%s6061 + $0x50] sm:$0xff]
      %v6068 = vld [vmem:[%s6061 + $0x60] sm:$0xff]
      %v6069 = vld [vmem:[%s6061 + $0x70] sm:$0xff]
      %v6070 = vld [vmem:[%s6061 + $0xa0] sm:$0xff]
      %v6071 = vld [vmem:[%s6061 + $0xb0] sm:$0xff]
      %v6072 = vld [vmem:[%s6061 + $0xc0] sm:$0xff]
      %v6073 = vld [vmem:[%s6061 + $0xd0] sm:$0xff]
      %v6074 = vld [vmem:[%s6061 + $0xe0] sm:$0xff]
      %v6075 = vld [vmem:[%s6061 + $0xf0] sm:$0xff]
      %v6076 = vld [vmem:[%s6061 + $0x100] sm:$0xff]
      %v6077 = vld [vmem:[%s6061 + $0x110] sm:$0xff]
      %v6078 = vld [vmem:[%s6061 + $0x140] sm:$0xff]
      %v6079 = vld [vmem:[%s6061 + $0x150] sm:$0xff]
      %v6080 = vld [vmem:[%s6061 + $0x160] sm:$0xff]
      %v6081 = vld [vmem:[%s6061 + $0x170] sm:$0xff]
      %v6082 = vld [vmem:[%s6061 + $0x180] sm:$0xff]
      %v6083 = vld [vmem:[%s6061 + $0x190] sm:$0xff]
      %v6084 = vld [vmem:[%s6061 + $0x1a0] sm:$0xff]
      %v6085 = vld [vmem:[%s6061 + $0x1b0] sm:$0xff]
      %v6086 = vld [vmem:[%s6061 + $0x1e0] sm:$0xff]
      %v6087 = vld [vmem:[%s6061 + $0x1f0] sm:$0xff]
      %v6088 = vld [vmem:[%s6061 + $0x200] sm:$0xff]
      %v6089 = vld [vmem:[%s6061 + $0x210] sm:$0xff]
      %v6090 = vld [vmem:[%s6061 + $0x220] sm:$0xff]
      %v6091 = vld [vmem:[%s6061 + $0x230] sm:$0xff]
      %v6092 = vld [vmem:[%s6061 + $0x240] sm:$0xff]
      %v6093 = vld [vmem:[%s6061 + $0x250] sm:$0xff]
      %v6094 = vld [vmem:[%s6061 + $0x280] sm:$0xff]
      %v6095 = vld [vmem:[%s6061 + $0x290] sm:$0xff]
      %v6096 = vld [vmem:[%s6061 + $0x2a0] sm:$0xff]
      %v6097 = vld [vmem:[%s6061 + $0x2b0] sm:$0xff]
      %v6098 = vld [vmem:[%s6061 + $0x2c0] sm:$0xff]
      %v6099 = vld [vmem:[%s6061 + $0x2d0] sm:$0xff]
      %v6100 = vld [vmem:[%s6061 + $0x2e0] sm:$0xff]
      %v6101 = vld [vmem:[%s6061 + $0x2f0] sm:$0xff]
      %v6102 = vld [vmem:[%s6061 + $0x320] sm:$0xff]
      %v6103 = vld [vmem:[%s6061 + $0x330] sm:$0xff]
      %v6104 = vld [vmem:[%s6061 + $0x340] sm:$0xff]
      %v6105 = vld [vmem:[%s6061 + $0x350] sm:$0xff]
      %v6106 = vld [vmem:[%s6061 + $0x360] sm:$0xff]
      %v6107 = vld [vmem:[%s6061 + $0x370] sm:$0xff]
      %v6108 = vld [vmem:[%s6061 + $0x380] sm:$0xff]
      %v6109 = vld [vmem:[%s6061 + $0x390] sm:$0xff]
      %v6110 = vld [vmem:[%s6061 + $0x3c0] sm:$0xff]
      %v6111 = vld [vmem:[%s6061 + $0x3d0] sm:$0xff]
      %v6112 = vld [vmem:[%s6061 + $0x3e0] sm:$0xff]
      %v6113 = vld [vmem:[%s6061 + $0x3f0] sm:$0xff]
      %v6114 = vld [vmem:[%s6061 + $0x400] sm:$0xff]
      %v6115 = vld [vmem:[%s6061 + $0x410] sm:$0xff]
      %v6116 = vld [vmem:[%s6061 + $0x420] sm:$0xff]
      %v6117 = vld [vmem:[%s6061 + $0x430] sm:$0xff]
      %v6118 = vld [vmem:[%s6061 + $0x460] sm:$0xff]
      %v6119 = vld [vmem:[%s6061 + $0x470] sm:$0xff]
      %v6120 = vld [vmem:[%s6061 + $0x480] sm:$0xff]
      %v6121 = vld [vmem:[%s6061 + $0x490] sm:$0xff]
      %v6122 = vld [vmem:[%s6061 + $0x4a0] sm:$0xff]
      %v6123 = vld [vmem:[%s6061 + $0x4b0] sm:$0xff]
      %v6124 = vld [vmem:[%s6061 + $0x4c0] sm:$0xff]
      %v6125 = vld [vmem:[%s6061 + $0x4d0] sm:$0xff]
      %v6126 = vld [vmem:[%s5 + $0x15] sm:$0x1]
      %v6127 = vlaneseq
      %v6128 = vshrl.u32 %v6127, 7
      %v6129 = vsub.s32 0, %v6128
      %v6130 = vrot.slane %v6126, %v6129
      %v6131 = vmul.f32 %v6062, %v6130
      %v6132 = vmul.f32 %v6063, %v6130
      %v6133 = vmul.f32 %v6064, %v6130
      %v6134 = vmul.f32 %v6065, %v6130
      %v6135 = vmul.f32 %v6066, %v6130
      %v6136 = vmul.f32 %v6067, %v6130
      %v6137 = vmul.f32 %v6068, %v6130
      %v6138 = vmul.f32 %v6069, %v6130
      %v6139 = vmul.f32 %v6070, %v6130
      %v6140 = vmul.f32 %v6071, %v6130
      %v6141 = vmul.f32 %v6072, %v6130
      %v6142 = vmul.f32 %v6073, %v6130
      %v6143 = vmul.f32 %v6074, %v6130
      %v6144 = vmul.f32 %v6075, %v6130
      %v6145 = vmul.f32 %v6076, %v6130
      %v6146 = vmul.f32 %v6077, %v6130
      %v6147 = vmul.f32 %v6078, %v6130
      %v6148 = vmul.f32 %v6079, %v6130
      %v6149 = vmul.f32 %v6080, %v6130
      %v6150 = vmul.f32 %v6081, %v6130
      %v6151 = vmul.f32 %v6082, %v6130
      %v6152 = vmul.f32 %v6083, %v6130
      %v6153 = vmul.f32 %v6084, %v6130
      %v6154 = vmul.f32 %v6085, %v6130
      %v6155 = vmul.f32 %v6086, %v6130
      %v6156 = vmul.f32 %v6087, %v6130
      %v6157 = vmul.f32 %v6088, %v6130
      %v6158 = vmul.f32 %v6089, %v6130
      %v6159 = vmul.f32 %v6090, %v6130
      %v6160 = vmul.f32 %v6091, %v6130
      %v6161 = vmul.f32 %v6092, %v6130
      %v6162 = vmul.f32 %v6093, %v6130
      %v6163 = vmul.f32 %v6094, %v6130
      %v6164 = vmul.f32 %v6095, %v6130
      %v6165 = vmul.f32 %v6096, %v6130
      %v6166 = vmul.f32 %v6097, %v6130
      %v6167 = vmul.f32 %v6098, %v6130
      %v6168 = vmul.f32 %v6099, %v6130
      %v6169 = vmul.f32 %v6100, %v6130
      %v6170 = vmul.f32 %v6101, %v6130
      %v6171 = vmul.f32 %v6102, %v6130
      %v6172 = vmul.f32 %v6103, %v6130
      %v6173 = vmul.f32 %v6104, %v6130
      %v6174 = vmul.f32 %v6105, %v6130
      %v6175 = vmul.f32 %v6106, %v6130
      %v6176 = vmul.f32 %v6107, %v6130
      %v6177 = vmul.f32 %v6108, %v6130
      %v6178 = vmul.f32 %v6109, %v6130
      %v6179 = vmul.f32 %v6110, %v6130
      %v6180 = vmul.f32 %v6111, %v6130
      %v6181 = vmul.f32 %v6112, %v6130
      %v6182 = vmul.f32 %v6113, %v6130
      %v6183 = vmul.f32 %v6114, %v6130
      %v6184 = vmul.f32 %v6115, %v6130
      %v6185 = vmul.f32 %v6116, %v6130
      %v6186 = vmul.f32 %v6117, %v6130
      %v6187 = vmul.f32 %v6118, %v6130
      %v6188 = vmul.f32 %v6119, %v6130
      %v6189 = vmul.f32 %v6120, %v6130
      %v6190 = vmul.f32 %v6121, %v6130
      %v6191 = vmul.f32 %v6122, %v6130
      %v6192 = vmul.f32 %v6123, %v6130
      %v6193 = vmul.f32 %v6124, %v6130
      %v6194 = vmul.f32 %v6125, %v6130
      %v6195 = vadd.f32 %v5997, %v6131
      %v6196 = vadd.f32 %v5998, %v6132
      %v6197 = vadd.f32 %v5999, %v6133
      %v6198 = vadd.f32 %v6000, %v6134
      %v6199 = vadd.f32 %v6001, %v6135
      %v6200 = vadd.f32 %v6002, %v6136
      %v6201 = vadd.f32 %v6003, %v6137
      %v6202 = vadd.f32 %v6004, %v6138
      %v6203 = vadd.f32 %v6005, %v6139
      %v6204 = vadd.f32 %v6006, %v6140
      %v6205 = vadd.f32 %v6007, %v6141
      %v6206 = vadd.f32 %v6008, %v6142
      %v6207 = vadd.f32 %v6009, %v6143
      %v6208 = vadd.f32 %v6010, %v6144
      %v6209 = vadd.f32 %v6011, %v6145
      %v6210 = vadd.f32 %v6012, %v6146
      %v6211 = vadd.f32 %v6013, %v6147
      %v6212 = vadd.f32 %v6014, %v6148
      %v6213 = vadd.f32 %v6015, %v6149
      %v6214 = vadd.f32 %v6016, %v6150
      %v6215 = vadd.f32 %v6017, %v6151
      %v6216 = vadd.f32 %v6018, %v6152
      %v6217 = vadd.f32 %v6019, %v6153
      %v6218 = vadd.f32 %v6020, %v6154
      %v6219 = vadd.f32 %v6021, %v6155
      %v6220 = vadd.f32 %v6022, %v6156
      %v6221 = vadd.f32 %v6023, %v6157
      %v6222 = vadd.f32 %v6024, %v6158
      %v6223 = vadd.f32 %v6025, %v6159
      %v6224 = vadd.f32 %v6026, %v6160
      %v6225 = vadd.f32 %v6027, %v6161
      %v6226 = vadd.f32 %v6028, %v6162
      %v6227 = vadd.f32 %v6029, %v6163
      %v6228 = vadd.f32 %v6030, %v6164
      %v6229 = vadd.f32 %v6031, %v6165
      %v6230 = vadd.f32 %v6032, %v6166
      %v6231 = vadd.f32 %v6033, %v6167
      %v6232 = vadd.f32 %v6034, %v6168
      %v6233 = vadd.f32 %v6035, %v6169
      %v6234 = vadd.f32 %v6036, %v6170
      %v6235 = vadd.f32 %v6037, %v6171
      %v6236 = vadd.f32 %v6038, %v6172
      %v6237 = vadd.f32 %v6039, %v6173
      %v6238 = vadd.f32 %v6040, %v6174
      %v6239 = vadd.f32 %v6041, %v6175
      %v6240 = vadd.f32 %v6042, %v6176
      %v6241 = vadd.f32 %v6043, %v6177
      %v6242 = vadd.f32 %v6044, %v6178
      %v6243 = vadd.f32 %v6045, %v6179
      %v6244 = vadd.f32 %v6046, %v6180
      %v6245 = vadd.f32 %v6047, %v6181
      %v6246 = vadd.f32 %v6048, %v6182
      %v6247 = vadd.f32 %v6049, %v6183
      %v6248 = vadd.f32 %v6050, %v6184
      %v6249 = vadd.f32 %v6051, %v6185
      %v6250 = vadd.f32 %v6052, %v6186
      %v6251 = vadd.f32 %v6053, %v6187
      %v6252 = vadd.f32 %v6054, %v6188
      %v6253 = vadd.f32 %v6055, %v6189
      %v6254 = vadd.f32 %v6056, %v6190
      %v6255 = vadd.f32 %v6057, %v6191
      %v6256 = vadd.f32 %v6058, %v6192
      %v6257 = vadd.f32 %v6059, %v6193
      %v6258 = vadd.f32 %v6060, %v6194
      %v6259 = vld [vmem:[%s6061 + $0x1] sm:$0xff]
      %v6260 = vld [vmem:[%s6061 + $0x11] sm:$0xff]
      %v6261 = vld [vmem:[%s6061 + $0x21] sm:$0xff]
      %v6262 = vld [vmem:[%s6061 + $0x31] sm:$0xff]
      %v6263 = vld [vmem:[%s6061 + $0x41] sm:$0xff]
      %v6264 = vld [vmem:[%s6061 + $0x51] sm:$0xff]
      %v6265 = vld [vmem:[%s6061 + $0x61] sm:$0xff]
      %v6266 = vld [vmem:[%s6061 + $0x71] sm:$0xff]
      %v6267 = vld [vmem:[%s6061 + $0xa1] sm:$0xff]
      %v6268 = vld [vmem:[%s6061 + $0xb1] sm:$0xff]
      %v6269 = vld [vmem:[%s6061 + $0xc1] sm:$0xff]
      %v6270 = vld [vmem:[%s6061 + $0xd1] sm:$0xff]
      %v6271 = vld [vmem:[%s6061 + $0xe1] sm:$0xff]
      %v6272 = vld [vmem:[%s6061 + $0xf1] sm:$0xff]
      %v6273 = vld [vmem:[%s6061 + $0x101] sm:$0xff]
      %v6274 = vld [vmem:[%s6061 + $0x111] sm:$0xff]
      %v6275 = vld [vmem:[%s6061 + $0x141] sm:$0xff]
      %v6276 = vld [vmem:[%s6061 + $0x151] sm:$0xff]
      %v6277 = vld [vmem:[%s6061 + $0x161] sm:$0xff]
      %v6278 = vld [vmem:[%s6061 + $0x171] sm:$0xff]
      %v6279 = vld [vmem:[%s6061 + $0x181] sm:$0xff]
      %v6280 = vld [vmem:[%s6061 + $0x191] sm:$0xff]
      %v6281 = vld [vmem:[%s6061 + $0x1a1] sm:$0xff]
      %v6282 = vld [vmem:[%s6061 + $0x1b1] sm:$0xff]
      %v6283 = vld [vmem:[%s6061 + $0x1e1] sm:$0xff]
      %v6284 = vld [vmem:[%s6061 + $0x1f1] sm:$0xff]
      %v6285 = vld [vmem:[%s6061 + $0x201] sm:$0xff]
      %v6286 = vld [vmem:[%s6061 + $0x211] sm:$0xff]
      %v6287 = vld [vmem:[%s6061 + $0x221] sm:$0xff]
      %v6288 = vld [vmem:[%s6061 + $0x231] sm:$0xff]
      %v6289 = vld [vmem:[%s6061 + $0x241] sm:$0xff]
      %v6290 = vld [vmem:[%s6061 + $0x251] sm:$0xff]
      %v6291 = vld [vmem:[%s6061 + $0x281] sm:$0xff]
      %v6292 = vld [vmem:[%s6061 + $0x291] sm:$0xff]
      %v6293 = vld [vmem:[%s6061 + $0x2a1] sm:$0xff]
      %v6294 = vld [vmem:[%s6061 + $0x2b1] sm:$0xff]
      %v6295 = vld [vmem:[%s6061 + $0x2c1] sm:$0xff]
      %v6296 = vld [vmem:[%s6061 + $0x2d1] sm:$0xff]
      %v6297 = vld [vmem:[%s6061 + $0x2e1] sm:$0xff]
      %v6298 = vld [vmem:[%s6061 + $0x2f1] sm:$0xff]
      %v6299 = vld [vmem:[%s6061 + $0x321] sm:$0xff]
      %v6300 = vld [vmem:[%s6061 + $0x331] sm:$0xff]
      %v6301 = vld [vmem:[%s6061 + $0x341] sm:$0xff]
      %v6302 = vld [vmem:[%s6061 + $0x351] sm:$0xff]
      %v6303 = vld [vmem:[%s6061 + $0x361] sm:$0xff]
      %v6304 = vld [vmem:[%s6061 + $0x371] sm:$0xff]
      %v6305 = vld [vmem:[%s6061 + $0x381] sm:$0xff]
      %v6306 = vld [vmem:[%s6061 + $0x391] sm:$0xff]
      %v6307 = vld [vmem:[%s6061 + $0x3c1] sm:$0xff]
      %v6308 = vld [vmem:[%s6061 + $0x3d1] sm:$0xff]
      %v6309 = vld [vmem:[%s6061 + $0x3e1] sm:$0xff]
      %v6310 = vld [vmem:[%s6061 + $0x3f1] sm:$0xff]
      %v6311 = vld [vmem:[%s6061 + $0x401] sm:$0xff]
      %v6312 = vld [vmem:[%s6061 + $0x411] sm:$0xff]
      %v6313 = vld [vmem:[%s6061 + $0x421] sm:$0xff]
      %v6314 = vld [vmem:[%s6061 + $0x431] sm:$0xff]
      %v6315 = vld [vmem:[%s6061 + $0x461] sm:$0xff]
      %v6316 = vld [vmem:[%s6061 + $0x471] sm:$0xff]
      %v6317 = vld [vmem:[%s6061 + $0x481] sm:$0xff]
      %v6318 = vld [vmem:[%s6061 + $0x491] sm:$0xff]
      %v6319 = vld [vmem:[%s6061 + $0x4a1] sm:$0xff]
      %v6320 = vld [vmem:[%s6061 + $0x4b1] sm:$0xff]
      %v6321 = vld [vmem:[%s6061 + $0x4c1] sm:$0xff]
      %v6322 = vld [vmem:[%s6061 + $0x4d1] sm:$0xff]
      %v6323 = vld [vmem:[%s5 + $0x16] sm:$0x1]
      %v6324 = vlaneseq
      %v6325 = vshrl.u32 %v6324, 7
      %v6326 = vsub.s32 0, %v6325
      %v6327 = vrot.slane %v6323, %v6326
      %v6328 = vmul.f32 %v6259, %v6327
      %v6329 = vmul.f32 %v6260, %v6327
      %v6330 = vmul.f32 %v6261, %v6327
      %v6331 = vmul.f32 %v6262, %v6327
      %v6332 = vmul.f32 %v6263, %v6327
      %v6333 = vmul.f32 %v6264, %v6327
      %v6334 = vmul.f32 %v6265, %v6327
      %v6335 = vmul.f32 %v6266, %v6327
      %v6336 = vmul.f32 %v6267, %v6327
      %v6337 = vmul.f32 %v6268, %v6327
      %v6338 = vmul.f32 %v6269, %v6327
      %v6339 = vmul.f32 %v6270, %v6327
      %v6340 = vmul.f32 %v6271, %v6327
      %v6341 = vmul.f32 %v6272, %v6327
      %v6342 = vmul.f32 %v6273, %v6327
      %v6343 = vmul.f32 %v6274, %v6327
      %v6344 = vmul.f32 %v6275, %v6327
      %v6345 = vmul.f32 %v6276, %v6327
      %v6346 = vmul.f32 %v6277, %v6327
      %v6347 = vmul.f32 %v6278, %v6327
      %v6348 = vmul.f32 %v6279, %v6327
      %v6349 = vmul.f32 %v6280, %v6327
      %v6350 = vmul.f32 %v6281, %v6327
      %v6351 = vmul.f32 %v6282, %v6327
      %v6352 = vmul.f32 %v6283, %v6327
      %v6353 = vmul.f32 %v6284, %v6327
      %v6354 = vmul.f32 %v6285, %v6327
      %v6355 = vmul.f32 %v6286, %v6327
      %v6356 = vmul.f32 %v6287, %v6327
      %v6357 = vmul.f32 %v6288, %v6327
      %v6358 = vmul.f32 %v6289, %v6327
      %v6359 = vmul.f32 %v6290, %v6327
      %v6360 = vmul.f32 %v6291, %v6327
      %v6361 = vmul.f32 %v6292, %v6327
      %v6362 = vmul.f32 %v6293, %v6327
      %v6363 = vmul.f32 %v6294, %v6327
      %v6364 = vmul.f32 %v6295, %v6327
      %v6365 = vmul.f32 %v6296, %v6327
      %v6366 = vmul.f32 %v6297, %v6327
      %v6367 = vmul.f32 %v6298, %v6327
      %v6368 = vmul.f32 %v6299, %v6327
      %v6369 = vmul.f32 %v6300, %v6327
      %v6370 = vmul.f32 %v6301, %v6327
      %v6371 = vmul.f32 %v6302, %v6327
      %v6372 = vmul.f32 %v6303, %v6327
      %v6373 = vmul.f32 %v6304, %v6327
      %v6374 = vmul.f32 %v6305, %v6327
      %v6375 = vmul.f32 %v6306, %v6327
      %v6376 = vmul.f32 %v6307, %v6327
      %v6377 = vmul.f32 %v6308, %v6327
      %v6378 = vmul.f32 %v6309, %v6327
      %v6379 = vmul.f32 %v6310, %v6327
      %v6380 = vmul.f32 %v6311, %v6327
      %v6381 = vmul.f32 %v6312, %v6327
      %v6382 = vmul.f32 %v6313, %v6327
      %v6383 = vmul.f32 %v6314, %v6327
      %v6384 = vmul.f32 %v6315, %v6327
      %v6385 = vmul.f32 %v6316, %v6327
      %v6386 = vmul.f32 %v6317, %v6327
      %v6387 = vmul.f32 %v6318, %v6327
      %v6388 = vmul.f32 %v6319, %v6327
      %v6389 = vmul.f32 %v6320, %v6327
      %v6390 = vmul.f32 %v6321, %v6327
      %v6391 = vmul.f32 %v6322, %v6327
      %v6392 = vadd.f32 %v6195, %v6328
      %v6393 = vadd.f32 %v6196, %v6329
      %v6394 = vadd.f32 %v6197, %v6330
      %v6395 = vadd.f32 %v6198, %v6331
      %v6396 = vadd.f32 %v6199, %v6332
      %v6397 = vadd.f32 %v6200, %v6333
      %v6398 = vadd.f32 %v6201, %v6334
      %v6399 = vadd.f32 %v6202, %v6335
      %v6400 = vadd.f32 %v6203, %v6336
      %v6401 = vadd.f32 %v6204, %v6337
      %v6402 = vadd.f32 %v6205, %v6338
      %v6403 = vadd.f32 %v6206, %v6339
      %v6404 = vadd.f32 %v6207, %v6340
      %v6405 = vadd.f32 %v6208, %v6341
      %v6406 = vadd.f32 %v6209, %v6342
      %v6407 = vadd.f32 %v6210, %v6343
      %v6408 = vadd.f32 %v6211, %v6344
      %v6409 = vadd.f32 %v6212, %v6345
      %v6410 = vadd.f32 %v6213, %v6346
      %v6411 = vadd.f32 %v6214, %v6347
      %v6412 = vadd.f32 %v6215, %v6348
      %v6413 = vadd.f32 %v6216, %v6349
      %v6414 = vadd.f32 %v6217, %v6350
      %v6415 = vadd.f32 %v6218, %v6351
      %v6416 = vadd.f32 %v6219, %v6352
      %v6417 = vadd.f32 %v6220, %v6353
      %v6418 = vadd.f32 %v6221, %v6354
      %v6419 = vadd.f32 %v6222, %v6355
      %v6420 = vadd.f32 %v6223, %v6356
      %v6421 = vadd.f32 %v6224, %v6357
      %v6422 = vadd.f32 %v6225, %v6358
      %v6423 = vadd.f32 %v6226, %v6359
      %v6424 = vadd.f32 %v6227, %v6360
      %v6425 = vadd.f32 %v6228, %v6361
      %v6426 = vadd.f32 %v6229, %v6362
      %v6427 = vadd.f32 %v6230, %v6363
      %v6428 = vadd.f32 %v6231, %v6364
      %v6429 = vadd.f32 %v6232, %v6365
      %v6430 = vadd.f32 %v6233, %v6366
      %v6431 = vadd.f32 %v6234, %v6367
      %v6432 = vadd.f32 %v6235, %v6368
      %v6433 = vadd.f32 %v6236, %v6369
      %v6434 = vadd.f32 %v6237, %v6370
      %v6435 = vadd.f32 %v6238, %v6371
      %v6436 = vadd.f32 %v6239, %v6372
      %v6437 = vadd.f32 %v6240, %v6373
      %v6438 = vadd.f32 %v6241, %v6374
      %v6439 = vadd.f32 %v6242, %v6375
      %v6440 = vadd.f32 %v6243, %v6376
      %v6441 = vadd.f32 %v6244, %v6377
      %v6442 = vadd.f32 %v6245, %v6378
      %v6443 = vadd.f32 %v6246, %v6379
      %v6444 = vadd.f32 %v6247, %v6380
      %v6445 = vadd.f32 %v6248, %v6381
      %v6446 = vadd.f32 %v6249, %v6382
      %v6447 = vadd.f32 %v6250, %v6383
      %v6448 = vadd.f32 %v6251, %v6384
      %v6449 = vadd.f32 %v6252, %v6385
      %v6450 = vadd.f32 %v6253, %v6386
      %v6451 = vadd.f32 %v6254, %v6387
      %v6452 = vadd.f32 %v6255, %v6388
      %v6453 = vadd.f32 %v6256, %v6389
      %v6454 = vadd.f32 %v6257, %v6390
      %v6455 = vadd.f32 %v6258, %v6391
      %v6456 = vld [vmem:[%s6061 + $0x2] sm:$0xff]
      %v6457 = vld [vmem:[%s6061 + $0x12] sm:$0xff]
      %v6458 = vld [vmem:[%s6061 + $0x22] sm:$0xff]
      %v6459 = vld [vmem:[%s6061 + $0x32] sm:$0xff]
      %v6460 = vld [vmem:[%s6061 + $0x42] sm:$0xff]
      %v6461 = vld [vmem:[%s6061 + $0x52] sm:$0xff]
      %v6462 = vld [vmem:[%s6061 + $0x62] sm:$0xff]
      %v6463 = vld [vmem:[%s6061 + $0x72] sm:$0xff]
      %v6464 = vld [vmem:[%s6061 + $0xa2] sm:$0xff]
      %v6465 = vld [vmem:[%s6061 + $0xb2] sm:$0xff]
      %v6466 = vld [vmem:[%s6061 + $0xc2] sm:$0xff]
      %v6467 = vld [vmem:[%s6061 + $0xd2] sm:$0xff]
      %v6468 = vld [vmem:[%s6061 + $0xe2] sm:$0xff]
      %v6469 = vld [vmem:[%s6061 + $0xf2] sm:$0xff]
      %v6470 = vld [vmem:[%s6061 + $0x102] sm:$0xff]
      %v6471 = vld [vmem:[%s6061 + $0x112] sm:$0xff]
      %v6472 = vld [vmem:[%s6061 + $0x142] sm:$0xff]
      %v6473 = vld [vmem:[%s6061 + $0x152] sm:$0xff]
      %v6474 = vld [vmem:[%s6061 + $0x162] sm:$0xff]
      %v6475 = vld [vmem:[%s6061 + $0x172] sm:$0xff]
      %v6476 = vld [vmem:[%s6061 + $0x182] sm:$0xff]
      %v6477 = vld [vmem:[%s6061 + $0x192] sm:$0xff]
      %v6478 = vld [vmem:[%s6061 + $0x1a2] sm:$0xff]
      %v6479 = vld [vmem:[%s6061 + $0x1b2] sm:$0xff]
      %v6480 = vld [vmem:[%s6061 + $0x1e2] sm:$0xff]
      %v6481 = vld [vmem:[%s6061 + $0x1f2] sm:$0xff]
      %v6482 = vld [vmem:[%s6061 + $0x202] sm:$0xff]
      %v6483 = vld [vmem:[%s6061 + $0x212] sm:$0xff]
      %v6484 = vld [vmem:[%s6061 + $0x222] sm:$0xff]
      %v6485 = vld [vmem:[%s6061 + $0x232] sm:$0xff]
      %v6486 = vld [vmem:[%s6061 + $0x242] sm:$0xff]
      %v6487 = vld [vmem:[%s6061 + $0x252] sm:$0xff]
      %v6488 = vld [vmem:[%s6061 + $0x282] sm:$0xff]
      %v6489 = vld [vmem:[%s6061 + $0x292] sm:$0xff]
      %v6490 = vld [vmem:[%s6061 + $0x2a2] sm:$0xff]
      %v6491 = vld [vmem:[%s6061 + $0x2b2] sm:$0xff]
      %v6492 = vld [vmem:[%s6061 + $0x2c2] sm:$0xff]
      %v6493 = vld [vmem:[%s6061 + $0x2d2] sm:$0xff]
      %v6494 = vld [vmem:[%s6061 + $0x2e2] sm:$0xff]
      %v6495 = vld [vmem:[%s6061 + $0x2f2] sm:$0xff]
      %v6496 = vld [vmem:[%s6061 + $0x322] sm:$0xff]
      %v6497 = vld [vmem:[%s6061 + $0x332] sm:$0xff]
      %v6498 = vld [vmem:[%s6061 + $0x342] sm:$0xff]
      %v6499 = vld [vmem:[%s6061 + $0x352] sm:$0xff]
      %v6500 = vld [vmem:[%s6061 + $0x362] sm:$0xff]
      %v6501 = vld [vmem:[%s6061 + $0x372] sm:$0xff]
      %v6502 = vld [vmem:[%s6061 + $0x382] sm:$0xff]
      %v6503 = vld [vmem:[%s6061 + $0x392] sm:$0xff]
      %v6504 = vld [vmem:[%s6061 + $0x3c2] sm:$0xff]
      %v6505 = vld [vmem:[%s6061 + $0x3d2] sm:$0xff]
      %v6506 = vld [vmem:[%s6061 + $0x3e2] sm:$0xff]
      %v6507 = vld [vmem:[%s6061 + $0x3f2] sm:$0xff]
      %v6508 = vld [vmem:[%s6061 + $0x402] sm:$0xff]
      %v6509 = vld [vmem:[%s6061 + $0x412] sm:$0xff]
      %v6510 = vld [vmem:[%s6061 + $0x422] sm:$0xff]
      %v6511 = vld [vmem:[%s6061 + $0x432] sm:$0xff]
      %v6512 = vld [vmem:[%s6061 + $0x462] sm:$0xff]
      %v6513 = vld [vmem:[%s6061 + $0x472] sm:$0xff]
      %v6514 = vld [vmem:[%s6061 + $0x482] sm:$0xff]
      %v6515 = vld [vmem:[%s6061 + $0x492] sm:$0xff]
      %v6516 = vld [vmem:[%s6061 + $0x4a2] sm:$0xff]
      %v6517 = vld [vmem:[%s6061 + $0x4b2] sm:$0xff]
      %v6518 = vld [vmem:[%s6061 + $0x4c2] sm:$0xff]
      %v6519 = vld [vmem:[%s6061 + $0x4d2] sm:$0xff]
      %v6520 = vld [vmem:[%s5 + $0x17] sm:$0x1]
      %v6521 = vlaneseq
      %v6522 = vshrl.u32 %v6521, 7
      %v6523 = vsub.s32 0, %v6522
      %v6524 = vrot.slane %v6520, %v6523
      %v6525 = vmul.f32 %v6456, %v6524
      %v6526 = vmul.f32 %v6457, %v6524
      %v6527 = vmul.f32 %v6458, %v6524
      %v6528 = vmul.f32 %v6459, %v6524
      %v6529 = vmul.f32 %v6460, %v6524
      %v6530 = vmul.f32 %v6461, %v6524
      %v6531 = vmul.f32 %v6462, %v6524
      %v6532 = vmul.f32 %v6463, %v6524
      %v6533 = vmul.f32 %v6464, %v6524
      %v6534 = vmul.f32 %v6465, %v6524
      %v6535 = vmul.f32 %v6466, %v6524
      %v6536 = vmul.f32 %v6467, %v6524
      %v6537 = vmul.f32 %v6468, %v6524
      %v6538 = vmul.f32 %v6469, %v6524
      %v6539 = vmul.f32 %v6470, %v6524
      %v6540 = vmul.f32 %v6471, %v6524
      %v6541 = vmul.f32 %v6472, %v6524
      %v6542 = vmul.f32 %v6473, %v6524
      %v6543 = vmul.f32 %v6474, %v6524
      %v6544 = vmul.f32 %v6475, %v6524
      %v6545 = vmul.f32 %v6476, %v6524
      %v6546 = vmul.f32 %v6477, %v6524
      %v6547 = vmul.f32 %v6478, %v6524
      %v6548 = vmul.f32 %v6479, %v6524
      %v6549 = vmul.f32 %v6480, %v6524
      %v6550 = vmul.f32 %v6481, %v6524
      %v6551 = vmul.f32 %v6482, %v6524
      %v6552 = vmul.f32 %v6483, %v6524
      %v6553 = vmul.f32 %v6484, %v6524
      %v6554 = vmul.f32 %v6485, %v6524
      %v6555 = vmul.f32 %v6486, %v6524
      %v6556 = vmul.f32 %v6487, %v6524
      %v6557 = vmul.f32 %v6488, %v6524
      %v6558 = vmul.f32 %v6489, %v6524
      %v6559 = vmul.f32 %v6490, %v6524
      %v6560 = vmul.f32 %v6491, %v6524
      %v6561 = vmul.f32 %v6492, %v6524
      %v6562 = vmul.f32 %v6493, %v6524
      %v6563 = vmul.f32 %v6494, %v6524
      %v6564 = vmul.f32 %v6495, %v6524
      %v6565 = vmul.f32 %v6496, %v6524
      %v6566 = vmul.f32 %v6497, %v6524
      %v6567 = vmul.f32 %v6498, %v6524
      %v6568 = vmul.f32 %v6499, %v6524
      %v6569 = vmul.f32 %v6500, %v6524
      %v6570 = vmul.f32 %v6501, %v6524
      %v6571 = vmul.f32 %v6502, %v6524
      %v6572 = vmul.f32 %v6503, %v6524
      %v6573 = vmul.f32 %v6504, %v6524
      %v6574 = vmul.f32 %v6505, %v6524
      %v6575 = vmul.f32 %v6506, %v6524
      %v6576 = vmul.f32 %v6507, %v6524
      %v6577 = vmul.f32 %v6508, %v6524
      %v6578 = vmul.f32 %v6509, %v6524
      %v6579 = vmul.f32 %v6510, %v6524
      %v6580 = vmul.f32 %v6511, %v6524
      %v6581 = vmul.f32 %v6512, %v6524
      %v6582 = vmul.f32 %v6513, %v6524
      %v6583 = vmul.f32 %v6514, %v6524
      %v6584 = vmul.f32 %v6515, %v6524
      %v6585 = vmul.f32 %v6516, %v6524
      %v6586 = vmul.f32 %v6517, %v6524
      %v6587 = vmul.f32 %v6518, %v6524
      %v6588 = vmul.f32 %v6519, %v6524
      %v6589 = vadd.f32 %v6392, %v6525
      %v6590 = vadd.f32 %v6393, %v6526
      %v6591 = vadd.f32 %v6394, %v6527
      %v6592 = vadd.f32 %v6395, %v6528
      %v6593 = vadd.f32 %v6396, %v6529
      %v6594 = vadd.f32 %v6397, %v6530
      %v6595 = vadd.f32 %v6398, %v6531
      %v6596 = vadd.f32 %v6399, %v6532
      %v6597 = vadd.f32 %v6400, %v6533
      %v6598 = vadd.f32 %v6401, %v6534
      %v6599 = vadd.f32 %v6402, %v6535
      %v6600 = vadd.f32 %v6403, %v6536
      %v6601 = vadd.f32 %v6404, %v6537
      %v6602 = vadd.f32 %v6405, %v6538
      %v6603 = vadd.f32 %v6406, %v6539
      %v6604 = vadd.f32 %v6407, %v6540
      %v6605 = vadd.f32 %v6408, %v6541
      %v6606 = vadd.f32 %v6409, %v6542
      %v6607 = vadd.f32 %v6410, %v6543
      %v6608 = vadd.f32 %v6411, %v6544
      %v6609 = vadd.f32 %v6412, %v6545
      %v6610 = vadd.f32 %v6413, %v6546
      %v6611 = vadd.f32 %v6414, %v6547
      %v6612 = vadd.f32 %v6415, %v6548
      %v6613 = vadd.f32 %v6416, %v6549
      %v6614 = vadd.f32 %v6417, %v6550
      %v6615 = vadd.f32 %v6418, %v6551
      %v6616 = vadd.f32 %v6419, %v6552
      %v6617 = vadd.f32 %v6420, %v6553
      %v6618 = vadd.f32 %v6421, %v6554
      %v6619 = vadd.f32 %v6422, %v6555
      %v6620 = vadd.f32 %v6423, %v6556
      %v6621 = vadd.f32 %v6424, %v6557
      %v6622 = vadd.f32 %v6425, %v6558
      %v6623 = vadd.f32 %v6426, %v6559
      %v6624 = vadd.f32 %v6427, %v6560
      %v6625 = vadd.f32 %v6428, %v6561
      %v6626 = vadd.f32 %v6429, %v6562
      %v6627 = vadd.f32 %v6430, %v6563
      %v6628 = vadd.f32 %v6431, %v6564
      %v6629 = vadd.f32 %v6432, %v6565
      %v6630 = vadd.f32 %v6433, %v6566
      %v6631 = vadd.f32 %v6434, %v6567
      %v6632 = vadd.f32 %v6435, %v6568
      %v6633 = vadd.f32 %v6436, %v6569
      %v6634 = vadd.f32 %v6437, %v6570
      %v6635 = vadd.f32 %v6438, %v6571
      %v6636 = vadd.f32 %v6439, %v6572
      %v6637 = vadd.f32 %v6440, %v6573
      %v6638 = vadd.f32 %v6441, %v6574
      %v6639 = vadd.f32 %v6442, %v6575
      %v6640 = vadd.f32 %v6443, %v6576
      %v6641 = vadd.f32 %v6444, %v6577
      %v6642 = vadd.f32 %v6445, %v6578
      %v6643 = vadd.f32 %v6446, %v6579
      %v6644 = vadd.f32 %v6447, %v6580
      %v6645 = vadd.f32 %v6448, %v6581
      %v6646 = vadd.f32 %v6449, %v6582
      %v6647 = vadd.f32 %v6450, %v6583
      %v6648 = vadd.f32 %v6451, %v6584
      %v6649 = vadd.f32 %v6452, %v6585
      %v6650 = vadd.f32 %v6453, %v6586
      %v6651 = vadd.f32 %v6454, %v6587
      %v6652 = vadd.f32 %v6455, %v6588
      %s6653 = scalar_lea.vmem [#allocation2], 352
      %v6654 = vld [vmem:[%s6653] sm:$0xff]
      %v6655 = vld [vmem:[%s6653 + $0x10] sm:$0xff]
      %v6656 = vld [vmem:[%s6653 + $0x20] sm:$0xff]
      %v6657 = vld [vmem:[%s6653 + $0x30] sm:$0xff]
      %v6658 = vld [vmem:[%s6653 + $0x40] sm:$0xff]
      %v6659 = vld [vmem:[%s6653 + $0x50] sm:$0xff]
      %v6660 = vld [vmem:[%s6653 + $0x60] sm:$0xff]
      %v6661 = vld [vmem:[%s6653 + $0x70] sm:$0xff]
      %v6662 = vld [vmem:[%s6653 + $0xa0] sm:$0xff]
      %v6663 = vld [vmem:[%s6653 + $0xb0] sm:$0xff]
      %v6664 = vld [vmem:[%s6653 + $0xc0] sm:$0xff]
      %v6665 = vld [vmem:[%s6653 + $0xd0] sm:$0xff]
      %v6666 = vld [vmem:[%s6653 + $0xe0] sm:$0xff]
      %v6667 = vld [vmem:[%s6653 + $0xf0] sm:$0xff]
      %v6668 = vld [vmem:[%s6653 + $0x100] sm:$0xff]
      %v6669 = vld [vmem:[%s6653 + $0x110] sm:$0xff]
      %v6670 = vld [vmem:[%s6653 + $0x140] sm:$0xff]
      %v6671 = vld [vmem:[%s6653 + $0x150] sm:$0xff]
      %v6672 = vld [vmem:[%s6653 + $0x160] sm:$0xff]
      %v6673 = vld [vmem:[%s6653 + $0x170] sm:$0xff]
      %v6674 = vld [vmem:[%s6653 + $0x180] sm:$0xff]
      %v6675 = vld [vmem:[%s6653 + $0x190] sm:$0xff]
      %v6676 = vld [vmem:[%s6653 + $0x1a0] sm:$0xff]
      %v6677 = vld [vmem:[%s6653 + $0x1b0] sm:$0xff]
      %v6678 = vld [vmem:[%s6653 + $0x1e0] sm:$0xff]
      %v6679 = vld [vmem:[%s6653 + $0x1f0] sm:$0xff]
      %v6680 = vld [vmem:[%s6653 + $0x200] sm:$0xff]
      %v6681 = vld [vmem:[%s6653 + $0x210] sm:$0xff]
      %v6682 = vld [vmem:[%s6653 + $0x220] sm:$0xff]
      %v6683 = vld [vmem:[%s6653 + $0x230] sm:$0xff]
      %v6684 = vld [vmem:[%s6653 + $0x240] sm:$0xff]
      %v6685 = vld [vmem:[%s6653 + $0x250] sm:$0xff]
      %v6686 = vld [vmem:[%s6653 + $0x280] sm:$0xff]
      %v6687 = vld [vmem:[%s6653 + $0x290] sm:$0xff]
      %v6688 = vld [vmem:[%s6653 + $0x2a0] sm:$0xff]
      %v6689 = vld [vmem:[%s6653 + $0x2b0] sm:$0xff]
      %v6690 = vld [vmem:[%s6653 + $0x2c0] sm:$0xff]
      %v6691 = vld [vmem:[%s6653 + $0x2d0] sm:$0xff]
      %v6692 = vld [vmem:[%s6653 + $0x2e0] sm:$0xff]
      %v6693 = vld [vmem:[%s6653 + $0x2f0] sm:$0xff]
      %v6694 = vld [vmem:[%s6653 + $0x320] sm:$0xff]
      %v6695 = vld [vmem:[%s6653 + $0x330] sm:$0xff]
      %v6696 = vld [vmem:[%s6653 + $0x340] sm:$0xff]
      %v6697 = vld [vmem:[%s6653 + $0x350] sm:$0xff]
      %v6698 = vld [vmem:[%s6653 + $0x360] sm:$0xff]
      %v6699 = vld [vmem:[%s6653 + $0x370] sm:$0xff]
      %v6700 = vld [vmem:[%s6653 + $0x380] sm:$0xff]
      %v6701 = vld [vmem:[%s6653 + $0x390] sm:$0xff]
      %v6702 = vld [vmem:[%s6653 + $0x3c0] sm:$0xff]
      %v6703 = vld [vmem:[%s6653 + $0x3d0] sm:$0xff]
      %v6704 = vld [vmem:[%s6653 + $0x3e0] sm:$0xff]
      %v6705 = vld [vmem:[%s6653 + $0x3f0] sm:$0xff]
      %v6706 = vld [vmem:[%s6653 + $0x400] sm:$0xff]
      %v6707 = vld [vmem:[%s6653 + $0x410] sm:$0xff]
      %v6708 = vld [vmem:[%s6653 + $0x420] sm:$0xff]
      %v6709 = vld [vmem:[%s6653 + $0x430] sm:$0xff]
      %v6710 = vld [vmem:[%s6653 + $0x460] sm:$0xff]
      %v6711 = vld [vmem:[%s6653 + $0x470] sm:$0xff]
      %v6712 = vld [vmem:[%s6653 + $0x480] sm:$0xff]
      %v6713 = vld [vmem:[%s6653 + $0x490] sm:$0xff]
      %v6714 = vld [vmem:[%s6653 + $0x4a0] sm:$0xff]
      %v6715 = vld [vmem:[%s6653 + $0x4b0] sm:$0xff]
      %v6716 = vld [vmem:[%s6653 + $0x4c0] sm:$0xff]
      %v6717 = vld [vmem:[%s6653 + $0x4d0] sm:$0xff]
      %v6718 = vld [vmem:[%s5 + $0x18] sm:$0x1]
      %v6719 = vlaneseq
      %v6720 = vshrl.u32 %v6719, 7
      %v6721 = vsub.s32 0, %v6720
      %v6722 = vrot.slane %v6718, %v6721
      %v6723 = vmul.f32 %v6654, %v6722
      %v6724 = vmul.f32 %v6655, %v6722
      %v6725 = vmul.f32 %v6656, %v6722
      %v6726 = vmul.f32 %v6657, %v6722
      %v6727 = vmul.f32 %v6658, %v6722
      %v6728 = vmul.f32 %v6659, %v6722
      %v6729 = vmul.f32 %v6660, %v6722
      %v6730 = vmul.f32 %v6661, %v6722
      %v6731 = vmul.f32 %v6662, %v6722
      %v6732 = vmul.f32 %v6663, %v6722
      %v6733 = vmul.f32 %v6664, %v6722
      %v6734 = vmul.f32 %v6665, %v6722
      %v6735 = vmul.f32 %v6666, %v6722
      %v6736 = vmul.f32 %v6667, %v6722
      %v6737 = vmul.f32 %v6668, %v6722
      %v6738 = vmul.f32 %v6669, %v6722
      %v6739 = vmul.f32 %v6670, %v6722
      %v6740 = vmul.f32 %v6671, %v6722
      %v6741 = vmul.f32 %v6672, %v6722
      %v6742 = vmul.f32 %v6673, %v6722
      %v6743 = vmul.f32 %v6674, %v6722
      %v6744 = vmul.f32 %v6675, %v6722
      %v6745 = vmul.f32 %v6676, %v6722
      %v6746 = vmul.f32 %v6677, %v6722
      %v6747 = vmul.f32 %v6678, %v6722
      %v6748 = vmul.f32 %v6679, %v6722
      %v6749 = vmul.f32 %v6680, %v6722
      %v6750 = vmul.f32 %v6681, %v6722
      %v6751 = vmul.f32 %v6682, %v6722
      %v6752 = vmul.f32 %v6683, %v6722
      %v6753 = vmul.f32 %v6684, %v6722
      %v6754 = vmul.f32 %v6685, %v6722
      %v6755 = vmul.f32 %v6686, %v6722
      %v6756 = vmul.f32 %v6687, %v6722
      %v6757 = vmul.f32 %v6688, %v6722
      %v6758 = vmul.f32 %v6689, %v6722
      %v6759 = vmul.f32 %v6690, %v6722
      %v6760 = vmul.f32 %v6691, %v6722
      %v6761 = vmul.f32 %v6692, %v6722
      %v6762 = vmul.f32 %v6693, %v6722
      %v6763 = vmul.f32 %v6694, %v6722
      %v6764 = vmul.f32 %v6695, %v6722
      %v6765 = vmul.f32 %v6696, %v6722
      %v6766 = vmul.f32 %v6697, %v6722
      %v6767 = vmul.f32 %v6698, %v6722
      %v6768 = vmul.f32 %v6699, %v6722
      %v6769 = vmul.f32 %v6700, %v6722
      %v6770 = vmul.f32 %v6701, %v6722
      %v6771 = vmul.f32 %v6702, %v6722
      %v6772 = vmul.f32 %v6703, %v6722
      %v6773 = vmul.f32 %v6704, %v6722
      %v6774 = vmul.f32 %v6705, %v6722
      %v6775 = vmul.f32 %v6706, %v6722
      %v6776 = vmul.f32 %v6707, %v6722
      %v6777 = vmul.f32 %v6708, %v6722
      %v6778 = vmul.f32 %v6709, %v6722
      %v6779 = vmul.f32 %v6710, %v6722
      %v6780 = vmul.f32 %v6711, %v6722
      %v6781 = vmul.f32 %v6712, %v6722
      %v6782 = vmul.f32 %v6713, %v6722
      %v6783 = vmul.f32 %v6714, %v6722
      %v6784 = vmul.f32 %v6715, %v6722
      %v6785 = vmul.f32 %v6716, %v6722
      %v6786 = vmul.f32 %v6717, %v6722
      %v6787 = vadd.f32 %v6589, %v6723
      %v6788 = vadd.f32 %v6590, %v6724
      %v6789 = vadd.f32 %v6591, %v6725
      %v6790 = vadd.f32 %v6592, %v6726
      %v6791 = vadd.f32 %v6593, %v6727
      %v6792 = vadd.f32 %v6594, %v6728
      %v6793 = vadd.f32 %v6595, %v6729
      %v6794 = vadd.f32 %v6596, %v6730
      %v6795 = vadd.f32 %v6597, %v6731
      %v6796 = vadd.f32 %v6598, %v6732
      %v6797 = vadd.f32 %v6599, %v6733
      %v6798 = vadd.f32 %v6600, %v6734
      %v6799 = vadd.f32 %v6601, %v6735
      %v6800 = vadd.f32 %v6602, %v6736
      %v6801 = vadd.f32 %v6603, %v6737
      %v6802 = vadd.f32 %v6604, %v6738
      %v6803 = vadd.f32 %v6605, %v6739
      %v6804 = vadd.f32 %v6606, %v6740
      %v6805 = vadd.f32 %v6607, %v6741
      %v6806 = vadd.f32 %v6608, %v6742
      %v6807 = vadd.f32 %v6609, %v6743
      %v6808 = vadd.f32 %v6610, %v6744
      %v6809 = vadd.f32 %v6611, %v6745
      %v6810 = vadd.f32 %v6612, %v6746
      %v6811 = vadd.f32 %v6613, %v6747
      %v6812 = vadd.f32 %v6614, %v6748
      %v6813 = vadd.f32 %v6615, %v6749
      %v6814 = vadd.f32 %v6616, %v6750
      %v6815 = vadd.f32 %v6617, %v6751
      %v6816 = vadd.f32 %v6618, %v6752
      %v6817 = vadd.f32 %v6619, %v6753
      %v6818 = vadd.f32 %v6620, %v6754
      %v6819 = vadd.f32 %v6621, %v6755
      %v6820 = vadd.f32 %v6622, %v6756
      %v6821 = vadd.f32 %v6623, %v6757
      %v6822 = vadd.f32 %v6624, %v6758
      %v6823 = vadd.f32 %v6625, %v6759
      %v6824 = vadd.f32 %v6626, %v6760
      %v6825 = vadd.f32 %v6627, %v6761
      %v6826 = vadd.f32 %v6628, %v6762
      %v6827 = vadd.f32 %v6629, %v6763
      %v6828 = vadd.f32 %v6630, %v6764
      %v6829 = vadd.f32 %v6631, %v6765
      %v6830 = vadd.f32 %v6632, %v6766
      %v6831 = vadd.f32 %v6633, %v6767
      %v6832 = vadd.f32 %v6634, %v6768
      %v6833 = vadd.f32 %v6635, %v6769
      %v6834 = vadd.f32 %v6636, %v6770
      %v6835 = vadd.f32 %v6637, %v6771
      %v6836 = vadd.f32 %v6638, %v6772
      %v6837 = vadd.f32 %v6639, %v6773
      %v6838 = vadd.f32 %v6640, %v6774
      %v6839 = vadd.f32 %v6641, %v6775
      %v6840 = vadd.f32 %v6642, %v6776
      %v6841 = vadd.f32 %v6643, %v6777
      %v6842 = vadd.f32 %v6644, %v6778
      %v6843 = vadd.f32 %v6645, %v6779
      %v6844 = vadd.f32 %v6646, %v6780
      %v6845 = vadd.f32 %v6647, %v6781
      %v6846 = vadd.f32 %v6648, %v6782
      %v6847 = vadd.f32 %v6649, %v6783
      %v6848 = vadd.f32 %v6650, %v6784
      %v6849 = vadd.f32 %v6651, %v6785
      %v6850 = vadd.f32 %v6652, %v6786
      %v6851 = vld [vmem:[%s6653 + $0x1] sm:$0xff]
      %v6852 = vld [vmem:[%s6653 + $0x11] sm:$0xff]
      %v6853 = vld [vmem:[%s6653 + $0x21] sm:$0xff]
      %v6854 = vld [vmem:[%s6653 + $0x31] sm:$0xff]
      %v6855 = vld [vmem:[%s6653 + $0x41] sm:$0xff]
      %v6856 = vld [vmem:[%s6653 + $0x51] sm:$0xff]
      %v6857 = vld [vmem:[%s6653 + $0x61] sm:$0xff]
      %v6858 = vld [vmem:[%s6653 + $0x71] sm:$0xff]
      %v6859 = vld [vmem:[%s6653 + $0xa1] sm:$0xff]
      %v6860 = vld [vmem:[%s6653 + $0xb1] sm:$0xff]
      %v6861 = vld [vmem:[%s6653 + $0xc1] sm:$0xff]
      %v6862 = vld [vmem:[%s6653 + $0xd1] sm:$0xff]
      %v6863 = vld [vmem:[%s6653 + $0xe1] sm:$0xff]
      %v6864 = vld [vmem:[%s6653 + $0xf1] sm:$0xff]
      %v6865 = vld [vmem:[%s6653 + $0x101] sm:$0xff]
      %v6866 = vld [vmem:[%s6653 + $0x111] sm:$0xff]
      %v6867 = vld [vmem:[%s6653 + $0x141] sm:$0xff]
      %v6868 = vld [vmem:[%s6653 + $0x151] sm:$0xff]
      %v6869 = vld [vmem:[%s6653 + $0x161] sm:$0xff]
      %v6870 = vld [vmem:[%s6653 + $0x171] sm:$0xff]
      %v6871 = vld [vmem:[%s6653 + $0x181] sm:$0xff]
      %v6872 = vld [vmem:[%s6653 + $0x191] sm:$0xff]
      %v6873 = vld [vmem:[%s6653 + $0x1a1] sm:$0xff]
      %v6874 = vld [vmem:[%s6653 + $0x1b1] sm:$0xff]
      %v6875 = vld [vmem:[%s6653 + $0x1e1] sm:$0xff]
      %v6876 = vld [vmem:[%s6653 + $0x1f1] sm:$0xff]
      %v6877 = vld [vmem:[%s6653 + $0x201] sm:$0xff]
      %v6878 = vld [vmem:[%s6653 + $0x211] sm:$0xff]
      %v6879 = vld [vmem:[%s6653 + $0x221] sm:$0xff]
      %v6880 = vld [vmem:[%s6653 + $0x231] sm:$0xff]
      %v6881 = vld [vmem:[%s6653 + $0x241] sm:$0xff]
      %v6882 = vld [vmem:[%s6653 + $0x251] sm:$0xff]
      %v6883 = vld [vmem:[%s6653 + $0x281] sm:$0xff]
      %v6884 = vld [vmem:[%s6653 + $0x291] sm:$0xff]
      %v6885 = vld [vmem:[%s6653 + $0x2a1] sm:$0xff]
      %v6886 = vld [vmem:[%s6653 + $0x2b1] sm:$0xff]
      %v6887 = vld [vmem:[%s6653 + $0x2c1] sm:$0xff]
      %v6888 = vld [vmem:[%s6653 + $0x2d1] sm:$0xff]
      %v6889 = vld [vmem:[%s6653 + $0x2e1] sm:$0xff]
      %v6890 = vld [vmem:[%s6653 + $0x2f1] sm:$0xff]
      %v6891 = vld [vmem:[%s6653 + $0x321] sm:$0xff]
      %v6892 = vld [vmem:[%s6653 + $0x331] sm:$0xff]
      %v6893 = vld [vmem:[%s6653 + $0x341] sm:$0xff]
      %v6894 = vld [vmem:[%s6653 + $0x351] sm:$0xff]
      %v6895 = vld [vmem:[%s6653 + $0x361] sm:$0xff]
      %v6896 = vld [vmem:[%s6653 + $0x371] sm:$0xff]
      %v6897 = vld [vmem:[%s6653 + $0x381] sm:$0xff]
      %v6898 = vld [vmem:[%s6653 + $0x391] sm:$0xff]
      %v6899 = vld [vmem:[%s6653 + $0x3c1] sm:$0xff]
      %v6900 = vld [vmem:[%s6653 + $0x3d1] sm:$0xff]
      %v6901 = vld [vmem:[%s6653 + $0x3e1] sm:$0xff]
      %v6902 = vld [vmem:[%s6653 + $0x3f1] sm:$0xff]
      %v6903 = vld [vmem:[%s6653 + $0x401] sm:$0xff]
      %v6904 = vld [vmem:[%s6653 + $0x411] sm:$0xff]
      %v6905 = vld [vmem:[%s6653 + $0x421] sm:$0xff]
      %v6906 = vld [vmem:[%s6653 + $0x431] sm:$0xff]
      %v6907 = vld [vmem:[%s6653 + $0x461] sm:$0xff]
      %v6908 = vld [vmem:[%s6653 + $0x471] sm:$0xff]
      %v6909 = vld [vmem:[%s6653 + $0x481] sm:$0xff]
      %v6910 = vld [vmem:[%s6653 + $0x491] sm:$0xff]
      %v6911 = vld [vmem:[%s6653 + $0x4a1] sm:$0xff]
      %v6912 = vld [vmem:[%s6653 + $0x4b1] sm:$0xff]
      %v6913 = vld [vmem:[%s6653 + $0x4c1] sm:$0xff]
      %v6914 = vld [vmem:[%s6653 + $0x4d1] sm:$0xff]
      %v6915 = vld [vmem:[%s5 + $0x19] sm:$0x1]
      %v6916 = vlaneseq
      %v6917 = vshrl.u32 %v6916, 7
      %v6918 = vsub.s32 0, %v6917
      %v6919 = vrot.slane %v6915, %v6918
      %v6920 = vmul.f32 %v6851, %v6919
      %v6921 = vmul.f32 %v6852, %v6919
      %v6922 = vmul.f32 %v6853, %v6919
      %v6923 = vmul.f32 %v6854, %v6919
      %v6924 = vmul.f32 %v6855, %v6919
      %v6925 = vmul.f32 %v6856, %v6919
      %v6926 = vmul.f32 %v6857, %v6919
      %v6927 = vmul.f32 %v6858, %v6919
      %v6928 = vmul.f32 %v6859, %v6919
      %v6929 = vmul.f32 %v6860, %v6919
      %v6930 = vmul.f32 %v6861, %v6919
      %v6931 = vmul.f32 %v6862, %v6919
      %v6932 = vmul.f32 %v6863, %v6919
      %v6933 = vmul.f32 %v6864, %v6919
      %v6934 = vmul.f32 %v6865, %v6919
      %v6935 = vmul.f32 %v6866, %v6919
      %v6936 = vmul.f32 %v6867, %v6919
      %v6937 = vmul.f32 %v6868, %v6919
      %v6938 = vmul.f32 %v6869, %v6919
      %v6939 = vmul.f32 %v6870, %v6919
      %v6940 = vmul.f32 %v6871, %v6919
      %v6941 = vmul.f32 %v6872, %v6919
      %v6942 = vmul.f32 %v6873, %v6919
      %v6943 = vmul.f32 %v6874, %v6919
      %v6944 = vmul.f32 %v6875, %v6919
      %v6945 = vmul.f32 %v6876, %v6919
      %v6946 = vmul.f32 %v6877, %v6919
      %v6947 = vmul.f32 %v6878, %v6919
      %v6948 = vmul.f32 %v6879, %v6919
      %v6949 = vmul.f32 %v6880, %v6919
      %v6950 = vmul.f32 %v6881, %v6919
      %v6951 = vmul.f32 %v6882, %v6919
      %v6952 = vmul.f32 %v6883, %v6919
      %v6953 = vmul.f32 %v6884, %v6919
      %v6954 = vmul.f32 %v6885, %v6919
      %v6955 = vmul.f32 %v6886, %v6919
      %v6956 = vmul.f32 %v6887, %v6919
      %v6957 = vmul.f32 %v6888, %v6919
      %v6958 = vmul.f32 %v6889, %v6919
      %v6959 = vmul.f32 %v6890, %v6919
      %v6960 = vmul.f32 %v6891, %v6919
      %v6961 = vmul.f32 %v6892, %v6919
      %v6962 = vmul.f32 %v6893, %v6919
      %v6963 = vmul.f32 %v6894, %v6919
      %v6964 = vmul.f32 %v6895, %v6919
      %v6965 = vmul.f32 %v6896, %v6919
      %v6966 = vmul.f32 %v6897, %v6919
      %v6967 = vmul.f32 %v6898, %v6919
      %v6968 = vmul.f32 %v6899, %v6919
      %v6969 = vmul.f32 %v6900, %v6919
      %v6970 = vmul.f32 %v6901, %v6919
      %v6971 = vmul.f32 %v6902, %v6919
      %v6972 = vmul.f32 %v6903, %v6919
      %v6973 = vmul.f32 %v6904, %v6919
      %v6974 = vmul.f32 %v6905, %v6919
      %v6975 = vmul.f32 %v6906, %v6919
      %v6976 = vmul.f32 %v6907, %v6919
      %v6977 = vmul.f32 %v6908, %v6919
      %v6978 = vmul.f32 %v6909, %v6919
      %v6979 = vmul.f32 %v6910, %v6919
      %v6980 = vmul.f32 %v6911, %v6919
      %v6981 = vmul.f32 %v6912, %v6919
      %v6982 = vmul.f32 %v6913, %v6919
      %v6983 = vmul.f32 %v6914, %v6919
      %v6984 = vadd.f32 %v6787, %v6920
      %v6985 = vadd.f32 %v6788, %v6921
      %v6986 = vadd.f32 %v6789, %v6922
      %v6987 = vadd.f32 %v6790, %v6923
      %v6988 = vadd.f32 %v6791, %v6924
      %v6989 = vadd.f32 %v6792, %v6925
      %v6990 = vadd.f32 %v6793, %v6926
      %v6991 = vadd.f32 %v6794, %v6927
      %v6992 = vadd.f32 %v6795, %v6928
      %v6993 = vadd.f32 %v6796, %v6929
      %v6994 = vadd.f32 %v6797, %v6930
      %v6995 = vadd.f32 %v6798, %v6931
      %v6996 = vadd.f32 %v6799, %v6932
      %v6997 = vadd.f32 %v6800, %v6933
      %v6998 = vadd.f32 %v6801, %v6934
      %v6999 = vadd.f32 %v6802, %v6935
      %v7000 = vadd.f32 %v6803, %v6936
      %v7001 = vadd.f32 %v6804, %v6937
      %v7002 = vadd.f32 %v6805, %v6938
      %v7003 = vadd.f32 %v6806, %v6939
      %v7004 = vadd.f32 %v6807, %v6940
      %v7005 = vadd.f32 %v6808, %v6941
      %v7006 = vadd.f32 %v6809, %v6942
      %v7007 = vadd.f32 %v6810, %v6943
      %v7008 = vadd.f32 %v6811, %v6944
      %v7009 = vadd.f32 %v6812, %v6945
      %v7010 = vadd.f32 %v6813, %v6946
      %v7011 = vadd.f32 %v6814, %v6947
      %v7012 = vadd.f32 %v6815, %v6948
      %v7013 = vadd.f32 %v6816, %v6949
      %v7014 = vadd.f32 %v6817, %v6950
      %v7015 = vadd.f32 %v6818, %v6951
      %v7016 = vadd.f32 %v6819, %v6952
      %v7017 = vadd.f32 %v6820, %v6953
      %v7018 = vadd.f32 %v6821, %v6954
      %v7019 = vadd.f32 %v6822, %v6955
      %v7020 = vadd.f32 %v6823, %v6956
      %v7021 = vadd.f32 %v6824, %v6957
      %v7022 = vadd.f32 %v6825, %v6958
      %v7023 = vadd.f32 %v6826, %v6959
      %v7024 = vadd.f32 %v6827, %v6960
      %v7025 = vadd.f32 %v6828, %v6961
      %v7026 = vadd.f32 %v6829, %v6962
      %v7027 = vadd.f32 %v6830, %v6963
      %v7028 = vadd.f32 %v6831, %v6964
      %v7029 = vadd.f32 %v6832, %v6965
      %v7030 = vadd.f32 %v6833, %v6966
      %v7031 = vadd.f32 %v6834, %v6967
      %v7032 = vadd.f32 %v6835, %v6968
      %v7033 = vadd.f32 %v6836, %v6969
      %v7034 = vadd.f32 %v6837, %v6970
      %v7035 = vadd.f32 %v6838, %v6971
      %v7036 = vadd.f32 %v6839, %v6972
      %v7037 = vadd.f32 %v6840, %v6973
      %v7038 = vadd.f32 %v6841, %v6974
      %v7039 = vadd.f32 %v6842, %v6975
      %v7040 = vadd.f32 %v6843, %v6976
      %v7041 = vadd.f32 %v6844, %v6977
      %v7042 = vadd.f32 %v6845, %v6978
      %v7043 = vadd.f32 %v6846, %v6979
      %v7044 = vadd.f32 %v6847, %v6980
      %v7045 = vadd.f32 %v6848, %v6981
      %v7046 = vadd.f32 %v6849, %v6982
      %v7047 = vadd.f32 %v6850, %v6983
      %v7048 = vld [vmem:[%s6653 + $0x2] sm:$0xff]
      %v7049 = vld [vmem:[%s6653 + $0x12] sm:$0xff]
      %v7050 = vld [vmem:[%s6653 + $0x22] sm:$0xff]
      %v7051 = vld [vmem:[%s6653 + $0x32] sm:$0xff]
      %v7052 = vld [vmem:[%s6653 + $0x42] sm:$0xff]
      %v7053 = vld [vmem:[%s6653 + $0x52] sm:$0xff]
      %v7054 = vld [vmem:[%s6653 + $0x62] sm:$0xff]
      %v7055 = vld [vmem:[%s6653 + $0x72] sm:$0xff]
      %v7056 = vld [vmem:[%s6653 + $0xa2] sm:$0xff]
      %v7057 = vld [vmem:[%s6653 + $0xb2] sm:$0xff]
      %v7058 = vld [vmem:[%s6653 + $0xc2] sm:$0xff]
      %v7059 = vld [vmem:[%s6653 + $0xd2] sm:$0xff]
      %v7060 = vld [vmem:[%s6653 + $0xe2] sm:$0xff]
      %v7061 = vld [vmem:[%s6653 + $0xf2] sm:$0xff]
      %v7062 = vld [vmem:[%s6653 + $0x102] sm:$0xff]
      %v7063 = vld [vmem:[%s6653 + $0x112] sm:$0xff]
      %v7064 = vld [vmem:[%s6653 + $0x142] sm:$0xff]
      %v7065 = vld [vmem:[%s6653 + $0x152] sm:$0xff]
      %v7066 = vld [vmem:[%s6653 + $0x162] sm:$0xff]
      %v7067 = vld [vmem:[%s6653 + $0x172] sm:$0xff]
      %v7068 = vld [vmem:[%s6653 + $0x182] sm:$0xff]
      %v7069 = vld [vmem:[%s6653 + $0x192] sm:$0xff]
      %v7070 = vld [vmem:[%s6653 + $0x1a2] sm:$0xff]
      %v7071 = vld [vmem:[%s6653 + $0x1b2] sm:$0xff]
      %v7072 = vld [vmem:[%s6653 + $0x1e2] sm:$0xff]
      %v7073 = vld [vmem:[%s6653 + $0x1f2] sm:$0xff]
      %v7074 = vld [vmem:[%s6653 + $0x202] sm:$0xff]
      %v7075 = vld [vmem:[%s6653 + $0x212] sm:$0xff]
      %v7076 = vld [vmem:[%s6653 + $0x222] sm:$0xff]
      %v7077 = vld [vmem:[%s6653 + $0x232] sm:$0xff]
      %v7078 = vld [vmem:[%s6653 + $0x242] sm:$0xff]
      %v7079 = vld [vmem:[%s6653 + $0x252] sm:$0xff]
      %v7080 = vld [vmem:[%s6653 + $0x282] sm:$0xff]
      %v7081 = vld [vmem:[%s6653 + $0x292] sm:$0xff]
      %v7082 = vld [vmem:[%s6653 + $0x2a2] sm:$0xff]
      %v7083 = vld [vmem:[%s6653 + $0x2b2] sm:$0xff]
      %v7084 = vld [vmem:[%s6653 + $0x2c2] sm:$0xff]
      %v7085 = vld [vmem:[%s6653 + $0x2d2] sm:$0xff]
      %v7086 = vld [vmem:[%s6653 + $0x2e2] sm:$0xff]
      %v7087 = vld [vmem:[%s6653 + $0x2f2] sm:$0xff]
      %v7088 = vld [vmem:[%s6653 + $0x322] sm:$0xff]
      %v7089 = vld [vmem:[%s6653 + $0x332] sm:$0xff]
      %v7090 = vld [vmem:[%s6653 + $0x342] sm:$0xff]
      %v7091 = vld [vmem:[%s6653 + $0x352] sm:$0xff]
      %v7092 = vld [vmem:[%s6653 + $0x362] sm:$0xff]
      %v7093 = vld [vmem:[%s6653 + $0x372] sm:$0xff]
      %v7094 = vld [vmem:[%s6653 + $0x382] sm:$0xff]
      %v7095 = vld [vmem:[%s6653 + $0x392] sm:$0xff]
      %v7096 = vld [vmem:[%s6653 + $0x3c2] sm:$0xff]
      %v7097 = vld [vmem:[%s6653 + $0x3d2] sm:$0xff]
      %v7098 = vld [vmem:[%s6653 + $0x3e2] sm:$0xff]
      %v7099 = vld [vmem:[%s6653 + $0x3f2] sm:$0xff]
      %v7100 = vld [vmem:[%s6653 + $0x402] sm:$0xff]
      %v7101 = vld [vmem:[%s6653 + $0x412] sm:$0xff]
      %v7102 = vld [vmem:[%s6653 + $0x422] sm:$0xff]
      %v7103 = vld [vmem:[%s6653 + $0x432] sm:$0xff]
      %v7104 = vld [vmem:[%s6653 + $0x462] sm:$0xff]
      %v7105 = vld [vmem:[%s6653 + $0x472] sm:$0xff]
      %v7106 = vld [vmem:[%s6653 + $0x482] sm:$0xff]
      %v7107 = vld [vmem:[%s6653 + $0x492] sm:$0xff]
      %v7108 = vld [vmem:[%s6653 + $0x4a2] sm:$0xff]
      %v7109 = vld [vmem:[%s6653 + $0x4b2] sm:$0xff]
      %v7110 = vld [vmem:[%s6653 + $0x4c2] sm:$0xff]
      %v7111 = vld [vmem:[%s6653 + $0x4d2] sm:$0xff]
      %v7112 = vld [vmem:[%s5 + $0x1a] sm:$0x1]
      %v7113 = vlaneseq
      %v7114 = vshrl.u32 %v7113, 7
      %v7115 = vsub.s32 0, %v7114
      %v7116 = vrot.slane %v7112, %v7115
      %v7117 = vmul.f32 %v7048, %v7116
      %v7118 = vmul.f32 %v7049, %v7116
      %v7119 = vmul.f32 %v7050, %v7116
      %v7120 = vmul.f32 %v7051, %v7116
      %v7121 = vmul.f32 %v7052, %v7116
      %v7122 = vmul.f32 %v7053, %v7116
      %v7123 = vmul.f32 %v7054, %v7116
      %v7124 = vmul.f32 %v7055, %v7116
      %v7125 = vmul.f32 %v7056, %v7116
      %v7126 = vmul.f32 %v7057, %v7116
      %v7127 = vmul.f32 %v7058, %v7116
      %v7128 = vmul.f32 %v7059, %v7116
      %v7129 = vmul.f32 %v7060, %v7116
      %v7130 = vmul.f32 %v7061, %v7116
      %v7131 = vmul.f32 %v7062, %v7116
      %v7132 = vmul.f32 %v7063, %v7116
      %v7133 = vmul.f32 %v7064, %v7116
      %v7134 = vmul.f32 %v7065, %v7116
      %v7135 = vmul.f32 %v7066, %v7116
      %v7136 = vmul.f32 %v7067, %v7116
      %v7137 = vmul.f32 %v7068, %v7116
      %v7138 = vmul.f32 %v7069, %v7116
      %v7139 = vmul.f32 %v7070, %v7116
      %v7140 = vmul.f32 %v7071, %v7116
      %v7141 = vmul.f32 %v7072, %v7116
      %v7142 = vmul.f32 %v7073, %v7116
      %v7143 = vmul.f32 %v7074, %v7116
      %v7144 = vmul.f32 %v7075, %v7116
      %v7145 = vmul.f32 %v7076, %v7116
      %v7146 = vmul.f32 %v7077, %v7116
      %v7147 = vmul.f32 %v7078, %v7116
      %v7148 = vmul.f32 %v7079, %v7116
      %v7149 = vmul.f32 %v7080, %v7116
      %v7150 = vmul.f32 %v7081, %v7116
      %v7151 = vmul.f32 %v7082, %v7116
      %v7152 = vmul.f32 %v7083, %v7116
      %v7153 = vmul.f32 %v7084, %v7116
      %v7154 = vmul.f32 %v7085, %v7116
      %v7155 = vmul.f32 %v7086, %v7116
      %v7156 = vmul.f32 %v7087, %v7116
      %v7157 = vmul.f32 %v7088, %v7116
      %v7158 = vmul.f32 %v7089, %v7116
      %v7159 = vmul.f32 %v7090, %v7116
      %v7160 = vmul.f32 %v7091, %v7116
      %v7161 = vmul.f32 %v7092, %v7116
      %v7162 = vmul.f32 %v7093, %v7116
      %v7163 = vmul.f32 %v7094, %v7116
      %v7164 = vmul.f32 %v7095, %v7116
      %v7165 = vmul.f32 %v7096, %v7116
      %v7166 = vmul.f32 %v7097, %v7116
      %v7167 = vmul.f32 %v7098, %v7116
      %v7168 = vmul.f32 %v7099, %v7116
      %v7169 = vmul.f32 %v7100, %v7116
      %v7170 = vmul.f32 %v7101, %v7116
      %v7171 = vmul.f32 %v7102, %v7116
      %v7172 = vmul.f32 %v7103, %v7116
      %v7173 = vmul.f32 %v7104, %v7116
      %v7174 = vmul.f32 %v7105, %v7116
      %v7175 = vmul.f32 %v7106, %v7116
      %v7176 = vmul.f32 %v7107, %v7116
      %v7177 = vmul.f32 %v7108, %v7116
      %v7178 = vmul.f32 %v7109, %v7116
      %v7179 = vmul.f32 %v7110, %v7116
      %v7180 = vmul.f32 %v7111, %v7116
      %v7181 = vadd.f32 %v6984, %v7117
      %v7182 = vadd.f32 %v6985, %v7118
      %v7183 = vadd.f32 %v6986, %v7119
      %v7184 = vadd.f32 %v6987, %v7120
      %v7185 = vadd.f32 %v6988, %v7121
      %v7186 = vadd.f32 %v6989, %v7122
      %v7187 = vadd.f32 %v6990, %v7123
      %v7188 = vadd.f32 %v6991, %v7124
      %v7189 = vadd.f32 %v6992, %v7125
      %v7190 = vadd.f32 %v6993, %v7126
      %v7191 = vadd.f32 %v6994, %v7127
      %v7192 = vadd.f32 %v6995, %v7128
      %v7193 = vadd.f32 %v6996, %v7129
      %v7194 = vadd.f32 %v6997, %v7130
      %v7195 = vadd.f32 %v6998, %v7131
      %v7196 = vadd.f32 %v6999, %v7132
      %v7197 = vadd.f32 %v7000, %v7133
      %v7198 = vadd.f32 %v7001, %v7134
      %v7199 = vadd.f32 %v7002, %v7135
      %v7200 = vadd.f32 %v7003, %v7136
      %v7201 = vadd.f32 %v7004, %v7137
      %v7202 = vadd.f32 %v7005, %v7138
      %v7203 = vadd.f32 %v7006, %v7139
      %v7204 = vadd.f32 %v7007, %v7140
      %v7205 = vadd.f32 %v7008, %v7141
      %v7206 = vadd.f32 %v7009, %v7142
      %v7207 = vadd.f32 %v7010, %v7143
      %v7208 = vadd.f32 %v7011, %v7144
      %v7209 = vadd.f32 %v7012, %v7145
      %v7210 = vadd.f32 %v7013, %v7146
      %v7211 = vadd.f32 %v7014, %v7147
      %v7212 = vadd.f32 %v7015, %v7148
      %v7213 = vadd.f32 %v7016, %v7149
      %v7214 = vadd.f32 %v7017, %v7150
      %v7215 = vadd.f32 %v7018, %v7151
      %v7216 = vadd.f32 %v7019, %v7152
      %v7217 = vadd.f32 %v7020, %v7153
      %v7218 = vadd.f32 %v7021, %v7154
      %v7219 = vadd.f32 %v7022, %v7155
      %v7220 = vadd.f32 %v7023, %v7156
      %v7221 = vadd.f32 %v7024, %v7157
      %v7222 = vadd.f32 %v7025, %v7158
      %v7223 = vadd.f32 %v7026, %v7159
      %v7224 = vadd.f32 %v7027, %v7160
      %v7225 = vadd.f32 %v7028, %v7161
      %v7226 = vadd.f32 %v7029, %v7162
      %v7227 = vadd.f32 %v7030, %v7163
      %v7228 = vadd.f32 %v7031, %v7164
      %v7229 = vadd.f32 %v7032, %v7165
      %v7230 = vadd.f32 %v7033, %v7166
      %v7231 = vadd.f32 %v7034, %v7167
      %v7232 = vadd.f32 %v7035, %v7168
      %v7233 = vadd.f32 %v7036, %v7169
      %v7234 = vadd.f32 %v7037, %v7170
      %v7235 = vadd.f32 %v7038, %v7171
      %v7236 = vadd.f32 %v7039, %v7172
      %v7237 = vadd.f32 %v7040, %v7173
      %v7238 = vadd.f32 %v7041, %v7174
      %v7239 = vadd.f32 %v7042, %v7175
      %v7240 = vadd.f32 %v7043, %v7176
      %v7241 = vadd.f32 %v7044, %v7177
      %v7242 = vadd.f32 %v7045, %v7178
      %v7243 = vadd.f32 %v7046, %v7179
      %v7244 = vadd.f32 %v7047, %v7180
      %v7245 = vld [vmem:[%s6] sm:$0x1]
      %v7247 = vlaneseq
      %v7248 = vshrl.u32 %v7247, 7
      %v7249 = vsub.s32 0, %v7248
      %v7250 = vrot.slane %v7245, %v7249
      %v7252 = vadd.f32 %v7181, %v7250
      %v7253 = vadd.f32 %v7182, %v7250
      %v7254 = vadd.f32 %v7183, %v7250
      %v7255 = vadd.f32 %v7184, %v7250
      %v7256 = vadd.f32 %v7185, %v7250
      %v7257 = vadd.f32 %v7186, %v7250
      %v7258 = vadd.f32 %v7187, %v7250
      %v7259 = vadd.f32 %v7188, %v7250
      %v7260 = vadd.f32 %v7189, %v7250
      %v7261 = vadd.f32 %v7190, %v7250
      %v7262 = vadd.f32 %v7191, %v7250
      %v7263 = vadd.f32 %v7192, %v7250
      %v7264 = vadd.f32 %v7193, %v7250
      %v7265 = vadd.f32 %v7194, %v7250
      %v7266 = vadd.f32 %v7195, %v7250
      %v7267 = vadd.f32 %v7196, %v7250
      %v7268 = vadd.f32 %v7197, %v7250
      %v7269 = vadd.f32 %v7198, %v7250
      %v7270 = vadd.f32 %v7199, %v7250
      %v7271 = vadd.f32 %v7200, %v7250
      %v7272 = vadd.f32 %v7201, %v7250
      %v7273 = vadd.f32 %v7202, %v7250
      %v7274 = vadd.f32 %v7203, %v7250
      %v7275 = vadd.f32 %v7204, %v7250
      %v7276 = vadd.f32 %v7205, %v7250
      %v7277 = vadd.f32 %v7206, %v7250
      %v7278 = vadd.f32 %v7207, %v7250
      %v7279 = vadd.f32 %v7208, %v7250
      %v7280 = vadd.f32 %v7209, %v7250
      %v7281 = vadd.f32 %v7210, %v7250
      %v7282 = vadd.f32 %v7211, %v7250
      %v7283 = vadd.f32 %v7212, %v7250
      %v7284 = vadd.f32 %v7213, %v7250
      %v7285 = vadd.f32 %v7214, %v7250
      %v7286 = vadd.f32 %v7215, %v7250
      %v7287 = vadd.f32 %v7216, %v7250
      %v7288 = vadd.f32 %v7217, %v7250
      %v7289 = vadd.f32 %v7218, %v7250
      %v7290 = vadd.f32 %v7219, %v7250
      %v7291 = vadd.f32 %v7220, %v7250
      %v7292 = vadd.f32 %v7221, %v7250
      %v7293 = vadd.f32 %v7222, %v7250
      %v7294 = vadd.f32 %v7223, %v7250
      %v7295 = vadd.f32 %v7224, %v7250
      %v7296 = vadd.f32 %v7225, %v7250
      %v7297 = vadd.f32 %v7226, %v7250
      %v7298 = vadd.f32 %v7227, %v7250
      %v7299 = vadd.f32 %v7228, %v7250
      %v7300 = vadd.f32 %v7229, %v7250
      %v7301 = vadd.f32 %v7230, %v7250
      %v7302 = vadd.f32 %v7231, %v7250
      %v7303 = vadd.f32 %v7232, %v7250
      %v7304 = vadd.f32 %v7233, %v7250
      %v7305 = vadd.f32 %v7234, %v7250
      %v7306 = vadd.f32 %v7235, %v7250
      %v7307 = vadd.f32 %v7236, %v7250
      %v7308 = vadd.f32 %v7237, %v7250
      %v7309 = vadd.f32 %v7238, %v7250
      %v7310 = vadd.f32 %v7239, %v7250
      %v7311 = vadd.f32 %v7240, %v7250
      %v7312 = vadd.f32 %v7241, %v7250
      %v7313 = vadd.f32 %v7242, %v7250
      %v7314 = vadd.f32 %v7243, %v7250
      %v7315 = vadd.f32 %v7244, %v7250
      %v7316 = vmax.f32 %v7252, 0.0
      %v7317 = vmax.f32 %v7253, 0.0
      %v7318 = vmax.f32 %v7254, 0.0
      %v7319 = vmax.f32 %v7255, 0.0
      %v7320 = vmax.f32 %v7256, 0.0
      %v7321 = vmax.f32 %v7257, 0.0
      %v7322 = vmax.f32 %v7258, 0.0
      %v7323 = vmax.f32 %v7259, 0.0
      %v7324 = vmax.f32 %v7260, 0.0
      %v7325 = vmax.f32 %v7261, 0.0
      %v7326 = vmax.f32 %v7262, 0.0
      %v7327 = vmax.f32 %v7263, 0.0
      %v7328 = vmax.f32 %v7264, 0.0
      %v7329 = vmax.f32 %v7265, 0.0
      %v7330 = vmax.f32 %v7266, 0.0
      %v7331 = vmax.f32 %v7267, 0.0
      %v7332 = vmax.f32 %v7268, 0.0
      %v7333 = vmax.f32 %v7269, 0.0
      %v7334 = vmax.f32 %v7270, 0.0
      %v7335 = vmax.f32 %v7271, 0.0
      %v7336 = vmax.f32 %v7272, 0.0
      %v7337 = vmax.f32 %v7273, 0.0
      %v7338 = vmax.f32 %v7274, 0.0
      %v7339 = vmax.f32 %v7275, 0.0
      %v7340 = vmax.f32 %v7276, 0.0
      %v7341 = vmax.f32 %v7277, 0.0
      %v7342 = vmax.f32 %v7278, 0.0
      %v7343 = vmax.f32 %v7279, 0.0
      %v7344 = vmax.f32 %v7280, 0.0
      %v7345 = vmax.f32 %v7281, 0.0
      %v7346 = vmax.f32 %v7282, 0.0
      %v7347 = vmax.f32 %v7283, 0.0
      %v7348 = vmax.f32 %v7284, 0.0
      %v7349 = vmax.f32 %v7285, 0.0
      %v7350 = vmax.f32 %v7286, 0.0
      %v7351 = vmax.f32 %v7287, 0.0
      %v7352 = vmax.f32 %v7288, 0.0
      %v7353 = vmax.f32 %v7289, 0.0
      %v7354 = vmax.f32 %v7290, 0.0
      %v7355 = vmax.f32 %v7291, 0.0
      %v7356 = vmax.f32 %v7292, 0.0
      %v7357 = vmax.f32 %v7293, 0.0
      %v7358 = vmax.f32 %v7294, 0.0
      %v7359 = vmax.f32 %v7295, 0.0
      %v7360 = vmax.f32 %v7296, 0.0
      %v7361 = vmax.f32 %v7297, 0.0
      %v7362 = vmax.f32 %v7298, 0.0
      %v7363 = vmax.f32 %v7299, 0.0
      %v7364 = vmax.f32 %v7300, 0.0
      %v7365 = vmax.f32 %v7301, 0.0
      %v7366 = vmax.f32 %v7302, 0.0
      %v7367 = vmax.f32 %v7303, 0.0
      %v7368 = vmax.f32 %v7304, 0.0
      %v7369 = vmax.f32 %v7305, 0.0
      %v7370 = vmax.f32 %v7306, 0.0
      %v7371 = vmax.f32 %v7307, 0.0
      %v7372 = vmax.f32 %v7308, 0.0
      %v7373 = vmax.f32 %v7309, 0.0
      %v7374 = vmax.f32 %v7310, 0.0
      %v7375 = vmax.f32 %v7311, 0.0
      %v7376 = vmax.f32 %v7312, 0.0
      %v7377 = vmax.f32 %v7313, 0.0
      %v7378 = vmax.f32 %v7314, 0.0
      %v7379 = vmax.f32 %v7315, 0.0
      %v7380 = vmin.f32 %v7316, 6.0
      %v7381 = vmin.f32 %v7317, 6.0
      %v7382 = vmin.f32 %v7318, 6.0
      %v7383 = vmin.f32 %v7319, 6.0
      %v7384 = vmin.f32 %v7320, 6.0
      %v7385 = vmin.f32 %v7321, 6.0
      %v7386 = vmin.f32 %v7322, 6.0
      %v7387 = vmin.f32 %v7323, 6.0
      %v7388 = vmin.f32 %v7324, 6.0
      %v7389 = vmin.f32 %v7325, 6.0
      %v7390 = vmin.f32 %v7326, 6.0
      %v7391 = vmin.f32 %v7327, 6.0
      %v7392 = vmin.f32 %v7328, 6.0
      %v7393 = vmin.f32 %v7329, 6.0
      %v7394 = vmin.f32 %v7330, 6.0
      %v7395 = vmin.f32 %v7331, 6.0
      %v7396 = vmin.f32 %v7332, 6.0
      %v7397 = vmin.f32 %v7333, 6.0
      %v7398 = vmin.f32 %v7334, 6.0
      %v7399 = vmin.f32 %v7335, 6.0
      %v7400 = vmin.f32 %v7336, 6.0
      %v7401 = vmin.f32 %v7337, 6.0
      %v7402 = vmin.f32 %v7338, 6.0
      %v7403 = vmin.f32 %v7339, 6.0
      %v7404 = vmin.f32 %v7340, 6.0
      %v7405 = vmin.f32 %v7341, 6.0
      %v7406 = vmin.f32 %v7342, 6.0
      %v7407 = vmin.f32 %v7343, 6.0
      %v7408 = vmin.f32 %v7344, 6.0
      %v7409 = vmin.f32 %v7345, 6.0
      %v7410 = vmin.f32 %v7346, 6.0
      %v7411 = vmin.f32 %v7347, 6.0
      %v7412 = vmin.f32 %v7348, 6.0
      %v7413 = vmin.f32 %v7349, 6.0
      %v7414 = vmin.f32 %v7350, 6.0
      %v7415 = vmin.f32 %v7351, 6.0
      %v7416 = vmin.f32 %v7352, 6.0
      %v7417 = vmin.f32 %v7353, 6.0
      %v7418 = vmin.f32 %v7354, 6.0
      %v7419 = vmin.f32 %v7355, 6.0
      %v7420 = vmin.f32 %v7356, 6.0
      %v7421 = vmin.f32 %v7357, 6.0
      %v7422 = vmin.f32 %v7358, 6.0
      %v7423 = vmin.f32 %v7359, 6.0
      %v7424 = vmin.f32 %v7360, 6.0
      %v7425 = vmin.f32 %v7361, 6.0
      %v7426 = vmin.f32 %v7362, 6.0
      %v7427 = vmin.f32 %v7363, 6.0
      %v7428 = vmin.f32 %v7364, 6.0
      %v7429 = vmin.f32 %v7365, 6.0
      %v7430 = vmin.f32 %v7366, 6.0
      %v7431 = vmin.f32 %v7367, 6.0
      %v7432 = vmin.f32 %v7368, 6.0
      %v7433 = vmin.f32 %v7369, 6.0
      %v7434 = vmin.f32 %v7370, 6.0
      %v7435 = vmin.f32 %v7371, 6.0
      %v7436 = vmin.f32 %v7372, 6.0
      %v7437 = vmin.f32 %v7373, 6.0
      %v7438 = vmin.f32 %v7374, 6.0
      %v7439 = vmin.f32 %v7375, 6.0
      %v7440 = vmin.f32 %v7376, 6.0
      %v7441 = vmin.f32 %v7377, 6.0
      %v7442 = vmin.f32 %v7378, 6.0
      %v7443 = vmin.f32 %v7379, 6.0
      %v7444 = vld [vmem:[%s7] sm:$0xff]
      %v7445 = vld [vmem:[%s8] sm:$0x1]
      %v7447 = vlaneseq
      %v7448 = vshrl.u32 %v7447, 7
      %v7449 = vsub.s32 0, %v7448
      %v7450 = vrot.slane %v7445, %v7449
      %v7453 = vsel %vm499, %v7380, 0
      %v7456 = vsel %vm499, %v7381, 0
      %v7459 = vsel %vm499, %v7382, 0
      %v7462 = vsel %vm499, %v7383, 0
      %v7465 = vsel %vm499, %v7384, 0
      %v7468 = vsel %vm499, %v7385, 0
      %v7471 = vsel %vm499, %v7386, 0
      %v7474 = vsel %vm499, %v7387, 0
      %v7477 = vsel %vm499, %v7388, 0
      %v7480 = vsel %vm499, %v7389, 0
      %v7483 = vsel %vm499, %v7390, 0
      %v7486 = vsel %vm499, %v7391, 0
      %v7489 = vsel %vm499, %v7392, 0
      %v7492 = vsel %vm499, %v7393, 0
      %v7495 = vsel %vm499, %v7394, 0
      %v7498 = vsel %vm499, %v7395, 0
      %v7501 = vsel %vm499, %v7396, 0
      %v7504 = vsel %vm499, %v7397, 0
      %v7507 = vsel %vm499, %v7398, 0
      %v7510 = vsel %vm499, %v7399, 0
      %v7513 = vsel %vm499, %v7400, 0
      %v7516 = vsel %vm499, %v7401, 0
      %v7519 = vsel %vm499, %v7402, 0
      %v7522 = vsel %vm499, %v7403, 0
      %v7525 = vsel %vm499, %v7404, 0
      %v7528 = vsel %vm499, %v7405, 0
      %v7531 = vsel %vm499, %v7406, 0
      %v7534 = vsel %vm499, %v7407, 0
      %v7537 = vsel %vm499, %v7408, 0
      %v7540 = vsel %vm499, %v7409, 0
      %v7543 = vsel %vm499, %v7410, 0
      %v7546 = vsel %vm499, %v7411, 0
      %v7549 = vsel %vm499, %v7412, 0
      %v7552 = vsel %vm499, %v7413, 0
      %v7555 = vsel %vm499, %v7414, 0
      %v7558 = vsel %vm499, %v7415, 0
      %v7561 = vsel %vm499, %v7416, 0
      %v7564 = vsel %vm499, %v7417, 0
      %v7567 = vsel %vm499, %v7418, 0
      %v7570 = vsel %vm499, %v7419, 0
      %v7573 = vsel %vm499, %v7420, 0
      %v7576 = vsel %vm499, %v7421, 0
      %v7579 = vsel %vm499, %v7422, 0
      %v7582 = vsel %vm499, %v7423, 0
      %v7585 = vsel %vm499, %v7424, 0
      %v7588 = vsel %vm499, %v7425, 0
      %v7591 = vsel %vm499, %v7426, 0
      %v7594 = vsel %vm499, %v7427, 0
      %v7597 = vsel %vm499, %v7428, 0
      %v7600 = vsel %vm499, %v7429, 0
      %v7603 = vsel %vm499, %v7430, 0
      %v7606 = vsel %vm499, %v7431, 0
      %v7609 = vsel %vm499, %v7432, 0
      %v7612 = vsel %vm499, %v7433, 0
      %v7615 = vsel %vm499, %v7434, 0
      %v7618 = vsel %vm499, %v7435, 0
      %v7621 = vsel %vm499, %v7436, 0
      %v7624 = vsel %vm499, %v7437, 0
      %v7627 = vsel %vm499, %v7438, 0
      %v7630 = vsel %vm499, %v7439, 0
      %v7633 = vsel %vm499, %v7440, 0
      %v7636 = vsel %vm499, %v7441, 0
      %v7639 = vsel %vm499, %v7442, 0
      %v7642 = vsel %vm499, %v7443, 0
      %7644 = vmatprep.subr.mxu0 0.0
      %7645 = vmatpush1.msra.mxu0 %v7444
      %7646 = vmatprep.subr.mxu0 0.0
      %7647 = vmatpush1.msra.mxu0 0.0
      %7648 = vmatprep.subr.mxu0 0.0
      %7649 = vmatpush1.msra.mxu0 0.0
      %7650 = vmatprep.subr.mxu0 0.0
      %7651 = vmatpush1.msra.mxu0 0.0
      %7652 = vmatprep.subr.mxu0 0.0
      %7653 = vmatpush1.msra.mxu0 0.0
      %7654 = vmatprep.subr.mxu0 0.0
      %7655 = vmatpush1.msra.mxu0 0.0
      %7656 = vmatprep.subr.mxu0 0.0
      %7657 = vmatpush1.msra.mxu0 0.0
      %7658 = vmatprep.subr.mxu0 0.0
      %7659 = vmatpush1.msra.mxu0 0.0
      %7660 = vmatprep.subr.mxu0 0.0
      %7661 = vmatpush1.msra.mxu0 0.0
      %7662 = vmatprep.subr.mxu0 0.0
      %7663 = vmatpush1.msra.mxu0 0.0
      %7664 = vmatprep.subr.mxu0 0.0
      %7665 = vmatpush1.msra.mxu0 0.0
      %7666 = vmatprep.subr.mxu0 0.0
      %7667 = vmatpush1.msra.mxu0 0.0
      %7668 = vmatprep.subr.mxu0 0.0
      %7669 = vmatpush1.msra.mxu0 0.0
      %7670 = vmatprep.subr.mxu0 0.0
      %7671 = vmatpush1.msra.mxu0 0.0
      %7672 = vmatprep.subr.mxu0 0.0
      %7673 = vmatpush1.msra.mxu0 0.0
      %7674 = vmatprep.subr.mxu0 0.0
      %7675 = vmatpush1.msra.mxu0 0.0
      %7676 = vmatprep.subr.mxu0 0.0
      %7677 = vmatpush1.msra.mxu0 0.0
      %7678 = vmatprep.subr.mxu0 0.0
      %7679 = vmatpush1.msra.mxu0 0.0
      %7680 = vmatprep.subr.mxu0 0.0
      %7681 = vmatpush1.msra.mxu0 0.0
      %7682 = vmatprep.subr.mxu0 0.0
      %7683 = vmatpush1.msra.mxu0 0.0
      %7684 = vmatprep.subr.mxu0 0.0
      %7685 = vmatpush1.msra.mxu0 0.0
      %7686 = vmatprep.subr.mxu0 0.0
      %7687 = vmatpush1.msra.mxu0 0.0
      %7688 = vmatprep.subr.mxu0 0.0
      %7689 = vmatpush1.msra.mxu0 0.0
      %7690 = vmatprep.subr.mxu0 0.0
      %7691 = vmatpush1.msra.mxu0 0.0
      %7692 = vmatprep.subr.mxu0 0.0
      %7693 = vmatpush1.msra.mxu0 0.0
      %7694 = vmatprep.subr.mxu0 0.0
      %7695 = vmatpush1.msra.mxu0 0.0
      %7696 = vmatprep.subr.mxu0 0.0
      %7697 = vmatpush1.msra.mxu0 0.0
      %7698 = vmatprep.subr.mxu0 0.0
      %7699 = vmatpush1.msra.mxu0 0.0
      %7700 = vmatprep.subr.mxu0 0.0
      %7701 = vmatpush1.msra.mxu0 0.0
      %7702 = vmatprep.subr.mxu0 0.0
      %7703 = vmatpush1.msra.mxu0 0.0
      %7704 = vmatprep.subr.mxu0 0.0
      %7705 = vmatpush1.msra.mxu0 0.0
      %7706 = vmatprep.subr.mxu0 0.0
      %7707 = vmatpush1.msra.mxu0 0.0
      %7708 = vmatprep.mubr.f32.mxu0 0.0
      %7709 = vmatmul.mubr.f32.gmra.mrb[0].mxu0 %v7453
      %v7710 = vpop.f32.mrb[0].mxu0
      %v7711 = vadd.f32 %v7450, %v7710
      %v7712 = vpop.f32.mrb[0].mxu0
      %7713 = vmatprep.mubr.f32.mxu0 0.0
      %7714 = vmatmul.mubr.f32.gmra.mrb[0].mxu0 %v7456
      %v7715 = vpop.f32.mrb[0].mxu0
      %v7716 = vadd.f32 %v7450, %v7715
      %v7717 = vpop.f32.mrb[0].mxu0
      %7718 = vmatprep.mubr.f32.mxu0 0.0
      %7719 = vmatmul.mubr.f32.gmra.mrb[0].mxu0 %v7459
      %v7720 = vpop.f32.mrb[0].mxu0
      %v7721 = vadd.f32 %v7450, %v7720
      %v7722 = vpop.f32.mrb[0].mxu0
      %7723 = vmatprep.mubr.f32.mxu0 0.0
      %7724 = vmatmul.mubr.f32.gmra.mrb[0].mxu0 %v7462
      %v7725 = vpop.f32.mrb[0].mxu0
      %v7726 = vadd.f32 %v7450, %v7725
      %v7727 = vpop.f32.mrb[0].mxu0
      %7728 = vmatprep.mubr.f32.mxu0 0.0
      %7729 = vmatmul.mubr.f32.gmra.mrb[0].mxu0 %v7465
      %v7730 = vpop.f32.mrb[0].mxu0
      %v7731 = vadd.f32 %v7450, %v7730
      %v7732 = vpop.f32.mrb[0].mxu0
      %7733 = vmatprep.mubr.f32.mxu0 0.0
      %7734 = vmatmul.mubr.f32.gmra.mrb[0].mxu0 %v7468
      %v7735 = vpop.f32.mrb[0].mxu0
      %v7736 = vadd.f32 %v7450, %v7735
      %v7737 = vpop.f32.mrb[0].mxu0
      %7738 = vmatprep.mubr.f32.mxu0 0.0
      %7739 = vmatmul.mubr.f32.gmra.mrb[0].mxu0 %v7471
      %v7740 = vpop.f32.mrb[0].mxu0
      %v7741 = vadd.f32 %v7450, %v7740
      %v7742 = vpop.f32.mrb[0].mxu0
      %7743 = vmatprep.mubr.f32.mxu0 0.0
      %7744 = vmatmul.mubr.f32.gmra.mrb[0].mxu0 %v7474
      %v7745 = vpop.f32.mrb[0].mxu0
      %v7746 = vadd.f32 %v7450, %v7745
      %v7747 = vpop.f32.mrb[0].mxu0
      %7748 = vmatprep.mubr.f32.mxu0 0.0
      %7749 = vmatmul.mubr.f32.gmra.mrb[0].mxu0 %v7477
      %v7750 = vpop.f32.mrb[0].mxu0
      %v7751 = vadd.f32 %v7450, %v7750
      %v7752 = vpop.f32.mrb[0].mxu0
      %7753 = vmatprep.mubr.f32.mxu0 0.0
      %7754 = vmatmul.mubr.f32.gmra.mrb[0].mxu0 %v7480
      %v7755 = vpop.f32.mrb[0].mxu0
      %v7756 = vadd.f32 %v7450, %v7755
      %v7757 = vpop.f32.mrb[0].mxu0
      %7758 = vmatprep.mubr.f32.mxu0 0.0
      %7759 = vmatmul.mubr.f32.gmra.mrb[0].mxu0 %v7483
      %v7760 = vpop.f32.mrb[0].mxu0
      %v7761 = vadd.f32 %v7450, %v7760
      %v7762 = vpop.f32.mrb[0].mxu0
      %7763 = vmatprep.mubr.f32.mxu0 0.0
      %7764 = vmatmul.mubr.f32.gmra.mrb[0].mxu0 %v7486
      %v7765 = vpop.f32.mrb[0].mxu0
      %v7766 = vadd.f32 %v7450, %v7765
      %v7767 = vpop.f32.mrb[0].mxu0
      %7768 = vmatprep.mubr.f32.mxu0 0.0
      %7769 = vmatmul.mubr.f32.gmra.mrb[0].mxu0 %v7489
      %v7770 = vpop.f32.mrb[0].mxu0
      %v7771 = vadd.f32 %v7450, %v7770
      %v7772 = vpop.f32.mrb[0].mxu0
      %7773 = vmatprep.mubr.f32.mxu0 0.0
      %7774 = vmatmul.mubr.f32.gmra.mrb[0].mxu0 %v7492
      %v7775 = vpop.f32.mrb[0].mxu0
      %v7776 = vadd.f32 %v7450, %v7775
      %v7777 = vpop.f32.mrb[0].mxu0
      %7778 = vmatprep.mubr.f32.mxu0 0.0
      %7779 = vmatmul.mubr.f32.gmra.mrb[0].mxu0 %v7495
      %v7780 = vpop.f32.mrb[0].mxu0
      %v7781 = vadd.f32 %v7450, %v7780
      %v7782 = vpop.f32.mrb[0].mxu0
      %7783 = vmatprep.mubr.f32.mxu0 0.0
      %7784 = vmatmul.mubr.f32.gmra.mrb[0].mxu0 %v7498
      %v7785 = vpop.f32.mrb[0].mxu0
      %v7786 = vadd.f32 %v7450, %v7785
      %v7787 = vpop.f32.mrb[0].mxu0
      %7788 = vmatprep.mubr.f32.mxu0 0.0
      %7789 = vmatmul.mubr.f32.gmra.mrb[0].mxu0 %v7501
      %v7790 = vpop.f32.mrb[0].mxu0
      %v7791 = vadd.f32 %v7450, %v7790
      %v7792 = vpop.f32.mrb[0].mxu0
      %7793 = vmatprep.mubr.f32.mxu0 0.0
      %7794 = vmatmul.mubr.f32.gmra.mrb[0].mxu0 %v7504
      %v7795 = vpop.f32.mrb[0].mxu0
      %v7796 = vadd.f32 %v7450, %v7795
      %v7797 = vpop.f32.mrb[0].mxu0
      %7798 = vmatprep.mubr.f32.mxu0 0.0
      %7799 = vmatmul.mubr.f32.gmra.mrb[0].mxu0 %v7507
      %v7800 = vpop.f32.mrb[0].mxu0
      %v7801 = vadd.f32 %v7450, %v7800
      %v7802 = vpop.f32.mrb[0].mxu0
      %7803 = vmatprep.mubr.f32.mxu0 0.0
      %7804 = vmatmul.mubr.f32.gmra.mrb[0].mxu0 %v7510
      %v7805 = vpop.f32.mrb[0].mxu0
      %v7806 = vadd.f32 %v7450, %v7805
      %v7807 = vpop.f32.mrb[0].mxu0
      %7808 = vmatprep.mubr.f32.mxu0 0.0
      %7809 = vmatmul.mubr.f32.gmra.mrb[0].mxu0 %v7513
      %v7810 = vpop.f32.mrb[0].mxu0
      %v7811 = vadd.f32 %v7450, %v7810
      %v7812 = vpop.f32.mrb[0].mxu0
      %7813 = vmatprep.mubr.f32.mxu0 0.0
      %7814 = vmatmul.mubr.f32.gmra.mrb[0].mxu0 %v7516
      %v7815 = vpop.f32.mrb[0].mxu0
      %v7816 = vadd.f32 %v7450, %v7815
      %v7817 = vpop.f32.mrb[0].mxu0
      %7818 = vmatprep.mubr.f32.mxu0 0.0
      %7819 = vmatmul.mubr.f32.gmra.mrb[0].mxu0 %v7519
      %v7820 = vpop.f32.mrb[0].mxu0
      %v7821 = vadd.f32 %v7450, %v7820
      %v7822 = vpop.f32.mrb[0].mxu0
      %7823 = vmatprep.mubr.f32.mxu0 0.0
      %7824 = vmatmul.mubr.f32.gmra.mrb[0].mxu0 %v7522
      %v7825 = vpop.f32.mrb[0].mxu0
      %v7826 = vadd.f32 %v7450, %v7825
      %v7827 = vpop.f32.mrb[0].mxu0
      %7828 = vmatprep.mubr.f32.mxu0 0.0
      %7829 = vmatmul.mubr.f32.gmra.mrb[0].mxu0 %v7525
      %v7830 = vpop.f32.mrb[0].mxu0
      %v7831 = vadd.f32 %v7450, %v7830
      %v7832 = vpop.f32.mrb[0].mxu0
      %7833 = vmatprep.mubr.f32.mxu0 0.0
      %7834 = vmatmul.mubr.f32.gmra.mrb[0].mxu0 %v7528
      %v7835 = vpop.f32.mrb[0].mxu0
      %v7836 = vadd.f32 %v7450, %v7835
      %v7837 = vpop.f32.mrb[0].mxu0
      %7838 = vmatprep.mubr.f32.mxu0 0.0
      %7839 = vmatmul.mubr.f32.gmra.mrb[0].mxu0 %v7531
      %v7840 = vpop.f32.mrb[0].mxu0
      %v7841 = vadd.f32 %v7450, %v7840
      %v7842 = vpop.f32.mrb[0].mxu0
      %7843 = vmatprep.mubr.f32.mxu0 0.0
      %7844 = vmatmul.mubr.f32.gmra.mrb[0].mxu0 %v7534
      %v7845 = vpop.f32.mrb[0].mxu0
      %v7846 = vadd.f32 %v7450, %v7845
      %v7847 = vpop.f32.mrb[0].mxu0
      %7848 = vmatprep.mubr.f32.mxu0 0.0
      %7849 = vmatmul.mubr.f32.gmra.mrb[0].mxu0 %v7537
      %v7850 = vpop.f32.mrb[0].mxu0
      %v7851 = vadd.f32 %v7450, %v7850
      %v7852 = vpop.f32.mrb[0].mxu0
      %7853 = vmatprep.mubr.f32.mxu0 0.0
      %7854 = vmatmul.mubr.f32.gmra.mrb[0].mxu0 %v7540
      %v7855 = vpop.f32.mrb[0].mxu0
      %v7856 = vadd.f32 %v7450, %v7855
      %v7857 = vpop.f32.mrb[0].mxu0
      %7858 = vmatprep.mubr.f32.mxu0 0.0
      %7859 = vmatmul.mubr.f32.gmra.mrb[0].mxu0 %v7543
      %v7860 = vpop.f32.mrb[0].mxu0
      %v7861 = vadd.f32 %v7450, %v7860
      %v7862 = vpop.f32.mrb[0].mxu0
      %7863 = vmatprep.mubr.f32.mxu0 0.0
      %7864 = vmatmul.mubr.f32.gmra.mrb[0].mxu0 %v7546
      %v7865 = vpop.f32.mrb[0].mxu0
      %v7866 = vadd.f32 %v7450, %v7865
      %v7867 = vpop.f32.mrb[0].mxu0
      %7868 = vmatprep.mubr.f32.mxu0 0.0
      %7869 = vmatmul.mubr.f32.gmra.mrb[0].mxu0 %v7549
      %v7870 = vpop.f32.mrb[0].mxu0
      %v7871 = vadd.f32 %v7450, %v7870
      %v7872 = vpop.f32.mrb[0].mxu0
      %7873 = vmatprep.mubr.f32.mxu0 0.0
      %7874 = vmatmul.mubr.f32.gmra.mrb[0].mxu0 %v7552
      %v7875 = vpop.f32.mrb[0].mxu0
      %v7876 = vadd.f32 %v7450, %v7875
      %v7877 = vpop.f32.mrb[0].mxu0
      %7878 = vmatprep.mubr.f32.mxu0 0.0
      %7879 = vmatmul.mubr.f32.gmra.mrb[0].mxu0 %v7555
      %v7880 = vpop.f32.mrb[0].mxu0
      %v7881 = vadd.f32 %v7450, %v7880
      %v7882 = vpop.f32.mrb[0].mxu0
      %7883 = vmatprep.mubr.f32.mxu0 0.0
      %7884 = vmatmul.mubr.f32.gmra.mrb[0].mxu0 %v7558
      %v7885 = vpop.f32.mrb[0].mxu0
      %v7886 = vadd.f32 %v7450, %v7885
      %v7887 = vpop.f32.mrb[0].mxu0
      %7888 = vmatprep.mubr.f32.mxu0 0.0
      %7889 = vmatmul.mubr.f32.gmra.mrb[0].mxu0 %v7561
      %v7890 = vpop.f32.mrb[0].mxu0
      %v7891 = vadd.f32 %v7450, %v7890
      %v7892 = vpop.f32.mrb[0].mxu0
      %7893 = vmatprep.mubr.f32.mxu0 0.0
      %7894 = vmatmul.mubr.f32.gmra.mrb[0].mxu0 %v7564
      %v7895 = vpop.f32.mrb[0].mxu0
      %v7896 = vadd.f32 %v7450, %v7895
      %v7897 = vpop.f32.mrb[0].mxu0
      %7898 = vmatprep.mubr.f32.mxu0 0.0
      %7899 = vmatmul.mubr.f32.gmra.mrb[0].mxu0 %v7567
      %v7900 = vpop.f32.mrb[0].mxu0
      %v7901 = vadd.f32 %v7450, %v7900
      %v7902 = vpop.f32.mrb[0].mxu0
      %7903 = vmatprep.mubr.f32.mxu0 0.0
      %7904 = vmatmul.mubr.f32.gmra.mrb[0].mxu0 %v7570
      %v7905 = vpop.f32.mrb[0].mxu0
      %v7906 = vadd.f32 %v7450, %v7905
      %v7907 = vpop.f32.mrb[0].mxu0
      %7908 = vmatprep.mubr.f32.mxu0 0.0
      %7909 = vmatmul.mubr.f32.gmra.mrb[0].mxu0 %v7573
      %v7910 = vpop.f32.mrb[0].mxu0
      %v7911 = vadd.f32 %v7450, %v7910
      %v7912 = vpop.f32.mrb[0].mxu0
      %7913 = vmatprep.mubr.f32.mxu0 0.0
      %7914 = vmatmul.mubr.f32.gmra.mrb[0].mxu0 %v7576
      %v7915 = vpop.f32.mrb[0].mxu0
      %v7916 = vadd.f32 %v7450, %v7915
      %v7917 = vpop.f32.mrb[0].mxu0
      %7918 = vmatprep.mubr.f32.mxu0 0.0
      %7919 = vmatmul.mubr.f32.gmra.mrb[0].mxu0 %v7579
      %v7920 = vpop.f32.mrb[0].mxu0
      %v7921 = vadd.f32 %v7450, %v7920
      %v7922 = vpop.f32.mrb[0].mxu0
      %7923 = vmatprep.mubr.f32.mxu0 0.0
      %7924 = vmatmul.mubr.f32.gmra.mrb[0].mxu0 %v7582
      %v7925 = vpop.f32.mrb[0].mxu0
      %v7926 = vadd.f32 %v7450, %v7925
      %v7927 = vpop.f32.mrb[0].mxu0
      %7928 = vmatprep.mubr.f32.mxu0 0.0
      %7929 = vmatmul.mubr.f32.gmra.mrb[0].mxu0 %v7585
      %v7930 = vpop.f32.mrb[0].mxu0
      %v7931 = vadd.f32 %v7450, %v7930
      %v7932 = vpop.f32.mrb[0].mxu0
      %7933 = vmatprep.mubr.f32.mxu0 0.0
      %7934 = vmatmul.mubr.f32.gmra.mrb[0].mxu0 %v7588
      %v7935 = vpop.f32.mrb[0].mxu0
      %v7936 = vadd.f32 %v7450, %v7935
      %v7937 = vpop.f32.mrb[0].mxu0
      %7938 = vmatprep.mubr.f32.mxu0 0.0
      %7939 = vmatmul.mubr.f32.gmra.mrb[0].mxu0 %v7591
      %v7940 = vpop.f32.mrb[0].mxu0
      %v7941 = vadd.f32 %v7450, %v7940
      %v7942 = vpop.f32.mrb[0].mxu0
      %7943 = vmatprep.mubr.f32.mxu0 0.0
      %7944 = vmatmul.mubr.f32.gmra.mrb[0].mxu0 %v7594
      %v7945 = vpop.f32.mrb[0].mxu0
      %v7946 = vadd.f32 %v7450, %v7945
      %v7947 = vpop.f32.mrb[0].mxu0
      %7948 = vmatprep.mubr.f32.mxu0 0.0
      %7949 = vmatmul.mubr.f32.gmra.mrb[0].mxu0 %v7597
      %v7950 = vpop.f32.mrb[0].mxu0
      %v7951 = vadd.f32 %v7450, %v7950
      %v7952 = vpop.f32.mrb[0].mxu0
      %7953 = vmatprep.mubr.f32.mxu0 0.0
      %7954 = vmatmul.mubr.f32.gmra.mrb[0].mxu0 %v7600
      %v7955 = vpop.f32.mrb[0].mxu0
      %v7956 = vadd.f32 %v7450, %v7955
      %v7957 = vpop.f32.mrb[0].mxu0
      %7958 = vmatprep.mubr.f32.mxu0 0.0
      %7959 = vmatmul.mubr.f32.gmra.mrb[0].mxu0 %v7603
      %v7960 = vpop.f32.mrb[0].mxu0
      %v7961 = vadd.f32 %v7450, %v7960
      %v7962 = vpop.f32.mrb[0].mxu0
      %7963 = vmatprep.mubr.f32.mxu0 0.0
      %7964 = vmatmul.mubr.f32.gmra.mrb[0].mxu0 %v7606
      %v7965 = vpop.f32.mrb[0].mxu0
      %v7966 = vadd.f32 %v7450, %v7965
      %v7967 = vpop.f32.mrb[0].mxu0
      %7968 = vmatprep.mubr.f32.mxu0 0.0
      %7969 = vmatmul.mubr.f32.gmra.mrb[0].mxu0 %v7609
      %v7970 = vpop.f32.mrb[0].mxu0
      %v7971 = vadd.f32 %v7450, %v7970
      %v7972 = vpop.f32.mrb[0].mxu0
      %7973 = vmatprep.mubr.f32.mxu0 0.0
      %7974 = vmatmul.mubr.f32.gmra.mrb[0].mxu0 %v7612
      %v7975 = vpop.f32.mrb[0].mxu0
      %v7976 = vadd.f32 %v7450, %v7975
      %v7977 = vpop.f32.mrb[0].mxu0
      %7978 = vmatprep.mubr.f32.mxu0 0.0
      %7979 = vmatmul.mubr.f32.gmra.mrb[0].mxu0 %v7615
      %v7980 = vpop.f32.mrb[0].mxu0
      %v7981 = vadd.f32 %v7450, %v7980
      %v7982 = vpop.f32.mrb[0].mxu0
      %7983 = vmatprep.mubr.f32.mxu0 0.0
      %7984 = vmatmul.mubr.f32.gmra.mrb[0].mxu0 %v7618
      %v7985 = vpop.f32.mrb[0].mxu0
      %v7986 = vadd.f32 %v7450, %v7985
      %v7987 = vpop.f32.mrb[0].mxu0
      %7988 = vmatprep.mubr.f32.mxu0 0.0
      %7989 = vmatmul.mubr.f32.gmra.mrb[0].mxu0 %v7621
      %v7990 = vpop.f32.mrb[0].mxu0
      %v7991 = vadd.f32 %v7450, %v7990
      %v7992 = vpop.f32.mrb[0].mxu0
      %7993 = vmatprep.mubr.f32.mxu0 0.0
      %7994 = vmatmul.mubr.f32.gmra.mrb[0].mxu0 %v7624
      %v7995 = vpop.f32.mrb[0].mxu0
      %v7996 = vadd.f32 %v7450, %v7995
      %v7997 = vpop.f32.mrb[0].mxu0
      %7998 = vmatprep.mubr.f32.mxu0 0.0
      %7999 = vmatmul.mubr.f32.gmra.mrb[0].mxu0 %v7627
      %v8000 = vpop.f32.mrb[0].mxu0
      %v8001 = vadd.f32 %v7450, %v8000
      %v8002 = vpop.f32.mrb[0].mxu0
      %8003 = vmatprep.mubr.f32.mxu0 0.0
      %8004 = vmatmul.mubr.f32.gmra.mrb[0].mxu0 %v7630
      %v8005 = vpop.f32.mrb[0].mxu0
      %v8006 = vadd.f32 %v7450, %v8005
      %v8007 = vpop.f32.mrb[0].mxu0
      %8008 = vmatprep.mubr.f32.mxu0 0.0
      %8009 = vmatmul.mubr.f32.gmra.mrb[0].mxu0 %v7633
      %v8010 = vpop.f32.mrb[0].mxu0
      %v8011 = vadd.f32 %v7450, %v8010
      %v8012 = vpop.f32.mrb[0].mxu0
      %8013 = vmatprep.mubr.f32.mxu0 0.0
      %8014 = vmatmul.mubr.f32.gmra.mrb[0].mxu0 %v7636
      %v8015 = vpop.f32.mrb[0].mxu0
      %v8016 = vadd.f32 %v7450, %v8015
      %v8017 = vpop.f32.mrb[0].mxu0
      %8018 = vmatprep.mubr.f32.mxu0 0.0
      %8019 = vmatmul.mubr.f32.gmra.mrb[0].mxu0 %v7639
      %v8020 = vpop.f32.mrb[0].mxu0
      %v8021 = vadd.f32 %v7450, %v8020
      %v8022 = vpop.f32.mrb[0].mxu0
      %8023 = vmatprep.mubr.f32.mxu0 0.0
      %8024 = vmatmul.mubr.f32.gmra.mrb[0].mxu0 %v7642
      %v8025 = vpop.f32.mrb[0].mxu0
      %v8026 = vadd.f32 %v7450, %v8025
      %v8027 = vpop.f32.mrb[0].mxu0
      %8028 = vdwg.mxu0
      %v8029 = vadd.f32 %v7711, %v701
      %v8030 = vadd.f32 %v7716, %v702
      %v8031 = vadd.f32 %v7721, %v703
      %v8032 = vadd.f32 %v7726, %v704
      %v8033 = vadd.f32 %v7731, %v705
      %v8034 = vadd.f32 %v7736, %v706
      %v8035 = vadd.f32 %v7741, %v707
      %v8036 = vadd.f32 %v7746, %v708
      %v8037 = vadd.f32 %v7751, %v709
      %v8038 = vadd.f32 %v7756, %v710
      %v8039 = vadd.f32 %v7761, %v711
      %v8040 = vadd.f32 %v7766, %v712
      %v8041 = vadd.f32 %v7771, %v713
      %v8042 = vadd.f32 %v7776, %v714
      %v8043 = vadd.f32 %v7781, %v715
      %v8044 = vadd.f32 %v7786, %v716
      %v8045 = vadd.f32 %v7791, %v717
      %v8046 = vadd.f32 %v7796, %v718
      %v8047 = vadd.f32 %v7801, %v719
      %v8048 = vadd.f32 %v7806, %v720
      %v8049 = vadd.f32 %v7811, %v721
      %v8050 = vadd.f32 %v7816, %v722
      %v8051 = vadd.f32 %v7821, %v723
      %v8052 = vadd.f32 %v7826, %v724
      %v8053 = vadd.f32 %v7831, %v725
      %v8054 = vadd.f32 %v7836, %v726
      %v8055 = vadd.f32 %v7841, %v727
      %v8056 = vadd.f32 %v7846, %v728
      %v8057 = vadd.f32 %v7851, %v729
      %v8058 = vadd.f32 %v7856, %v730
      %v8059 = vadd.f32 %v7861, %v731
      %v8060 = vadd.f32 %v7866, %v732
      %v8061 = vadd.f32 %v7871, %v733
      %v8062 = vadd.f32 %v7876, %v734
      %v8063 = vadd.f32 %v7881, %v735
      %v8064 = vadd.f32 %v7886, %v736
      %v8065 = vadd.f32 %v7891, %v737
      %v8066 = vadd.f32 %v7896, %v738
      %v8067 = vadd.f32 %v7901, %v739
      %v8068 = vadd.f32 %v7906, %v740
      %v8069 = vadd.f32 %v7911, %v741
      %v8070 = vadd.f32 %v7916, %v742
      %v8071 = vadd.f32 %v7921, %v743
      %v8072 = vadd.f32 %v7926, %v744
      %v8073 = vadd.f32 %v7931, %v745
      %v8074 = vadd.f32 %v7936, %v746
      %v8075 = vadd.f32 %v7941, %v747
      %v8076 = vadd.f32 %v7946, %v748
      %v8077 = vadd.f32 %v7951, %v749
      %v8078 = vadd.f32 %v7956, %v750
      %v8079 = vadd.f32 %v7961, %v751
      %v8080 = vadd.f32 %v7966, %v752
      %v8081 = vadd.f32 %v7971, %v753
      %v8082 = vadd.f32 %v7976, %v754
      %v8083 = vadd.f32 %v7981, %v755
      %v8084 = vadd.f32 %v7986, %v756
      %v8085 = vadd.f32 %v7991, %v757
      %v8086 = vadd.f32 %v7996, %v758
      %v8087 = vadd.f32 %v8001, %v759
      %v8088 = vadd.f32 %v8006, %v760
      %v8089 = vadd.f32 %v8011, %v761
      %v8090 = vadd.f32 %v8016, %v762
      %v8091 = vadd.f32 %v8021, %v763
      %v8092 = vadd.f32 %v8026, %v764
      %8093 = vst.msk [vmem:[%s497] sm:$0xff] %vm773, %v8029
      %8094 = vst.msk [vmem:[%s497 + $0x8] sm:$0xff] %vm773, %v8030
      %8095 = vst.msk [vmem:[%s497 + $0x10] sm:$0xff] %vm773, %v8031
      %8096 = vst.msk [vmem:[%s497 + $0x18] sm:$0xff] %vm773, %v8032
      %8097 = vst.msk [vmem:[%s497 + $0x20] sm:$0xff] %vm773, %v8033
      %8098 = vst.msk [vmem:[%s497 + $0x28] sm:$0xff] %vm773, %v8034
      %8099 = vst.msk [vmem:[%s497 + $0x30] sm:$0xff] %vm773, %v8035
      %8100 = vst.msk [vmem:[%s497 + $0x38] sm:$0xff] %vm773, %v8036
      %8101 = vst.msk [vmem:[%s497 + $0x40] sm:$0xff] %vm773, %v8037
      %8102 = vst.msk [vmem:[%s497 + $0x48] sm:$0xff] %vm773, %v8038
      %8103 = vst.msk [vmem:[%s497 + $0x50] sm:$0xff] %vm773, %v8039
      %8104 = vst.msk [vmem:[%s497 + $0x58] sm:$0xff] %vm773, %v8040
      %8105 = vst.msk [vmem:[%s497 + $0x60] sm:$0xff] %vm773, %v8041
      %8106 = vst.msk [vmem:[%s497 + $0x68] sm:$0xff] %vm773, %v8042
      %8107 = vst.msk [vmem:[%s497 + $0x70] sm:$0xff] %vm773, %v8043
      %8108 = vst.msk [vmem:[%s497 + $0x78] sm:$0xff] %vm773, %v8044
      %8109 = vst.msk [vmem:[%s497 + $0x80] sm:$0xff] %vm773, %v8045
      %8110 = vst.msk [vmem:[%s497 + $0x88] sm:$0xff] %vm773, %v8046
      %8111 = vst.msk [vmem:[%s497 + $0x90] sm:$0xff] %vm773, %v8047
      %8112 = vst.msk [vmem:[%s497 + $0x98] sm:$0xff] %vm773, %v8048
      %8113 = vst.msk [vmem:[%s497 + $0xa0] sm:$0xff] %vm773, %v8049
      %8114 = vst.msk [vmem:[%s497 + $0xa8] sm:$0xff] %vm773, %v8050
      %8115 = vst.msk [vmem:[%s497 + $0xb0] sm:$0xff] %vm773, %v8051
      %8116 = vst.msk [vmem:[%s497 + $0xb8] sm:$0xff] %vm773, %v8052
      %8117 = vst.msk [vmem:[%s497 + $0xc0] sm:$0xff] %vm773, %v8053
      %8118 = vst.msk [vmem:[%s497 + $0xc8] sm:$0xff] %vm773, %v8054
      %8119 = vst.msk [vmem:[%s497 + $0xd0] sm:$0xff] %vm773, %v8055
      %8120 = vst.msk [vmem:[%s497 + $0xd8] sm:$0xff] %vm773, %v8056
      %8121 = vst.msk [vmem:[%s497 + $0xe0] sm:$0xff] %vm773, %v8057
      %8122 = vst.msk [vmem:[%s497 + $0xe8] sm:$0xff] %vm773, %v8058
      %8123 = vst.msk [vmem:[%s497 + $0xf0] sm:$0xff] %vm773, %v8059
      %8124 = vst.msk [vmem:[%s497 + $0xf8] sm:$0xff] %vm773, %v8060
      %8125 = vst.msk [vmem:[%s497 + $0x100] sm:$0xff] %vm773, %v8061
      %8126 = vst.msk [vmem:[%s497 + $0x108] sm:$0xff] %vm773, %v8062
      %8127 = vst.msk [vmem:[%s497 + $0x110] sm:$0xff] %vm773, %v8063
      %8128 = vst.msk [vmem:[%s497 + $0x118] sm:$0xff] %vm773, %v8064
      %8129 = vst.msk [vmem:[%s497 + $0x120] sm:$0xff] %vm773, %v8065
      %8130 = vst.msk [vmem:[%s497 + $0x128] sm:$0xff] %vm773, %v8066
      %8131 = vst.msk [vmem:[%s497 + $0x130] sm:$0xff] %vm773, %v8067
      %8132 = vst.msk [vmem:[%s497 + $0x138] sm:$0xff] %vm773, %v8068
      %8133 = vst.msk [vmem:[%s497 + $0x140] sm:$0xff] %vm773, %v8069
      %8134 = vst.msk [vmem:[%s497 + $0x148] sm:$0xff] %vm773, %v8070
      %8135 = vst.msk [vmem:[%s497 + $0x150] sm:$0xff] %vm773, %v8071
      %8136 = vst.msk [vmem:[%s497 + $0x158] sm:$0xff] %vm773, %v8072
      %8137 = vst.msk [vmem:[%s497 + $0x160] sm:$0xff] %vm773, %v8073
      %8138 = vst.msk [vmem:[%s497 + $0x168] sm:$0xff] %vm773, %v8074
      %8139 = vst.msk [vmem:[%s497 + $0x170] sm:$0xff] %vm773, %v8075
      %8140 = vst.msk [vmem:[%s497 + $0x178] sm:$0xff] %vm773, %v8076
      %8141 = vst.msk [vmem:[%s497 + $0x180] sm:$0xff] %vm773, %v8077
      %8142 = vst.msk [vmem:[%s497 + $0x188] sm:$0xff] %vm773, %v8078
      %8143 = vst.msk [vmem:[%s497 + $0x190] sm:$0xff] %vm773, %v8079
      %8144 = vst.msk [vmem:[%s497 + $0x198] sm:$0xff] %vm773, %v8080
      %8145 = vst.msk [vmem:[%s497 + $0x1a0] sm:$0xff] %vm773, %v8081
      %8146 = vst.msk [vmem:[%s497 + $0x1a8] sm:$0xff] %vm773, %v8082
      %8147 = vst.msk [vmem:[%s497 + $0x1b0] sm:$0xff] %vm773, %v8083
      %8148 = vst.msk [vmem:[%s497 + $0x1b8] sm:$0xff] %vm773, %v8084
      %8149 = vst.msk [vmem:[%s497 + $0x1c0] sm:$0xff] %vm773, %v8085
      %8150 = vst.msk [vmem:[%s497 + $0x1c8] sm:$0xff] %vm773, %v8086
      %8151 = vst.msk [vmem:[%s497 + $0x1d0] sm:$0xff] %vm773, %v8087
      %8152 = vst.msk [vmem:[%s497 + $0x1d8] sm:$0xff] %vm773, %v8088
      %8153 = vst.msk [vmem:[%s497 + $0x1e0] sm:$0xff] %vm773, %v8089
      %8154 = vst.msk [vmem:[%s497 + $0x1e8] sm:$0xff] %vm773, %v8090
      %8155 = vst.msk [vmem:[%s497 + $0x1f0] sm:$0xff] %vm773, %v8091
      %8156 = vst.msk [vmem:[%s497 + $0x1f8] sm:$0xff] %vm773, %v8092
      %s8157 = smul.u32 64, %s25
      %p8158 = scmp.lt.s32.totalorder %s24, 1
      %s8159 = scalar_select %p8158, %s24, 1
      %p8160 = scmp.lt.s32.totalorder %s8157, 127
      %s8161 = scalar_select %p8160, %s8157, 127
      %s8162 = smul.addr %s8159, 128
      %s8163 = sadd.s32 %s8161, %s8162
      %s8164 = smul.addr %s8163, 8
      %s8165 = scalar_lea.vmem %s9, %s8164
      // Predicated region
      $region57: #{tpu_custom_call.1} parent=55 // pred_check
        %p8166 = pneg %p278
      $region58: #{tpu_custom_call.1} parent=55 // pred_check_branch
        %8168 = sbr.rel (%p8166) target = $region60
      $region59: #{tpu_custom_call.1} parent=55 // pred_region
        %s8169 = smul.u32 64, %s25
      $region60: #{tpu_custom_call.1} parent=55 // pred_fallthru
        _
    $region56: #{tpu_custom_call.1} parent=5 // pred_fallthru
      _
    %p8170 = scmp.le.s32.totalorder 2, %s15
    // Predicated region
    $region61: #{tpu_custom_call.1} parent=5 // pred_check
      %p8171 = pneg %p8170
    $region62: #{tpu_custom_call.1} parent=5 // pred_check_branch
      %8173 = sbr.rel (%p8171) target = $region64
    $region63: #{tpu_custom_call.1} parent=5 // pred_region
      %s8174 = ssub.s32 %s15, 2
      // Predicated region
      $region65: #{tpu_custom_call.1} parent=63 // pred_check
        %p8175 = pneg %p284
      $region66: #{tpu_custom_call.1} parent=63 // pred_check_branch
        %8177 = sbr.rel (%p8175) target = $region68
      $region67: #{tpu_custom_call.1} parent=63 // pred_region
        %s8178 = smul.u32 64, %s27
        %p8179 = scmp.lt.s32.totalorder %s26, 1
        %s8180 = scalar_select %p8179, %s26, 1
        %p8181 = scmp.lt.s32.totalorder %s8178, 127
        %s8182 = scalar_select %p8181, %s8178, 127
        %s8183 = smul.addr %s8180, 128
        %s8184 = sadd.s32 %s8182, %s8183
        %s8185 = smul.addr %s8184, 8
        %s8186 = scalar_lea.vmem %s9, %s8185
      $region68: #{tpu_custom_call.1} parent=63 // pred_fallthru
        _
    $region64: #{tpu_custom_call.1} parent=5 // pred_fallthru
      _
  $region6: #{tpu_custom_call.1} parent=0 // loop_footer
    %s19 = sadd.s32 1, %s15
  $region7: #{tpu_custom_call.1} parent=0 // loop_footer_branch
    %14 = sbr.rel target = $region3
  $region8: #{tpu_custom_call.1} parent=0 // loop_exit
    _

</llo_original>
